<compile_context>
chip_gen: v6e
topology: v6e:2x2x1
jax: 0.10.0
libtpu: 0.0.40
codegen_flags: <defaults>
</compile_context>

<pallas_src>
import numpy as np

import jax
import jax.numpy as jnp
from jax.experimental import pallas as pl
from jax.experimental.pallas import tpu as pltpu


# Geometry fixed by the module (fc1 expects 64 = 64*1*1 input features):
# 28x28 --conv1(3x3,s2)--> 13x13 --conv2(5x5,s2)--> 5x5 --conv3(5x5,s2)--> 1x1
H_IN = 28
H1 = 13          # conv1 output spatial extent
H2 = 5           # conv2 output spatial extent
C1, C2, C3 = 16, 32, 64
K1, K2 = 3, 5    # conv kernel sizes
BN_EPS = 1e-5
SLOPE = 0.2

# Packed small-parameter slab layout (rows of a (40, 128) f32 array).
_ROW_W1 = 0      # rows 0..15 : conv1 weight, padded to (16, 16) (rows 9.. zero)
_ROW_SG = 16     # rows 16..25: [colsum(p1); p1^T p1] padded to 16 cols (per call)
_ROW_G1 = 26
_ROW_B1 = 27
_ROW_G2 = 28
_ROW_B2 = 29
_ROW_G3 = 30
_ROW_B3 = 31
_ROW_WFC = 32
_ROW_BFC = 33
_PAR_ROWS = 40


# ------------------------------ fused kernel -------------------------------

def _fused_discriminator_kernel(p1d_ref, w2_ref, w3_ref, par_ref, o_ref):
    r2 = p1d_ref.shape[1]            # N * 25   (conv2 output positions)
    nb = r2 // (H2 * H2)             # batch size
    r1 = nb * H1 * H1                # N * 169  (BN1 population)

    # ---- unpack the packed small-parameter slab (one DMA for 8+2 tensors).
    w1f = par_ref[_ROW_W1:_ROW_W1 + 16, 0:16]          # (16,16) f32, rows 9.. zero
    sg = par_ref[_ROW_SG:_ROW_SG + 10, 0:16]           # (10,16) sufficient stats
    g1 = par_ref[_ROW_G1:_ROW_G1 + 1, 0:C1]
    b1 = par_ref[_ROW_B1:_ROW_B1 + 1, 0:C1]
    g2 = par_ref[_ROW_G2:_ROW_G2 + 1, 0:C2]
    b2 = par_ref[_ROW_B2:_ROW_B2 + 1, 0:C2]
    g3 = par_ref[_ROW_G3:_ROW_G3 + 1, 0:C3]
    b3 = par_ref[_ROW_B3:_ROW_B3 + 1, 0:C3]
    wfc = par_ref[_ROW_WFC:_ROW_WFC + 1, 0:C3]
    bfc = par_ref[_ROW_BFC:_ROW_BFC + 1, 0:1]

    # ---- BN1 statistics from sufficient statistics of the *unduplicated*
    #      conv1 output:  mean = colsum(p1) @ w1 / R1,
    #      E[y^2]_c = w1[:,c]^T (p1^T p1) w1[:,c] / R1.
    #      (Training-mode BN; the conv bias is dropped -- BN cancels it.)
    m = jnp.dot(sg, w1f, preferred_element_type=jnp.float32)       # (10, 16)
    inv_r1 = 1.0 / float(r1)
    mean1 = m[0:1, :] * inv_r1
    ey2 = jnp.sum(m[1:10, :] * w1f[0:9, :], axis=0, keepdims=True) * inv_r1
    var1 = jnp.maximum(ey2 - mean1 * mean1, 0.0)
    scale1 = g1 * jax.lax.rsqrt(var1 + BN_EPS)
    shift1 = b1 - mean1 * scale1

    # ---- conv1 + BN1 + LeakyReLU + conv2 as 25 tap-accumulated MXU dots.
    #      Each tap's LHS is a clean leading-index load (lane/sublane offset 0)
    #      of the tap-major duplicated patch tensor; all dots are bf16 x bf16.
    w1b = w1f.astype(jnp.bfloat16)
    y2 = jnp.zeros((r2, C2), jnp.float32)
    for k in range(K2 * K2):
        p1k = p1d_ref[k].astype(jnp.bfloat16)                       # (r2, 16)
        y1k = jnp.dot(p1k, w1b, preferred_element_type=jnp.float32)  # (r2, 16)
        z = y1k * scale1 + shift1
        a1k = jnp.where(z >= 0, z, SLOPE * z).astype(jnp.bfloat16)
        y2 = y2 + jnp.dot(a1k, w2_ref[k],
                          preferred_element_type=jnp.float32)       # (r2, 32)

    # ---- BN2 + LeakyReLU (stats over the N*25 conv2 output positions).
    inv_r2 = 1.0 / float(r2)
    mean2 = jnp.sum(y2, axis=0, keepdims=True) * inv_r2
    var2 = jnp.maximum(
        jnp.sum(y2 * y2, axis=0, keepdims=True) * inv_r2 - mean2 * mean2, 0.0)
    scale2 = g2 * jax.lax.rsqrt(var2 + BN_EPS)
    shift2 = b2 - mean2 * scale2
    z2 = y2 * scale2 + shift2
    a2 = jnp.where(z2 >= 0, z2, SLOPE * z2).astype(jnp.bfloat16)    # (r2, 32)

    # ---- conv3 (5x5 on a 5x5 input -> 1x1) as 25 spatial-accumulated dots.
    #      y2/a2 rows are (p, n)-ordered, so each slice is contiguous/static.
    y3 = jnp.zeros((nb, C3), jnp.float32)
    for p in range(H2 * H2):
        y3 = y3 + jnp.dot(a2[p * nb:(p + 1) * nb, :], w3_ref[p],
                          preferred_element_type=jnp.float32)       # (nb, 64)

    # ---- BN3 + LeakyReLU + fc (64 -> 1) on the VPU (no 1-column MXU dot).
    inv_r3 = 1.0 / float(nb)
    mean3 = jnp.sum(y3, axis=0, keepdims=True) * inv_r3
    var3 = jnp.maximum(
        jnp.sum(y3 * y3, axis=0, keepdims=True) * inv_r3 - mean3 * mean3, 0.0)
    scale3 = g3 * jax.lax.rsqrt(var3 + BN_EPS)
    shift3 = b3 - mean3 * scale3
    z3 = y3 * scale3 + shift3
    a3 = jnp.where(z3 >= 0, z3, SLOPE * z3)
    # (N, 1) output is fine at this size; pad to a lane-dense slab at large N.
    o_ref[...] = jnp.sum(a3 * wfc, axis=1, keepdims=True) + bfc


# --------------------------------- glue ------------------------------------

def _im2col(x_nhwc, kh, kw, stride):
    """(N,H,W,C) -> (N*Ho*Wo, kh*kw*C) valid-padding patches, (kh,kw,c) cols."""
    n, h, w, c = x_nhwc.shape
    ho = (h - kh) // stride + 1
    wo = (w - kw) // stride + 1
    cols = []
    for i in range(kh):
        for j in range(kw):
            cols.append(x_nhwc[:, i:i + stride * ho:stride,
                               j:j + stride * wo:stride, :])
    p = jnp.stack(cols, axis=3)                       # (n, ho, wo, kh*kw, c)
    return p.reshape(n * ho * wo, kh * kw * c), ho, wo


def _conv2_dup_index(n_batch):
    """Row-gather indices building the tap-major duplicated conv1-patch tensor.

    idx[k, p*N + n] = row of the standard (N*169, 9) conv1 patch matrix that
    holds the conv1 patch feeding conv2 tap k=(i,j) at conv2 output position
    p=(ho,wo) of image n, i.e. conv1-output pixel (2*ho + i, 2*wo + j)."""
    idx = np.empty((K2 * K2, H2 * H2 * n_batch), np.int32)
    for i in range(K2):
        for j in range(K2):
            k = i * K2 + j
            for ho in range(H2):
                for wo in range(H2):
                    p = ho * H2 + wo
                    h1 = 2 * ho + i
                    w1 = 2 * wo + j
                    for n in range(n_batch):
                        idx[k, p * n_batch + n] = (n * H1 + h1) * H1 + w1
    return idx


def init_params(key):
    """Deterministic synthetic parameters matching the PyTorch module shapes."""
    ks = jax.random.split(key, 8)

    def w(k, shape, fan_in):
        return jax.random.normal(k, shape, jnp.float32) / jnp.sqrt(fan_in)

    return {
        "conv1": dict(w=w(ks[0], (16, 1, 3, 3), 9),
                      b=0.01 * jax.random.normal(ks[1], (16,), jnp.float32),
                      gamma=jnp.ones((16,), jnp.float32),
                      beta=jnp.zeros((16,), jnp.float32)),
        "conv2": dict(w=w(ks[2], (32, 16, 5, 5), 400),
                      b=0.01 * jax.random.normal(ks[3], (32,), jnp.float32),
                      gamma=jnp.ones((32,), jnp.float32),
                      beta=jnp.zeros((32,), jnp.float32)),
        "conv3": dict(w=w(ks[4], (64, 32, 5, 5), 800),
                      b=0.01 * jax.random.normal(ks[5], (64,), jnp.float32),
                      gamma=jnp.ones((64,), jnp.float32),
                      beta=jnp.zeros((64,), jnp.float32)),
        "fc1": dict(w=w(ks[6], (1, 64), 64),           # PyTorch Linear (out,in)
                    b=0.01 * jax.random.normal(ks[7], (1,), jnp.float32)),
    }


def prepare_params(params):
    """One-time layout prep (hoisted out of the forward pass).

    * conv weights (Cout,Cin,kh,kw) -> tap-major (kh*kw, Cin, Cout);
      conv2/conv3 weights in bf16 (the dots are bf16 x bf16 -> f32).
    * conv1 weight, BN gammas/betas, fc weight/bias packed into one
      (40, 128) f32 slab -> a single DMA for all small parameters.
    * conv biases dropped: training-mode BN's mean subtraction cancels them.
    """
    def conv_taps(w):
        cout, cin, kh, kw = w.shape
        return jnp.transpose(w, (2, 3, 1, 0)).reshape(kh * kw, cin, cout)

    w1 = conv_taps(params["conv1"]["w"]).reshape(K1 * K1, C1)       # (9, 16)

    par = jnp.zeros((_PAR_ROWS, 128), jnp.float32)
    par = par.at[_ROW_W1:_ROW_W1 + K1 * K1, 0:C1].set(w1)
    par = par.at[_ROW_G1, 0:C1].set(params["conv1"]["gamma"])
    par = par.at[_ROW_B1, 0:C1].set(params["conv1"]["beta"])
    par = par.at[_ROW_G2, 0:C2].set(params["conv2"]["gamma"])
    par = par.at[_ROW_B2, 0:C2].set(params["conv2"]["beta"])
    par = par.at[_ROW_G3, 0:C3].set(params["conv3"]["gamma"])
    par = par.at[_ROW_B3, 0:C3].set(params["conv3"]["beta"])
    par = par.at[_ROW_WFC, 0:C3].set(params["fc1"]["w"].reshape(C3))
    par = par.at[_ROW_BFC, 0].set(params["fc1"]["b"][0])

    return dict(
        par=par,
        w2=conv_taps(params["conv2"]["w"]).astype(jnp.bfloat16),    # (25,16,32)
        w3=conv_taps(params["conv3"]["w"]).astype(jnp.bfloat16),    # (25,32,64)
    )


@jax.jit
def discriminator_forward(x_nchw, prepped):
    """Forward pass: NCHW f32 input -> (N, 1) f32 logits, one pallas_call."""
    nb = x_nchw.shape[0]
    assert x_nchw.shape[1:] == (1, H_IN, H_IN), "expects (N, 1, 28, 28) input"
    x = jnp.transpose(x_nchw, (0, 2, 3, 1)).astype(jnp.float32)     # NHWC

    # Tiny XLA prologue: conv1 im2col, the tap-major conv2-ordered duplication
    # of its rows, and BN1's sufficient statistics over the unduplicated rows.
    p1, _, _ = _im2col(x, K1, K1, 2)                                # (N*169, 9)
    idx = _conv2_dup_index(nb)                                      # trace-time
    p1d = jnp.pad(p1[idx], ((0, 0), (0, 0), (0, 16 - K1 * K1)))     # (25,N*25,16)

    s1 = jnp.sum(p1, axis=0, keepdims=True)                         # (1, 9)
    g1m = jnp.dot(p1.T, p1, preferred_element_type=jnp.float32,
                  precision=jax.lax.Precision.HIGHEST)              # (9, 9)
    sg = jnp.pad(jnp.concatenate([s1, g1m], axis=0), ((0, 0), (0, 7)))
    par = prepped["par"].at[_ROW_SG:_ROW_SG + 10, 0:16].set(sg)

    r2 = nb * H2 * H2
    flops = 2 * (K2 * K2 * (r2 * 16 * C1 + r2 * C1 * C2 + nb * C2 * C3)
                 + nb * C3)
    bytes_accessed = int(p1d.size * 4 + prepped["w2"].size * 2
                         + prepped["w3"].size * 2 + par.size * 4 + nb * 4)

    in_specs = [pl.BlockSpec(memory_space=pltpu.MemorySpace.VMEM)
                for _ in range(4)]
    out_spec = pl.BlockSpec(memory_space=pltpu.MemorySpace.VMEM)

    # No grid: the whole model needs ~1 MiB of VMEM at this size.  For large N
    # (esp. v7x) add a batch-tile "parallel" grid axis + cross-tile BN stats.
    return pl.pallas_call(
        _fused_discriminator_kernel,
        out_shape=jax.ShapeDtypeStruct((nb, 1), jnp.float32),
        in_specs=in_specs,
        out_specs=out_spec,
        cost_estimate=pl.CostEstimate(flops=flops,
                                      transcendentals=C1 + C2 + C3,
                                      bytes_accessed=bytes_accessed),
    )(p1d, prepped["w2"], prepped["w3"], par)


def reference_forward(x_nchw, params):
    """Pure-JAX (non-Pallas) reference with matching numerics: bf16 operands
    feeding every conv dot (as the kernel does), f32 accumulation/BN math,
    training-mode batch statistics (biased variance, eps=1e-5)."""
    def conv_mat(w):
        cout, cin, kh, kw = w.shape
        return jnp.transpose(w, (2, 3, 1, 0)).reshape(kh * kw * cin, cout)

    def bn_lrelu(y, gamma, beta):
        mean = jnp.mean(y, axis=0, keepdims=True)
        var = jnp.mean(jnp.square(y - mean), axis=0, keepdims=True)
        z = (gamma.reshape(1, -1) * (y - mean) * jax.lax.rsqrt(var + BN_EPS)
             + beta.reshape(1, -1))
        return jnp.where(z >= 0, z, SLOPE * z)

    def stage(x_nhwc, layer, k, stride):
        nb = x_nhwc.shape[0]
        p, ho, wo = _im2col(x_nhwc, k, k, stride)
        w_mat = conv_mat(layer["w"]).astype(jnp.bfloat16)
        y = jnp.dot(p.astype(jnp.bfloat16), w_mat,
                    preferred_element_type=jnp.float32)
        y = y + layer["b"].reshape(1, -1)   # cancelled by training-mode BN
        return bn_lrelu(y, layer["gamma"], layer["beta"]).reshape(nb, ho, wo, -1)

    x = jnp.transpose(x_nchw, (0, 2, 3, 1)).astype(jnp.float32)
    x = stage(x, params["conv1"], K1, 2)
    x = stage(x, params["conv2"], K2, 2)
    x = stage(x, params["conv3"], K2, 2)
    flat = x.reshape(x.shape[0], -1)                                # (N, 64)
    return (jnp.dot(flat, params["fc1"]["w"].T,
                    preferred_element_type=jnp.float32,
                    precision=jax.lax.Precision.HIGHEST)
            + params["fc1"]["b"].reshape(1, 1))


if __name__ == "__main__":
    key = jax.random.PRNGKey(0)
    k_param, k_x = jax.random.split(key)
    params = init_params(k_param)
    prepped = prepare_params(params)

    # Input must be 28x28 so the 64 -> 1 fc lines up (28 -> 13 -> 5 -> 1).
    x = jax.random.normal(k_x, (2, 1, 28, 28), jnp.float32)

    out = jax.block_until_ready(discriminator_forward(x, prepped))
    assert out.shape == (2, 1) and out.dtype == jnp.float32

    ref = jax.block_until_ready(reference_forward(x, params))
    diff = float(np.max(np.abs(np.asarray(out) - np.asarray(ref))))
    # Tolerance is intentionally not razor-tight: conv3's BatchNorm sees only
    # N=2 samples per channel, so near-zero-variance channels can amplify
    # benign rounding differences.  Real layout/indexing bugs give O(1).
    if not diff < 5e-2:
        raise AssertionError(f"kernel/reference mismatch, max|diff|={diff:.3e}")
    print("KERNEL_OK")
</pallas_src>

<mosaic_0001>
module attributes {stable_mosaic.version = 11 : i64} {
  func.func @_fused_discriminator_kernel(%arg0: memref<25x50x16xf32, #tpu.memory_space<vmem>>, %arg1: memref<25x16x32xbf16, #tpu.memory_space<vmem>>, %arg2: memref<25x32x64xbf16, #tpu.memory_space<vmem>>, %arg3: memref<40x128xf32, #tpu.memory_space<vmem>>, %arg4: memref<2x1xf32, #tpu.memory_space<vmem>>) attributes {dimension_semantics = [], scalar_prefetch = 0 : i64, scratch_operands = 0 : i64, tpu.core_type = #tpu.core_type<tc>} {
    %c0 = arith.constant 0 : index
    %c0_0 = arith.constant 0 : index
    %0 = vector.load %arg3[%c0, %c0_0] : memref<40x128xf32, #tpu.memory_space<vmem>>, vector<16x16xf32>
    %c16 = arith.constant 16 : index
    %c0_1 = arith.constant 0 : index
    %1 = vector.load %arg3[%c16, %c0_1] : memref<40x128xf32, #tpu.memory_space<vmem>>, vector<10x16xf32>
    %c26 = arith.constant 26 : index
    %c0_2 = arith.constant 0 : index
    %2 = vector.load %arg3[%c26, %c0_2] : memref<40x128xf32, #tpu.memory_space<vmem>>, vector<1x16xf32>
    %c27 = arith.constant 27 : index
    %c0_3 = arith.constant 0 : index
    %3 = vector.load %arg3[%c27, %c0_3] : memref<40x128xf32, #tpu.memory_space<vmem>>, vector<1x16xf32>
    %c28 = arith.constant 28 : index
    %c0_4 = arith.constant 0 : index
    %4 = vector.load %arg3[%c28, %c0_4] : memref<40x128xf32, #tpu.memory_space<vmem>>, vector<1x32xf32>
    %c29 = arith.constant 29 : index
    %c0_5 = arith.constant 0 : index
    %5 = vector.load %arg3[%c29, %c0_5] : memref<40x128xf32, #tpu.memory_space<vmem>>, vector<1x32xf32>
    %c30 = arith.constant 30 : index
    %c0_6 = arith.constant 0 : index
    %6 = vector.load %arg3[%c30, %c0_6] : memref<40x128xf32, #tpu.memory_space<vmem>>, vector<1x64xf32>
    %c31 = arith.constant 31 : index
    %c0_7 = arith.constant 0 : index
    %7 = vector.load %arg3[%c31, %c0_7] : memref<40x128xf32, #tpu.memory_space<vmem>>, vector<1x64xf32>
    %c32 = arith.constant 32 : index
    %c0_8 = arith.constant 0 : index
    %8 = vector.load %arg3[%c32, %c0_8] : memref<40x128xf32, #tpu.memory_space<vmem>>, vector<1x64xf32>
    %c33 = arith.constant 33 : index
    %c0_9 = arith.constant 0 : index
    %9 = vector.load %arg3[%c33, %c0_9] : memref<40x128xf32, #tpu.memory_space<vmem>>, vector<1x1xf32>
    %cst = arith.constant dense<0.000000e+00> : vector<10x16xf32>
    %10 = tpu.matmul %1, %0, %cst {dimension_numbers = #tpu.dot_dimension_numbers<[1], [0], [0], [1], [0, 0, 1, 1], [], []>} : vector<10x16xf32>, vector<16x16xf32>, vector<10x16xf32> -> vector<10x16xf32>
    %11 = vector.extract_strided_slice %10 {offsets = [0, 0], sizes = [1, 16], strides = [1, 1]} : vector<10x16xf32> to vector<1x16xf32>
    %cst_10 = arith.constant 2.958580e-03 : f32
    %12 = vector.broadcast %cst_10 : f32 to vector<1x16xf32>
    %13 = arith.mulf %11, %12 : vector<1x16xf32>
    %14 = vector.extract_strided_slice %10 {offsets = [1, 0], sizes = [9, 16], strides = [1, 1]} : vector<10x16xf32> to vector<9x16xf32>
    %15 = vector.extract_strided_slice %0 {offsets = [0, 0], sizes = [9, 16], strides = [1, 1]} : vector<16x16xf32> to vector<9x16xf32>
    %16 = arith.mulf %14, %15 : vector<9x16xf32>
    %cst_11 = arith.constant dense<0.000000e+00> : vector<16xf32>
    %17 = vector.multi_reduction <add>, %16, %cst_11 [0] : vector<9x16xf32> to vector<16xf32>
    %18 = vector.shape_cast %17 : vector<16xf32> to vector<1x16xf32>
    %cst_12 = arith.constant 2.958580e-03 : f32
    %19 = vector.broadcast %cst_12 : f32 to vector<1x16xf32>
    %20 = arith.mulf %18, %19 : vector<1x16xf32>
    %21 = arith.mulf %13, %13 : vector<1x16xf32>
    %22 = arith.subf %20, %21 : vector<1x16xf32>
    %cst_13 = arith.constant 0.000000e+00 : f32
    %23 = vector.broadcast %cst_13 : f32 to vector<1x16xf32>
    %24 = arith.maximumf %22, %23 : vector<1x16xf32>
    %cst_14 = arith.constant 9.99999974E-6 : f32
    %25 = vector.broadcast %cst_14 : f32 to vector<1x16xf32>
    %26 = arith.addf %24, %25 : vector<1x16xf32>
    %27 = math.rsqrt %26 : vector<1x16xf32>
    %28 = arith.mulf %2, %27 : vector<1x16xf32>
    %29 = arith.mulf %13, %28 : vector<1x16xf32>
    %30 = arith.subf %3, %29 : vector<1x16xf32>
    %31 = arith.truncf %0 : vector<16x16xf32> to vector<16x16xbf16>
    %cst_15 = arith.constant 0.000000e+00 : f32
    %32 = vector.broadcast %cst_15 : f32 to vector<50x32xf32>
    %c0_16 = arith.constant 0 : index
    %c0_17 = arith.constant 0 : index
    %c0_18 = arith.constant 0 : index
    %33 = vector.load %arg0[%c0_16, %c0_17, %c0_18] : memref<25x50x16xf32, #tpu.memory_space<vmem>>, vector<1x50x16xf32>
    %34 = vector.shape_cast %33 : vector<1x50x16xf32> to vector<50x16xf32>
    %35 = arith.truncf %34 : vector<50x16xf32> to vector<50x16xbf16>
    %cst_19 = arith.constant dense<0.000000e+00> : vector<50x16xf32>
    %36 = tpu.matmul %35, %31, %cst_19 {dimension_numbers = #tpu.dot_dimension_numbers<[1], [0], [0], [1], [0, 0, 1, 1], [], []>} : vector<50x16xbf16>, vector<16x16xbf16>, vector<50x16xf32> -> vector<50x16xf32>
    %37 = vector.broadcast %28 : vector<1x16xf32> to vector<50x16xf32>
    %38 = arith.mulf %36, %37 : vector<50x16xf32>
    %39 = vector.broadcast %30 : vector<1x16xf32> to vector<50x16xf32>
    %40 = arith.addf %38, %39 : vector<50x16xf32>
    %cst_20 = arith.constant 0.000000e+00 : f32
    %41 = vector.broadcast %cst_20 : f32 to vector<50x16xf32>
    %42 = arith.cmpf oge, %40, %41 : vector<50x16xf32>
    %cst_21 = arith.constant 2.000000e-01 : f32
    %43 = vector.broadcast %cst_21 : f32 to vector<50x16xf32>
    %44 = arith.mulf %43, %40 : vector<50x16xf32>
    %45 = arith.select %42, %40, %44 : vector<50x16xi1>, vector<50x16xf32>
    %46 = arith.truncf %45 : vector<50x16xf32> to vector<50x16xbf16>
    %c0_22 = arith.constant 0 : index
    %c0_23 = arith.constant 0 : index
    %c0_24 = arith.constant 0 : index
    %47 = vector.load %arg1[%c0_22, %c0_23, %c0_24] : memref<25x16x32xbf16, #tpu.memory_space<vmem>>, vector<1x16x32xbf16>
    %48 = vector.shape_cast %47 : vector<1x16x32xbf16> to vector<16x32xbf16>
    %cst_25 = arith.constant dense<0.000000e+00> : vector<50x32xf32>
    %49 = tpu.matmul %46, %48, %cst_25 {dimension_numbers = #tpu.dot_dimension_numbers<[1], [0], [0], [1], [0, 0, 1, 1], [], []>} : vector<50x16xbf16>, vector<16x32xbf16>, vector<50x32xf32> -> vector<50x32xf32>
    %50 = arith.addf %32, %49 : vector<50x32xf32>
    %c1 = arith.constant 1 : index
    %c0_26 = arith.constant 0 : index
    %c0_27 = arith.constant 0 : index
    %51 = vector.load %arg0[%c1, %c0_26, %c0_27] : memref<25x50x16xf32, #tpu.memory_space<vmem>>, vector<1x50x16xf32>
    %52 = vector.shape_cast %51 : vector<1x50x16xf32> to vector<50x16xf32>
    %53 = arith.truncf %52 : vector<50x16xf32> to vector<50x16xbf16>
    %cst_28 = arith.constant dense<0.000000e+00> : vector<50x16xf32>
    %54 = tpu.matmul %53, %31, %cst_28 {dimension_numbers = #tpu.dot_dimension_numbers<[1], [0], [0], [1], [0, 0, 1, 1], [], []>} : vector<50x16xbf16>, vector<16x16xbf16>, vector<50x16xf32> -> vector<50x16xf32>
    %55 = vector.broadcast %28 : vector<1x16xf32> to vector<50x16xf32>
    %56 = arith.mulf %54, %55 : vector<50x16xf32>
    %57 = vector.broadcast %30 : vector<1x16xf32> to vector<50x16xf32>
    %58 = arith.addf %56, %57 : vector<50x16xf32>
    %cst_29 = arith.constant 0.000000e+00 : f32
    %59 = vector.broadcast %cst_29 : f32 to vector<50x16xf32>
    %60 = arith.cmpf oge, %58, %59 : vector<50x16xf32>
    %cst_30 = arith.constant 2.000000e-01 : f32
    %61 = vector.broadcast %cst_30 : f32 to vector<50x16xf32>
    %62 = arith.mulf %61, %58 : vector<50x16xf32>
    %63 = arith.select %60, %58, %62 : vector<50x16xi1>, vector<50x16xf32>
    %64 = arith.truncf %63 : vector<50x16xf32> to vector<50x16xbf16>
    %c1_31 = arith.constant 1 : index
    %c0_32 = arith.constant 0 : index
    %c0_33 = arith.constant 0 : index
    %65 = vector.load %arg1[%c1_31, %c0_32, %c0_33] : memref<25x16x32xbf16, #tpu.memory_space<vmem>>, vector<1x16x32xbf16>
    %66 = vector.shape_cast %65 : vector<1x16x32xbf16> to vector<16x32xbf16>
    %cst_34 = arith.constant dense<0.000000e+00> : vector<50x32xf32>
    %67 = tpu.matmul %64, %66, %cst_34 {dimension_numbers = #tpu.dot_dimension_numbers<[1], [0], [0], [1], [0, 0, 1, 1], [], []>} : vector<50x16xbf16>, vector<16x32xbf16>, vector<50x32xf32> -> vector<50x32xf32>
    %68 = arith.addf %50, %67 : vector<50x32xf32>
    %c2 = arith.constant 2 : index
    %c0_35 = arith.constant 0 : index
    %c0_36 = arith.constant 0 : index
    %69 = vector.load %arg0[%c2, %c0_35, %c0_36] : memref<25x50x16xf32, #tpu.memory_space<vmem>>, vector<1x50x16xf32>
    %70 = vector.shape_cast %69 : vector<1x50x16xf32> to vector<50x16xf32>
    %71 = arith.truncf %70 : vector<50x16xf32> to vector<50x16xbf16>
    %cst_37 = arith.constant dense<0.000000e+00> : vector<50x16xf32>
    %72 = tpu.matmul %71, %31, %cst_37 {dimension_numbers = #tpu.dot_dimension_numbers<[1], [0], [0], [1], [0, 0, 1, 1], [], []>} : vector<50x16xbf16>, vector<16x16xbf16>, vector<50x16xf32> -> vector<50x16xf32>
    %73 = vector.broadcast %28 : vector<1x16xf32> to vector<50x16xf32>
    %74 = arith.mulf %72, %73 : vector<50x16xf32>
    %75 = vector.broadcast %30 : vector<1x16xf32> to vector<50x16xf32>
    %76 = arith.addf %74, %75 : vector<50x16xf32>
    %cst_38 = arith.constant 0.000000e+00 : f32
    %77 = vector.broadcast %cst_38 : f32 to vector<50x16xf32>
    %78 = arith.cmpf oge, %76, %77 : vector<50x16xf32>
    %cst_39 = arith.constant 2.000000e-01 : f32
    %79 = vector.broadcast %cst_39 : f32 to vector<50x16xf32>
    %80 = arith.mulf %79, %76 : vector<50x16xf32>
    %81 = arith.select %78, %76, %80 : vector<50x16xi1>, vector<50x16xf32>
    %82 = arith.truncf %81 : vector<50x16xf32> to vector<50x16xbf16>
    %c2_40 = arith.constant 2 : index
    %c0_41 = arith.constant 0 : index
    %c0_42 = arith.constant 0 : index
    %83 = vector.load %arg1[%c2_40, %c0_41, %c0_42] : memref<25x16x32xbf16, #tpu.memory_space<vmem>>, vector<1x16x32xbf16>
    %84 = vector.shape_cast %83 : vector<1x16x32xbf16> to vector<16x32xbf16>
    %cst_43 = arith.constant dense<0.000000e+00> : vector<50x32xf32>
    %85 = tpu.matmul %82, %84, %cst_43 {dimension_numbers = #tpu.dot_dimension_numbers<[1], [0], [0], [1], [0, 0, 1, 1], [], []>} : vector<50x16xbf16>, vector<16x32xbf16>, vector<50x32xf32> -> vector<50x32xf32>
    %86 = arith.addf %68, %85 : vector<50x32xf32>
    %c3 = arith.constant 3 : index
    %c0_44 = arith.constant 0 : index
    %c0_45 = arith.constant 0 : index
    %87 = vector.load %arg0[%c3, %c0_44, %c0_45] : memref<25x50x16xf32, #tpu.memory_space<vmem>>, vector<1x50x16xf32>
    %88 = vector.shape_cast %87 : vector<1x50x16xf32> to vector<50x16xf32>
    %89 = arith.truncf %88 : vector<50x16xf32> to vector<50x16xbf16>
    %cst_46 = arith.constant dense<0.000000e+00> : vector<50x16xf32>
    %90 = tpu.matmul %89, %31, %cst_46 {dimension_numbers = #tpu.dot_dimension_numbers<[1], [0], [0], [1], [0, 0, 1, 1], [], []>} : vector<50x16xbf16>, vector<16x16xbf16>, vector<50x16xf32> -> vector<50x16xf32>
    %91 = vector.broadcast %28 : vector<1x16xf32> to vector<50x16xf32>
    %92 = arith.mulf %90, %91 : vector<50x16xf32>
    %93 = vector.broadcast %30 : vector<1x16xf32> to vector<50x16xf32>
    %94 = arith.addf %92, %93 : vector<50x16xf32>
    %cst_47 = arith.constant 0.000000e+00 : f32
    %95 = vector.broadcast %cst_47 : f32 to vector<50x16xf32>
    %96 = arith.cmpf oge, %94, %95 : vector<50x16xf32>
    %cst_48 = arith.constant 2.000000e-01 : f32
    %97 = vector.broadcast %cst_48 : f32 to vector<50x16xf32>
    %98 = arith.mulf %97, %94 : vector<50x16xf32>
    %99 = arith.select %96, %94, %98 : vector<50x16xi1>, vector<50x16xf32>
    %100 = arith.truncf %99 : vector<50x16xf32> to vector<50x16xbf16>
    %c3_49 = arith.constant 3 : index
    %c0_50 = arith.constant 0 : index
    %c0_51 = arith.constant 0 : index
    %101 = vector.load %arg1[%c3_49, %c0_50, %c0_51] : memref<25x16x32xbf16, #tpu.memory_space<vmem>>, vector<1x16x32xbf16>
    %102 = vector.shape_cast %101 : vector<1x16x32xbf16> to vector<16x32xbf16>
    %cst_52 = arith.constant dense<0.000000e+00> : vector<50x32xf32>
    %103 = tpu.matmul %100, %102, %cst_52 {dimension_numbers = #tpu.dot_dimension_numbers<[1], [0], [0], [1], [0, 0, 1, 1], [], []>} : vector<50x16xbf16>, vector<16x32xbf16>, vector<50x32xf32> -> vector<50x32xf32>
    %104 = arith.addf %86, %103 : vector<50x32xf32>
    %c4 = arith.constant 4 : index
    %c0_53 = arith.constant 0 : index
    %c0_54 = arith.constant 0 : index
    %105 = vector.load %arg0[%c4, %c0_53, %c0_54] : memref<25x50x16xf32, #tpu.memory_space<vmem>>, vector<1x50x16xf32>
    %106 = vector.shape_cast %105 : vector<1x50x16xf32> to vector<50x16xf32>
    %107 = arith.truncf %106 : vector<50x16xf32> to vector<50x16xbf16>
    %cst_55 = arith.constant dense<0.000000e+00> : vector<50x16xf32>
    %108 = tpu.matmul %107, %31, %cst_55 {dimension_numbers = #tpu.dot_dimension_numbers<[1], [0], [0], [1], [0, 0, 1, 1], [], []>} : vector<50x16xbf16>, vector<16x16xbf16>, vector<50x16xf32> -> vector<50x16xf32>
    %109 = vector.broadcast %28 : vector<1x16xf32> to vector<50x16xf32>
    %110 = arith.mulf %108, %109 : vector<50x16xf32>
    %111 = vector.broadcast %30 : vector<1x16xf32> to vector<50x16xf32>
    %112 = arith.addf %110, %111 : vector<50x16xf32>
    %cst_56 = arith.constant 0.000000e+00 : f32
    %113 = vector.broadcast %cst_56 : f32 to vector<50x16xf32>
    %114 = arith.cmpf oge, %112, %113 : vector<50x16xf32>
    %cst_57 = arith.constant 2.000000e-01 : f32
    %115 = vector.broadcast %cst_57 : f32 to vector<50x16xf32>
    %116 = arith.mulf %115, %112 : vector<50x16xf32>
    %117 = arith.select %114, %112, %116 : vector<50x16xi1>, vector<50x16xf32>
    %118 = arith.truncf %117 : vector<50x16xf32> to vector<50x16xbf16>
    %c4_58 = arith.constant 4 : index
    %c0_59 = arith.constant 0 : index
    %c0_60 = arith.constant 0 : index
    %119 = vector.load %arg1[%c4_58, %c0_59, %c0_60] : memref<25x16x32xbf16, #tpu.memory_space<vmem>>, vector<1x16x32xbf16>
    %120 = vector.shape_cast %119 : vector<1x16x32xbf16> to vector<16x32xbf16>
    %cst_61 = arith.constant dense<0.000000e+00> : vector<50x32xf32>
    %121 = tpu.matmul %118, %120, %cst_61 {dimension_numbers = #tpu.dot_dimension_numbers<[1], [0], [0], [1], [0, 0, 1, 1], [], []>} : vector<50x16xbf16>, vector<16x32xbf16>, vector<50x32xf32> -> vector<50x32xf32>
    %122 = arith.addf %104, %121 : vector<50x32xf32>
    %c5 = arith.constant 5 : index
    %c0_62 = arith.constant 0 : index
    %c0_63 = arith.constant 0 : index
    %123 = vector.load %arg0[%c5, %c0_62, %c0_63] : memref<25x50x16xf32, #tpu.memory_space<vmem>>, vector<1x50x16xf32>
    %124 = vector.shape_cast %123 : vector<1x50x16xf32> to vector<50x16xf32>
    %125 = arith.truncf %124 : vector<50x16xf32> to vector<50x16xbf16>
    %cst_64 = arith.constant dense<0.000000e+00> : vector<50x16xf32>
    %126 = tpu.matmul %125, %31, %cst_64 {dimension_numbers = #tpu.dot_dimension_numbers<[1], [0], [0], [1], [0, 0, 1, 1], [], []>} : vector<50x16xbf16>, vector<16x16xbf16>, vector<50x16xf32> -> vector<50x16xf32>
    %127 = vector.broadcast %28 : vector<1x16xf32> to vector<50x16xf32>
    %128 = arith.mulf %126, %127 : vector<50x16xf32>
    %129 = vector.broadcast %30 : vector<1x16xf32> to vector<50x16xf32>
    %130 = arith.addf %128, %129 : vector<50x16xf32>
    %cst_65 = arith.constant 0.000000e+00 : f32
    %131 = vector.broadcast %cst_65 : f32 to vector<50x16xf32>
    %132 = arith.cmpf oge, %130, %131 : vector<50x16xf32>
    %cst_66 = arith.constant 2.000000e-01 : f32
    %133 = vector.broadcast %cst_66 : f32 to vector<50x16xf32>
    %134 = arith.mulf %133, %130 : vector<50x16xf32>
    %135 = arith.select %132, %130, %134 : vector<50x16xi1>, vector<50x16xf32>
    %136 = arith.truncf %135 : vector<50x16xf32> to vector<50x16xbf16>
    %c5_67 = arith.constant 5 : index
    %c0_68 = arith.constant 0 : index
    %c0_69 = arith.constant 0 : index
    %137 = vector.load %arg1[%c5_67, %c0_68, %c0_69] : memref<25x16x32xbf16, #tpu.memory_space<vmem>>, vector<1x16x32xbf16>
    %138 = vector.shape_cast %137 : vector<1x16x32xbf16> to vector<16x32xbf16>
    %cst_70 = arith.constant dense<0.000000e+00> : vector<50x32xf32>
    %139 = tpu.matmul %136, %138, %cst_70 {dimension_numbers = #tpu.dot_dimension_numbers<[1], [0], [0], [1], [0, 0, 1, 1], [], []>} : vector<50x16xbf16>, vector<16x32xbf16>, vector<50x32xf32> -> vector<50x32xf32>
    %140 = arith.addf %122, %139 : vector<50x32xf32>
    %c6 = arith.constant 6 : index
    %c0_71 = arith.constant 0 : index
    %c0_72 = arith.constant 0 : index
    %141 = vector.load %arg0[%c6, %c0_71, %c0_72] : memref<25x50x16xf32, #tpu.memory_space<vmem>>, vector<1x50x16xf32>
    %142 = vector.shape_cast %141 : vector<1x50x16xf32> to vector<50x16xf32>
    %143 = arith.truncf %142 : vector<50x16xf32> to vector<50x16xbf16>
    %cst_73 = arith.constant dense<0.000000e+00> : vector<50x16xf32>
    %144 = tpu.matmul %143, %31, %cst_73 {dimension_numbers = #tpu.dot_dimension_numbers<[1], [0], [0], [1], [0, 0, 1, 1], [], []>} : vector<50x16xbf16>, vector<16x16xbf16>, vector<50x16xf32> -> vector<50x16xf32>
    %145 = vector.broadcast %28 : vector<1x16xf32> to vector<50x16xf32>
    %146 = arith.mulf %144, %145 : vector<50x16xf32>
    %147 = vector.broadcast %30 : vector<1x16xf32> to vector<50x16xf32>
    %148 = arith.addf %146, %147 : vector<50x16xf32>
    %cst_74 = arith.constant 0.000000e+00 : f32
    %149 = vector.broadcast %cst_74 : f32 to vector<50x16xf32>
    %150 = arith.cmpf oge, %148, %149 : vector<50x16xf32>
    %cst_75 = arith.constant 2.000000e-01 : f32
    %151 = vector.broadcast %cst_75 : f32 to vector<50x16xf32>
    %152 = arith.mulf %151, %148 : vector<50x16xf32>
    %153 = arith.select %150, %148, %152 : vector<50x16xi1>, vector<50x16xf32>
    %154 = arith.truncf %153 : vector<50x16xf32> to vector<50x16xbf16>
    %c6_76 = arith.constant 6 : index
    %c0_77 = arith.constant 0 : index
    %c0_78 = arith.constant 0 : index
    %155 = vector.load %arg1[%c6_76, %c0_77, %c0_78] : memref<25x16x32xbf16, #tpu.memory_space<vmem>>, vector<1x16x32xbf16>
    %156 = vector.shape_cast %155 : vector<1x16x32xbf16> to vector<16x32xbf16>
    %cst_79 = arith.constant dense<0.000000e+00> : vector<50x32xf32>
    %157 = tpu.matmul %154, %156, %cst_79 {dimension_numbers = #tpu.dot_dimension_numbers<[1], [0], [0], [1], [0, 0, 1, 1], [], []>} : vector<50x16xbf16>, vector<16x32xbf16>, vector<50x32xf32> -> vector<50x32xf32>
    %158 = arith.addf %140, %157 : vector<50x32xf32>
    %c7 = arith.constant 7 : index
    %c0_80 = arith.constant 0 : index
    %c0_81 = arith.constant 0 : index
    %159 = vector.load %arg0[%c7, %c0_80, %c0_81] : memref<25x50x16xf32, #tpu.memory_space<vmem>>, vector<1x50x16xf32>
    %160 = vector.shape_cast %159 : vector<1x50x16xf32> to vector<50x16xf32>
    %161 = arith.truncf %160 : vector<50x16xf32> to vector<50x16xbf16>
    %cst_82 = arith.constant dense<0.000000e+00> : vector<50x16xf32>
    %162 = tpu.matmul %161, %31, %cst_82 {dimension_numbers = #tpu.dot_dimension_numbers<[1], [0], [0], [1], [0, 0, 1, 1], [], []>} : vector<50x16xbf16>, vector<16x16xbf16>, vector<50x16xf32> -> vector<50x16xf32>
    %163 = vector.broadcast %28 : vector<1x16xf32> to vector<50x16xf32>
    %164 = arith.mulf %162, %163 : vector<50x16xf32>
    %165 = vector.broadcast %30 : vector<1x16xf32> to vector<50x16xf32>
    %166 = arith.addf %164, %165 : vector<50x16xf32>
    %cst_83 = arith.constant 0.000000e+00 : f32
    %167 = vector.broadcast %cst_83 : f32 to vector<50x16xf32>
    %168 = arith.cmpf oge, %166, %167 : vector<50x16xf32>
    %cst_84 = arith.constant 2.000000e-01 : f32
    %169 = vector.broadcast %cst_84 : f32 to vector<50x16xf32>
    %170 = arith.mulf %169, %166 : vector<50x16xf32>
    %171 = arith.select %168, %166, %170 : vector<50x16xi1>, vector<50x16xf32>
    %172 = arith.truncf %171 : vector<50x16xf32> to vector<50x16xbf16>
    %c7_85 = arith.constant 7 : index
    %c0_86 = arith.constant 0 : index
    %c0_87 = arith.constant 0 : index
    %173 = vector.load %arg1[%c7_85, %c0_86, %c0_87] : memref<25x16x32xbf16, #tpu.memory_space<vmem>>, vector<1x16x32xbf16>
    %174 = vector.shape_cast %173 : vector<1x16x32xbf16> to vector<16x32xbf16>
    %cst_88 = arith.constant dense<0.000000e+00> : vector<50x32xf32>
    %175 = tpu.matmul %172, %174, %cst_88 {dimension_numbers = #tpu.dot_dimension_numbers<[1], [0], [0], [1], [0, 0, 1, 1], [], []>} : vector<50x16xbf16>, vector<16x32xbf16>, vector<50x32xf32> -> vector<50x32xf32>
    %176 = arith.addf %158, %175 : vector<50x32xf32>
    %c8 = arith.constant 8 : index
    %c0_89 = arith.constant 0 : index
    %c0_90 = arith.constant 0 : index
    %177 = vector.load %arg0[%c8, %c0_89, %c0_90] : memref<25x50x16xf32, #tpu.memory_space<vmem>>, vector<1x50x16xf32>
    %178 = vector.shape_cast %177 : vector<1x50x16xf32> to vector<50x16xf32>
    %179 = arith.truncf %178 : vector<50x16xf32> to vector<50x16xbf16>
    %cst_91 = arith.constant dense<0.000000e+00> : vector<50x16xf32>
    %180 = tpu.matmul %179, %31, %cst_91 {dimension_numbers = #tpu.dot_dimension_numbers<[1], [0], [0], [1], [0, 0, 1, 1], [], []>} : vector<50x16xbf16>, vector<16x16xbf16>, vector<50x16xf32> -> vector<50x16xf32>
    %181 = vector.broadcast %28 : vector<1x16xf32> to vector<50x16xf32>
    %182 = arith.mulf %180, %181 : vector<50x16xf32>
    %183 = vector.broadcast %30 : vector<1x16xf32> to vector<50x16xf32>
    %184 = arith.addf %182, %183 : vector<50x16xf32>
    %cst_92 = arith.constant 0.000000e+00 : f32
    %185 = vector.broadcast %cst_92 : f32 to vector<50x16xf32>
    %186 = arith.cmpf oge, %184, %185 : vector<50x16xf32>
    %cst_93 = arith.constant 2.000000e-01 : f32
    %187 = vector.broadcast %cst_93 : f32 to vector<50x16xf32>
    %188 = arith.mulf %187, %184 : vector<50x16xf32>
    %189 = arith.select %186, %184, %188 : vector<50x16xi1>, vector<50x16xf32>
    %190 = arith.truncf %189 : vector<50x16xf32> to vector<50x16xbf16>
    %c8_94 = arith.constant 8 : index
    %c0_95 = arith.constant 0 : index
    %c0_96 = arith.constant 0 : index
    %191 = vector.load %arg1[%c8_94, %c0_95, %c0_96] : memref<25x16x32xbf16, #tpu.memory_space<vmem>>, vector<1x16x32xbf16>
    %192 = vector.shape_cast %191 : vector<1x16x32xbf16> to vector<16x32xbf16>
    %cst_97 = arith.constant dense<0.000000e+00> : vector<50x32xf32>
    %193 = tpu.matmul %190, %192, %cst_97 {dimension_numbers = #tpu.dot_dimension_numbers<[1], [0], [0], [1], [0, 0, 1, 1], [], []>} : vector<50x16xbf16>, vector<16x32xbf16>, vector<50x32xf32> -> vector<50x32xf32>
    %194 = arith.addf %176, %193 : vector<50x32xf32>
    %c9 = arith.constant 9 : index
    %c0_98 = arith.constant 0 : index
    %c0_99 = arith.constant 0 : index
    %195 = vector.load %arg0[%c9, %c0_98, %c0_99] : memref<25x50x16xf32, #tpu.memory_space<vmem>>, vector<1x50x16xf32>
    %196 = vector.shape_cast %195 : vector<1x50x16xf32> to vector<50x16xf32>
    %197 = arith.truncf %196 : vector<50x16xf32> to vector<50x16xbf16>
    %cst_100 = arith.constant dense<0.000000e+00> : vector<50x16xf32>
    %198 = tpu.matmul %197, %31, %cst_100 {dimension_numbers = #tpu.dot_dimension_numbers<[1], [0], [0], [1], [0, 0, 1, 1], [], []>} : vector<50x16xbf16>, vector<16x16xbf16>, vector<50x16xf32> -> vector<50x16xf32>
    %199 = vector.broadcast %28 : vector<1x16xf32> to vector<50x16xf32>
    %200 = arith.mulf %198, %199 : vector<50x16xf32>
    %201 = vector.broadcast %30 : vector<1x16xf32> to vector<50x16xf32>
    %202 = arith.addf %200, %201 : vector<50x16xf32>
    %cst_101 = arith.constant 0.000000e+00 : f32
    %203 = vector.broadcast %cst_101 : f32 to vector<50x16xf32>
    %204 = arith.cmpf oge, %202, %203 : vector<50x16xf32>
    %cst_102 = arith.constant 2.000000e-01 : f32
    %205 = vector.broadcast %cst_102 : f32 to vector<50x16xf32>
    %206 = arith.mulf %205, %202 : vector<50x16xf32>
    %207 = arith.select %204, %202, %206 : vector<50x16xi1>, vector<50x16xf32>
    %208 = arith.truncf %207 : vector<50x16xf32> to vector<50x16xbf16>
    %c9_103 = arith.constant 9 : index
    %c0_104 = arith.constant 0 : index
    %c0_105 = arith.constant 0 : index
    %209 = vector.load %arg1[%c9_103, %c0_104, %c0_105] : memref<25x16x32xbf16, #tpu.memory_space<vmem>>, vector<1x16x32xbf16>
    %210 = vector.shape_cast %209 : vector<1x16x32xbf16> to vector<16x32xbf16>
    %cst_106 = arith.constant dense<0.000000e+00> : vector<50x32xf32>
    %211 = tpu.matmul %208, %210, %cst_106 {dimension_numbers = #tpu.dot_dimension_numbers<[1], [0], [0], [1], [0, 0, 1, 1], [], []>} : vector<50x16xbf16>, vector<16x32xbf16>, vector<50x32xf32> -> vector<50x32xf32>
    %212 = arith.addf %194, %211 : vector<50x32xf32>
    %c10 = arith.constant 10 : index
    %c0_107 = arith.constant 0 : index
    %c0_108 = arith.constant 0 : index
    %213 = vector.load %arg0[%c10, %c0_107, %c0_108] : memref<25x50x16xf32, #tpu.memory_space<vmem>>, vector<1x50x16xf32>
    %214 = vector.shape_cast %213 : vector<1x50x16xf32> to vector<50x16xf32>
    %215 = arith.truncf %214 : vector<50x16xf32> to vector<50x16xbf16>
    %cst_109 = arith.constant dense<0.000000e+00> : vector<50x16xf32>
    %216 = tpu.matmul %215, %31, %cst_109 {dimension_numbers = #tpu.dot_dimension_numbers<[1], [0], [0], [1], [0, 0, 1, 1], [], []>} : vector<50x16xbf16>, vector<16x16xbf16>, vector<50x16xf32> -> vector<50x16xf32>
    %217 = vector.broadcast %28 : vector<1x16xf32> to vector<50x16xf32>
    %218 = arith.mulf %216, %217 : vector<50x16xf32>
    %219 = vector.broadcast %30 : vector<1x16xf32> to vector<50x16xf32>
    %220 = arith.addf %218, %219 : vector<50x16xf32>
    %cst_110 = arith.constant 0.000000e+00 : f32
    %221 = vector.broadcast %cst_110 : f32 to vector<50x16xf32>
    %222 = arith.cmpf oge, %220, %221 : vector<50x16xf32>
    %cst_111 = arith.constant 2.000000e-01 : f32
    %223 = vector.broadcast %cst_111 : f32 to vector<50x16xf32>
    %224 = arith.mulf %223, %220 : vector<50x16xf32>
    %225 = arith.select %222, %220, %224 : vector<50x16xi1>, vector<50x16xf32>
    %226 = arith.truncf %225 : vector<50x16xf32> to vector<50x16xbf16>
    %c10_112 = arith.constant 10 : index
    %c0_113 = arith.constant 0 : index
    %c0_114 = arith.constant 0 : index
    %227 = vector.load %arg1[%c10_112, %c0_113, %c0_114] : memref<25x16x32xbf16, #tpu.memory_space<vmem>>, vector<1x16x32xbf16>
    %228 = vector.shape_cast %227 : vector<1x16x32xbf16> to vector<16x32xbf16>
    %cst_115 = arith.constant dense<0.000000e+00> : vector<50x32xf32>
    %229 = tpu.matmul %226, %228, %cst_115 {dimension_numbers = #tpu.dot_dimension_numbers<[1], [0], [0], [1], [0, 0, 1, 1], [], []>} : vector<50x16xbf16>, vector<16x32xbf16>, vector<50x32xf32> -> vector<50x32xf32>
    %230 = arith.addf %212, %229 : vector<50x32xf32>
    %c11 = arith.constant 11 : index
    %c0_116 = arith.constant 0 : index
    %c0_117 = arith.constant 0 : index
    %231 = vector.load %arg0[%c11, %c0_116, %c0_117] : memref<25x50x16xf32, #tpu.memory_space<vmem>>, vector<1x50x16xf32>
    %232 = vector.shape_cast %231 : vector<1x50x16xf32> to vector<50x16xf32>
    %233 = arith.truncf %232 : vector<50x16xf32> to vector<50x16xbf16>
    %cst_118 = arith.constant dense<0.000000e+00> : vector<50x16xf32>
    %234 = tpu.matmul %233, %31, %cst_118 {dimension_numbers = #tpu.dot_dimension_numbers<[1], [0], [0], [1], [0, 0, 1, 1], [], []>} : vector<50x16xbf16>, vector<16x16xbf16>, vector<50x16xf32> -> vector<50x16xf32>
    %235 = vector.broadcast %28 : vector<1x16xf32> to vector<50x16xf32>
    %236 = arith.mulf %234, %235 : vector<50x16xf32>
    %237 = vector.broadcast %30 : vector<1x16xf32> to vector<50x16xf32>
    %238 = arith.addf %236, %237 : vector<50x16xf32>
    %cst_119 = arith.constant 0.000000e+00 : f32
    %239 = vector.broadcast %cst_119 : f32 to vector<50x16xf32>
    %240 = arith.cmpf oge, %238, %239 : vector<50x16xf32>
    %cst_120 = arith.constant 2.000000e-01 : f32
    %241 = vector.broadcast %cst_120 : f32 to vector<50x16xf32>
    %242 = arith.mulf %241, %238 : vector<50x16xf32>
    %243 = arith.select %240, %238, %242 : vector<50x16xi1>, vector<50x16xf32>
    %244 = arith.truncf %243 : vector<50x16xf32> to vector<50x16xbf16>
    %c11_121 = arith.constant 11 : index
    %c0_122 = arith.constant 0 : index
    %c0_123 = arith.constant 0 : index
    %245 = vector.load %arg1[%c11_121, %c0_122, %c0_123] : memref<25x16x32xbf16, #tpu.memory_space<vmem>>, vector<1x16x32xbf16>
    %246 = vector.shape_cast %245 : vector<1x16x32xbf16> to vector<16x32xbf16>
    %cst_124 = arith.constant dense<0.000000e+00> : vector<50x32xf32>
    %247 = tpu.matmul %244, %246, %cst_124 {dimension_numbers = #tpu.dot_dimension_numbers<[1], [0], [0], [1], [0, 0, 1, 1], [], []>} : vector<50x16xbf16>, vector<16x32xbf16>, vector<50x32xf32> -> vector<50x32xf32>
    %248 = arith.addf %230, %247 : vector<50x32xf32>
    %c12 = arith.constant 12 : index
    %c0_125 = arith.constant 0 : index
    %c0_126 = arith.constant 0 : index
    %249 = vector.load %arg0[%c12, %c0_125, %c0_126] : memref<25x50x16xf32, #tpu.memory_space<vmem>>, vector<1x50x16xf32>
    %250 = vector.shape_cast %249 : vector<1x50x16xf32> to vector<50x16xf32>
    %251 = arith.truncf %250 : vector<50x16xf32> to vector<50x16xbf16>
    %cst_127 = arith.constant dense<0.000000e+00> : vector<50x16xf32>
    %252 = tpu.matmul %251, %31, %cst_127 {dimension_numbers = #tpu.dot_dimension_numbers<[1], [0], [0], [1], [0, 0, 1, 1], [], []>} : vector<50x16xbf16>, vector<16x16xbf16>, vector<50x16xf32> -> vector<50x16xf32>
    %253 = vector.broadcast %28 : vector<1x16xf32> to vector<50x16xf32>
    %254 = arith.mulf %252, %253 : vector<50x16xf32>
    %255 = vector.broadcast %30 : vector<1x16xf32> to vector<50x16xf32>
    %256 = arith.addf %254, %255 : vector<50x16xf32>
    %cst_128 = arith.constant 0.000000e+00 : f32
    %257 = vector.broadcast %cst_128 : f32 to vector<50x16xf32>
    %258 = arith.cmpf oge, %256, %257 : vector<50x16xf32>
    %cst_129 = arith.constant 2.000000e-01 : f32
    %259 = vector.broadcast %cst_129 : f32 to vector<50x16xf32>
    %260 = arith.mulf %259, %256 : vector<50x16xf32>
    %261 = arith.select %258, %256, %260 : vector<50x16xi1>, vector<50x16xf32>
    %262 = arith.truncf %261 : vector<50x16xf32> to vector<50x16xbf16>
    %c12_130 = arith.constant 12 : index
    %c0_131 = arith.constant 0 : index
    %c0_132 = arith.constant 0 : index
    %263 = vector.load %arg1[%c12_130, %c0_131, %c0_132] : memref<25x16x32xbf16, #tpu.memory_space<vmem>>, vector<1x16x32xbf16>
    %264 = vector.shape_cast %263 : vector<1x16x32xbf16> to vector<16x32xbf16>
    %cst_133 = arith.constant dense<0.000000e+00> : vector<50x32xf32>
    %265 = tpu.matmul %262, %264, %cst_133 {dimension_numbers = #tpu.dot_dimension_numbers<[1], [0], [0], [1], [0, 0, 1, 1], [], []>} : vector<50x16xbf16>, vector<16x32xbf16>, vector<50x32xf32> -> vector<50x32xf32>
    %266 = arith.addf %248, %265 : vector<50x32xf32>
    %c13 = arith.constant 13 : index
    %c0_134 = arith.constant 0 : index
    %c0_135 = arith.constant 0 : index
    %267 = vector.load %arg0[%c13, %c0_134, %c0_135] : memref<25x50x16xf32, #tpu.memory_space<vmem>>, vector<1x50x16xf32>
    %268 = vector.shape_cast %267 : vector<1x50x16xf32> to vector<50x16xf32>
    %269 = arith.truncf %268 : vector<50x16xf32> to vector<50x16xbf16>
    %cst_136 = arith.constant dense<0.000000e+00> : vector<50x16xf32>
    %270 = tpu.matmul %269, %31, %cst_136 {dimension_numbers = #tpu.dot_dimension_numbers<[1], [0], [0], [1], [0, 0, 1, 1], [], []>} : vector<50x16xbf16>, vector<16x16xbf16>, vector<50x16xf32> -> vector<50x16xf32>
    %271 = vector.broadcast %28 : vector<1x16xf32> to vector<50x16xf32>
    %272 = arith.mulf %270, %271 : vector<50x16xf32>
    %273 = vector.broadcast %30 : vector<1x16xf32> to vector<50x16xf32>
    %274 = arith.addf %272, %273 : vector<50x16xf32>
    %cst_137 = arith.constant 0.000000e+00 : f32
    %275 = vector.broadcast %cst_137 : f32 to vector<50x16xf32>
    %276 = arith.cmpf oge, %274, %275 : vector<50x16xf32>
    %cst_138 = arith.constant 2.000000e-01 : f32
    %277 = vector.broadcast %cst_138 : f32 to vector<50x16xf32>
    %278 = arith.mulf %277, %274 : vector<50x16xf32>
    %279 = arith.select %276, %274, %278 : vector<50x16xi1>, vector<50x16xf32>
    %280 = arith.truncf %279 : vector<50x16xf32> to vector<50x16xbf16>
    %c13_139 = arith.constant 13 : index
    %c0_140 = arith.constant 0 : index
    %c0_141 = arith.constant 0 : index
    %281 = vector.load %arg1[%c13_139, %c0_140, %c0_141] : memref<25x16x32xbf16, #tpu.memory_space<vmem>>, vector<1x16x32xbf16>
    %282 = vector.shape_cast %281 : vector<1x16x32xbf16> to vector<16x32xbf16>
    %cst_142 = arith.constant dense<0.000000e+00> : vector<50x32xf32>
    %283 = tpu.matmul %280, %282, %cst_142 {dimension_numbers = #tpu.dot_dimension_numbers<[1], [0], [0], [1], [0, 0, 1, 1], [], []>} : vector<50x16xbf16>, vector<16x32xbf16>, vector<50x32xf32> -> vector<50x32xf32>
    %284 = arith.addf %266, %283 : vector<50x32xf32>
    %c14 = arith.constant 14 : index
    %c0_143 = arith.constant 0 : index
    %c0_144 = arith.constant 0 : index
    %285 = vector.load %arg0[%c14, %c0_143, %c0_144] : memref<25x50x16xf32, #tpu.memory_space<vmem>>, vector<1x50x16xf32>
    %286 = vector.shape_cast %285 : vector<1x50x16xf32> to vector<50x16xf32>
    %287 = arith.truncf %286 : vector<50x16xf32> to vector<50x16xbf16>
    %cst_145 = arith.constant dense<0.000000e+00> : vector<50x16xf32>
    %288 = tpu.matmul %287, %31, %cst_145 {dimension_numbers = #tpu.dot_dimension_numbers<[1], [0], [0], [1], [0, 0, 1, 1], [], []>} : vector<50x16xbf16>, vector<16x16xbf16>, vector<50x16xf32> -> vector<50x16xf32>
    %289 = vector.broadcast %28 : vector<1x16xf32> to vector<50x16xf32>
    %290 = arith.mulf %288, %289 : vector<50x16xf32>
    %291 = vector.broadcast %30 : vector<1x16xf32> to vector<50x16xf32>
    %292 = arith.addf %290, %291 : vector<50x16xf32>
    %cst_146 = arith.constant 0.000000e+00 : f32
    %293 = vector.broadcast %cst_146 : f32 to vector<50x16xf32>
    %294 = arith.cmpf oge, %292, %293 : vector<50x16xf32>
    %cst_147 = arith.constant 2.000000e-01 : f32
    %295 = vector.broadcast %cst_147 : f32 to vector<50x16xf32>
    %296 = arith.mulf %295, %292 : vector<50x16xf32>
    %297 = arith.select %294, %292, %296 : vector<50x16xi1>, vector<50x16xf32>
    %298 = arith.truncf %297 : vector<50x16xf32> to vector<50x16xbf16>
    %c14_148 = arith.constant 14 : index
    %c0_149 = arith.constant 0 : index
    %c0_150 = arith.constant 0 : index
    %299 = vector.load %arg1[%c14_148, %c0_149, %c0_150] : memref<25x16x32xbf16, #tpu.memory_space<vmem>>, vector<1x16x32xbf16>
    %300 = vector.shape_cast %299 : vector<1x16x32xbf16> to vector<16x32xbf16>
    %cst_151 = arith.constant dense<0.000000e+00> : vector<50x32xf32>
    %301 = tpu.matmul %298, %300, %cst_151 {dimension_numbers = #tpu.dot_dimension_numbers<[1], [0], [0], [1], [0, 0, 1, 1], [], []>} : vector<50x16xbf16>, vector<16x32xbf16>, vector<50x32xf32> -> vector<50x32xf32>
    %302 = arith.addf %284, %301 : vector<50x32xf32>
    %c15 = arith.constant 15 : index
    %c0_152 = arith.constant 0 : index
    %c0_153 = arith.constant 0 : index
    %303 = vector.load %arg0[%c15, %c0_152, %c0_153] : memref<25x50x16xf32, #tpu.memory_space<vmem>>, vector<1x50x16xf32>
    %304 = vector.shape_cast %303 : vector<1x50x16xf32> to vector<50x16xf32>
    %305 = arith.truncf %304 : vector<50x16xf32> to vector<50x16xbf16>
    %cst_154 = arith.constant dense<0.000000e+00> : vector<50x16xf32>
    %306 = tpu.matmul %305, %31, %cst_154 {dimension_numbers = #tpu.dot_dimension_numbers<[1], [0], [0], [1], [0, 0, 1, 1], [], []>} : vector<50x16xbf16>, vector<16x16xbf16>, vector<50x16xf32> -> vector<50x16xf32>
    %307 = vector.broadcast %28 : vector<1x16xf32> to vector<50x16xf32>
    %308 = arith.mulf %306, %307 : vector<50x16xf32>
    %309 = vector.broadcast %30 : vector<1x16xf32> to vector<50x16xf32>
    %310 = arith.addf %308, %309 : vector<50x16xf32>
    %cst_155 = arith.constant 0.000000e+00 : f32
    %311 = vector.broadcast %cst_155 : f32 to vector<50x16xf32>
    %312 = arith.cmpf oge, %310, %311 : vector<50x16xf32>
    %cst_156 = arith.constant 2.000000e-01 : f32
    %313 = vector.broadcast %cst_156 : f32 to vector<50x16xf32>
    %314 = arith.mulf %313, %310 : vector<50x16xf32>
    %315 = arith.select %312, %310, %314 : vector<50x16xi1>, vector<50x16xf32>
    %316 = arith.truncf %315 : vector<50x16xf32> to vector<50x16xbf16>
    %c15_157 = arith.constant 15 : index
    %c0_158 = arith.constant 0 : index
    %c0_159 = arith.constant 0 : index
    %317 = vector.load %arg1[%c15_157, %c0_158, %c0_159] : memref<25x16x32xbf16, #tpu.memory_space<vmem>>, vector<1x16x32xbf16>
    %318 = vector.shape_cast %317 : vector<1x16x32xbf16> to vector<16x32xbf16>
    %cst_160 = arith.constant dense<0.000000e+00> : vector<50x32xf32>
    %319 = tpu.matmul %316, %318, %cst_160 {dimension_numbers = #tpu.dot_dimension_numbers<[1], [0], [0], [1], [0, 0, 1, 1], [], []>} : vector<50x16xbf16>, vector<16x32xbf16>, vector<50x32xf32> -> vector<50x32xf32>
    %320 = arith.addf %302, %319 : vector<50x32xf32>
    %c16_161 = arith.constant 16 : index
    %c0_162 = arith.constant 0 : index
    %c0_163 = arith.constant 0 : index
    %321 = vector.load %arg0[%c16_161, %c0_162, %c0_163] : memref<25x50x16xf32, #tpu.memory_space<vmem>>, vector<1x50x16xf32>
    %322 = vector.shape_cast %321 : vector<1x50x16xf32> to vector<50x16xf32>
    %323 = arith.truncf %322 : vector<50x16xf32> to vector<50x16xbf16>
    %cst_164 = arith.constant dense<0.000000e+00> : vector<50x16xf32>
    %324 = tpu.matmul %323, %31, %cst_164 {dimension_numbers = #tpu.dot_dimension_numbers<[1], [0], [0], [1], [0, 0, 1, 1], [], []>} : vector<50x16xbf16>, vector<16x16xbf16>, vector<50x16xf32> -> vector<50x16xf32>
    %325 = vector.broadcast %28 : vector<1x16xf32> to vector<50x16xf32>
    %326 = arith.mulf %324, %325 : vector<50x16xf32>
    %327 = vector.broadcast %30 : vector<1x16xf32> to vector<50x16xf32>
    %328 = arith.addf %326, %327 : vector<50x16xf32>
    %cst_165 = arith.constant 0.000000e+00 : f32
    %329 = vector.broadcast %cst_165 : f32 to vector<50x16xf32>
    %330 = arith.cmpf oge, %328, %329 : vector<50x16xf32>
    %cst_166 = arith.constant 2.000000e-01 : f32
    %331 = vector.broadcast %cst_166 : f32 to vector<50x16xf32>
    %332 = arith.mulf %331, %328 : vector<50x16xf32>
    %333 = arith.select %330, %328, %332 : vector<50x16xi1>, vector<50x16xf32>
    %334 = arith.truncf %333 : vector<50x16xf32> to vector<50x16xbf16>
    %c16_167 = arith.constant 16 : index
    %c0_168 = arith.constant 0 : index
    %c0_169 = arith.constant 0 : index
    %335 = vector.load %arg1[%c16_167, %c0_168, %c0_169] : memref<25x16x32xbf16, #tpu.memory_space<vmem>>, vector<1x16x32xbf16>
    %336 = vector.shape_cast %335 : vector<1x16x32xbf16> to vector<16x32xbf16>
    %cst_170 = arith.constant dense<0.000000e+00> : vector<50x32xf32>
    %337 = tpu.matmul %334, %336, %cst_170 {dimension_numbers = #tpu.dot_dimension_numbers<[1], [0], [0], [1], [0, 0, 1, 1], [], []>} : vector<50x16xbf16>, vector<16x32xbf16>, vector<50x32xf32> -> vector<50x32xf32>
    %338 = arith.addf %320, %337 : vector<50x32xf32>
    %c17 = arith.constant 17 : index
    %c0_171 = arith.constant 0 : index
    %c0_172 = arith.constant 0 : index
    %339 = vector.load %arg0[%c17, %c0_171, %c0_172] : memref<25x50x16xf32, #tpu.memory_space<vmem>>, vector<1x50x16xf32>
    %340 = vector.shape_cast %339 : vector<1x50x16xf32> to vector<50x16xf32>
    %341 = arith.truncf %340 : vector<50x16xf32> to vector<50x16xbf16>
    %cst_173 = arith.constant dense<0.000000e+00> : vector<50x16xf32>
    %342 = tpu.matmul %341, %31, %cst_173 {dimension_numbers = #tpu.dot_dimension_numbers<[1], [0], [0], [1], [0, 0, 1, 1], [], []>} : vector<50x16xbf16>, vector<16x16xbf16>, vector<50x16xf32> -> vector<50x16xf32>
    %343 = vector.broadcast %28 : vector<1x16xf32> to vector<50x16xf32>
    %344 = arith.mulf %342, %343 : vector<50x16xf32>
    %345 = vector.broadcast %30 : vector<1x16xf32> to vector<50x16xf32>
    %346 = arith.addf %344, %345 : vector<50x16xf32>
    %cst_174 = arith.constant 0.000000e+00 : f32
    %347 = vector.broadcast %cst_174 : f32 to vector<50x16xf32>
    %348 = arith.cmpf oge, %346, %347 : vector<50x16xf32>
    %cst_175 = arith.constant 2.000000e-01 : f32
    %349 = vector.broadcast %cst_175 : f32 to vector<50x16xf32>
    %350 = arith.mulf %349, %346 : vector<50x16xf32>
    %351 = arith.select %348, %346, %350 : vector<50x16xi1>, vector<50x16xf32>
    %352 = arith.truncf %351 : vector<50x16xf32> to vector<50x16xbf16>
    %c17_176 = arith.constant 17 : index
    %c0_177 = arith.constant 0 : index
    %c0_178 = arith.constant 0 : index
    %353 = vector.load %arg1[%c17_176, %c0_177, %c0_178] : memref<25x16x32xbf16, #tpu.memory_space<vmem>>, vector<1x16x32xbf16>
    %354 = vector.shape_cast %353 : vector<1x16x32xbf16> to vector<16x32xbf16>
    %cst_179 = arith.constant dense<0.000000e+00> : vector<50x32xf32>
    %355 = tpu.matmul %352, %354, %cst_179 {dimension_numbers = #tpu.dot_dimension_numbers<[1], [0], [0], [1], [0, 0, 1, 1], [], []>} : vector<50x16xbf16>, vector<16x32xbf16>, vector<50x32xf32> -> vector<50x32xf32>
    %356 = arith.addf %338, %355 : vector<50x32xf32>
    %c18 = arith.constant 18 : index
    %c0_180 = arith.constant 0 : index
    %c0_181 = arith.constant 0 : index
    %357 = vector.load %arg0[%c18, %c0_180, %c0_181] : memref<25x50x16xf32, #tpu.memory_space<vmem>>, vector<1x50x16xf32>
    %358 = vector.shape_cast %357 : vector<1x50x16xf32> to vector<50x16xf32>
    %359 = arith.truncf %358 : vector<50x16xf32> to vector<50x16xbf16>
    %cst_182 = arith.constant dense<0.000000e+00> : vector<50x16xf32>
    %360 = tpu.matmul %359, %31, %cst_182 {dimension_numbers = #tpu.dot_dimension_numbers<[1], [0], [0], [1], [0, 0, 1, 1], [], []>} : vector<50x16xbf16>, vector<16x16xbf16>, vector<50x16xf32> -> vector<50x16xf32>
    %361 = vector.broadcast %28 : vector<1x16xf32> to vector<50x16xf32>
    %362 = arith.mulf %360, %361 : vector<50x16xf32>
    %363 = vector.broadcast %30 : vector<1x16xf32> to vector<50x16xf32>
    %364 = arith.addf %362, %363 : vector<50x16xf32>
    %cst_183 = arith.constant 0.000000e+00 : f32
    %365 = vector.broadcast %cst_183 : f32 to vector<50x16xf32>
    %366 = arith.cmpf oge, %364, %365 : vector<50x16xf32>
    %cst_184 = arith.constant 2.000000e-01 : f32
    %367 = vector.broadcast %cst_184 : f32 to vector<50x16xf32>
    %368 = arith.mulf %367, %364 : vector<50x16xf32>
    %369 = arith.select %366, %364, %368 : vector<50x16xi1>, vector<50x16xf32>
    %370 = arith.truncf %369 : vector<50x16xf32> to vector<50x16xbf16>
    %c18_185 = arith.constant 18 : index
    %c0_186 = arith.constant 0 : index
    %c0_187 = arith.constant 0 : index
    %371 = vector.load %arg1[%c18_185, %c0_186, %c0_187] : memref<25x16x32xbf16, #tpu.memory_space<vmem>>, vector<1x16x32xbf16>
    %372 = vector.shape_cast %371 : vector<1x16x32xbf16> to vector<16x32xbf16>
    %cst_188 = arith.constant dense<0.000000e+00> : vector<50x32xf32>
    %373 = tpu.matmul %370, %372, %cst_188 {dimension_numbers = #tpu.dot_dimension_numbers<[1], [0], [0], [1], [0, 0, 1, 1], [], []>} : vector<50x16xbf16>, vector<16x32xbf16>, vector<50x32xf32> -> vector<50x32xf32>
    %374 = arith.addf %356, %373 : vector<50x32xf32>
    %c19 = arith.constant 19 : index
    %c0_189 = arith.constant 0 : index
    %c0_190 = arith.constant 0 : index
    %375 = vector.load %arg0[%c19, %c0_189, %c0_190] : memref<25x50x16xf32, #tpu.memory_space<vmem>>, vector<1x50x16xf32>
    %376 = vector.shape_cast %375 : vector<1x50x16xf32> to vector<50x16xf32>
    %377 = arith.truncf %376 : vector<50x16xf32> to vector<50x16xbf16>
    %cst_191 = arith.constant dense<0.000000e+00> : vector<50x16xf32>
    %378 = tpu.matmul %377, %31, %cst_191 {dimension_numbers = #tpu.dot_dimension_numbers<[1], [0], [0], [1], [0, 0, 1, 1], [], []>} : vector<50x16xbf16>, vector<16x16xbf16>, vector<50x16xf32> -> vector<50x16xf32>
    %379 = vector.broadcast %28 : vector<1x16xf32> to vector<50x16xf32>
    %380 = arith.mulf %378, %379 : vector<50x16xf32>
    %381 = vector.broadcast %30 : vector<1x16xf32> to vector<50x16xf32>
    %382 = arith.addf %380, %381 : vector<50x16xf32>
    %cst_192 = arith.constant 0.000000e+00 : f32
    %383 = vector.broadcast %cst_192 : f32 to vector<50x16xf32>
    %384 = arith.cmpf oge, %382, %383 : vector<50x16xf32>
    %cst_193 = arith.constant 2.000000e-01 : f32
    %385 = vector.broadcast %cst_193 : f32 to vector<50x16xf32>
    %386 = arith.mulf %385, %382 : vector<50x16xf32>
    %387 = arith.select %384, %382, %386 : vector<50x16xi1>, vector<50x16xf32>
    %388 = arith.truncf %387 : vector<50x16xf32> to vector<50x16xbf16>
    %c19_194 = arith.constant 19 : index
    %c0_195 = arith.constant 0 : index
    %c0_196 = arith.constant 0 : index
    %389 = vector.load %arg1[%c19_194, %c0_195, %c0_196] : memref<25x16x32xbf16, #tpu.memory_space<vmem>>, vector<1x16x32xbf16>
    %390 = vector.shape_cast %389 : vector<1x16x32xbf16> to vector<16x32xbf16>
    %cst_197 = arith.constant dense<0.000000e+00> : vector<50x32xf32>
    %391 = tpu.matmul %388, %390, %cst_197 {dimension_numbers = #tpu.dot_dimension_numbers<[1], [0], [0], [1], [0, 0, 1, 1], [], []>} : vector<50x16xbf16>, vector<16x32xbf16>, vector<50x32xf32> -> vector<50x32xf32>
    %392 = arith.addf %374, %391 : vector<50x32xf32>
    %c20 = arith.constant 20 : index
    %c0_198 = arith.constant 0 : index
    %c0_199 = arith.constant 0 : index
    %393 = vector.load %arg0[%c20, %c0_198, %c0_199] : memref<25x50x16xf32, #tpu.memory_space<vmem>>, vector<1x50x16xf32>
    %394 = vector.shape_cast %393 : vector<1x50x16xf32> to vector<50x16xf32>
    %395 = arith.truncf %394 : vector<50x16xf32> to vector<50x16xbf16>
    %cst_200 = arith.constant dense<0.000000e+00> : vector<50x16xf32>
    %396 = tpu.matmul %395, %31, %cst_200 {dimension_numbers = #tpu.dot_dimension_numbers<[1], [0], [0], [1], [0, 0, 1, 1], [], []>} : vector<50x16xbf16>, vector<16x16xbf16>, vector<50x16xf32> -> vector<50x16xf32>
    %397 = vector.broadcast %28 : vector<1x16xf32> to vector<50x16xf32>
    %398 = arith.mulf %396, %397 : vector<50x16xf32>
    %399 = vector.broadcast %30 : vector<1x16xf32> to vector<50x16xf32>
    %400 = arith.addf %398, %399 : vector<50x16xf32>
    %cst_201 = arith.constant 0.000000e+00 : f32
    %401 = vector.broadcast %cst_201 : f32 to vector<50x16xf32>
    %402 = arith.cmpf oge, %400, %401 : vector<50x16xf32>
    %cst_202 = arith.constant 2.000000e-01 : f32
    %403 = vector.broadcast %cst_202 : f32 to vector<50x16xf32>
    %404 = arith.mulf %403, %400 : vector<50x16xf32>
    %405 = arith.select %402, %400, %404 : vector<50x16xi1>, vector<50x16xf32>
    %406 = arith.truncf %405 : vector<50x16xf32> to vector<50x16xbf16>
    %c20_203 = arith.constant 20 : index
    %c0_204 = arith.constant 0 : index
    %c0_205 = arith.constant 0 : index
    %407 = vector.load %arg1[%c20_203, %c0_204, %c0_205] : memref<25x16x32xbf16, #tpu.memory_space<vmem>>, vector<1x16x32xbf16>
    %408 = vector.shape_cast %407 : vector<1x16x32xbf16> to vector<16x32xbf16>
    %cst_206 = arith.constant dense<0.000000e+00> : vector<50x32xf32>
    %409 = tpu.matmul %406, %408, %cst_206 {dimension_numbers = #tpu.dot_dimension_numbers<[1], [0], [0], [1], [0, 0, 1, 1], [], []>} : vector<50x16xbf16>, vector<16x32xbf16>, vector<50x32xf32> -> vector<50x32xf32>
    %410 = arith.addf %392, %409 : vector<50x32xf32>
    %c21 = arith.constant 21 : index
    %c0_207 = arith.constant 0 : index
    %c0_208 = arith.constant 0 : index
    %411 = vector.load %arg0[%c21, %c0_207, %c0_208] : memref<25x50x16xf32, #tpu.memory_space<vmem>>, vector<1x50x16xf32>
    %412 = vector.shape_cast %411 : vector<1x50x16xf32> to vector<50x16xf32>
    %413 = arith.truncf %412 : vector<50x16xf32> to vector<50x16xbf16>
    %cst_209 = arith.constant dense<0.000000e+00> : vector<50x16xf32>
    %414 = tpu.matmul %413, %31, %cst_209 {dimension_numbers = #tpu.dot_dimension_numbers<[1], [0], [0], [1], [0, 0, 1, 1], [], []>} : vector<50x16xbf16>, vector<16x16xbf16>, vector<50x16xf32> -> vector<50x16xf32>
    %415 = vector.broadcast %28 : vector<1x16xf32> to vector<50x16xf32>
    %416 = arith.mulf %414, %415 : vector<50x16xf32>
    %417 = vector.broadcast %30 : vector<1x16xf32> to vector<50x16xf32>
    %418 = arith.addf %416, %417 : vector<50x16xf32>
    %cst_210 = arith.constant 0.000000e+00 : f32
    %419 = vector.broadcast %cst_210 : f32 to vector<50x16xf32>
    %420 = arith.cmpf oge, %418, %419 : vector<50x16xf32>
    %cst_211 = arith.constant 2.000000e-01 : f32
    %421 = vector.broadcast %cst_211 : f32 to vector<50x16xf32>
    %422 = arith.mulf %421, %418 : vector<50x16xf32>
    %423 = arith.select %420, %418, %422 : vector<50x16xi1>, vector<50x16xf32>
    %424 = arith.truncf %423 : vector<50x16xf32> to vector<50x16xbf16>
    %c21_212 = arith.constant 21 : index
    %c0_213 = arith.constant 0 : index
    %c0_214 = arith.constant 0 : index
    %425 = vector.load %arg1[%c21_212, %c0_213, %c0_214] : memref<25x16x32xbf16, #tpu.memory_space<vmem>>, vector<1x16x32xbf16>
    %426 = vector.shape_cast %425 : vector<1x16x32xbf16> to vector<16x32xbf16>
    %cst_215 = arith.constant dense<0.000000e+00> : vector<50x32xf32>
    %427 = tpu.matmul %424, %426, %cst_215 {dimension_numbers = #tpu.dot_dimension_numbers<[1], [0], [0], [1], [0, 0, 1, 1], [], []>} : vector<50x16xbf16>, vector<16x32xbf16>, vector<50x32xf32> -> vector<50x32xf32>
    %428 = arith.addf %410, %427 : vector<50x32xf32>
    %c22 = arith.constant 22 : index
    %c0_216 = arith.constant 0 : index
    %c0_217 = arith.constant 0 : index
    %429 = vector.load %arg0[%c22, %c0_216, %c0_217] : memref<25x50x16xf32, #tpu.memory_space<vmem>>, vector<1x50x16xf32>
    %430 = vector.shape_cast %429 : vector<1x50x16xf32> to vector<50x16xf32>
    %431 = arith.truncf %430 : vector<50x16xf32> to vector<50x16xbf16>
    %cst_218 = arith.constant dense<0.000000e+00> : vector<50x16xf32>
    %432 = tpu.matmul %431, %31, %cst_218 {dimension_numbers = #tpu.dot_dimension_numbers<[1], [0], [0], [1], [0, 0, 1, 1], [], []>} : vector<50x16xbf16>, vector<16x16xbf16>, vector<50x16xf32> -> vector<50x16xf32>
    %433 = vector.broadcast %28 : vector<1x16xf32> to vector<50x16xf32>
    %434 = arith.mulf %432, %433 : vector<50x16xf32>
    %435 = vector.broadcast %30 : vector<1x16xf32> to vector<50x16xf32>
    %436 = arith.addf %434, %435 : vector<50x16xf32>
    %cst_219 = arith.constant 0.000000e+00 : f32
    %437 = vector.broadcast %cst_219 : f32 to vector<50x16xf32>
    %438 = arith.cmpf oge, %436, %437 : vector<50x16xf32>
    %cst_220 = arith.constant 2.000000e-01 : f32
    %439 = vector.broadcast %cst_220 : f32 to vector<50x16xf32>
    %440 = arith.mulf %439, %436 : vector<50x16xf32>
    %441 = arith.select %438, %436, %440 : vector<50x16xi1>, vector<50x16xf32>
    %442 = arith.truncf %441 : vector<50x16xf32> to vector<50x16xbf16>
    %c22_221 = arith.constant 22 : index
    %c0_222 = arith.constant 0 : index
    %c0_223 = arith.constant 0 : index
    %443 = vector.load %arg1[%c22_221, %c0_222, %c0_223] : memref<25x16x32xbf16, #tpu.memory_space<vmem>>, vector<1x16x32xbf16>
    %444 = vector.shape_cast %443 : vector<1x16x32xbf16> to vector<16x32xbf16>
    %cst_224 = arith.constant dense<0.000000e+00> : vector<50x32xf32>
    %445 = tpu.matmul %442, %444, %cst_224 {dimension_numbers = #tpu.dot_dimension_numbers<[1], [0], [0], [1], [0, 0, 1, 1], [], []>} : vector<50x16xbf16>, vector<16x32xbf16>, vector<50x32xf32> -> vector<50x32xf32>
    %446 = arith.addf %428, %445 : vector<50x32xf32>
    %c23 = arith.constant 23 : index
    %c0_225 = arith.constant 0 : index
    %c0_226 = arith.constant 0 : index
    %447 = vector.load %arg0[%c23, %c0_225, %c0_226] : memref<25x50x16xf32, #tpu.memory_space<vmem>>, vector<1x50x16xf32>
    %448 = vector.shape_cast %447 : vector<1x50x16xf32> to vector<50x16xf32>
    %449 = arith.truncf %448 : vector<50x16xf32> to vector<50x16xbf16>
    %cst_227 = arith.constant dense<0.000000e+00> : vector<50x16xf32>
    %450 = tpu.matmul %449, %31, %cst_227 {dimension_numbers = #tpu.dot_dimension_numbers<[1], [0], [0], [1], [0, 0, 1, 1], [], []>} : vector<50x16xbf16>, vector<16x16xbf16>, vector<50x16xf32> -> vector<50x16xf32>
    %451 = vector.broadcast %28 : vector<1x16xf32> to vector<50x16xf32>
    %452 = arith.mulf %450, %451 : vector<50x16xf32>
    %453 = vector.broadcast %30 : vector<1x16xf32> to vector<50x16xf32>
    %454 = arith.addf %452, %453 : vector<50x16xf32>
    %cst_228 = arith.constant 0.000000e+00 : f32
    %455 = vector.broadcast %cst_228 : f32 to vector<50x16xf32>
    %456 = arith.cmpf oge, %454, %455 : vector<50x16xf32>
    %cst_229 = arith.constant 2.000000e-01 : f32
    %457 = vector.broadcast %cst_229 : f32 to vector<50x16xf32>
    %458 = arith.mulf %457, %454 : vector<50x16xf32>
    %459 = arith.select %456, %454, %458 : vector<50x16xi1>, vector<50x16xf32>
    %460 = arith.truncf %459 : vector<50x16xf32> to vector<50x16xbf16>
    %c23_230 = arith.constant 23 : index
    %c0_231 = arith.constant 0 : index
    %c0_232 = arith.constant 0 : index
    %461 = vector.load %arg1[%c23_230, %c0_231, %c0_232] : memref<25x16x32xbf16, #tpu.memory_space<vmem>>, vector<1x16x32xbf16>
    %462 = vector.shape_cast %461 : vector<1x16x32xbf16> to vector<16x32xbf16>
    %cst_233 = arith.constant dense<0.000000e+00> : vector<50x32xf32>
    %463 = tpu.matmul %460, %462, %cst_233 {dimension_numbers = #tpu.dot_dimension_numbers<[1], [0], [0], [1], [0, 0, 1, 1], [], []>} : vector<50x16xbf16>, vector<16x32xbf16>, vector<50x32xf32> -> vector<50x32xf32>
    %464 = arith.addf %446, %463 : vector<50x32xf32>
    %c24 = arith.constant 24 : index
    %c0_234 = arith.constant 0 : index
    %c0_235 = arith.constant 0 : index
    %465 = vector.load %arg0[%c24, %c0_234, %c0_235] : memref<25x50x16xf32, #tpu.memory_space<vmem>>, vector<1x50x16xf32>
    %466 = vector.shape_cast %465 : vector<1x50x16xf32> to vector<50x16xf32>
    %467 = arith.truncf %466 : vector<50x16xf32> to vector<50x16xbf16>
    %cst_236 = arith.constant dense<0.000000e+00> : vector<50x16xf32>
    %468 = tpu.matmul %467, %31, %cst_236 {dimension_numbers = #tpu.dot_dimension_numbers<[1], [0], [0], [1], [0, 0, 1, 1], [], []>} : vector<50x16xbf16>, vector<16x16xbf16>, vector<50x16xf32> -> vector<50x16xf32>
    %469 = vector.broadcast %28 : vector<1x16xf32> to vector<50x16xf32>
    %470 = arith.mulf %468, %469 : vector<50x16xf32>
    %471 = vector.broadcast %30 : vector<1x16xf32> to vector<50x16xf32>
    %472 = arith.addf %470, %471 : vector<50x16xf32>
    %cst_237 = arith.constant 0.000000e+00 : f32
    %473 = vector.broadcast %cst_237 : f32 to vector<50x16xf32>
    %474 = arith.cmpf oge, %472, %473 : vector<50x16xf32>
    %cst_238 = arith.constant 2.000000e-01 : f32
    %475 = vector.broadcast %cst_238 : f32 to vector<50x16xf32>
    %476 = arith.mulf %475, %472 : vector<50x16xf32>
    %477 = arith.select %474, %472, %476 : vector<50x16xi1>, vector<50x16xf32>
    %478 = arith.truncf %477 : vector<50x16xf32> to vector<50x16xbf16>
    %c24_239 = arith.constant 24 : index
    %c0_240 = arith.constant 0 : index
    %c0_241 = arith.constant 0 : index
    %479 = vector.load %arg1[%c24_239, %c0_240, %c0_241] : memref<25x16x32xbf16, #tpu.memory_space<vmem>>, vector<1x16x32xbf16>
    %480 = vector.shape_cast %479 : vector<1x16x32xbf16> to vector<16x32xbf16>
    %cst_242 = arith.constant dense<0.000000e+00> : vector<50x32xf32>
    %481 = tpu.matmul %478, %480, %cst_242 {dimension_numbers = #tpu.dot_dimension_numbers<[1], [0], [0], [1], [0, 0, 1, 1], [], []>} : vector<50x16xbf16>, vector<16x32xbf16>, vector<50x32xf32> -> vector<50x32xf32>
    %482 = arith.addf %464, %481 : vector<50x32xf32>
    %cst_243 = arith.constant dense<0.000000e+00> : vector<32xf32>
    %483 = vector.multi_reduction <add>, %482, %cst_243 [0] : vector<50x32xf32> to vector<32xf32>
    %484 = vector.shape_cast %483 : vector<32xf32> to vector<1x32xf32>
    %cst_244 = arith.constant 2.000000e-02 : f32
    %485 = vector.broadcast %cst_244 : f32 to vector<1x32xf32>
    %486 = arith.mulf %484, %485 : vector<1x32xf32>
    %487 = arith.mulf %482, %482 : vector<50x32xf32>
    %cst_245 = arith.constant dense<0.000000e+00> : vector<32xf32>
    %488 = vector.multi_reduction <add>, %487, %cst_245 [0] : vector<50x32xf32> to vector<32xf32>
    %489 = vector.shape_cast %488 : vector<32xf32> to vector<1x32xf32>
    %cst_246 = arith.constant 2.000000e-02 : f32
    %490 = vector.broadcast %cst_246 : f32 to vector<1x32xf32>
    %491 = arith.mulf %489, %490 : vector<1x32xf32>
    %492 = arith.mulf %486, %486 : vector<1x32xf32>
    %493 = arith.subf %491, %492 : vector<1x32xf32>
    %cst_247 = arith.constant 0.000000e+00 : f32
    %494 = vector.broadcast %cst_247 : f32 to vector<1x32xf32>
    %495 = arith.maximumf %493, %494 : vector<1x32xf32>
    %cst_248 = arith.constant 9.99999974E-6 : f32
    %496 = vector.broadcast %cst_248 : f32 to vector<1x32xf32>
    %497 = arith.addf %495, %496 : vector<1x32xf32>
    %498 = math.rsqrt %497 : vector<1x32xf32>
    %499 = arith.mulf %4, %498 : vector<1x32xf32>
    %500 = arith.mulf %486, %499 : vector<1x32xf32>
    %501 = arith.subf %5, %500 : vector<1x32xf32>
    %502 = vector.broadcast %499 : vector<1x32xf32> to vector<50x32xf32>
    %503 = arith.mulf %482, %502 : vector<50x32xf32>
    %504 = vector.broadcast %501 : vector<1x32xf32> to vector<50x32xf32>
    %505 = arith.addf %503, %504 : vector<50x32xf32>
    %cst_249 = arith.constant 0.000000e+00 : f32
    %506 = vector.broadcast %cst_249 : f32 to vector<50x32xf32>
    %507 = arith.cmpf oge, %505, %506 : vector<50x32xf32>
    %cst_250 = arith.constant 2.000000e-01 : f32
    %508 = vector.broadcast %cst_250 : f32 to vector<50x32xf32>
    %509 = arith.mulf %508, %505 : vector<50x32xf32>
    %510 = arith.select %507, %505, %509 : vector<50x32xi1>, vector<50x32xf32>
    %511 = arith.truncf %510 : vector<50x32xf32> to vector<50x32xbf16>
    %cst_251 = arith.constant 0.000000e+00 : f32
    %512 = vector.broadcast %cst_251 : f32 to vector<2x64xf32>
    %513 = vector.extract_strided_slice %511 {offsets = [0, 0], sizes = [2, 32], strides = [1, 1]} : vector<50x32xbf16> to vector<2x32xbf16>
    %c0_252 = arith.constant 0 : index
    %c0_253 = arith.constant 0 : index
    %c0_254 = arith.constant 0 : index
    %514 = vector.load %arg2[%c0_252, %c0_253, %c0_254] : memref<25x32x64xbf16, #tpu.memory_space<vmem>>, vector<1x32x64xbf16>
    %515 = vector.shape_cast %514 : vector<1x32x64xbf16> to vector<32x64xbf16>
    %cst_255 = arith.constant dense<0.000000e+00> : vector<2x64xf32>
    %516 = tpu.matmul %513, %515, %cst_255 {dimension_numbers = #tpu.dot_dimension_numbers<[1], [0], [0], [1], [0, 0, 1, 1], [], []>} : vector<2x32xbf16>, vector<32x64xbf16>, vector<2x64xf32> -> vector<2x64xf32>
    %517 = arith.addf %512, %516 : vector<2x64xf32>
    %518 = vector.extract_strided_slice %511 {offsets = [2, 0], sizes = [2, 32], strides = [1, 1]} : vector<50x32xbf16> to vector<2x32xbf16>
    %c1_256 = arith.constant 1 : index
    %c0_257 = arith.constant 0 : index
    %c0_258 = arith.constant 0 : index
    %519 = vector.load %arg2[%c1_256, %c0_257, %c0_258] : memref<25x32x64xbf16, #tpu.memory_space<vmem>>, vector<1x32x64xbf16>
    %520 = vector.shape_cast %519 : vector<1x32x64xbf16> to vector<32x64xbf16>
    %cst_259 = arith.constant dense<0.000000e+00> : vector<2x64xf32>
    %521 = tpu.matmul %518, %520, %cst_259 {dimension_numbers = #tpu.dot_dimension_numbers<[1], [0], [0], [1], [0, 0, 1, 1], [], []>} : vector<2x32xbf16>, vector<32x64xbf16>, vector<2x64xf32> -> vector<2x64xf32>
    %522 = arith.addf %517, %521 : vector<2x64xf32>
    %523 = vector.extract_strided_slice %511 {offsets = [4, 0], sizes = [2, 32], strides = [1, 1]} : vector<50x32xbf16> to vector<2x32xbf16>
    %c2_260 = arith.constant 2 : index
    %c0_261 = arith.constant 0 : index
    %c0_262 = arith.constant 0 : index
    %524 = vector.load %arg2[%c2_260, %c0_261, %c0_262] : memref<25x32x64xbf16, #tpu.memory_space<vmem>>, vector<1x32x64xbf16>
    %525 = vector.shape_cast %524 : vector<1x32x64xbf16> to vector<32x64xbf16>
    %cst_263 = arith.constant dense<0.000000e+00> : vector<2x64xf32>
    %526 = tpu.matmul %523, %525, %cst_263 {dimension_numbers = #tpu.dot_dimension_numbers<[1], [0], [0], [1], [0, 0, 1, 1], [], []>} : vector<2x32xbf16>, vector<32x64xbf16>, vector<2x64xf32> -> vector<2x64xf32>
    %527 = arith.addf %522, %526 : vector<2x64xf32>
    %528 = vector.extract_strided_slice %511 {offsets = [6, 0], sizes = [2, 32], strides = [1, 1]} : vector<50x32xbf16> to vector<2x32xbf16>
    %c3_264 = arith.constant 3 : index
    %c0_265 = arith.constant 0 : index
    %c0_266 = arith.constant 0 : index
    %529 = vector.load %arg2[%c3_264, %c0_265, %c0_266] : memref<25x32x64xbf16, #tpu.memory_space<vmem>>, vector<1x32x64xbf16>
    %530 = vector.shape_cast %529 : vector<1x32x64xbf16> to vector<32x64xbf16>
    %cst_267 = arith.constant dense<0.000000e+00> : vector<2x64xf32>
    %531 = tpu.matmul %528, %530, %cst_267 {dimension_numbers = #tpu.dot_dimension_numbers<[1], [0], [0], [1], [0, 0, 1, 1], [], []>} : vector<2x32xbf16>, vector<32x64xbf16>, vector<2x64xf32> -> vector<2x64xf32>
    %532 = arith.addf %527, %531 : vector<2x64xf32>
    %533 = vector.extract_strided_slice %511 {offsets = [8, 0], sizes = [2, 32], strides = [1, 1]} : vector<50x32xbf16> to vector<2x32xbf16>
    %c4_268 = arith.constant 4 : index
    %c0_269 = arith.constant 0 : index
    %c0_270 = arith.constant 0 : index
    %534 = vector.load %arg2[%c4_268, %c0_269, %c0_270] : memref<25x32x64xbf16, #tpu.memory_space<vmem>>, vector<1x32x64xbf16>
    %535 = vector.shape_cast %534 : vector<1x32x64xbf16> to vector<32x64xbf16>
    %cst_271 = arith.constant dense<0.000000e+00> : vector<2x64xf32>
    %536 = tpu.matmul %533, %535, %cst_271 {dimension_numbers = #tpu.dot_dimension_numbers<[1], [0], [0], [1], [0, 0, 1, 1], [], []>} : vector<2x32xbf16>, vector<32x64xbf16>, vector<2x64xf32> -> vector<2x64xf32>
    %537 = arith.addf %532, %536 : vector<2x64xf32>
    %538 = vector.extract_strided_slice %511 {offsets = [10, 0], sizes = [2, 32], strides = [1, 1]} : vector<50x32xbf16> to vector<2x32xbf16>
    %c5_272 = arith.constant 5 : index
    %c0_273 = arith.constant 0 : index
    %c0_274 = arith.constant 0 : index
    %539 = vector.load %arg2[%c5_272, %c0_273, %c0_274] : memref<25x32x64xbf16, #tpu.memory_space<vmem>>, vector<1x32x64xbf16>
    %540 = vector.shape_cast %539 : vector<1x32x64xbf16> to vector<32x64xbf16>
    %cst_275 = arith.constant dense<0.000000e+00> : vector<2x64xf32>
    %541 = tpu.matmul %538, %540, %cst_275 {dimension_numbers = #tpu.dot_dimension_numbers<[1], [0], [0], [1], [0, 0, 1, 1], [], []>} : vector<2x32xbf16>, vector<32x64xbf16>, vector<2x64xf32> -> vector<2x64xf32>
    %542 = arith.addf %537, %541 : vector<2x64xf32>
    %543 = vector.extract_strided_slice %511 {offsets = [12, 0], sizes = [2, 32], strides = [1, 1]} : vector<50x32xbf16> to vector<2x32xbf16>
    %c6_276 = arith.constant 6 : index
    %c0_277 = arith.constant 0 : index
    %c0_278 = arith.constant 0 : index
    %544 = vector.load %arg2[%c6_276, %c0_277, %c0_278] : memref<25x32x64xbf16, #tpu.memory_space<vmem>>, vector<1x32x64xbf16>
    %545 = vector.shape_cast %544 : vector<1x32x64xbf16> to vector<32x64xbf16>
    %cst_279 = arith.constant dense<0.000000e+00> : vector<2x64xf32>
    %546 = tpu.matmul %543, %545, %cst_279 {dimension_numbers = #tpu.dot_dimension_numbers<[1], [0], [0], [1], [0, 0, 1, 1], [], []>} : vector<2x32xbf16>, vector<32x64xbf16>, vector<2x64xf32> -> vector<2x64xf32>
    %547 = arith.addf %542, %546 : vector<2x64xf32>
    %548 = vector.extract_strided_slice %511 {offsets = [14, 0], sizes = [2, 32], strides = [1, 1]} : vector<50x32xbf16> to vector<2x32xbf16>
    %c7_280 = arith.constant 7 : index
    %c0_281 = arith.constant 0 : index
    %c0_282 = arith.constant 0 : index
    %549 = vector.load %arg2[%c7_280, %c0_281, %c0_282] : memref<25x32x64xbf16, #tpu.memory_space<vmem>>, vector<1x32x64xbf16>
    %550 = vector.shape_cast %549 : vector<1x32x64xbf16> to vector<32x64xbf16>
    %cst_283 = arith.constant dense<0.000000e+00> : vector<2x64xf32>
    %551 = tpu.matmul %548, %550, %cst_283 {dimension_numbers = #tpu.dot_dimension_numbers<[1], [0], [0], [1], [0, 0, 1, 1], [], []>} : vector<2x32xbf16>, vector<32x64xbf16>, vector<2x64xf32> -> vector<2x64xf32>
    %552 = arith.addf %547, %551 : vector<2x64xf32>
    %553 = vector.extract_strided_slice %511 {offsets = [16, 0], sizes = [2, 32], strides = [1, 1]} : vector<50x32xbf16> to vector<2x32xbf16>
    %c8_284 = arith.constant 8 : index
    %c0_285 = arith.constant 0 : index
    %c0_286 = arith.constant 0 : index
    %554 = vector.load %arg2[%c8_284, %c0_285, %c0_286] : memref<25x32x64xbf16, #tpu.memory_space<vmem>>, vector<1x32x64xbf16>
    %555 = vector.shape_cast %554 : vector<1x32x64xbf16> to vector<32x64xbf16>
    %cst_287 = arith.constant dense<0.000000e+00> : vector<2x64xf32>
    %556 = tpu.matmul %553, %555, %cst_287 {dimension_numbers = #tpu.dot_dimension_numbers<[1], [0], [0], [1], [0, 0, 1, 1], [], []>} : vector<2x32xbf16>, vector<32x64xbf16>, vector<2x64xf32> -> vector<2x64xf32>
    %557 = arith.addf %552, %556 : vector<2x64xf32>
    %558 = vector.extract_strided_slice %511 {offsets = [18, 0], sizes = [2, 32], strides = [1, 1]} : vector<50x32xbf16> to vector<2x32xbf16>
    %c9_288 = arith.constant 9 : index
    %c0_289 = arith.constant 0 : index
    %c0_290 = arith.constant 0 : index
    %559 = vector.load %arg2[%c9_288, %c0_289, %c0_290] : memref<25x32x64xbf16, #tpu.memory_space<vmem>>, vector<1x32x64xbf16>
    %560 = vector.shape_cast %559 : vector<1x32x64xbf16> to vector<32x64xbf16>
    %cst_291 = arith.constant dense<0.000000e+00> : vector<2x64xf32>
    %561 = tpu.matmul %558, %560, %cst_291 {dimension_numbers = #tpu.dot_dimension_numbers<[1], [0], [0], [1], [0, 0, 1, 1], [], []>} : vector<2x32xbf16>, vector<32x64xbf16>, vector<2x64xf32> -> vector<2x64xf32>
    %562 = arith.addf %557, %561 : vector<2x64xf32>
    %563 = vector.extract_strided_slice %511 {offsets = [20, 0], sizes = [2, 32], strides = [1, 1]} : vector<50x32xbf16> to vector<2x32xbf16>
    %c10_292 = arith.constant 10 : index
    %c0_293 = arith.constant 0 : index
    %c0_294 = arith.constant 0 : index
    %564 = vector.load %arg2[%c10_292, %c0_293, %c0_294] : memref<25x32x64xbf16, #tpu.memory_space<vmem>>, vector<1x32x64xbf16>
    %565 = vector.shape_cast %564 : vector<1x32x64xbf16> to vector<32x64xbf16>
    %cst_295 = arith.constant dense<0.000000e+00> : vector<2x64xf32>
    %566 = tpu.matmul %563, %565, %cst_295 {dimension_numbers = #tpu.dot_dimension_numbers<[1], [0], [0], [1], [0, 0, 1, 1], [], []>} : vector<2x32xbf16>, vector<32x64xbf16>, vector<2x64xf32> -> vector<2x64xf32>
    %567 = arith.addf %562, %566 : vector<2x64xf32>
    %568 = vector.extract_strided_slice %511 {offsets = [22, 0], sizes = [2, 32], strides = [1, 1]} : vector<50x32xbf16> to vector<2x32xbf16>
    %c11_296 = arith.constant 11 : index
    %c0_297 = arith.constant 0 : index
    %c0_298 = arith.constant 0 : index
    %569 = vector.load %arg2[%c11_296, %c0_297, %c0_298] : memref<25x32x64xbf16, #tpu.memory_space<vmem>>, vector<1x32x64xbf16>
    %570 = vector.shape_cast %569 : vector<1x32x64xbf16> to vector<32x64xbf16>
    %cst_299 = arith.constant dense<0.000000e+00> : vector<2x64xf32>
    %571 = tpu.matmul %568, %570, %cst_299 {dimension_numbers = #tpu.dot_dimension_numbers<[1], [0], [0], [1], [0, 0, 1, 1], [], []>} : vector<2x32xbf16>, vector<32x64xbf16>, vector<2x64xf32> -> vector<2x64xf32>
    %572 = arith.addf %567, %571 : vector<2x64xf32>
    %573 = vector.extract_strided_slice %511 {offsets = [24, 0], sizes = [2, 32], strides = [1, 1]} : vector<50x32xbf16> to vector<2x32xbf16>
    %c12_300 = arith.constant 12 : index
    %c0_301 = arith.constant 0 : index
    %c0_302 = arith.constant 0 : index
    %574 = vector.load %arg2[%c12_300, %c0_301, %c0_302] : memref<25x32x64xbf16, #tpu.memory_space<vmem>>, vector<1x32x64xbf16>
    %575 = vector.shape_cast %574 : vector<1x32x64xbf16> to vector<32x64xbf16>
    %cst_303 = arith.constant dense<0.000000e+00> : vector<2x64xf32>
    %576 = tpu.matmul %573, %575, %cst_303 {dimension_numbers = #tpu.dot_dimension_numbers<[1], [0], [0], [1], [0, 0, 1, 1], [], []>} : vector<2x32xbf16>, vector<32x64xbf16>, vector<2x64xf32> -> vector<2x64xf32>
    %577 = arith.addf %572, %576 : vector<2x64xf32>
    %578 = vector.extract_strided_slice %511 {offsets = [26, 0], sizes = [2, 32], strides = [1, 1]} : vector<50x32xbf16> to vector<2x32xbf16>
    %c13_304 = arith.constant 13 : index
    %c0_305 = arith.constant 0 : index
    %c0_306 = arith.constant 0 : index
    %579 = vector.load %arg2[%c13_304, %c0_305, %c0_306] : memref<25x32x64xbf16, #tpu.memory_space<vmem>>, vector<1x32x64xbf16>
    %580 = vector.shape_cast %579 : vector<1x32x64xbf16> to vector<32x64xbf16>
    %cst_307 = arith.constant dense<0.000000e+00> : vector<2x64xf32>
    %581 = tpu.matmul %578, %580, %cst_307 {dimension_numbers = #tpu.dot_dimension_numbers<[1], [0], [0], [1], [0, 0, 1, 1], [], []>} : vector<2x32xbf16>, vector<32x64xbf16>, vector<2x64xf32> -> vector<2x64xf32>
    %582 = arith.addf %577, %581 : vector<2x64xf32>
    %583 = vector.extract_strided_slice %511 {offsets = [28, 0], sizes = [2, 32], strides = [1, 1]} : vector<50x32xbf16> to vector<2x32xbf16>
    %c14_308 = arith.constant 14 : index
    %c0_309 = arith.constant 0 : index
    %c0_310 = arith.constant 0 : index
    %584 = vector.load %arg2[%c14_308, %c0_309, %c0_310] : memref<25x32x64xbf16, #tpu.memory_space<vmem>>, vector<1x32x64xbf16>
    %585 = vector.shape_cast %584 : vector<1x32x64xbf16> to vector<32x64xbf16>
    %cst_311 = arith.constant dense<0.000000e+00> : vector<2x64xf32>
    %586 = tpu.matmul %583, %585, %cst_311 {dimension_numbers = #tpu.dot_dimension_numbers<[1], [0], [0], [1], [0, 0, 1, 1], [], []>} : vector<2x32xbf16>, vector<32x64xbf16>, vector<2x64xf32> -> vector<2x64xf32>
    %587 = arith.addf %582, %586 : vector<2x64xf32>
    %588 = vector.extract_strided_slice %511 {offsets = [30, 0], sizes = [2, 32], strides = [1, 1]} : vector<50x32xbf16> to vector<2x32xbf16>
    %c15_312 = arith.constant 15 : index
    %c0_313 = arith.constant 0 : index
    %c0_314 = arith.constant 0 : index
    %589 = vector.load %arg2[%c15_312, %c0_313, %c0_314] : memref<25x32x64xbf16, #tpu.memory_space<vmem>>, vector<1x32x64xbf16>
    %590 = vector.shape_cast %589 : vector<1x32x64xbf16> to vector<32x64xbf16>
    %cst_315 = arith.constant dense<0.000000e+00> : vector<2x64xf32>
    %591 = tpu.matmul %588, %590, %cst_315 {dimension_numbers = #tpu.dot_dimension_numbers<[1], [0], [0], [1], [0, 0, 1, 1], [], []>} : vector<2x32xbf16>, vector<32x64xbf16>, vector<2x64xf32> -> vector<2x64xf32>
    %592 = arith.addf %587, %591 : vector<2x64xf32>
    %593 = vector.extract_strided_slice %511 {offsets = [32, 0], sizes = [2, 32], strides = [1, 1]} : vector<50x32xbf16> to vector<2x32xbf16>
    %c16_316 = arith.constant 16 : index
    %c0_317 = arith.constant 0 : index
    %c0_318 = arith.constant 0 : index
    %594 = vector.load %arg2[%c16_316, %c0_317, %c0_318] : memref<25x32x64xbf16, #tpu.memory_space<vmem>>, vector<1x32x64xbf16>
    %595 = vector.shape_cast %594 : vector<1x32x64xbf16> to vector<32x64xbf16>
    %cst_319 = arith.constant dense<0.000000e+00> : vector<2x64xf32>
    %596 = tpu.matmul %593, %595, %cst_319 {dimension_numbers = #tpu.dot_dimension_numbers<[1], [0], [0], [1], [0, 0, 1, 1], [], []>} : vector<2x32xbf16>, vector<32x64xbf16>, vector<2x64xf32> -> vector<2x64xf32>
    %597 = arith.addf %592, %596 : vector<2x64xf32>
    %598 = vector.extract_strided_slice %511 {offsets = [34, 0], sizes = [2, 32], strides = [1, 1]} : vector<50x32xbf16> to vector<2x32xbf16>
    %c17_320 = arith.constant 17 : index
    %c0_321 = arith.constant 0 : index
    %c0_322 = arith.constant 0 : index
    %599 = vector.load %arg2[%c17_320, %c0_321, %c0_322] : memref<25x32x64xbf16, #tpu.memory_space<vmem>>, vector<1x32x64xbf16>
    %600 = vector.shape_cast %599 : vector<1x32x64xbf16> to vector<32x64xbf16>
    %cst_323 = arith.constant dense<0.000000e+00> : vector<2x64xf32>
    %601 = tpu.matmul %598, %600, %cst_323 {dimension_numbers = #tpu.dot_dimension_numbers<[1], [0], [0], [1], [0, 0, 1, 1], [], []>} : vector<2x32xbf16>, vector<32x64xbf16>, vector<2x64xf32> -> vector<2x64xf32>
    %602 = arith.addf %597, %601 : vector<2x64xf32>
    %603 = vector.extract_strided_slice %511 {offsets = [36, 0], sizes = [2, 32], strides = [1, 1]} : vector<50x32xbf16> to vector<2x32xbf16>
    %c18_324 = arith.constant 18 : index
    %c0_325 = arith.constant 0 : index
    %c0_326 = arith.constant 0 : index
    %604 = vector.load %arg2[%c18_324, %c0_325, %c0_326] : memref<25x32x64xbf16, #tpu.memory_space<vmem>>, vector<1x32x64xbf16>
    %605 = vector.shape_cast %604 : vector<1x32x64xbf16> to vector<32x64xbf16>
    %cst_327 = arith.constant dense<0.000000e+00> : vector<2x64xf32>
    %606 = tpu.matmul %603, %605, %cst_327 {dimension_numbers = #tpu.dot_dimension_numbers<[1], [0], [0], [1], [0, 0, 1, 1], [], []>} : vector<2x32xbf16>, vector<32x64xbf16>, vector<2x64xf32> -> vector<2x64xf32>
    %607 = arith.addf %602, %606 : vector<2x64xf32>
    %608 = vector.extract_strided_slice %511 {offsets = [38, 0], sizes = [2, 32], strides = [1, 1]} : vector<50x32xbf16> to vector<2x32xbf16>
    %c19_328 = arith.constant 19 : index
    %c0_329 = arith.constant 0 : index
    %c0_330 = arith.constant 0 : index
    %609 = vector.load %arg2[%c19_328, %c0_329, %c0_330] : memref<25x32x64xbf16, #tpu.memory_space<vmem>>, vector<1x32x64xbf16>
    %610 = vector.shape_cast %609 : vector<1x32x64xbf16> to vector<32x64xbf16>
    %cst_331 = arith.constant dense<0.000000e+00> : vector<2x64xf32>
    %611 = tpu.matmul %608, %610, %cst_331 {dimension_numbers = #tpu.dot_dimension_numbers<[1], [0], [0], [1], [0, 0, 1, 1], [], []>} : vector<2x32xbf16>, vector<32x64xbf16>, vector<2x64xf32> -> vector<2x64xf32>
    %612 = arith.addf %607, %611 : vector<2x64xf32>
    %613 = vector.extract_strided_slice %511 {offsets = [40, 0], sizes = [2, 32], strides = [1, 1]} : vector<50x32xbf16> to vector<2x32xbf16>
    %c20_332 = arith.constant 20 : index
    %c0_333 = arith.constant 0 : index
    %c0_334 = arith.constant 0 : index
    %614 = vector.load %arg2[%c20_332, %c0_333, %c0_334] : memref<25x32x64xbf16, #tpu.memory_space<vmem>>, vector<1x32x64xbf16>
    %615 = vector.shape_cast %614 : vector<1x32x64xbf16> to vector<32x64xbf16>
    %cst_335 = arith.constant dense<0.000000e+00> : vector<2x64xf32>
    %616 = tpu.matmul %613, %615, %cst_335 {dimension_numbers = #tpu.dot_dimension_numbers<[1], [0], [0], [1], [0, 0, 1, 1], [], []>} : vector<2x32xbf16>, vector<32x64xbf16>, vector<2x64xf32> -> vector<2x64xf32>
    %617 = arith.addf %612, %616 : vector<2x64xf32>
    %618 = vector.extract_strided_slice %511 {offsets = [42, 0], sizes = [2, 32], strides = [1, 1]} : vector<50x32xbf16> to vector<2x32xbf16>
    %c21_336 = arith.constant 21 : index
    %c0_337 = arith.constant 0 : index
    %c0_338 = arith.constant 0 : index
    %619 = vector.load %arg2[%c21_336, %c0_337, %c0_338] : memref<25x32x64xbf16, #tpu.memory_space<vmem>>, vector<1x32x64xbf16>
    %620 = vector.shape_cast %619 : vector<1x32x64xbf16> to vector<32x64xbf16>
    %cst_339 = arith.constant dense<0.000000e+00> : vector<2x64xf32>
    %621 = tpu.matmul %618, %620, %cst_339 {dimension_numbers = #tpu.dot_dimension_numbers<[1], [0], [0], [1], [0, 0, 1, 1], [], []>} : vector<2x32xbf16>, vector<32x64xbf16>, vector<2x64xf32> -> vector<2x64xf32>
    %622 = arith.addf %617, %621 : vector<2x64xf32>
    %623 = vector.extract_strided_slice %511 {offsets = [44, 0], sizes = [2, 32], strides = [1, 1]} : vector<50x32xbf16> to vector<2x32xbf16>
    %c22_340 = arith.constant 22 : index
    %c0_341 = arith.constant 0 : index
    %c0_342 = arith.constant 0 : index
    %624 = vector.load %arg2[%c22_340, %c0_341, %c0_342] : memref<25x32x64xbf16, #tpu.memory_space<vmem>>, vector<1x32x64xbf16>
    %625 = vector.shape_cast %624 : vector<1x32x64xbf16> to vector<32x64xbf16>
    %cst_343 = arith.constant dense<0.000000e+00> : vector<2x64xf32>
    %626 = tpu.matmul %623, %625, %cst_343 {dimension_numbers = #tpu.dot_dimension_numbers<[1], [0], [0], [1], [0, 0, 1, 1], [], []>} : vector<2x32xbf16>, vector<32x64xbf16>, vector<2x64xf32> -> vector<2x64xf32>
    %627 = arith.addf %622, %626 : vector<2x64xf32>
    %628 = vector.extract_strided_slice %511 {offsets = [46, 0], sizes = [2, 32], strides = [1, 1]} : vector<50x32xbf16> to vector<2x32xbf16>
    %c23_344 = arith.constant 23 : index
    %c0_345 = arith.constant 0 : index
    %c0_346 = arith.constant 0 : index
    %629 = vector.load %arg2[%c23_344, %c0_345, %c0_346] : memref<25x32x64xbf16, #tpu.memory_space<vmem>>, vector<1x32x64xbf16>
    %630 = vector.shape_cast %629 : vector<1x32x64xbf16> to vector<32x64xbf16>
    %cst_347 = arith.constant dense<0.000000e+00> : vector<2x64xf32>
    %631 = tpu.matmul %628, %630, %cst_347 {dimension_numbers = #tpu.dot_dimension_numbers<[1], [0], [0], [1], [0, 0, 1, 1], [], []>} : vector<2x32xbf16>, vector<32x64xbf16>, vector<2x64xf32> -> vector<2x64xf32>
    %632 = arith.addf %627, %631 : vector<2x64xf32>
    %633 = vector.extract_strided_slice %511 {offsets = [48, 0], sizes = [2, 32], strides = [1, 1]} : vector<50x32xbf16> to vector<2x32xbf16>
    %c24_348 = arith.constant 24 : index
    %c0_349 = arith.constant 0 : index
    %c0_350 = arith.constant 0 : index
    %634 = vector.load %arg2[%c24_348, %c0_349, %c0_350] : memref<25x32x64xbf16, #tpu.memory_space<vmem>>, vector<1x32x64xbf16>
    %635 = vector.shape_cast %634 : vector<1x32x64xbf16> to vector<32x64xbf16>
    %cst_351 = arith.constant dense<0.000000e+00> : vector<2x64xf32>
    %636 = tpu.matmul %633, %635, %cst_351 {dimension_numbers = #tpu.dot_dimension_numbers<[1], [0], [0], [1], [0, 0, 1, 1], [], []>} : vector<2x32xbf16>, vector<32x64xbf16>, vector<2x64xf32> -> vector<2x64xf32>
    %637 = arith.addf %632, %636 : vector<2x64xf32>
    %cst_352 = arith.constant dense<0.000000e+00> : vector<64xf32>
    %638 = vector.multi_reduction <add>, %637, %cst_352 [0] : vector<2x64xf32> to vector<64xf32>
    %639 = vector.shape_cast %638 : vector<64xf32> to vector<1x64xf32>
    %cst_353 = arith.constant 5.000000e-01 : f32
    %640 = vector.broadcast %cst_353 : f32 to vector<1x64xf32>
    %641 = arith.mulf %639, %640 : vector<1x64xf32>
    %642 = arith.mulf %637, %637 : vector<2x64xf32>
    %cst_354 = arith.constant dense<0.000000e+00> : vector<64xf32>
    %643 = vector.multi_reduction <add>, %642, %cst_354 [0] : vector<2x64xf32> to vector<64xf32>
    %644 = vector.shape_cast %643 : vector<64xf32> to vector<1x64xf32>
    %cst_355 = arith.constant 5.000000e-01 : f32
    %645 = vector.broadcast %cst_355 : f32 to vector<1x64xf32>
    %646 = arith.mulf %644, %645 : vector<1x64xf32>
    %647 = arith.mulf %641, %641 : vector<1x64xf32>
    %648 = arith.subf %646, %647 : vector<1x64xf32>
    %cst_356 = arith.constant 0.000000e+00 : f32
    %649 = vector.broadcast %cst_356 : f32 to vector<1x64xf32>
    %650 = arith.maximumf %648, %649 : vector<1x64xf32>
    %cst_357 = arith.constant 9.99999974E-6 : f32
    %651 = vector.broadcast %cst_357 : f32 to vector<1x64xf32>
    %652 = arith.addf %650, %651 : vector<1x64xf32>
    %653 = math.rsqrt %652 : vector<1x64xf32>
    %654 = arith.mulf %6, %653 : vector<1x64xf32>
    %655 = arith.mulf %641, %654 : vector<1x64xf32>
    %656 = arith.subf %7, %655 : vector<1x64xf32>
    %657 = vector.broadcast %654 : vector<1x64xf32> to vector<2x64xf32>
    %658 = arith.mulf %637, %657 : vector<2x64xf32>
    %659 = vector.broadcast %656 : vector<1x64xf32> to vector<2x64xf32>
    %660 = arith.addf %658, %659 : vector<2x64xf32>
    %cst_358 = arith.constant 0.000000e+00 : f32
    %661 = vector.broadcast %cst_358 : f32 to vector<2x64xf32>
    %662 = arith.cmpf oge, %660, %661 : vector<2x64xf32>
    %cst_359 = arith.constant 2.000000e-01 : f32
    %663 = vector.broadcast %cst_359 : f32 to vector<2x64xf32>
    %664 = arith.mulf %663, %660 : vector<2x64xf32>
    %665 = arith.select %662, %660, %664 : vector<2x64xi1>, vector<2x64xf32>
    %666 = vector.broadcast %8 : vector<1x64xf32> to vector<2x64xf32>
    %667 = arith.mulf %665, %666 : vector<2x64xf32>
    %cst_360 = arith.constant dense<0.000000e+00> : vector<2xf32>
    %668 = vector.multi_reduction <add>, %667, %cst_360 [1] : vector<2x64xf32> to vector<2xf32>
    %669 = vector.shape_cast %668 : vector<2xf32> to vector<2x1xf32>
    %670 = vector.broadcast %9 : vector<1x1xf32> to vector<2x1xf32>
    %671 = arith.addf %669, %670 : vector<2x1xf32>
    %c0_361 = arith.constant 0 : index
    %c0_362 = arith.constant 0 : index
    %672 = vector.load %arg4[%c0_361, %c0_362] : memref<2x1xf32, #tpu.memory_space<vmem>>, vector<2x1xf32>
    tpu.vector_store %arg4[%c0_361, %c0_362], %671 {strides = array<i32>} : memref<2x1xf32, #tpu.memory_space<vmem>>, vector<2x1xf32>,
    return
  }
}

</mosaic_0001>

<llo_original>
// kernel: discriminator_forward.1
$region0: #{discriminator_forward.1}
  #allocation0 [shape = 'u32[]', space=smem, size = 0x4, offset = 0x4, fixed_abs, tag = 'smem constant byte address 0x4 - core index']
  #allocation1 [shape = 'u32[144,128]{1,0:T(1,128)}', space=vmem, size = 0x12000, scoped, tag = 'internal scratch']
  %s0 = inlined_call_operand.vmem [shape: f32[25,50,16], index: 0, kind: input, shape index: {}]
  %s1 = inlined_call_operand.vmem [shape: bf16[25,16,32], index: 1, kind: input, shape index: {}]
  %s2 = inlined_call_operand.vmem [shape: bf16[25,32,64], index: 2, kind: input, shape index: {}]
  %s3 = inlined_call_operand.vmem [shape: f32[40,128], index: 3, kind: input, shape index: {}]
  %s4 = inlined_call_operand.vmem [shape: f32[2,1], index: 4, kind: output, shape index: {}]
  %s5 = sld [smem:[#allocation0]]
  $region26: #{discriminator_forward.1} parent=0
    _
  %s7 = ssub.s32 1, %s5
  %s8 = scalar_select 0, %s7, %s5
  // Predicated region
  $region2: #{discriminator_forward.1} parent=0 // pred_check
    _
  $region3: #{discriminator_forward.1} parent=0 // pred_check_branch
    %10 = sbr.rel (0) target = $region5
  $region4: #{discriminator_forward.1} parent=0 // pred_region
    _
  $region5: #{discriminator_forward.1} parent=0 // pred_fallthru
    _
  // Predicated region
  $region6: #{discriminator_forward.1} parent=0 // pred_check
    _
  $region7: #{discriminator_forward.1} parent=0 // pred_check_branch
    %12 = sbr.rel (0) target = $region9
  $region8: #{discriminator_forward.1} parent=0 // pred_region
    _
  $region9: #{discriminator_forward.1} parent=0 // pred_fallthru
    _
  // Predicated region
  $region10: #{discriminator_forward.1} parent=0 // pred_check
    _
  $region11: #{discriminator_forward.1} parent=0 // pred_check_branch
    %14 = sbr.rel (0) target = $region13
  $region12: #{discriminator_forward.1} parent=0 // pred_region
    _
  $region13: #{discriminator_forward.1} parent=0 // pred_fallthru
    _
  // Predicated region
  $region14: #{discriminator_forward.1} parent=0 // pred_check
    _
  $region15: #{discriminator_forward.1} parent=0 // pred_check_branch
    %16 = sbr.rel (0) target = $region17
  $region16: #{discriminator_forward.1} parent=0 // pred_region
    _
  $region17: #{discriminator_forward.1} parent=0 // pred_fallthru
    _
  %v18 = vld [vmem:[%s3] sm:$0xff]
  %v19 = vld [vmem:[%s3 + $0x8] sm:$0xff]
  %v20 = vld [vmem:[%s3 + $0x10] sm:$0xff]
  %v21 = vld [vmem:[%s3 + $0x18] sm:$0x3]
  %v22 = vld [vmem:[%s3 + $0x1a] sm:$0x1]
  %v23 = vld [vmem:[%s3 + $0x1b] sm:$0x1]
  %v24 = vld [vmem:[%s3 + $0x1c] sm:$0x1]
  %v25 = vld [vmem:[%s3 + $0x1d] sm:$0x1]
  %v26 = vld [vmem:[%s3 + $0x1e] sm:$0x1]
  %v27 = vld [vmem:[%s3 + $0x1f] sm:$0x1]
  %v28 = vld [vmem:[%s3 + $0x20] sm:$0x1]
  %v29 = vld [vmem:[%s3 + $0x21] sm:$0x1]
  %vm30 = vcmask 130048
  %v32 = vsel %vm30, %v20, 0
  %v35 = vsel %vm30, %v21, 0
  %37 = vmatprep.subr.mxu0 0.0
  %38 = vmatpush1.msra.mxu0 0.0
  %39 = vmatprep.subr.mxu0 0.0
  %40 = vmatpush1.msra.mxu0 0.0
  %41 = vmatprep.subr.mxu0 0.0
  %42 = vmatpush1.msra.mxu0 0.0
  %43 = vmatprep.subr.mxu0 0.0
  %44 = vmatpush1.msra.mxu0 0.0
  %45 = vmatprep.subr.mxu0 0.0
  %46 = vmatpush1.msra.mxu0 0.0
  %47 = vmatprep.subr.mxu0 0.0
  %48 = vmatpush1.msra.mxu0 0.0
  %49 = vmatprep.subr.mxu0 0.0
  %50 = vmatpush1.msra.mxu0 0.0
  %51 = vmatprep.subr.mxu0 0.0
  %52 = vmatpush1.msra.mxu0 0.0
  %53 = vmatprep.subr.mxu0 0.0
  %54 = vmatpush1.msra.mxu0 0.0
  %55 = vmatprep.subr.mxu0 0.0
  %56 = vmatpush1.msra.mxu0 0.0
  %57 = vmatprep.subr.mxu0 0.0
  %58 = vmatpush1.msra.mxu0 0.0
  %59 = vmatprep.subr.mxu0 0.0
  %60 = vmatpush1.msra.mxu0 0.0
  %61 = vmatprep.subr.mxu0 0.0
  %62 = vmatpush1.msra.mxu0 0.0
  %63 = vmatprep.subr.mxu0 0.0
  %64 = vmatpush1.msra.mxu0 0.0
  %65 = vmatprep.subr.mxu0 0.0
  %66 = vmatpush1.msra.mxu0 %v19
  %67 = vmatprep.subr.mxu0 0.0
  %68 = vmatpush1.msra.mxu0 %v18
  %69 = vmatprep.subr.mxu0 0.0
  %70 = vmatpush2.msra.mxu0 0.0
  %71 = vmatprep.subr.mxu0 0.0
  %72 = vmatpush2.msra.mxu0 0.0
  %73 = vmatprep.subr.mxu0 0.0
  %74 = vmatpush2.msra.mxu0 0.0
  %75 = vmatprep.subr.mxu0 0.0
  %76 = vmatpush2.msra.mxu0 0.0
  %77 = vmatprep.subr.mxu0 0.0
  %78 = vmatpush2.msra.mxu0 0.0
  %79 = vmatprep.subr.mxu0 0.0
  %80 = vmatpush2.msra.mxu0 0.0
  %81 = vmatprep.subr.mxu0 0.0
  %82 = vmatpush2.msra.mxu0 0.0
  %83 = vmatprep.subr.mxu0 0.0
  %84 = vmatpush2.msra.mxu0 0.0
  %85 = vmatprep.subr.mxu0 0.0
  %86 = vmatpush2.msra.mxu0 0.0
  %87 = vmatprep.subr.mxu0 0.0
  %88 = vmatpush2.msra.mxu0 0.0
  %89 = vmatprep.subr.mxu0 0.0
  %90 = vmatpush2.msra.mxu0 0.0
  %91 = vmatprep.subr.mxu0 0.0
  %92 = vmatpush2.msra.mxu0 0.0
  %93 = vmatprep.subr.mxu0 0.0
  %94 = vmatpush2.msra.mxu0 0.0
  %95 = vmatprep.subr.mxu0 0.0
  %96 = vmatpush2.msra.mxu0 0.0
  %97 = vmatprep.subr.mxu0 0.0
  %98 = vmatpush2.msra.mxu0 0.0
  %99 = vmatprep.subr.mxu0 0.0
  %100 = vmatpush2.msra.mxu0 0.0
  %101 = vmatprep.mubr.f32.mxu0 0.0
  %102 = vmatmul.mubr.f32.gmra.mxu0 %v32
  %v103 = vpop.f32.mrf.mxu0
  %v104 = vadd.f32 0.0, %v103
  %v105 = vpop.f32.mrf.mxu0
  %106 = vmatprep.mubr.f32.mxu0 0.0
  %107 = vmatmul.mubr.f32.gmra.mxu0 %v35
  %v108 = vpop.f32.mrf.mxu0
  %v109 = vadd.f32 0.0, %v108
  %v110 = vpop.f32.mrf.mxu0
  %111 = vdwg.mxu0
  %v112 = vmul.f32 %v104, 0.00295858
  %vm115 = vcmask 1040384
  %v116 = vrot.slane %v18, 7
  %v117 = vrot.slane %v19, 7
  %v118 = vsel %vm115, %v116, %v117
  %v121 = vmul.f32 %v104, %v116
  %v122 = vmul.f32 %v109, %v118
  %vm125 = vcmask 1046528
  %v126 = vrot.slane %v121, 1
  %v127 = vrot.slane %v122, 1
  %v128 = vsel %vm125, %v126, %v127
  %v131 = vsel %vm30, %v128, 0.0
  %vm132 = vcmask 122880
  %v133 = vsel %vm132, %v127, 0.0
  %v134 = vadd.f32 %v131, %v133
  %v135 = vrot.slane %v134, 4
  %v136 = vadd.f32 %v134, %v135
  %v137 = vrot.slane %v136, 2
  %v138 = vadd.f32 %v136, %v137
  %v139 = vrot.slane %v138, 1
  %v140 = vadd.f32 %v138, %v139
  %v141 = vmul.f32 %v140, 0.00295858
  %v142 = vmul.f32 %v112, %v112
  %v143 = vsub.f32 %v141, %v142
  %v144 = vmax.f32 %v143, 0.0
  %v145 = vadd.f32 %v144, 1e-05
  %v146 = vrsqrt.pop %v145
  %v147 = vmul.f32 %v22, %v146
  %v148 = vmul.f32 %v112, %v147
  %v149 = vsub.f32 %v23, %v148
  %v150 = vpack.c.bf16 %v19, %v18
  %v151 = vld [vmem:[%s0] sm:$0xff]
  %v152 = vld [vmem:[%s0 + $0x8] sm:$0xff]
  %v153 = vld [vmem:[%s0 + $0x10] sm:$0xff]
  %v154 = vld [vmem:[%s0 + $0x18] sm:$0xff]
  %v155 = vld [vmem:[%s0 + $0x20] sm:$0xff]
  %v156 = vld [vmem:[%s0 + $0x28] sm:$0xff]
  %v157 = vld [vmem:[%s0 + $0x30] sm:$0x3]
  %v158 = vpack.c.bf16 %v152, %v151
  %v159 = vpack.c.bf16 %v154, %v153
  %v160 = vpack.c.bf16 %v156, %v155
  %v161 = vpack.c.bf16 %v157, %v157
  %v163 = vsel %vm30, %v158, 0
  %v166 = vsel %vm30, %v159, 0
  %v169 = vsel %vm30, %v160, 0
  %v172 = vsel %vm30, %v161, 0
  %174 = vmatprep.subr.bf16.mxu0 0
  %175 = vmatpush1.bf16.msra.mxu0 0
  %176 = vmatprep.subr.bf16.mxu0 0
  %177 = vmatpush1.bf16.msra.mxu0 0
  %178 = vmatprep.subr.bf16.mxu0 0
  %179 = vmatpush1.bf16.msra.mxu0 0
  %180 = vmatprep.subr.bf16.mxu0 0
  %181 = vmatpush1.bf16.msra.mxu0 0
  %182 = vmatprep.subr.bf16.mxu0 0
  %183 = vmatpush1.bf16.msra.mxu0 0
  %184 = vmatprep.subr.bf16.mxu0 0
  %185 = vmatpush1.bf16.msra.mxu0 0
  %186 = vmatprep.subr.bf16.mxu0 0
  %187 = vmatpush1.bf16.msra.mxu0 0
  %188 = vmatprep.subr.bf16.mxu0 0
  %189 = vmatpush1.bf16.msra.mxu0 %v150
  %190 = vmatprep.subr.bf16.mxu0 0
  %191 = vmatpush2.bf16.msra.mxu0 0
  %192 = vmatprep.subr.bf16.mxu0 0
  %193 = vmatpush2.bf16.msra.mxu0 0
  %194 = vmatprep.subr.bf16.mxu0 0
  %195 = vmatpush2.bf16.msra.mxu0 0
  %196 = vmatprep.subr.bf16.mxu0 0
  %197 = vmatpush2.bf16.msra.mxu0 0
  %198 = vmatprep.subr.bf16.mxu0 0
  %199 = vmatpush2.bf16.msra.mxu0 0
  %200 = vmatprep.subr.bf16.mxu0 0
  %201 = vmatpush2.bf16.msra.mxu0 0
  %202 = vmatprep.subr.bf16.mxu0 0
  %203 = vmatpush2.bf16.msra.mxu0 0
  %204 = vmatprep.subr.bf16.mxu0 0
  %205 = vmatpush2.bf16.msra.mxu0 0
  %206 = vmatprep.mubr.bf16.mxu0 0
  %207 = vmatmul.mubr.bf16.gmra.mxu0 %v163
  %v208 = vpop.f32.mrf.mxu0
  %v209 = vadd.f32 0.0, %v208
  %v210 = vpop.f32.mrf.mxu0
  %v211 = vpop.f32.mrf.mxu0
  %v212 = vadd.f32 0.0, %v211
  %v213 = vpop.f32.mrf.mxu0
  %214 = vmatprep.mubr.bf16.mxu0 0
  %215 = vmatmul.mubr.bf16.gmra.mxu0 %v166
  %v216 = vpop.f32.mrf.mxu0
  %v217 = vadd.f32 0.0, %v216
  %v218 = vpop.f32.mrf.mxu0
  %v219 = vpop.f32.mrf.mxu0
  %v220 = vadd.f32 0.0, %v219
  %v221 = vpop.f32.mrf.mxu0
  %222 = vmatprep.mubr.bf16.mxu0 0
  %223 = vmatmul.mubr.bf16.gmra.mxu0 %v169
  %v224 = vpop.f32.mrf.mxu0
  %v225 = vadd.f32 0.0, %v224
  %v226 = vpop.f32.mrf.mxu0
  %v227 = vpop.f32.mrf.mxu0
  %v228 = vadd.f32 0.0, %v227
  %v229 = vpop.f32.mrf.mxu0
  %230 = vmatprep.mubr.bf16.mxu0 0
  %231 = vmatmul.mubr.bf16.gmra.mxu0 %v172
  %v232 = vpop.f32.mrf.mxu0
  %v233 = vadd.f32 0.0, %v232
  %v234 = vpop.f32.mrf.mxu0
  %v235 = vpop.f32.mrf.mxu0
  %v236 = vpop.f32.mrf.mxu0
  %237 = vdwg.mxu0
  %v238 = vlaneseq
  %v239 = vshrl.u32 %v238, 7
  %v240 = vsub.s32 0, %v239
  %v241 = vrot.slane %v147, %v240
  %v242 = vmul.f32 %v209, %v241
  %v243 = vmul.f32 %v212, %v241
  %v244 = vmul.f32 %v217, %v241
  %v245 = vmul.f32 %v220, %v241
  %v246 = vmul.f32 %v225, %v241
  %v247 = vmul.f32 %v228, %v241
  %v248 = vmul.f32 %v233, %v241
  %v249 = vlaneseq
  %v250 = vshrl.u32 %v249, 7
  %v251 = vsub.s32 0, %v250
  %v252 = vrot.slane %v149, %v251
  %v253 = vadd.f32 %v242, %v252
  %v254 = vadd.f32 %v243, %v252
  %v255 = vadd.f32 %v244, %v252
  %v256 = vadd.f32 %v245, %v252
  %v257 = vadd.f32 %v246, %v252
  %v258 = vadd.f32 %v247, %v252
  %v259 = vadd.f32 %v248, %v252
  %vm260 = vcmp.ge.f32.partialorder %v253, 0.0
  %vm261 = vcmp.ge.f32.partialorder %v254, 0.0
  %vm262 = vcmp.ge.f32.partialorder %v255, 0.0
  %vm263 = vcmp.ge.f32.partialorder %v256, 0.0
  %vm264 = vcmp.ge.f32.partialorder %v257, 0.0
  %vm265 = vcmp.ge.f32.partialorder %v258, 0.0
  %vm266 = vcmp.ge.f32.partialorder %v259, 0.0
  %v267 = vmul.f32 %v253, 0.2
  %v268 = vmul.f32 %v254, 0.2
  %v269 = vmul.f32 %v255, 0.2
  %v270 = vmul.f32 %v256, 0.2
  %v271 = vmul.f32 %v257, 0.2
  %v272 = vmul.f32 %v258, 0.2
  %v273 = vmul.f32 %v259, 0.2
  %v274 = vsel %vm260, %v253, %v267
  %v275 = vsel %vm261, %v254, %v268
  %v276 = vsel %vm262, %v255, %v269
  %v277 = vsel %vm263, %v256, %v270
  %v278 = vsel %vm264, %v257, %v271
  %v279 = vsel %vm265, %v258, %v272
  %v280 = vsel %vm266, %v259, %v273
  %v281 = vpack.c.bf16 %v275, %v274
  %v282 = vpack.c.bf16 %v277, %v276
  %v283 = vpack.c.bf16 %v279, %v278
  %v284 = vpack.c.bf16 %v280, %v280
  %v285 = vld [vmem:[%s1] sm:$0xf]
  %v286 = vld [vmem:[%s1 + $0x4] sm:$0xf]
  %s287 = scalar_lea.vmem %s0, 56
  %v288 = vld [vmem:[%s287] sm:$0xff]
  %v289 = vld [vmem:[%s287 + $0x8] sm:$0xff]
  %v290 = vld [vmem:[%s287 + $0x10] sm:$0xff]
  %v291 = vld [vmem:[%s287 + $0x18] sm:$0xff]
  %v292 = vld [vmem:[%s287 + $0x20] sm:$0xff]
  %v293 = vld [vmem:[%s287 + $0x28] sm:$0xff]
  %v294 = vld [vmem:[%s287 + $0x30] sm:$0x3]
  %v295 = vpack.c.bf16 %v289, %v288
  %v296 = vpack.c.bf16 %v291, %v290
  %v297 = vpack.c.bf16 %v293, %v292
  %v298 = vpack.c.bf16 %v294, %v294
  %v300 = vsel %vm30, %v295, 0
  %v303 = vsel %vm30, %v296, 0
  %v306 = vsel %vm30, %v297, 0
  %v309 = vsel %vm30, %v298, 0
  %311 = vmatprep.subr.bf16.mxu0 0
  %312 = vmatpush1.bf16.msra.mxu0 0
  %313 = vmatprep.subr.bf16.mxu0 0
  %314 = vmatpush1.bf16.msra.mxu0 0
  %315 = vmatprep.subr.bf16.mxu0 0
  %316 = vmatpush1.bf16.msra.mxu0 0
  %317 = vmatprep.subr.bf16.mxu0 0
  %318 = vmatpush1.bf16.msra.mxu0 0
  %319 = vmatprep.subr.bf16.mxu0 0
  %320 = vmatpush1.bf16.msra.mxu0 0
  %321 = vmatprep.subr.bf16.mxu0 0
  %322 = vmatpush1.bf16.msra.mxu0 0
  %323 = vmatprep.subr.bf16.mxu0 0
  %324 = vmatpush1.bf16.msra.mxu0 0
  %325 = vmatprep.subr.bf16.mxu0 0
  %326 = vmatpush1.bf16.msra.mxu0 %v150
  %327 = vmatprep.subr.bf16.mxu0 0
  %328 = vmatpush2.bf16.msra.mxu0 0
  %329 = vmatprep.subr.bf16.mxu0 0
  %330 = vmatpush2.bf16.msra.mxu0 0
  %331 = vmatprep.subr.bf16.mxu0 0
  %332 = vmatpush2.bf16.msra.mxu0 0
  %333 = vmatprep.subr.bf16.mxu0 0
  %334 = vmatpush2.bf16.msra.mxu0 0
  %335 = vmatprep.subr.bf16.mxu0 0
  %336 = vmatpush2.bf16.msra.mxu0 0
  %337 = vmatprep.subr.bf16.mxu0 0
  %338 = vmatpush2.bf16.msra.mxu0 0
  %339 = vmatprep.subr.bf16.mxu0 0
  %340 = vmatpush2.bf16.msra.mxu0 0
  %341 = vmatprep.subr.bf16.mxu0 0
  %342 = vmatpush2.bf16.msra.mxu0 0
  %343 = vmatprep.mubr.bf16.mxu0 0
  %344 = vmatmul.mubr.bf16.gmra.mxu0 %v300
  %v345 = vpop.f32.mrf.mxu0
  %v346 = vadd.f32 0.0, %v345
  %v347 = vpop.f32.mrf.mxu0
  %v348 = vpop.f32.mrf.mxu0
  %v349 = vadd.f32 0.0, %v348
  %v350 = vpop.f32.mrf.mxu0
  %351 = vmatprep.mubr.bf16.mxu0 0
  %352 = vmatmul.mubr.bf16.gmra.mxu0 %v303
  %v353 = vpop.f32.mrf.mxu0
  %v354 = vadd.f32 0.0, %v353
  %v355 = vpop.f32.mrf.mxu0
  %v356 = vpop.f32.mrf.mxu0
  %v357 = vadd.f32 0.0, %v356
  %v358 = vpop.f32.mrf.mxu0
  %359 = vmatprep.mubr.bf16.mxu0 0
  %360 = vmatmul.mubr.bf16.gmra.mxu0 %v306
  %v361 = vpop.f32.mrf.mxu0
  %v362 = vadd.f32 0.0, %v361
  %v363 = vpop.f32.mrf.mxu0
  %v364 = vpop.f32.mrf.mxu0
  %v365 = vadd.f32 0.0, %v364
  %v366 = vpop.f32.mrf.mxu0
  %367 = vmatprep.mubr.bf16.mxu0 0
  %368 = vmatmul.mubr.bf16.gmra.mxu0 %v309
  %v369 = vpop.f32.mrf.mxu0
  %v370 = vadd.f32 0.0, %v369
  %v371 = vpop.f32.mrf.mxu0
  %v372 = vpop.f32.mrf.mxu0
  %v373 = vpop.f32.mrf.mxu0
  %374 = vdwg.mxu0
  %v375 = vmul.f32 %v346, %v241
  %v376 = vmul.f32 %v349, %v241
  %v377 = vmul.f32 %v354, %v241
  %v378 = vmul.f32 %v357, %v241
  %v379 = vmul.f32 %v362, %v241
  %v380 = vmul.f32 %v365, %v241
  %v381 = vmul.f32 %v370, %v241
  %v382 = vadd.f32 %v375, %v252
  %v383 = vadd.f32 %v376, %v252
  %v384 = vadd.f32 %v377, %v252
  %v385 = vadd.f32 %v378, %v252
  %v386 = vadd.f32 %v379, %v252
  %v387 = vadd.f32 %v380, %v252
  %v388 = vadd.f32 %v381, %v252
  %vm389 = vcmp.ge.f32.partialorder %v382, 0.0
  %vm390 = vcmp.ge.f32.partialorder %v383, 0.0
  %vm391 = vcmp.ge.f32.partialorder %v384, 0.0
  %vm392 = vcmp.ge.f32.partialorder %v385, 0.0
  %vm393 = vcmp.ge.f32.partialorder %v386, 0.0
  %vm394 = vcmp.ge.f32.partialorder %v387, 0.0
  %vm395 = vcmp.ge.f32.partialorder %v388, 0.0
  %v396 = vmul.f32 %v382, 0.2
  %v397 = vmul.f32 %v383, 0.2
  %v398 = vmul.f32 %v384, 0.2
  %v399 = vmul.f32 %v385, 0.2
  %v400 = vmul.f32 %v386, 0.2
  %v401 = vmul.f32 %v387, 0.2
  %v402 = vmul.f32 %v388, 0.2
  %v403 = vsel %vm389, %v382, %v396
  %v404 = vsel %vm390, %v383, %v397
  %v405 = vsel %vm391, %v384, %v398
  %v406 = vsel %vm392, %v385, %v399
  %v407 = vsel %vm393, %v386, %v400
  %v408 = vsel %vm394, %v387, %v401
  %v409 = vsel %vm395, %v388, %v402
  %v410 = vpack.c.bf16 %v404, %v403
  %v411 = vpack.c.bf16 %v406, %v405
  %v412 = vpack.c.bf16 %v408, %v407
  %v413 = vpack.c.bf16 %v409, %v409
  %s414 = scalar_lea.vmem %s1, 8
  %v415 = vld [vmem:[%s414] sm:$0xf]
  %v416 = vld [vmem:[%s414 + $0x4] sm:$0xf]
  %v419 = vunpack.c.l.b16 %v415
  %v420 = vunpack.c.l.b16 %v416
  %v421 = vpack.c.b16 %v420, %v419
  %v424 = vsel %vm30, %v410, 0
  %v427 = vsel %vm30, %v411, 0
  %v430 = vsel %vm30, %v412, 0
  %v433 = vsel %vm30, %v413, 0
  %435 = vmatprep.subr.bf16.mxu0 0
  %436 = vmatpush1.bf16.msra.mxu0 0
  %437 = vmatprep.subr.bf16.mxu0 0
  %438 = vmatpush1.bf16.msra.mxu0 0
  %439 = vmatprep.subr.bf16.mxu0 0
  %440 = vmatpush1.bf16.msra.mxu0 0
  %441 = vmatprep.subr.bf16.mxu0 0
  %442 = vmatpush1.bf16.msra.mxu0 0
  %443 = vmatprep.subr.bf16.mxu0 0
  %444 = vmatpush1.bf16.msra.mxu0 0
  %445 = vmatprep.subr.bf16.mxu0 0
  %446 = vmatpush1.bf16.msra.mxu0 0
  %447 = vmatprep.subr.bf16.mxu0 0
  %448 = vmatpush1.bf16.msra.mxu0 0
  %449 = vmatprep.subr.bf16.mxu0 0
  %450 = vmatpush1.bf16.msra.mxu0 %v421
  %451 = vmatprep.subr.bf16.mxu0 0
  %452 = vmatpush2.bf16.msra.mxu0 0
  %453 = vmatprep.subr.bf16.mxu0 0
  %454 = vmatpush2.bf16.msra.mxu0 0
  %455 = vmatprep.subr.bf16.mxu0 0
  %456 = vmatpush2.bf16.msra.mxu0 0
  %457 = vmatprep.subr.bf16.mxu0 0
  %458 = vmatpush2.bf16.msra.mxu0 0
  %459 = vmatprep.subr.bf16.mxu0 0
  %460 = vmatpush2.bf16.msra.mxu0 0
  %461 = vmatprep.subr.bf16.mxu0 0
  %462 = vmatpush2.bf16.msra.mxu0 0
  %463 = vmatprep.subr.bf16.mxu0 0
  %464 = vmatpush2.bf16.msra.mxu0 0
  %465 = vmatprep.subr.bf16.mxu0 0
  %466 = vmatpush2.bf16.msra.mxu0 0
  %467 = vmatprep.mubr.bf16.mxu0 0
  %468 = vmatmul.mubr.bf16.gmra.mxu0 %v424
  %v469 = vpop.f32.mrf.mxu0
  %v470 = vadd.f32 0.0, %v469
  %v471 = vpop.f32.mrf.mxu0
  %v472 = vpop.f32.mrf.mxu0
  %v473 = vadd.f32 0.0, %v472
  %v474 = vpop.f32.mrf.mxu0
  %475 = vmatprep.mubr.bf16.mxu0 0
  %476 = vmatmul.mubr.bf16.gmra.mxu0 %v427
  %v477 = vpop.f32.mrf.mxu0
  %v478 = vadd.f32 0.0, %v477
  %v479 = vpop.f32.mrf.mxu0
  %v480 = vpop.f32.mrf.mxu0
  %v481 = vadd.f32 0.0, %v480
  %v482 = vpop.f32.mrf.mxu0
  %483 = vmatprep.mubr.bf16.mxu0 0
  %484 = vmatmul.mubr.bf16.gmra.mxu0 %v430
  %v485 = vpop.f32.mrf.mxu0
  %v486 = vadd.f32 0.0, %v485
  %v487 = vpop.f32.mrf.mxu0
  %v488 = vpop.f32.mrf.mxu0
  %v489 = vadd.f32 0.0, %v488
  %v490 = vpop.f32.mrf.mxu0
  %491 = vmatprep.mubr.bf16.mxu0 0
  %492 = vmatmul.mubr.bf16.gmra.mxu0 %v433
  %v493 = vpop.f32.mrf.mxu0
  %v494 = vadd.f32 0.0, %v493
  %v495 = vpop.f32.mrf.mxu0
  %v496 = vpop.f32.mrf.mxu0
  %v497 = vpop.f32.mrf.mxu0
  %498 = vdwg.mxu0
  %v501 = vunpack.c.l.b16 %v285
  %v502 = vunpack.c.l.b16 %v286
  %v503 = vpack.c.b16 %v502, %v501
  %v506 = vsel %vm30, %v281, 0
  %v509 = vsel %vm30, %v282, 0
  %v512 = vsel %vm30, %v283, 0
  %v515 = vsel %vm30, %v284, 0
  %517 = vmatprep.subr.bf16.mxu0 0
  %518 = vmatpush1.bf16.msra.mxu0 0
  %519 = vmatprep.subr.bf16.mxu0 0
  %520 = vmatpush1.bf16.msra.mxu0 0
  %521 = vmatprep.subr.bf16.mxu0 0
  %522 = vmatpush1.bf16.msra.mxu0 0
  %523 = vmatprep.subr.bf16.mxu0 0
  %524 = vmatpush1.bf16.msra.mxu0 0
  %525 = vmatprep.subr.bf16.mxu0 0
  %526 = vmatpush1.bf16.msra.mxu0 0
  %527 = vmatprep.subr.bf16.mxu0 0
  %528 = vmatpush1.bf16.msra.mxu0 0
  %529 = vmatprep.subr.bf16.mxu0 0
  %530 = vmatpush1.bf16.msra.mxu0 0
  %531 = vmatprep.subr.bf16.mxu0 0
  %532 = vmatpush1.bf16.msra.mxu0 %v503
  %533 = vmatprep.subr.bf16.mxu0 0
  %534 = vmatpush2.bf16.msra.mxu0 0
  %535 = vmatprep.subr.bf16.mxu0 0
  %536 = vmatpush2.bf16.msra.mxu0 0
  %537 = vmatprep.subr.bf16.mxu0 0
  %538 = vmatpush2.bf16.msra.mxu0 0
  %539 = vmatprep.subr.bf16.mxu0 0
  %540 = vmatpush2.bf16.msra.mxu0 0
  %541 = vmatprep.subr.bf16.mxu0 0
  %542 = vmatpush2.bf16.msra.mxu0 0
  %543 = vmatprep.subr.bf16.mxu0 0
  %544 = vmatpush2.bf16.msra.mxu0 0
  %545 = vmatprep.subr.bf16.mxu0 0
  %546 = vmatpush2.bf16.msra.mxu0 0
  %547 = vmatprep.subr.bf16.mxu0 0
  %548 = vmatpush2.bf16.msra.mxu0 0
  %549 = vmatprep.mubr.bf16.mxu0 0
  %550 = vmatmul.mubr.bf16.gmra.mxu0 %v506
  %v551 = vpop.f32.mrf.mxu0
  %v552 = vadd.f32 %v470, %v551
  %v553 = vpop.f32.mrf.mxu0
  %v554 = vpop.f32.mrf.mxu0
  %v555 = vadd.f32 %v473, %v554
  %v556 = vpop.f32.mrf.mxu0
  %557 = vmatprep.mubr.bf16.mxu0 0
  %558 = vmatmul.mubr.bf16.gmra.mxu0 %v509
  %v559 = vpop.f32.mrf.mxu0
  %v560 = vadd.f32 %v478, %v559
  %v561 = vpop.f32.mrf.mxu0
  %v562 = vpop.f32.mrf.mxu0
  %v563 = vadd.f32 %v481, %v562
  %v564 = vpop.f32.mrf.mxu0
  %565 = vmatprep.mubr.bf16.mxu0 0
  %566 = vmatmul.mubr.bf16.gmra.mxu0 %v512
  %v567 = vpop.f32.mrf.mxu0
  %v568 = vadd.f32 %v486, %v567
  %v569 = vpop.f32.mrf.mxu0
  %v570 = vpop.f32.mrf.mxu0
  %v571 = vadd.f32 %v489, %v570
  %v572 = vpop.f32.mrf.mxu0
  %573 = vmatprep.mubr.bf16.mxu0 0
  %574 = vmatmul.mubr.bf16.gmra.mxu0 %v515
  %v575 = vpop.f32.mrf.mxu0
  %v576 = vadd.f32 %v494, %v575
  %v577 = vpop.f32.mrf.mxu0
  %v578 = vpop.f32.mrf.mxu0
  %v579 = vpop.f32.mrf.mxu0
  %580 = vdwg.mxu0
  %s581 = scalar_lea.vmem %s0, 112
  %v582 = vld [vmem:[%s581] sm:$0xff]
  %v583 = vld [vmem:[%s581 + $0x8] sm:$0xff]
  %v584 = vld [vmem:[%s581 + $0x10] sm:$0xff]
  %v585 = vld [vmem:[%s581 + $0x18] sm:$0xff]
  %v586 = vld [vmem:[%s581 + $0x20] sm:$0xff]
  %v587 = vld [vmem:[%s581 + $0x28] sm:$0xff]
  %v588 = vld [vmem:[%s581 + $0x30] sm:$0x3]
  %v589 = vpack.c.bf16 %v583, %v582
  %v590 = vpack.c.bf16 %v585, %v584
  %v591 = vpack.c.bf16 %v587, %v586
  %v592 = vpack.c.bf16 %v588, %v588
  %v594 = vsel %vm30, %v589, 0
  %v597 = vsel %vm30, %v590, 0
  %v600 = vsel %vm30, %v591, 0
  %v603 = vsel %vm30, %v592, 0
  %605 = vmatprep.subr.bf16.mxu0 0
  %606 = vmatpush1.bf16.msra.mxu0 0
  %607 = vmatprep.subr.bf16.mxu0 0
  %608 = vmatpush1.bf16.msra.mxu0 0
  %609 = vmatprep.subr.bf16.mxu0 0
  %610 = vmatpush1.bf16.msra.mxu0 0
  %611 = vmatprep.subr.bf16.mxu0 0
  %612 = vmatpush1.bf16.msra.mxu0 0
  %613 = vmatprep.subr.bf16.mxu0 0
  %614 = vmatpush1.bf16.msra.mxu0 0
  %615 = vmatprep.subr.bf16.mxu0 0
  %616 = vmatpush1.bf16.msra.mxu0 0
  %617 = vmatprep.subr.bf16.mxu0 0
  %618 = vmatpush1.bf16.msra.mxu0 0
  %619 = vmatprep.subr.bf16.mxu0 0
  %620 = vmatpush1.bf16.msra.mxu0 %v150
  %621 = vmatprep.subr.bf16.mxu0 0
  %622 = vmatpush2.bf16.msra.mxu0 0
  %623 = vmatprep.subr.bf16.mxu0 0
  %624 = vmatpush2.bf16.msra.mxu0 0
  %625 = vmatprep.subr.bf16.mxu0 0
  %626 = vmatpush2.bf16.msra.mxu0 0
  %627 = vmatprep.subr.bf16.mxu0 0
  %628 = vmatpush2.bf16.msra.mxu0 0
  %629 = vmatprep.subr.bf16.mxu0 0
  %630 = vmatpush2.bf16.msra.mxu0 0
  %631 = vmatprep.subr.bf16.mxu0 0
  %632 = vmatpush2.bf16.msra.mxu0 0
  %633 = vmatprep.subr.bf16.mxu0 0
  %634 = vmatpush2.bf16.msra.mxu0 0
  %635 = vmatprep.subr.bf16.mxu0 0
  %636 = vmatpush2.bf16.msra.mxu0 0
  %637 = vmatprep.mubr.bf16.mxu0 0
  %638 = vmatmul.mubr.bf16.gmra.mxu0 %v594
  %v639 = vpop.f32.mrf.mxu0
  %v640 = vadd.f32 0.0, %v639
  %v641 = vpop.f32.mrf.mxu0
  %v642 = vpop.f32.mrf.mxu0
  %v643 = vadd.f32 0.0, %v642
  %v644 = vpop.f32.mrf.mxu0
  %645 = vmatprep.mubr.bf16.mxu0 0
  %646 = vmatmul.mubr.bf16.gmra.mxu0 %v597
  %v647 = vpop.f32.mrf.mxu0
  %v648 = vadd.f32 0.0, %v647
  %v649 = vpop.f32.mrf.mxu0
  %v650 = vpop.f32.mrf.mxu0
  %v651 = vadd.f32 0.0, %v650
  %v652 = vpop.f32.mrf.mxu0
  %653 = vmatprep.mubr.bf16.mxu0 0
  %654 = vmatmul.mubr.bf16.gmra.mxu0 %v600
  %v655 = vpop.f32.mrf.mxu0
  %v656 = vadd.f32 0.0, %v655
  %v657 = vpop.f32.mrf.mxu0
  %v658 = vpop.f32.mrf.mxu0
  %v659 = vadd.f32 0.0, %v658
  %v660 = vpop.f32.mrf.mxu0
  %661 = vmatprep.mubr.bf16.mxu0 0
  %662 = vmatmul.mubr.bf16.gmra.mxu0 %v603
  %v663 = vpop.f32.mrf.mxu0
  %v664 = vadd.f32 0.0, %v663
  %v665 = vpop.f32.mrf.mxu0
  %v666 = vpop.f32.mrf.mxu0
  %v667 = vpop.f32.mrf.mxu0
  %668 = vdwg.mxu0
  %v669 = vmul.f32 %v640, %v241
  %v670 = vmul.f32 %v643, %v241
  %v671 = vmul.f32 %v648, %v241
  %v672 = vmul.f32 %v651, %v241
  %v673 = vmul.f32 %v656, %v241
  %v674 = vmul.f32 %v659, %v241
  %v675 = vmul.f32 %v664, %v241
  %v676 = vadd.f32 %v669, %v252
  %v677 = vadd.f32 %v670, %v252
  %v678 = vadd.f32 %v671, %v252
  %v679 = vadd.f32 %v672, %v252
  %v680 = vadd.f32 %v673, %v252
  %v681 = vadd.f32 %v674, %v252
  %v682 = vadd.f32 %v675, %v252
  %vm683 = vcmp.ge.f32.partialorder %v676, 0.0
  %vm684 = vcmp.ge.f32.partialorder %v677, 0.0
  %vm685 = vcmp.ge.f32.partialorder %v678, 0.0
  %vm686 = vcmp.ge.f32.partialorder %v679, 0.0
  %vm687 = vcmp.ge.f32.partialorder %v680, 0.0
  %vm688 = vcmp.ge.f32.partialorder %v681, 0.0
  %vm689 = vcmp.ge.f32.partialorder %v682, 0.0
  %v690 = vmul.f32 %v676, 0.2
  %v691 = vmul.f32 %v677, 0.2
  %v692 = vmul.f32 %v678, 0.2
  %v693 = vmul.f32 %v679, 0.2
  %v694 = vmul.f32 %v680, 0.2
  %v695 = vmul.f32 %v681, 0.2
  %v696 = vmul.f32 %v682, 0.2
  %v697 = vsel %vm683, %v676, %v690
  %v698 = vsel %vm684, %v677, %v691
  %v699 = vsel %vm685, %v678, %v692
  %v700 = vsel %vm686, %v679, %v693
  %v701 = vsel %vm687, %v680, %v694
  %v702 = vsel %vm688, %v681, %v695
  %v703 = vsel %vm689, %v682, %v696
  %v704 = vpack.c.bf16 %v698, %v697
  %v705 = vpack.c.bf16 %v700, %v699
  %v706 = vpack.c.bf16 %v702, %v701
  %v707 = vpack.c.bf16 %v703, %v703
  %s708 = scalar_lea.vmem %s1, 16
  %v709 = vld [vmem:[%s708] sm:$0xf]
  %v710 = vld [vmem:[%s708 + $0x4] sm:$0xf]
  %v713 = vunpack.c.l.b16 %v709
  %v714 = vunpack.c.l.b16 %v710
  %v715 = vpack.c.b16 %v714, %v713
  %v718 = vsel %vm30, %v704, 0
  %v721 = vsel %vm30, %v705, 0
  %v724 = vsel %vm30, %v706, 0
  %v727 = vsel %vm30, %v707, 0
  %729 = vmatprep.subr.bf16.mxu0 0
  %730 = vmatpush1.bf16.msra.mxu0 0
  %731 = vmatprep.subr.bf16.mxu0 0
  %732 = vmatpush1.bf16.msra.mxu0 0
  %733 = vmatprep.subr.bf16.mxu0 0
  %734 = vmatpush1.bf16.msra.mxu0 0
  %735 = vmatprep.subr.bf16.mxu0 0
  %736 = vmatpush1.bf16.msra.mxu0 0
  %737 = vmatprep.subr.bf16.mxu0 0
  %738 = vmatpush1.bf16.msra.mxu0 0
  %739 = vmatprep.subr.bf16.mxu0 0
  %740 = vmatpush1.bf16.msra.mxu0 0
  %741 = vmatprep.subr.bf16.mxu0 0
  %742 = vmatpush1.bf16.msra.mxu0 0
  %743 = vmatprep.subr.bf16.mxu0 0
  %744 = vmatpush1.bf16.msra.mxu0 %v715
  %745 = vmatprep.subr.bf16.mxu0 0
  %746 = vmatpush2.bf16.msra.mxu0 0
  %747 = vmatprep.subr.bf16.mxu0 0
  %748 = vmatpush2.bf16.msra.mxu0 0
  %749 = vmatprep.subr.bf16.mxu0 0
  %750 = vmatpush2.bf16.msra.mxu0 0
  %751 = vmatprep.subr.bf16.mxu0 0
  %752 = vmatpush2.bf16.msra.mxu0 0
  %753 = vmatprep.subr.bf16.mxu0 0
  %754 = vmatpush2.bf16.msra.mxu0 0
  %755 = vmatprep.subr.bf16.mxu0 0
  %756 = vmatpush2.bf16.msra.mxu0 0
  %757 = vmatprep.subr.bf16.mxu0 0
  %758 = vmatpush2.bf16.msra.mxu0 0
  %759 = vmatprep.subr.bf16.mxu0 0
  %760 = vmatpush2.bf16.msra.mxu0 0
  %761 = vmatprep.mubr.bf16.mxu0 0
  %762 = vmatmul.mubr.bf16.gmra.mxu0 %v718
  %v763 = vpop.f32.mrf.mxu0
  %v764 = vadd.f32 0.0, %v763
  %v765 = vpop.f32.mrf.mxu0
  %v766 = vpop.f32.mrf.mxu0
  %v767 = vadd.f32 0.0, %v766
  %v768 = vpop.f32.mrf.mxu0
  %769 = vmatprep.mubr.bf16.mxu0 0
  %770 = vmatmul.mubr.bf16.gmra.mxu0 %v721
  %v771 = vpop.f32.mrf.mxu0
  %v772 = vadd.f32 0.0, %v771
  %v773 = vpop.f32.mrf.mxu0
  %v774 = vpop.f32.mrf.mxu0
  %v775 = vadd.f32 0.0, %v774
  %v776 = vpop.f32.mrf.mxu0
  %777 = vmatprep.mubr.bf16.mxu0 0
  %778 = vmatmul.mubr.bf16.gmra.mxu0 %v724
  %v779 = vpop.f32.mrf.mxu0
  %v780 = vadd.f32 0.0, %v779
  %v781 = vpop.f32.mrf.mxu0
  %v782 = vpop.f32.mrf.mxu0
  %v783 = vadd.f32 0.0, %v782
  %v784 = vpop.f32.mrf.mxu0
  %785 = vmatprep.mubr.bf16.mxu0 0
  %786 = vmatmul.mubr.bf16.gmra.mxu0 %v727
  %v787 = vpop.f32.mrf.mxu0
  %v788 = vadd.f32 0.0, %v787
  %v789 = vpop.f32.mrf.mxu0
  %v790 = vpop.f32.mrf.mxu0
  %v791 = vpop.f32.mrf.mxu0
  %792 = vdwg.mxu0
  %v793 = vadd.f32 %v552, %v764
  %v794 = vadd.f32 %v555, %v767
  %v795 = vadd.f32 %v560, %v772
  %v796 = vadd.f32 %v563, %v775
  %v797 = vadd.f32 %v568, %v780
  %v798 = vadd.f32 %v571, %v783
  %v799 = vadd.f32 %v576, %v788
  %s800 = scalar_lea.vmem %s0, 168
  %v801 = vld [vmem:[%s800] sm:$0xff]
  %v802 = vld [vmem:[%s800 + $0x8] sm:$0xff]
  %v803 = vld [vmem:[%s800 + $0x10] sm:$0xff]
  %v804 = vld [vmem:[%s800 + $0x18] sm:$0xff]
  %v805 = vld [vmem:[%s800 + $0x20] sm:$0xff]
  %v806 = vld [vmem:[%s800 + $0x28] sm:$0xff]
  %v807 = vld [vmem:[%s800 + $0x30] sm:$0x3]
  %v808 = vpack.c.bf16 %v802, %v801
  %v809 = vpack.c.bf16 %v804, %v803
  %v810 = vpack.c.bf16 %v806, %v805
  %v811 = vpack.c.bf16 %v807, %v807
  %v813 = vsel %vm30, %v808, 0
  %v816 = vsel %vm30, %v809, 0
  %v819 = vsel %vm30, %v810, 0
  %v822 = vsel %vm30, %v811, 0
  %824 = vmatprep.subr.bf16.mxu0 0
  %825 = vmatpush1.bf16.msra.mxu0 0
  %826 = vmatprep.subr.bf16.mxu0 0
  %827 = vmatpush1.bf16.msra.mxu0 0
  %828 = vmatprep.subr.bf16.mxu0 0
  %829 = vmatpush1.bf16.msra.mxu0 0
  %830 = vmatprep.subr.bf16.mxu0 0
  %831 = vmatpush1.bf16.msra.mxu0 0
  %832 = vmatprep.subr.bf16.mxu0 0
  %833 = vmatpush1.bf16.msra.mxu0 0
  %834 = vmatprep.subr.bf16.mxu0 0
  %835 = vmatpush1.bf16.msra.mxu0 0
  %836 = vmatprep.subr.bf16.mxu0 0
  %837 = vmatpush1.bf16.msra.mxu0 0
  %838 = vmatprep.subr.bf16.mxu0 0
  %839 = vmatpush1.bf16.msra.mxu0 %v150
  %840 = vmatprep.subr.bf16.mxu0 0
  %841 = vmatpush2.bf16.msra.mxu0 0
  %842 = vmatprep.subr.bf16.mxu0 0
  %843 = vmatpush2.bf16.msra.mxu0 0
  %844 = vmatprep.subr.bf16.mxu0 0
  %845 = vmatpush2.bf16.msra.mxu0 0
  %846 = vmatprep.subr.bf16.mxu0 0
  %847 = vmatpush2.bf16.msra.mxu0 0
  %848 = vmatprep.subr.bf16.mxu0 0
  %849 = vmatpush2.bf16.msra.mxu0 0
  %850 = vmatprep.subr.bf16.mxu0 0
  %851 = vmatpush2.bf16.msra.mxu0 0
  %852 = vmatprep.subr.bf16.mxu0 0
  %853 = vmatpush2.bf16.msra.mxu0 0
  %854 = vmatprep.subr.bf16.mxu0 0
  %855 = vmatpush2.bf16.msra.mxu0 0
  %856 = vmatprep.mubr.bf16.mxu0 0
  %857 = vmatmul.mubr.bf16.gmra.mxu0 %v813
  %v858 = vpop.f32.mrf.mxu0
  %v859 = vadd.f32 0.0, %v858
  %v860 = vpop.f32.mrf.mxu0
  %v861 = vpop.f32.mrf.mxu0
  %v862 = vadd.f32 0.0, %v861
  %v863 = vpop.f32.mrf.mxu0
  %864 = vmatprep.mubr.bf16.mxu0 0
  %865 = vmatmul.mubr.bf16.gmra.mxu0 %v816
  %v866 = vpop.f32.mrf.mxu0
  %v867 = vadd.f32 0.0, %v866
  %v868 = vpop.f32.mrf.mxu0
  %v869 = vpop.f32.mrf.mxu0
  %v870 = vadd.f32 0.0, %v869
  %v871 = vpop.f32.mrf.mxu0
  %872 = vmatprep.mubr.bf16.mxu0 0
  %873 = vmatmul.mubr.bf16.gmra.mxu0 %v819
  %v874 = vpop.f32.mrf.mxu0
  %v875 = vadd.f32 0.0, %v874
  %v876 = vpop.f32.mrf.mxu0
  %v877 = vpop.f32.mrf.mxu0
  %v878 = vadd.f32 0.0, %v877
  %v879 = vpop.f32.mrf.mxu0
  %880 = vmatprep.mubr.bf16.mxu0 0
  %881 = vmatmul.mubr.bf16.gmra.mxu0 %v822
  %v882 = vpop.f32.mrf.mxu0
  %v883 = vadd.f32 0.0, %v882
  %v884 = vpop.f32.mrf.mxu0
  %v885 = vpop.f32.mrf.mxu0
  %v886 = vpop.f32.mrf.mxu0
  %887 = vdwg.mxu0
  %v888 = vmul.f32 %v859, %v241
  %v889 = vmul.f32 %v862, %v241
  %v890 = vmul.f32 %v867, %v241
  %v891 = vmul.f32 %v870, %v241
  %v892 = vmul.f32 %v875, %v241
  %v893 = vmul.f32 %v878, %v241
  %v894 = vmul.f32 %v883, %v241
  %v895 = vadd.f32 %v888, %v252
  %v896 = vadd.f32 %v889, %v252
  %v897 = vadd.f32 %v890, %v252
  %v898 = vadd.f32 %v891, %v252
  %v899 = vadd.f32 %v892, %v252
  %v900 = vadd.f32 %v893, %v252
  %v901 = vadd.f32 %v894, %v252
  %vm902 = vcmp.ge.f32.partialorder %v895, 0.0
  %vm903 = vcmp.ge.f32.partialorder %v896, 0.0
  %vm904 = vcmp.ge.f32.partialorder %v897, 0.0
  %vm905 = vcmp.ge.f32.partialorder %v898, 0.0
  %vm906 = vcmp.ge.f32.partialorder %v899, 0.0
  %vm907 = vcmp.ge.f32.partialorder %v900, 0.0
  %vm908 = vcmp.ge.f32.partialorder %v901, 0.0
  %v909 = vmul.f32 %v895, 0.2
  %v910 = vmul.f32 %v896, 0.2
  %v911 = vmul.f32 %v897, 0.2
  %v912 = vmul.f32 %v898, 0.2
  %v913 = vmul.f32 %v899, 0.2
  %v914 = vmul.f32 %v900, 0.2
  %v915 = vmul.f32 %v901, 0.2
  %v916 = vsel %vm902, %v895, %v909
  %v917 = vsel %vm903, %v896, %v910
  %v918 = vsel %vm904, %v897, %v911
  %v919 = vsel %vm905, %v898, %v912
  %v920 = vsel %vm906, %v899, %v913
  %v921 = vsel %vm907, %v900, %v914
  %v922 = vsel %vm908, %v901, %v915
  %v923 = vpack.c.bf16 %v917, %v916
  %v924 = vpack.c.bf16 %v919, %v918
  %v925 = vpack.c.bf16 %v921, %v920
  %v926 = vpack.c.bf16 %v922, %v922
  %s927 = scalar_lea.vmem %s1, 24
  %v928 = vld [vmem:[%s927] sm:$0xf]
  %v929 = vld [vmem:[%s927 + $0x4] sm:$0xf]
  %v932 = vunpack.c.l.b16 %v928
  %v933 = vunpack.c.l.b16 %v929
  %v934 = vpack.c.b16 %v933, %v932
  %v937 = vsel %vm30, %v923, 0
  %v940 = vsel %vm30, %v924, 0
  %v943 = vsel %vm30, %v925, 0
  %v946 = vsel %vm30, %v926, 0
  %948 = vmatprep.subr.bf16.mxu0 0
  %949 = vmatpush1.bf16.msra.mxu0 0
  %950 = vmatprep.subr.bf16.mxu0 0
  %951 = vmatpush1.bf16.msra.mxu0 0
  %952 = vmatprep.subr.bf16.mxu0 0
  %953 = vmatpush1.bf16.msra.mxu0 0
  %954 = vmatprep.subr.bf16.mxu0 0
  %955 = vmatpush1.bf16.msra.mxu0 0
  %956 = vmatprep.subr.bf16.mxu0 0
  %957 = vmatpush1.bf16.msra.mxu0 0
  %958 = vmatprep.subr.bf16.mxu0 0
  %959 = vmatpush1.bf16.msra.mxu0 0
  %960 = vmatprep.subr.bf16.mxu0 0
  %961 = vmatpush1.bf16.msra.mxu0 0
  %962 = vmatprep.subr.bf16.mxu0 0
  %963 = vmatpush1.bf16.msra.mxu0 %v934
  %964 = vmatprep.subr.bf16.mxu0 0
  %965 = vmatpush2.bf16.msra.mxu0 0
  %966 = vmatprep.subr.bf16.mxu0 0
  %967 = vmatpush2.bf16.msra.mxu0 0
  %968 = vmatprep.subr.bf16.mxu0 0
  %969 = vmatpush2.bf16.msra.mxu0 0
  %970 = vmatprep.subr.bf16.mxu0 0
  %971 = vmatpush2.bf16.msra.mxu0 0
  %972 = vmatprep.subr.bf16.mxu0 0
  %973 = vmatpush2.bf16.msra.mxu0 0
  %974 = vmatprep.subr.bf16.mxu0 0
  %975 = vmatpush2.bf16.msra.mxu0 0
  %976 = vmatprep.subr.bf16.mxu0 0
  %977 = vmatpush2.bf16.msra.mxu0 0
  %978 = vmatprep.subr.bf16.mxu0 0
  %979 = vmatpush2.bf16.msra.mxu0 0
  %980 = vmatprep.mubr.bf16.mxu0 0
  %981 = vmatmul.mubr.bf16.gmra.mxu0 %v937
  %v982 = vpop.f32.mrf.mxu0
  %v983 = vadd.f32 0.0, %v982
  %v984 = vpop.f32.mrf.mxu0
  %v985 = vpop.f32.mrf.mxu0
  %v986 = vadd.f32 0.0, %v985
  %v987 = vpop.f32.mrf.mxu0
  %988 = vmatprep.mubr.bf16.mxu0 0
  %989 = vmatmul.mubr.bf16.gmra.mxu0 %v940
  %v990 = vpop.f32.mrf.mxu0
  %v991 = vadd.f32 0.0, %v990
  %v992 = vpop.f32.mrf.mxu0
  %v993 = vpop.f32.mrf.mxu0
  %v994 = vadd.f32 0.0, %v993
  %v995 = vpop.f32.mrf.mxu0
  %996 = vmatprep.mubr.bf16.mxu0 0
  %997 = vmatmul.mubr.bf16.gmra.mxu0 %v943
  %v998 = vpop.f32.mrf.mxu0
  %v999 = vadd.f32 0.0, %v998
  %v1000 = vpop.f32.mrf.mxu0
  %v1001 = vpop.f32.mrf.mxu0
  %v1002 = vadd.f32 0.0, %v1001
  %v1003 = vpop.f32.mrf.mxu0
  %1004 = vmatprep.mubr.bf16.mxu0 0
  %1005 = vmatmul.mubr.bf16.gmra.mxu0 %v946
  %v1006 = vpop.f32.mrf.mxu0
  %v1007 = vadd.f32 0.0, %v1006
  %v1008 = vpop.f32.mrf.mxu0
  %v1009 = vpop.f32.mrf.mxu0
  %v1010 = vpop.f32.mrf.mxu0
  %1011 = vdwg.mxu0
  %v1012 = vadd.f32 %v793, %v983
  %v1013 = vadd.f32 %v794, %v986
  %v1014 = vadd.f32 %v795, %v991
  %v1015 = vadd.f32 %v796, %v994
  %v1016 = vadd.f32 %v797, %v999
  %v1017 = vadd.f32 %v798, %v1002
  %v1018 = vadd.f32 %v799, %v1007
  %s1019 = scalar_lea.vmem %s0, 224
  %v1020 = vld [vmem:[%s1019] sm:$0xff]
  %v1021 = vld [vmem:[%s1019 + $0x8] sm:$0xff]
  %v1022 = vld [vmem:[%s1019 + $0x10] sm:$0xff]
  %v1023 = vld [vmem:[%s1019 + $0x18] sm:$0xff]
  %v1024 = vld [vmem:[%s1019 + $0x20] sm:$0xff]
  %v1025 = vld [vmem:[%s1019 + $0x28] sm:$0xff]
  %v1026 = vld [vmem:[%s1019 + $0x30] sm:$0x3]
  %v1027 = vpack.c.bf16 %v1021, %v1020
  %v1028 = vpack.c.bf16 %v1023, %v1022
  %v1029 = vpack.c.bf16 %v1025, %v1024
  %v1030 = vpack.c.bf16 %v1026, %v1026
  %v1032 = vsel %vm30, %v1027, 0
  %v1035 = vsel %vm30, %v1028, 0
  %v1038 = vsel %vm30, %v1029, 0
  %v1041 = vsel %vm30, %v1030, 0
  %1043 = vmatprep.subr.bf16.mxu0 0
  %1044 = vmatpush1.bf16.msra.mxu0 0
  %1045 = vmatprep.subr.bf16.mxu0 0
  %1046 = vmatpush1.bf16.msra.mxu0 0
  %1047 = vmatprep.subr.bf16.mxu0 0
  %1048 = vmatpush1.bf16.msra.mxu0 0
  %1049 = vmatprep.subr.bf16.mxu0 0
  %1050 = vmatpush1.bf16.msra.mxu0 0
  %1051 = vmatprep.subr.bf16.mxu0 0
  %1052 = vmatpush1.bf16.msra.mxu0 0
  %1053 = vmatprep.subr.bf16.mxu0 0
  %1054 = vmatpush1.bf16.msra.mxu0 0
  %1055 = vmatprep.subr.bf16.mxu0 0
  %1056 = vmatpush1.bf16.msra.mxu0 0
  %1057 = vmatprep.subr.bf16.mxu0 0
  %1058 = vmatpush1.bf16.msra.mxu0 %v150
  %1059 = vmatprep.subr.bf16.mxu0 0
  %1060 = vmatpush2.bf16.msra.mxu0 0
  %1061 = vmatprep.subr.bf16.mxu0 0
  %1062 = vmatpush2.bf16.msra.mxu0 0
  %1063 = vmatprep.subr.bf16.mxu0 0
  %1064 = vmatpush2.bf16.msra.mxu0 0
  %1065 = vmatprep.subr.bf16.mxu0 0
  %1066 = vmatpush2.bf16.msra.mxu0 0
  %1067 = vmatprep.subr.bf16.mxu0 0
  %1068 = vmatpush2.bf16.msra.mxu0 0
  %1069 = vmatprep.subr.bf16.mxu0 0
  %1070 = vmatpush2.bf16.msra.mxu0 0
  %1071 = vmatprep.subr.bf16.mxu0 0
  %1072 = vmatpush2.bf16.msra.mxu0 0
  %1073 = vmatprep.subr.bf16.mxu0 0
  %1074 = vmatpush2.bf16.msra.mxu0 0
  %1075 = vmatprep.mubr.bf16.mxu0 0
  %1076 = vmatmul.mubr.bf16.gmra.mxu0 %v1032
  %v1077 = vpop.f32.mrf.mxu0
  %v1078 = vadd.f32 0.0, %v1077
  %v1079 = vpop.f32.mrf.mxu0
  %v1080 = vpop.f32.mrf.mxu0
  %v1081 = vadd.f32 0.0, %v1080
  %v1082 = vpop.f32.mrf.mxu0
  %1083 = vmatprep.mubr.bf16.mxu0 0
  %1084 = vmatmul.mubr.bf16.gmra.mxu0 %v1035
  %v1085 = vpop.f32.mrf.mxu0
  %v1086 = vadd.f32 0.0, %v1085
  %v1087 = vpop.f32.mrf.mxu0
  %v1088 = vpop.f32.mrf.mxu0
  %v1089 = vadd.f32 0.0, %v1088
  %v1090 = vpop.f32.mrf.mxu0
  %1091 = vmatprep.mubr.bf16.mxu0 0
  %1092 = vmatmul.mubr.bf16.gmra.mxu0 %v1038
  %v1093 = vpop.f32.mrf.mxu0
  %v1094 = vadd.f32 0.0, %v1093
  %v1095 = vpop.f32.mrf.mxu0
  %v1096 = vpop.f32.mrf.mxu0
  %v1097 = vadd.f32 0.0, %v1096
  %v1098 = vpop.f32.mrf.mxu0
  %1099 = vmatprep.mubr.bf16.mxu0 0
  %1100 = vmatmul.mubr.bf16.gmra.mxu0 %v1041
  %v1101 = vpop.f32.mrf.mxu0
  %v1102 = vadd.f32 0.0, %v1101
  %v1103 = vpop.f32.mrf.mxu0
  %v1104 = vpop.f32.mrf.mxu0
  %v1105 = vpop.f32.mrf.mxu0
  %1106 = vdwg.mxu0
  %v1107 = vmul.f32 %v1078, %v241
  %v1108 = vmul.f32 %v1081, %v241
  %v1109 = vmul.f32 %v1086, %v241
  %v1110 = vmul.f32 %v1089, %v241
  %v1111 = vmul.f32 %v1094, %v241
  %v1112 = vmul.f32 %v1097, %v241
  %v1113 = vmul.f32 %v1102, %v241
  %v1114 = vadd.f32 %v1107, %v252
  %v1115 = vadd.f32 %v1108, %v252
  %v1116 = vadd.f32 %v1109, %v252
  %v1117 = vadd.f32 %v1110, %v252
  %v1118 = vadd.f32 %v1111, %v252
  %v1119 = vadd.f32 %v1112, %v252
  %v1120 = vadd.f32 %v1113, %v252
  %vm1121 = vcmp.ge.f32.partialorder %v1114, 0.0
  %vm1122 = vcmp.ge.f32.partialorder %v1115, 0.0
  %vm1123 = vcmp.ge.f32.partialorder %v1116, 0.0
  %vm1124 = vcmp.ge.f32.partialorder %v1117, 0.0
  %vm1125 = vcmp.ge.f32.partialorder %v1118, 0.0
  %vm1126 = vcmp.ge.f32.partialorder %v1119, 0.0
  %vm1127 = vcmp.ge.f32.partialorder %v1120, 0.0
  %v1128 = vmul.f32 %v1114, 0.2
  %v1129 = vmul.f32 %v1115, 0.2
  %v1130 = vmul.f32 %v1116, 0.2
  %v1131 = vmul.f32 %v1117, 0.2
  %v1132 = vmul.f32 %v1118, 0.2
  %v1133 = vmul.f32 %v1119, 0.2
  %v1134 = vmul.f32 %v1120, 0.2
  %v1135 = vsel %vm1121, %v1114, %v1128
  %v1136 = vsel %vm1122, %v1115, %v1129
  %v1137 = vsel %vm1123, %v1116, %v1130
  %v1138 = vsel %vm1124, %v1117, %v1131
  %v1139 = vsel %vm1125, %v1118, %v1132
  %v1140 = vsel %vm1126, %v1119, %v1133
  %v1141 = vsel %vm1127, %v1120, %v1134
  %v1142 = vpack.c.bf16 %v1136, %v1135
  %v1143 = vpack.c.bf16 %v1138, %v1137
  %v1144 = vpack.c.bf16 %v1140, %v1139
  %v1145 = vpack.c.bf16 %v1141, %v1141
  %s1146 = scalar_lea.vmem %s1, 32
  %v1147 = vld [vmem:[%s1146] sm:$0xf]
  %v1148 = vld [vmem:[%s1146 + $0x4] sm:$0xf]
  %v1151 = vunpack.c.l.b16 %v1147
  %v1152 = vunpack.c.l.b16 %v1148
  %v1153 = vpack.c.b16 %v1152, %v1151
  %v1156 = vsel %vm30, %v1142, 0
  %v1159 = vsel %vm30, %v1143, 0
  %v1162 = vsel %vm30, %v1144, 0
  %v1165 = vsel %vm30, %v1145, 0
  %1167 = vmatprep.subr.bf16.mxu0 0
  %1168 = vmatpush1.bf16.msra.mxu0 0
  %1169 = vmatprep.subr.bf16.mxu0 0
  %1170 = vmatpush1.bf16.msra.mxu0 0
  %1171 = vmatprep.subr.bf16.mxu0 0
  %1172 = vmatpush1.bf16.msra.mxu0 0
  %1173 = vmatprep.subr.bf16.mxu0 0
  %1174 = vmatpush1.bf16.msra.mxu0 0
  %1175 = vmatprep.subr.bf16.mxu0 0
  %1176 = vmatpush1.bf16.msra.mxu0 0
  %1177 = vmatprep.subr.bf16.mxu0 0
  %1178 = vmatpush1.bf16.msra.mxu0 0
  %1179 = vmatprep.subr.bf16.mxu0 0
  %1180 = vmatpush1.bf16.msra.mxu0 0
  %1181 = vmatprep.subr.bf16.mxu0 0
  %1182 = vmatpush1.bf16.msra.mxu0 %v1153
  %1183 = vmatprep.subr.bf16.mxu0 0
  %1184 = vmatpush2.bf16.msra.mxu0 0
  %1185 = vmatprep.subr.bf16.mxu0 0
  %1186 = vmatpush2.bf16.msra.mxu0 0
  %1187 = vmatprep.subr.bf16.mxu0 0
  %1188 = vmatpush2.bf16.msra.mxu0 0
  %1189 = vmatprep.subr.bf16.mxu0 0
  %1190 = vmatpush2.bf16.msra.mxu0 0
  %1191 = vmatprep.subr.bf16.mxu0 0
  %1192 = vmatpush2.bf16.msra.mxu0 0
  %1193 = vmatprep.subr.bf16.mxu0 0
  %1194 = vmatpush2.bf16.msra.mxu0 0
  %1195 = vmatprep.subr.bf16.mxu0 0
  %1196 = vmatpush2.bf16.msra.mxu0 0
  %1197 = vmatprep.subr.bf16.mxu0 0
  %1198 = vmatpush2.bf16.msra.mxu0 0
  %1199 = vmatprep.mubr.bf16.mxu0 0
  %1200 = vmatmul.mubr.bf16.gmra.mxu0 %v1156
  %v1201 = vpop.f32.mrf.mxu0
  %v1202 = vadd.f32 0.0, %v1201
  %v1203 = vpop.f32.mrf.mxu0
  %v1204 = vpop.f32.mrf.mxu0
  %v1205 = vadd.f32 0.0, %v1204
  %v1206 = vpop.f32.mrf.mxu0
  %1207 = vmatprep.mubr.bf16.mxu0 0
  %1208 = vmatmul.mubr.bf16.gmra.mxu0 %v1159
  %v1209 = vpop.f32.mrf.mxu0
  %v1210 = vadd.f32 0.0, %v1209
  %v1211 = vpop.f32.mrf.mxu0
  %v1212 = vpop.f32.mrf.mxu0
  %v1213 = vadd.f32 0.0, %v1212
  %v1214 = vpop.f32.mrf.mxu0
  %1215 = vmatprep.mubr.bf16.mxu0 0
  %1216 = vmatmul.mubr.bf16.gmra.mxu0 %v1162
  %v1217 = vpop.f32.mrf.mxu0
  %v1218 = vadd.f32 0.0, %v1217
  %v1219 = vpop.f32.mrf.mxu0
  %v1220 = vpop.f32.mrf.mxu0
  %v1221 = vadd.f32 0.0, %v1220
  %v1222 = vpop.f32.mrf.mxu0
  %1223 = vmatprep.mubr.bf16.mxu0 0
  %1224 = vmatmul.mubr.bf16.gmra.mxu0 %v1165
  %v1225 = vpop.f32.mrf.mxu0
  %v1226 = vadd.f32 0.0, %v1225
  %v1227 = vpop.f32.mrf.mxu0
  %v1228 = vpop.f32.mrf.mxu0
  %v1229 = vpop.f32.mrf.mxu0
  %1230 = vdwg.mxu0
  %v1231 = vadd.f32 %v1012, %v1202
  %v1232 = vadd.f32 %v1013, %v1205
  %v1233 = vadd.f32 %v1014, %v1210
  %v1234 = vadd.f32 %v1015, %v1213
  %v1235 = vadd.f32 %v1016, %v1218
  %v1236 = vadd.f32 %v1017, %v1221
  %v1237 = vadd.f32 %v1018, %v1226
  %s1238 = scalar_lea.vmem %s0, 280
  %v1239 = vld [vmem:[%s1238] sm:$0xff]
  %v1240 = vld [vmem:[%s1238 + $0x8] sm:$0xff]
  %v1241 = vld [vmem:[%s1238 + $0x10] sm:$0xff]
  %v1242 = vld [vmem:[%s1238 + $0x18] sm:$0xff]
  %v1243 = vld [vmem:[%s1238 + $0x20] sm:$0xff]
  %v1244 = vld [vmem:[%s1238 + $0x28] sm:$0xff]
  %v1245 = vld [vmem:[%s1238 + $0x30] sm:$0x3]
  %v1246 = vpack.c.bf16 %v1240, %v1239
  %v1247 = vpack.c.bf16 %v1242, %v1241
  %v1248 = vpack.c.bf16 %v1244, %v1243
  %v1249 = vpack.c.bf16 %v1245, %v1245
  %v1251 = vsel %vm30, %v1246, 0
  %v1254 = vsel %vm30, %v1247, 0
  %v1257 = vsel %vm30, %v1248, 0
  %v1260 = vsel %vm30, %v1249, 0
  %1262 = vmatprep.subr.bf16.mxu0 0
  %1263 = vmatpush1.bf16.msra.mxu0 0
  %1264 = vmatprep.subr.bf16.mxu0 0
  %1265 = vmatpush1.bf16.msra.mxu0 0
  %1266 = vmatprep.subr.bf16.mxu0 0
  %1267 = vmatpush1.bf16.msra.mxu0 0
  %1268 = vmatprep.subr.bf16.mxu0 0
  %1269 = vmatpush1.bf16.msra.mxu0 0
  %1270 = vmatprep.subr.bf16.mxu0 0
  %1271 = vmatpush1.bf16.msra.mxu0 0
  %1272 = vmatprep.subr.bf16.mxu0 0
  %1273 = vmatpush1.bf16.msra.mxu0 0
  %1274 = vmatprep.subr.bf16.mxu0 0
  %1275 = vmatpush1.bf16.msra.mxu0 0
  %1276 = vmatprep.subr.bf16.mxu0 0
  %1277 = vmatpush1.bf16.msra.mxu0 %v150
  %1278 = vmatprep.subr.bf16.mxu0 0
  %1279 = vmatpush2.bf16.msra.mxu0 0
  %1280 = vmatprep.subr.bf16.mxu0 0
  %1281 = vmatpush2.bf16.msra.mxu0 0
  %1282 = vmatprep.subr.bf16.mxu0 0
  %1283 = vmatpush2.bf16.msra.mxu0 0
  %1284 = vmatprep.subr.bf16.mxu0 0
  %1285 = vmatpush2.bf16.msra.mxu0 0
  %1286 = vmatprep.subr.bf16.mxu0 0
  %1287 = vmatpush2.bf16.msra.mxu0 0
  %1288 = vmatprep.subr.bf16.mxu0 0
  %1289 = vmatpush2.bf16.msra.mxu0 0
  %1290 = vmatprep.subr.bf16.mxu0 0
  %1291 = vmatpush2.bf16.msra.mxu0 0
  %1292 = vmatprep.subr.bf16.mxu0 0
  %1293 = vmatpush2.bf16.msra.mxu0 0
  %1294 = vmatprep.mubr.bf16.mxu0 0
  %1295 = vmatmul.mubr.bf16.gmra.mxu0 %v1251
  %v1296 = vpop.f32.mrf.mxu0
  %v1297 = vadd.f32 0.0, %v1296
  %v1298 = vpop.f32.mrf.mxu0
  %v1299 = vpop.f32.mrf.mxu0
  %v1300 = vadd.f32 0.0, %v1299
  %v1301 = vpop.f32.mrf.mxu0
  %1302 = vmatprep.mubr.bf16.mxu0 0
  %1303 = vmatmul.mubr.bf16.gmra.mxu0 %v1254
  %v1304 = vpop.f32.mrf.mxu0
  %v1305 = vadd.f32 0.0, %v1304
  %v1306 = vpop.f32.mrf.mxu0
  %v1307 = vpop.f32.mrf.mxu0
  %v1308 = vadd.f32 0.0, %v1307
  %v1309 = vpop.f32.mrf.mxu0
  %1310 = vmatprep.mubr.bf16.mxu0 0
  %1311 = vmatmul.mubr.bf16.gmra.mxu0 %v1257
  %v1312 = vpop.f32.mrf.mxu0
  %v1313 = vadd.f32 0.0, %v1312
  %v1314 = vpop.f32.mrf.mxu0
  %v1315 = vpop.f32.mrf.mxu0
  %v1316 = vadd.f32 0.0, %v1315
  %v1317 = vpop.f32.mrf.mxu0
  %1318 = vmatprep.mubr.bf16.mxu0 0
  %1319 = vmatmul.mubr.bf16.gmra.mxu0 %v1260
  %v1320 = vpop.f32.mrf.mxu0
  %v1321 = vadd.f32 0.0, %v1320
  %v1322 = vpop.f32.mrf.mxu0
  %v1323 = vpop.f32.mrf.mxu0
  %v1324 = vpop.f32.mrf.mxu0
  %1325 = vdwg.mxu0
  %v1326 = vmul.f32 %v1297, %v241
  %v1327 = vmul.f32 %v1300, %v241
  %v1328 = vmul.f32 %v1305, %v241
  %v1329 = vmul.f32 %v1308, %v241
  %v1330 = vmul.f32 %v1313, %v241
  %v1331 = vmul.f32 %v1316, %v241
  %v1332 = vmul.f32 %v1321, %v241
  %v1333 = vadd.f32 %v1326, %v252
  %v1334 = vadd.f32 %v1327, %v252
  %v1335 = vadd.f32 %v1328, %v252
  %v1336 = vadd.f32 %v1329, %v252
  %v1337 = vadd.f32 %v1330, %v252
  %v1338 = vadd.f32 %v1331, %v252
  %v1339 = vadd.f32 %v1332, %v252
  %vm1340 = vcmp.ge.f32.partialorder %v1333, 0.0
  %vm1341 = vcmp.ge.f32.partialorder %v1334, 0.0
  %vm1342 = vcmp.ge.f32.partialorder %v1335, 0.0
  %vm1343 = vcmp.ge.f32.partialorder %v1336, 0.0
  %vm1344 = vcmp.ge.f32.partialorder %v1337, 0.0
  %vm1345 = vcmp.ge.f32.partialorder %v1338, 0.0
  %vm1346 = vcmp.ge.f32.partialorder %v1339, 0.0
  %v1347 = vmul.f32 %v1333, 0.2
  %v1348 = vmul.f32 %v1334, 0.2
  %v1349 = vmul.f32 %v1335, 0.2
  %v1350 = vmul.f32 %v1336, 0.2
  %v1351 = vmul.f32 %v1337, 0.2
  %v1352 = vmul.f32 %v1338, 0.2
  %v1353 = vmul.f32 %v1339, 0.2
  %v1354 = vsel %vm1340, %v1333, %v1347
  %v1355 = vsel %vm1341, %v1334, %v1348
  %v1356 = vsel %vm1342, %v1335, %v1349
  %v1357 = vsel %vm1343, %v1336, %v1350
  %v1358 = vsel %vm1344, %v1337, %v1351
  %v1359 = vsel %vm1345, %v1338, %v1352
  %v1360 = vsel %vm1346, %v1339, %v1353
  %v1361 = vpack.c.bf16 %v1355, %v1354
  %v1362 = vpack.c.bf16 %v1357, %v1356
  %v1363 = vpack.c.bf16 %v1359, %v1358
  %v1364 = vpack.c.bf16 %v1360, %v1360
  %s1365 = scalar_lea.vmem %s1, 40
  %v1366 = vld [vmem:[%s1365] sm:$0xf]
  %v1367 = vld [vmem:[%s1365 + $0x4] sm:$0xf]
  %v1370 = vunpack.c.l.b16 %v1366
  %v1371 = vunpack.c.l.b16 %v1367
  %v1372 = vpack.c.b16 %v1371, %v1370
  %v1375 = vsel %vm30, %v1361, 0
  %v1378 = vsel %vm30, %v1362, 0
  %v1381 = vsel %vm30, %v1363, 0
  %v1384 = vsel %vm30, %v1364, 0
  %1386 = vmatprep.subr.bf16.mxu0 0
  %1387 = vmatpush1.bf16.msra.mxu0 0
  %1388 = vmatprep.subr.bf16.mxu0 0
  %1389 = vmatpush1.bf16.msra.mxu0 0
  %1390 = vmatprep.subr.bf16.mxu0 0
  %1391 = vmatpush1.bf16.msra.mxu0 0
  %1392 = vmatprep.subr.bf16.mxu0 0
  %1393 = vmatpush1.bf16.msra.mxu0 0
  %1394 = vmatprep.subr.bf16.mxu0 0
  %1395 = vmatpush1.bf16.msra.mxu0 0
  %1396 = vmatprep.subr.bf16.mxu0 0
  %1397 = vmatpush1.bf16.msra.mxu0 0
  %1398 = vmatprep.subr.bf16.mxu0 0
  %1399 = vmatpush1.bf16.msra.mxu0 0
  %1400 = vmatprep.subr.bf16.mxu0 0
  %1401 = vmatpush1.bf16.msra.mxu0 %v1372
  %1402 = vmatprep.subr.bf16.mxu0 0
  %1403 = vmatpush2.bf16.msra.mxu0 0
  %1404 = vmatprep.subr.bf16.mxu0 0
  %1405 = vmatpush2.bf16.msra.mxu0 0
  %1406 = vmatprep.subr.bf16.mxu0 0
  %1407 = vmatpush2.bf16.msra.mxu0 0
  %1408 = vmatprep.subr.bf16.mxu0 0
  %1409 = vmatpush2.bf16.msra.mxu0 0
  %1410 = vmatprep.subr.bf16.mxu0 0
  %1411 = vmatpush2.bf16.msra.mxu0 0
  %1412 = vmatprep.subr.bf16.mxu0 0
  %1413 = vmatpush2.bf16.msra.mxu0 0
  %1414 = vmatprep.subr.bf16.mxu0 0
  %1415 = vmatpush2.bf16.msra.mxu0 0
  %1416 = vmatprep.subr.bf16.mxu0 0
  %1417 = vmatpush2.bf16.msra.mxu0 0
  %1418 = vmatprep.mubr.bf16.mxu0 0
  %1419 = vmatmul.mubr.bf16.gmra.mxu0 %v1375
  %v1420 = vpop.f32.mrf.mxu0
  %v1421 = vadd.f32 0.0, %v1420
  %v1422 = vpop.f32.mrf.mxu0
  %v1423 = vpop.f32.mrf.mxu0
  %v1424 = vadd.f32 0.0, %v1423
  %v1425 = vpop.f32.mrf.mxu0
  %1426 = vmatprep.mubr.bf16.mxu0 0
  %1427 = vmatmul.mubr.bf16.gmra.mxu0 %v1378
  %v1428 = vpop.f32.mrf.mxu0
  %v1429 = vadd.f32 0.0, %v1428
  %v1430 = vpop.f32.mrf.mxu0
  %v1431 = vpop.f32.mrf.mxu0
  %v1432 = vadd.f32 0.0, %v1431
  %v1433 = vpop.f32.mrf.mxu0
  %1434 = vmatprep.mubr.bf16.mxu0 0
  %1435 = vmatmul.mubr.bf16.gmra.mxu0 %v1381
  %v1436 = vpop.f32.mrf.mxu0
  %v1437 = vadd.f32 0.0, %v1436
  %v1438 = vpop.f32.mrf.mxu0
  %v1439 = vpop.f32.mrf.mxu0
  %v1440 = vadd.f32 0.0, %v1439
  %v1441 = vpop.f32.mrf.mxu0
  %1442 = vmatprep.mubr.bf16.mxu0 0
  %1443 = vmatmul.mubr.bf16.gmra.mxu0 %v1384
  %v1444 = vpop.f32.mrf.mxu0
  %v1445 = vadd.f32 0.0, %v1444
  %v1446 = vpop.f32.mrf.mxu0
  %v1447 = vpop.f32.mrf.mxu0
  %v1448 = vpop.f32.mrf.mxu0
  %1449 = vdwg.mxu0
  %v1450 = vadd.f32 %v1231, %v1421
  %v1451 = vadd.f32 %v1232, %v1424
  %v1452 = vadd.f32 %v1233, %v1429
  %v1453 = vadd.f32 %v1234, %v1432
  %v1454 = vadd.f32 %v1235, %v1437
  %v1455 = vadd.f32 %v1236, %v1440
  %v1456 = vadd.f32 %v1237, %v1445
  %s1457 = scalar_lea.vmem %s0, 336
  %v1458 = vld [vmem:[%s1457] sm:$0xff]
  %v1459 = vld [vmem:[%s1457 + $0x8] sm:$0xff]
  %v1460 = vld [vmem:[%s1457 + $0x10] sm:$0xff]
  %v1461 = vld [vmem:[%s1457 + $0x18] sm:$0xff]
  %v1462 = vld [vmem:[%s1457 + $0x20] sm:$0xff]
  %v1463 = vld [vmem:[%s1457 + $0x28] sm:$0xff]
  %v1464 = vld [vmem:[%s1457 + $0x30] sm:$0x3]
  %v1465 = vpack.c.bf16 %v1459, %v1458
  %v1466 = vpack.c.bf16 %v1461, %v1460
  %v1467 = vpack.c.bf16 %v1463, %v1462
  %v1468 = vpack.c.bf16 %v1464, %v1464
  %v1470 = vsel %vm30, %v1465, 0
  %v1473 = vsel %vm30, %v1466, 0
  %v1476 = vsel %vm30, %v1467, 0
  %v1479 = vsel %vm30, %v1468, 0
  %1481 = vmatprep.subr.bf16.mxu0 0
  %1482 = vmatpush1.bf16.msra.mxu0 0
  %1483 = vmatprep.subr.bf16.mxu0 0
  %1484 = vmatpush1.bf16.msra.mxu0 0
  %1485 = vmatprep.subr.bf16.mxu0 0
  %1486 = vmatpush1.bf16.msra.mxu0 0
  %1487 = vmatprep.subr.bf16.mxu0 0
  %1488 = vmatpush1.bf16.msra.mxu0 0
  %1489 = vmatprep.subr.bf16.mxu0 0
  %1490 = vmatpush1.bf16.msra.mxu0 0
  %1491 = vmatprep.subr.bf16.mxu0 0
  %1492 = vmatpush1.bf16.msra.mxu0 0
  %1493 = vmatprep.subr.bf16.mxu0 0
  %1494 = vmatpush1.bf16.msra.mxu0 0
  %1495 = vmatprep.subr.bf16.mxu0 0
  %1496 = vmatpush1.bf16.msra.mxu0 %v150
  %1497 = vmatprep.subr.bf16.mxu0 0
  %1498 = vmatpush2.bf16.msra.mxu0 0
  %1499 = vmatprep.subr.bf16.mxu0 0
  %1500 = vmatpush2.bf16.msra.mxu0 0
  %1501 = vmatprep.subr.bf16.mxu0 0
  %1502 = vmatpush2.bf16.msra.mxu0 0
  %1503 = vmatprep.subr.bf16.mxu0 0
  %1504 = vmatpush2.bf16.msra.mxu0 0
  %1505 = vmatprep.subr.bf16.mxu0 0
  %1506 = vmatpush2.bf16.msra.mxu0 0
  %1507 = vmatprep.subr.bf16.mxu0 0
  %1508 = vmatpush2.bf16.msra.mxu0 0
  %1509 = vmatprep.subr.bf16.mxu0 0
  %1510 = vmatpush2.bf16.msra.mxu0 0
  %1511 = vmatprep.subr.bf16.mxu0 0
  %1512 = vmatpush2.bf16.msra.mxu0 0
  %1513 = vmatprep.mubr.bf16.mxu0 0
  %1514 = vmatmul.mubr.bf16.gmra.mxu0 %v1470
  %v1515 = vpop.f32.mrf.mxu0
  %v1516 = vadd.f32 0.0, %v1515
  %v1517 = vpop.f32.mrf.mxu0
  %v1518 = vpop.f32.mrf.mxu0
  %v1519 = vadd.f32 0.0, %v1518
  %v1520 = vpop.f32.mrf.mxu0
  %1521 = vmatprep.mubr.bf16.mxu0 0
  %1522 = vmatmul.mubr.bf16.gmra.mxu0 %v1473
  %v1523 = vpop.f32.mrf.mxu0
  %v1524 = vadd.f32 0.0, %v1523
  %v1525 = vpop.f32.mrf.mxu0
  %v1526 = vpop.f32.mrf.mxu0
  %v1527 = vadd.f32 0.0, %v1526
  %v1528 = vpop.f32.mrf.mxu0
  %1529 = vmatprep.mubr.bf16.mxu0 0
  %1530 = vmatmul.mubr.bf16.gmra.mxu0 %v1476
  %v1531 = vpop.f32.mrf.mxu0
  %v1532 = vadd.f32 0.0, %v1531
  %v1533 = vpop.f32.mrf.mxu0
  %v1534 = vpop.f32.mrf.mxu0
  %v1535 = vadd.f32 0.0, %v1534
  %v1536 = vpop.f32.mrf.mxu0
  %1537 = vmatprep.mubr.bf16.mxu0 0
  %1538 = vmatmul.mubr.bf16.gmra.mxu0 %v1479
  %v1539 = vpop.f32.mrf.mxu0
  %v1540 = vadd.f32 0.0, %v1539
  %v1541 = vpop.f32.mrf.mxu0
  %v1542 = vpop.f32.mrf.mxu0
  %v1543 = vpop.f32.mrf.mxu0
  %1544 = vdwg.mxu0
  %v1545 = vmul.f32 %v1516, %v241
  %v1546 = vmul.f32 %v1519, %v241
  %v1547 = vmul.f32 %v1524, %v241
  %v1548 = vmul.f32 %v1527, %v241
  %v1549 = vmul.f32 %v1532, %v241
  %v1550 = vmul.f32 %v1535, %v241
  %v1551 = vmul.f32 %v1540, %v241
  %v1552 = vadd.f32 %v1545, %v252
  %v1553 = vadd.f32 %v1546, %v252
  %v1554 = vadd.f32 %v1547, %v252
  %v1555 = vadd.f32 %v1548, %v252
  %v1556 = vadd.f32 %v1549, %v252
  %v1557 = vadd.f32 %v1550, %v252
  %v1558 = vadd.f32 %v1551, %v252
  %vm1559 = vcmp.ge.f32.partialorder %v1552, 0.0
  %vm1560 = vcmp.ge.f32.partialorder %v1553, 0.0
  %vm1561 = vcmp.ge.f32.partialorder %v1554, 0.0
  %vm1562 = vcmp.ge.f32.partialorder %v1555, 0.0
  %vm1563 = vcmp.ge.f32.partialorder %v1556, 0.0
  %vm1564 = vcmp.ge.f32.partialorder %v1557, 0.0
  %vm1565 = vcmp.ge.f32.partialorder %v1558, 0.0
  %v1566 = vmul.f32 %v1552, 0.2
  %v1567 = vmul.f32 %v1553, 0.2
  %v1568 = vmul.f32 %v1554, 0.2
  %v1569 = vmul.f32 %v1555, 0.2
  %v1570 = vmul.f32 %v1556, 0.2
  %v1571 = vmul.f32 %v1557, 0.2
  %v1572 = vmul.f32 %v1558, 0.2
  %v1573 = vsel %vm1559, %v1552, %v1566
  %v1574 = vsel %vm1560, %v1553, %v1567
  %v1575 = vsel %vm1561, %v1554, %v1568
  %v1576 = vsel %vm1562, %v1555, %v1569
  %v1577 = vsel %vm1563, %v1556, %v1570
  %v1578 = vsel %vm1564, %v1557, %v1571
  %v1579 = vsel %vm1565, %v1558, %v1572
  %v1580 = vpack.c.bf16 %v1574, %v1573
  %v1581 = vpack.c.bf16 %v1576, %v1575
  %v1582 = vpack.c.bf16 %v1578, %v1577
  %v1583 = vpack.c.bf16 %v1579, %v1579
  %s1584 = scalar_lea.vmem %s1, 48
  %v1585 = vld [vmem:[%s1584] sm:$0xf]
  %v1586 = vld [vmem:[%s1584 + $0x4] sm:$0xf]
  %v1589 = vunpack.c.l.b16 %v1585
  %v1590 = vunpack.c.l.b16 %v1586
  %v1591 = vpack.c.b16 %v1590, %v1589
  %v1594 = vsel %vm30, %v1580, 0
  %v1597 = vsel %vm30, %v1581, 0
  %v1600 = vsel %vm30, %v1582, 0
  %v1603 = vsel %vm30, %v1583, 0
  %1605 = vmatprep.subr.bf16.mxu0 0
  %1606 = vmatpush1.bf16.msra.mxu0 0
  %1607 = vmatprep.subr.bf16.mxu0 0
  %1608 = vmatpush1.bf16.msra.mxu0 0
  %1609 = vmatprep.subr.bf16.mxu0 0
  %1610 = vmatpush1.bf16.msra.mxu0 0
  %1611 = vmatprep.subr.bf16.mxu0 0
  %1612 = vmatpush1.bf16.msra.mxu0 0
  %1613 = vmatprep.subr.bf16.mxu0 0
  %1614 = vmatpush1.bf16.msra.mxu0 0
  %1615 = vmatprep.subr.bf16.mxu0 0
  %1616 = vmatpush1.bf16.msra.mxu0 0
  %1617 = vmatprep.subr.bf16.mxu0 0
  %1618 = vmatpush1.bf16.msra.mxu0 0
  %1619 = vmatprep.subr.bf16.mxu0 0
  %1620 = vmatpush1.bf16.msra.mxu0 %v1591
  %1621 = vmatprep.subr.bf16.mxu0 0
  %1622 = vmatpush2.bf16.msra.mxu0 0
  %1623 = vmatprep.subr.bf16.mxu0 0
  %1624 = vmatpush2.bf16.msra.mxu0 0
  %1625 = vmatprep.subr.bf16.mxu0 0
  %1626 = vmatpush2.bf16.msra.mxu0 0
  %1627 = vmatprep.subr.bf16.mxu0 0
  %1628 = vmatpush2.bf16.msra.mxu0 0
  %1629 = vmatprep.subr.bf16.mxu0 0
  %1630 = vmatpush2.bf16.msra.mxu0 0
  %1631 = vmatprep.subr.bf16.mxu0 0
  %1632 = vmatpush2.bf16.msra.mxu0 0
  %1633 = vmatprep.subr.bf16.mxu0 0
  %1634 = vmatpush2.bf16.msra.mxu0 0
  %1635 = vmatprep.subr.bf16.mxu0 0
  %1636 = vmatpush2.bf16.msra.mxu0 0
  %1637 = vmatprep.mubr.bf16.mxu0 0
  %1638 = vmatmul.mubr.bf16.gmra.mxu0 %v1594
  %v1639 = vpop.f32.mrf.mxu0
  %v1640 = vadd.f32 0.0, %v1639
  %v1641 = vpop.f32.mrf.mxu0
  %v1642 = vpop.f32.mrf.mxu0
  %v1643 = vadd.f32 0.0, %v1642
  %v1644 = vpop.f32.mrf.mxu0
  %1645 = vmatprep.mubr.bf16.mxu0 0
  %1646 = vmatmul.mubr.bf16.gmra.mxu0 %v1597
  %v1647 = vpop.f32.mrf.mxu0
  %v1648 = vadd.f32 0.0, %v1647
  %v1649 = vpop.f32.mrf.mxu0
  %v1650 = vpop.f32.mrf.mxu0
  %v1651 = vadd.f32 0.0, %v1650
  %v1652 = vpop.f32.mrf.mxu0
  %1653 = vmatprep.mubr.bf16.mxu0 0
  %1654 = vmatmul.mubr.bf16.gmra.mxu0 %v1600
  %v1655 = vpop.f32.mrf.mxu0
  %v1656 = vadd.f32 0.0, %v1655
  %v1657 = vpop.f32.mrf.mxu0
  %v1658 = vpop.f32.mrf.mxu0
  %v1659 = vadd.f32 0.0, %v1658
  %v1660 = vpop.f32.mrf.mxu0
  %1661 = vmatprep.mubr.bf16.mxu0 0
  %1662 = vmatmul.mubr.bf16.gmra.mxu0 %v1603
  %v1663 = vpop.f32.mrf.mxu0
  %v1664 = vadd.f32 0.0, %v1663
  %v1665 = vpop.f32.mrf.mxu0
  %v1666 = vpop.f32.mrf.mxu0
  %v1667 = vpop.f32.mrf.mxu0
  %1668 = vdwg.mxu0
  %v1669 = vadd.f32 %v1450, %v1640
  %v1670 = vadd.f32 %v1451, %v1643
  %v1671 = vadd.f32 %v1452, %v1648
  %v1672 = vadd.f32 %v1453, %v1651
  %v1673 = vadd.f32 %v1454, %v1656
  %v1674 = vadd.f32 %v1455, %v1659
  %v1675 = vadd.f32 %v1456, %v1664
  %s1676 = scalar_lea.vmem %s0, 392
  %v1677 = vld [vmem:[%s1676] sm:$0xff]
  %v1678 = vld [vmem:[%s1676 + $0x8] sm:$0xff]
  %v1679 = vld [vmem:[%s1676 + $0x10] sm:$0xff]
  %v1680 = vld [vmem:[%s1676 + $0x18] sm:$0xff]
  %v1681 = vld [vmem:[%s1676 + $0x20] sm:$0xff]
  %v1682 = vld [vmem:[%s1676 + $0x28] sm:$0xff]
  %v1683 = vld [vmem:[%s1676 + $0x30] sm:$0x3]
  %v1684 = vpack.c.bf16 %v1678, %v1677
  %v1685 = vpack.c.bf16 %v1680, %v1679
  %v1686 = vpack.c.bf16 %v1682, %v1681
  %v1687 = vpack.c.bf16 %v1683, %v1683
  %v1689 = vsel %vm30, %v1684, 0
  %v1692 = vsel %vm30, %v1685, 0
  %v1695 = vsel %vm30, %v1686, 0
  %v1698 = vsel %vm30, %v1687, 0
  %1700 = vmatprep.subr.bf16.mxu0 0
  %1701 = vmatpush1.bf16.msra.mxu0 0
  %1702 = vmatprep.subr.bf16.mxu0 0
  %1703 = vmatpush1.bf16.msra.mxu0 0
  %1704 = vmatprep.subr.bf16.mxu0 0
  %1705 = vmatpush1.bf16.msra.mxu0 0
  %1706 = vmatprep.subr.bf16.mxu0 0
  %1707 = vmatpush1.bf16.msra.mxu0 0
  %1708 = vmatprep.subr.bf16.mxu0 0
  %1709 = vmatpush1.bf16.msra.mxu0 0
  %1710 = vmatprep.subr.bf16.mxu0 0
  %1711 = vmatpush1.bf16.msra.mxu0 0
  %1712 = vmatprep.subr.bf16.mxu0 0
  %1713 = vmatpush1.bf16.msra.mxu0 0
  %1714 = vmatprep.subr.bf16.mxu0 0
  %1715 = vmatpush1.bf16.msra.mxu0 %v150
  %1716 = vmatprep.subr.bf16.mxu0 0
  %1717 = vmatpush2.bf16.msra.mxu0 0
  %1718 = vmatprep.subr.bf16.mxu0 0
  %1719 = vmatpush2.bf16.msra.mxu0 0
  %1720 = vmatprep.subr.bf16.mxu0 0
  %1721 = vmatpush2.bf16.msra.mxu0 0
  %1722 = vmatprep.subr.bf16.mxu0 0
  %1723 = vmatpush2.bf16.msra.mxu0 0
  %1724 = vmatprep.subr.bf16.mxu0 0
  %1725 = vmatpush2.bf16.msra.mxu0 0
  %1726 = vmatprep.subr.bf16.mxu0 0
  %1727 = vmatpush2.bf16.msra.mxu0 0
  %1728 = vmatprep.subr.bf16.mxu0 0
  %1729 = vmatpush2.bf16.msra.mxu0 0
  %1730 = vmatprep.subr.bf16.mxu0 0
  %1731 = vmatpush2.bf16.msra.mxu0 0
  %1732 = vmatprep.mubr.bf16.mxu0 0
  %1733 = vmatmul.mubr.bf16.gmra.mxu0 %v1689
  %v1734 = vpop.f32.mrf.mxu0
  %v1735 = vadd.f32 0.0, %v1734
  %v1736 = vpop.f32.mrf.mxu0
  %v1737 = vpop.f32.mrf.mxu0
  %v1738 = vadd.f32 0.0, %v1737
  %v1739 = vpop.f32.mrf.mxu0
  %1740 = vmatprep.mubr.bf16.mxu0 0
  %1741 = vmatmul.mubr.bf16.gmra.mxu0 %v1692
  %v1742 = vpop.f32.mrf.mxu0
  %v1743 = vadd.f32 0.0, %v1742
  %v1744 = vpop.f32.mrf.mxu0
  %v1745 = vpop.f32.mrf.mxu0
  %v1746 = vadd.f32 0.0, %v1745
  %v1747 = vpop.f32.mrf.mxu0
  %1748 = vmatprep.mubr.bf16.mxu0 0
  %1749 = vmatmul.mubr.bf16.gmra.mxu0 %v1695
  %v1750 = vpop.f32.mrf.mxu0
  %v1751 = vadd.f32 0.0, %v1750
  %v1752 = vpop.f32.mrf.mxu0
  %v1753 = vpop.f32.mrf.mxu0
  %v1754 = vadd.f32 0.0, %v1753
  %v1755 = vpop.f32.mrf.mxu0
  %1756 = vmatprep.mubr.bf16.mxu0 0
  %1757 = vmatmul.mubr.bf16.gmra.mxu0 %v1698
  %v1758 = vpop.f32.mrf.mxu0
  %v1759 = vadd.f32 0.0, %v1758
  %v1760 = vpop.f32.mrf.mxu0
  %v1761 = vpop.f32.mrf.mxu0
  %v1762 = vpop.f32.mrf.mxu0
  %1763 = vdwg.mxu0
  %v1764 = vmul.f32 %v1735, %v241
  %v1765 = vmul.f32 %v1738, %v241
  %v1766 = vmul.f32 %v1743, %v241
  %v1767 = vmul.f32 %v1746, %v241
  %v1768 = vmul.f32 %v1751, %v241
  %v1769 = vmul.f32 %v1754, %v241
  %v1770 = vmul.f32 %v1759, %v241
  %v1771 = vadd.f32 %v1764, %v252
  %v1772 = vadd.f32 %v1765, %v252
  %v1773 = vadd.f32 %v1766, %v252
  %v1774 = vadd.f32 %v1767, %v252
  %v1775 = vadd.f32 %v1768, %v252
  %v1776 = vadd.f32 %v1769, %v252
  %v1777 = vadd.f32 %v1770, %v252
  %vm1778 = vcmp.ge.f32.partialorder %v1771, 0.0
  %vm1779 = vcmp.ge.f32.partialorder %v1772, 0.0
  %vm1780 = vcmp.ge.f32.partialorder %v1773, 0.0
  %vm1781 = vcmp.ge.f32.partialorder %v1774, 0.0
  %vm1782 = vcmp.ge.f32.partialorder %v1775, 0.0
  %vm1783 = vcmp.ge.f32.partialorder %v1776, 0.0
  %vm1784 = vcmp.ge.f32.partialorder %v1777, 0.0
  %v1785 = vmul.f32 %v1771, 0.2
  %v1786 = vmul.f32 %v1772, 0.2
  %v1787 = vmul.f32 %v1773, 0.2
  %v1788 = vmul.f32 %v1774, 0.2
  %v1789 = vmul.f32 %v1775, 0.2
  %v1790 = vmul.f32 %v1776, 0.2
  %v1791 = vmul.f32 %v1777, 0.2
  %v1792 = vsel %vm1778, %v1771, %v1785
  %v1793 = vsel %vm1779, %v1772, %v1786
  %v1794 = vsel %vm1780, %v1773, %v1787
  %v1795 = vsel %vm1781, %v1774, %v1788
  %v1796 = vsel %vm1782, %v1775, %v1789
  %v1797 = vsel %vm1783, %v1776, %v1790
  %v1798 = vsel %vm1784, %v1777, %v1791
  %v1799 = vpack.c.bf16 %v1793, %v1792
  %v1800 = vpack.c.bf16 %v1795, %v1794
  %v1801 = vpack.c.bf16 %v1797, %v1796
  %v1802 = vpack.c.bf16 %v1798, %v1798
  %s1803 = scalar_lea.vmem %s1, 56
  %v1804 = vld [vmem:[%s1803] sm:$0xf]
  %v1805 = vld [vmem:[%s1803 + $0x4] sm:$0xf]
  %v1808 = vunpack.c.l.b16 %v1804
  %v1809 = vunpack.c.l.b16 %v1805
  %v1810 = vpack.c.b16 %v1809, %v1808
  %v1813 = vsel %vm30, %v1799, 0
  %v1816 = vsel %vm30, %v1800, 0
  %v1819 = vsel %vm30, %v1801, 0
  %v1822 = vsel %vm30, %v1802, 0
  %1824 = vmatprep.subr.bf16.mxu0 0
  %1825 = vmatpush1.bf16.msra.mxu0 0
  %1826 = vmatprep.subr.bf16.mxu0 0
  %1827 = vmatpush1.bf16.msra.mxu0 0
  %1828 = vmatprep.subr.bf16.mxu0 0
  %1829 = vmatpush1.bf16.msra.mxu0 0
  %1830 = vmatprep.subr.bf16.mxu0 0
  %1831 = vmatpush1.bf16.msra.mxu0 0
  %1832 = vmatprep.subr.bf16.mxu0 0
  %1833 = vmatpush1.bf16.msra.mxu0 0
  %1834 = vmatprep.subr.bf16.mxu0 0
  %1835 = vmatpush1.bf16.msra.mxu0 0
  %1836 = vmatprep.subr.bf16.mxu0 0
  %1837 = vmatpush1.bf16.msra.mxu0 0
  %1838 = vmatprep.subr.bf16.mxu0 0
  %1839 = vmatpush1.bf16.msra.mxu0 %v1810
  %1840 = vmatprep.subr.bf16.mxu0 0
  %1841 = vmatpush2.bf16.msra.mxu0 0
  %1842 = vmatprep.subr.bf16.mxu0 0
  %1843 = vmatpush2.bf16.msra.mxu0 0
  %1844 = vmatprep.subr.bf16.mxu0 0
  %1845 = vmatpush2.bf16.msra.mxu0 0
  %1846 = vmatprep.subr.bf16.mxu0 0
  %1847 = vmatpush2.bf16.msra.mxu0 0
  %1848 = vmatprep.subr.bf16.mxu0 0
  %1849 = vmatpush2.bf16.msra.mxu0 0
  %1850 = vmatprep.subr.bf16.mxu0 0
  %1851 = vmatpush2.bf16.msra.mxu0 0
  %1852 = vmatprep.subr.bf16.mxu0 0
  %1853 = vmatpush2.bf16.msra.mxu0 0
  %1854 = vmatprep.subr.bf16.mxu0 0
  %1855 = vmatpush2.bf16.msra.mxu0 0
  %1856 = vmatprep.mubr.bf16.mxu0 0
  %1857 = vmatmul.mubr.bf16.gmra.mxu0 %v1813
  %v1858 = vpop.f32.mrf.mxu0
  %v1859 = vadd.f32 0.0, %v1858
  %v1860 = vpop.f32.mrf.mxu0
  %v1861 = vpop.f32.mrf.mxu0
  %v1862 = vadd.f32 0.0, %v1861
  %v1863 = vpop.f32.mrf.mxu0
  %1864 = vmatprep.mubr.bf16.mxu0 0
  %1865 = vmatmul.mubr.bf16.gmra.mxu0 %v1816
  %v1866 = vpop.f32.mrf.mxu0
  %v1867 = vadd.f32 0.0, %v1866
  %v1868 = vpop.f32.mrf.mxu0
  %v1869 = vpop.f32.mrf.mxu0
  %v1870 = vadd.f32 0.0, %v1869
  %v1871 = vpop.f32.mrf.mxu0
  %1872 = vmatprep.mubr.bf16.mxu0 0
  %1873 = vmatmul.mubr.bf16.gmra.mxu0 %v1819
  %v1874 = vpop.f32.mrf.mxu0
  %v1875 = vadd.f32 0.0, %v1874
  %v1876 = vpop.f32.mrf.mxu0
  %v1877 = vpop.f32.mrf.mxu0
  %v1878 = vadd.f32 0.0, %v1877
  %v1879 = vpop.f32.mrf.mxu0
  %1880 = vmatprep.mubr.bf16.mxu0 0
  %1881 = vmatmul.mubr.bf16.gmra.mxu0 %v1822
  %v1882 = vpop.f32.mrf.mxu0
  %v1883 = vadd.f32 0.0, %v1882
  %v1884 = vpop.f32.mrf.mxu0
  %v1885 = vpop.f32.mrf.mxu0
  %v1886 = vpop.f32.mrf.mxu0
  %1887 = vdwg.mxu0
  %v1888 = vadd.f32 %v1669, %v1859
  %v1889 = vadd.f32 %v1670, %v1862
  %v1890 = vadd.f32 %v1671, %v1867
  %v1891 = vadd.f32 %v1672, %v1870
  %v1892 = vadd.f32 %v1673, %v1875
  %v1893 = vadd.f32 %v1674, %v1878
  %v1894 = vadd.f32 %v1675, %v1883
  %s1895 = scalar_lea.vmem %s0, 448
  %v1896 = vld [vmem:[%s1895] sm:$0xff]
  %v1897 = vld [vmem:[%s1895 + $0x8] sm:$0xff]
  %v1898 = vld [vmem:[%s1895 + $0x10] sm:$0xff]
  %v1899 = vld [vmem:[%s1895 + $0x18] sm:$0xff]
  %v1900 = vld [vmem:[%s1895 + $0x20] sm:$0xff]
  %v1901 = vld [vmem:[%s1895 + $0x28] sm:$0xff]
  %v1902 = vld [vmem:[%s1895 + $0x30] sm:$0x3]
  %v1903 = vpack.c.bf16 %v1897, %v1896
  %v1904 = vpack.c.bf16 %v1899, %v1898
  %v1905 = vpack.c.bf16 %v1901, %v1900
  %v1906 = vpack.c.bf16 %v1902, %v1902
  %v1908 = vsel %vm30, %v1903, 0
  %v1911 = vsel %vm30, %v1904, 0
  %v1914 = vsel %vm30, %v1905, 0
  %v1917 = vsel %vm30, %v1906, 0
  %1919 = vmatprep.subr.bf16.mxu0 0
  %1920 = vmatpush1.bf16.msra.mxu0 0
  %1921 = vmatprep.subr.bf16.mxu0 0
  %1922 = vmatpush1.bf16.msra.mxu0 0
  %1923 = vmatprep.subr.bf16.mxu0 0
  %1924 = vmatpush1.bf16.msra.mxu0 0
  %1925 = vmatprep.subr.bf16.mxu0 0
  %1926 = vmatpush1.bf16.msra.mxu0 0
  %1927 = vmatprep.subr.bf16.mxu0 0
  %1928 = vmatpush1.bf16.msra.mxu0 0
  %1929 = vmatprep.subr.bf16.mxu0 0
  %1930 = vmatpush1.bf16.msra.mxu0 0
  %1931 = vmatprep.subr.bf16.mxu0 0
  %1932 = vmatpush1.bf16.msra.mxu0 0
  %1933 = vmatprep.subr.bf16.mxu0 0
  %1934 = vmatpush1.bf16.msra.mxu0 %v150
  %1935 = vmatprep.subr.bf16.mxu0 0
  %1936 = vmatpush2.bf16.msra.mxu0 0
  %1937 = vmatprep.subr.bf16.mxu0 0
  %1938 = vmatpush2.bf16.msra.mxu0 0
  %1939 = vmatprep.subr.bf16.mxu0 0
  %1940 = vmatpush2.bf16.msra.mxu0 0
  %1941 = vmatprep.subr.bf16.mxu0 0
  %1942 = vmatpush2.bf16.msra.mxu0 0
  %1943 = vmatprep.subr.bf16.mxu0 0
  %1944 = vmatpush2.bf16.msra.mxu0 0
  %1945 = vmatprep.subr.bf16.mxu0 0
  %1946 = vmatpush2.bf16.msra.mxu0 0
  %1947 = vmatprep.subr.bf16.mxu0 0
  %1948 = vmatpush2.bf16.msra.mxu0 0
  %1949 = vmatprep.subr.bf16.mxu0 0
  %1950 = vmatpush2.bf16.msra.mxu0 0
  %1951 = vmatprep.mubr.bf16.mxu0 0
  %1952 = vmatmul.mubr.bf16.gmra.mxu0 %v1908
  %v1953 = vpop.f32.mrf.mxu0
  %v1954 = vadd.f32 0.0, %v1953
  %v1955 = vpop.f32.mrf.mxu0
  %v1956 = vpop.f32.mrf.mxu0
  %v1957 = vadd.f32 0.0, %v1956
  %v1958 = vpop.f32.mrf.mxu0
  %1959 = vmatprep.mubr.bf16.mxu0 0
  %1960 = vmatmul.mubr.bf16.gmra.mxu0 %v1911
  %v1961 = vpop.f32.mrf.mxu0
  %v1962 = vadd.f32 0.0, %v1961
  %v1963 = vpop.f32.mrf.mxu0
  %v1964 = vpop.f32.mrf.mxu0
  %v1965 = vadd.f32 0.0, %v1964
  %v1966 = vpop.f32.mrf.mxu0
  %1967 = vmatprep.mubr.bf16.mxu0 0
  %1968 = vmatmul.mubr.bf16.gmra.mxu0 %v1914
  %v1969 = vpop.f32.mrf.mxu0
  %v1970 = vadd.f32 0.0, %v1969
  %v1971 = vpop.f32.mrf.mxu0
  %v1972 = vpop.f32.mrf.mxu0
  %v1973 = vadd.f32 0.0, %v1972
  %v1974 = vpop.f32.mrf.mxu0
  %1975 = vmatprep.mubr.bf16.mxu0 0
  %1976 = vmatmul.mubr.bf16.gmra.mxu0 %v1917
  %v1977 = vpop.f32.mrf.mxu0
  %v1978 = vadd.f32 0.0, %v1977
  %v1979 = vpop.f32.mrf.mxu0
  %v1980 = vpop.f32.mrf.mxu0
  %v1981 = vpop.f32.mrf.mxu0
  %1982 = vdwg.mxu0
  %v1983 = vmul.f32 %v1954, %v241
  %v1984 = vmul.f32 %v1957, %v241
  %v1985 = vmul.f32 %v1962, %v241
  %v1986 = vmul.f32 %v1965, %v241
  %v1987 = vmul.f32 %v1970, %v241
  %v1988 = vmul.f32 %v1973, %v241
  %v1989 = vmul.f32 %v1978, %v241
  %v1990 = vadd.f32 %v1983, %v252
  %v1991 = vadd.f32 %v1984, %v252
  %v1992 = vadd.f32 %v1985, %v252
  %v1993 = vadd.f32 %v1986, %v252
  %v1994 = vadd.f32 %v1987, %v252
  %v1995 = vadd.f32 %v1988, %v252
  %v1996 = vadd.f32 %v1989, %v252
  %vm1997 = vcmp.ge.f32.partialorder %v1990, 0.0
  %vm1998 = vcmp.ge.f32.partialorder %v1991, 0.0
  %vm1999 = vcmp.ge.f32.partialorder %v1992, 0.0
  %vm2000 = vcmp.ge.f32.partialorder %v1993, 0.0
  %vm2001 = vcmp.ge.f32.partialorder %v1994, 0.0
  %vm2002 = vcmp.ge.f32.partialorder %v1995, 0.0
  %vm2003 = vcmp.ge.f32.partialorder %v1996, 0.0
  %v2004 = vmul.f32 %v1990, 0.2
  %v2005 = vmul.f32 %v1991, 0.2
  %v2006 = vmul.f32 %v1992, 0.2
  %v2007 = vmul.f32 %v1993, 0.2
  %v2008 = vmul.f32 %v1994, 0.2
  %v2009 = vmul.f32 %v1995, 0.2
  %v2010 = vmul.f32 %v1996, 0.2
  %v2011 = vsel %vm1997, %v1990, %v2004
  %v2012 = vsel %vm1998, %v1991, %v2005
  %v2013 = vsel %vm1999, %v1992, %v2006
  %v2014 = vsel %vm2000, %v1993, %v2007
  %v2015 = vsel %vm2001, %v1994, %v2008
  %v2016 = vsel %vm2002, %v1995, %v2009
  %v2017 = vsel %vm2003, %v1996, %v2010
  %v2018 = vpack.c.bf16 %v2012, %v2011
  %v2019 = vpack.c.bf16 %v2014, %v2013
  %v2020 = vpack.c.bf16 %v2016, %v2015
  %v2021 = vpack.c.bf16 %v2017, %v2017
  %s2022 = scalar_lea.vmem %s1, 64
  %v2023 = vld [vmem:[%s2022] sm:$0xf]
  %v2024 = vld [vmem:[%s2022 + $0x4] sm:$0xf]
  %v2027 = vunpack.c.l.b16 %v2023
  %v2028 = vunpack.c.l.b16 %v2024
  %v2029 = vpack.c.b16 %v2028, %v2027
  %v2032 = vsel %vm30, %v2018, 0
  %v2035 = vsel %vm30, %v2019, 0
  %v2038 = vsel %vm30, %v2020, 0
  %v2041 = vsel %vm30, %v2021, 0
  %2043 = vmatprep.subr.bf16.mxu0 0
  %2044 = vmatpush1.bf16.msra.mxu0 0
  %2045 = vmatprep.subr.bf16.mxu0 0
  %2046 = vmatpush1.bf16.msra.mxu0 0
  %2047 = vmatprep.subr.bf16.mxu0 0
  %2048 = vmatpush1.bf16.msra.mxu0 0
  %2049 = vmatprep.subr.bf16.mxu0 0
  %2050 = vmatpush1.bf16.msra.mxu0 0
  %2051 = vmatprep.subr.bf16.mxu0 0
  %2052 = vmatpush1.bf16.msra.mxu0 0
  %2053 = vmatprep.subr.bf16.mxu0 0
  %2054 = vmatpush1.bf16.msra.mxu0 0
  %2055 = vmatprep.subr.bf16.mxu0 0
  %2056 = vmatpush1.bf16.msra.mxu0 0
  %2057 = vmatprep.subr.bf16.mxu0 0
  %2058 = vmatpush1.bf16.msra.mxu0 %v2029
  %2059 = vmatprep.subr.bf16.mxu0 0
  %2060 = vmatpush2.bf16.msra.mxu0 0
  %2061 = vmatprep.subr.bf16.mxu0 0
  %2062 = vmatpush2.bf16.msra.mxu0 0
  %2063 = vmatprep.subr.bf16.mxu0 0
  %2064 = vmatpush2.bf16.msra.mxu0 0
  %2065 = vmatprep.subr.bf16.mxu0 0
  %2066 = vmatpush2.bf16.msra.mxu0 0
  %2067 = vmatprep.subr.bf16.mxu0 0
  %2068 = vmatpush2.bf16.msra.mxu0 0
  %2069 = vmatprep.subr.bf16.mxu0 0
  %2070 = vmatpush2.bf16.msra.mxu0 0
  %2071 = vmatprep.subr.bf16.mxu0 0
  %2072 = vmatpush2.bf16.msra.mxu0 0
  %2073 = vmatprep.subr.bf16.mxu0 0
  %2074 = vmatpush2.bf16.msra.mxu0 0
  %2075 = vmatprep.mubr.bf16.mxu0 0
  %2076 = vmatmul.mubr.bf16.gmra.mxu0 %v2032
  %v2077 = vpop.f32.mrf.mxu0
  %v2078 = vadd.f32 0.0, %v2077
  %v2079 = vpop.f32.mrf.mxu0
  %v2080 = vpop.f32.mrf.mxu0
  %v2081 = vadd.f32 0.0, %v2080
  %v2082 = vpop.f32.mrf.mxu0
  %2083 = vmatprep.mubr.bf16.mxu0 0
  %2084 = vmatmul.mubr.bf16.gmra.mxu0 %v2035
  %v2085 = vpop.f32.mrf.mxu0
  %v2086 = vadd.f32 0.0, %v2085
  %v2087 = vpop.f32.mrf.mxu0
  %v2088 = vpop.f32.mrf.mxu0
  %v2089 = vadd.f32 0.0, %v2088
  %v2090 = vpop.f32.mrf.mxu0
  %2091 = vmatprep.mubr.bf16.mxu0 0
  %2092 = vmatmul.mubr.bf16.gmra.mxu0 %v2038
  %v2093 = vpop.f32.mrf.mxu0
  %v2094 = vadd.f32 0.0, %v2093
  %v2095 = vpop.f32.mrf.mxu0
  %v2096 = vpop.f32.mrf.mxu0
  %v2097 = vadd.f32 0.0, %v2096
  %v2098 = vpop.f32.mrf.mxu0
  %2099 = vmatprep.mubr.bf16.mxu0 0
  %2100 = vmatmul.mubr.bf16.gmra.mxu0 %v2041
  %v2101 = vpop.f32.mrf.mxu0
  %v2102 = vadd.f32 0.0, %v2101
  %v2103 = vpop.f32.mrf.mxu0
  %v2104 = vpop.f32.mrf.mxu0
  %v2105 = vpop.f32.mrf.mxu0
  %2106 = vdwg.mxu0
  %v2107 = vadd.f32 %v1888, %v2078
  %v2108 = vadd.f32 %v1889, %v2081
  %v2109 = vadd.f32 %v1890, %v2086
  %v2110 = vadd.f32 %v1891, %v2089
  %v2111 = vadd.f32 %v1892, %v2094
  %v2112 = vadd.f32 %v1893, %v2097
  %v2113 = vadd.f32 %v1894, %v2102
  %s2114 = scalar_lea.vmem %s0, 504
  %v2115 = vld [vmem:[%s2114] sm:$0xff]
  %v2116 = vld [vmem:[%s2114 + $0x8] sm:$0xff]
  %v2117 = vld [vmem:[%s2114 + $0x10] sm:$0xff]
  %v2118 = vld [vmem:[%s2114 + $0x18] sm:$0xff]
  %v2119 = vld [vmem:[%s2114 + $0x20] sm:$0xff]
  %v2120 = vld [vmem:[%s2114 + $0x28] sm:$0xff]
  %v2121 = vld [vmem:[%s2114 + $0x30] sm:$0x3]
  %v2122 = vpack.c.bf16 %v2116, %v2115
  %v2123 = vpack.c.bf16 %v2118, %v2117
  %v2124 = vpack.c.bf16 %v2120, %v2119
  %v2125 = vpack.c.bf16 %v2121, %v2121
  %v2127 = vsel %vm30, %v2122, 0
  %v2130 = vsel %vm30, %v2123, 0
  %v2133 = vsel %vm30, %v2124, 0
  %v2136 = vsel %vm30, %v2125, 0
  %2138 = vmatprep.subr.bf16.mxu0 0
  %2139 = vmatpush1.bf16.msra.mxu0 0
  %2140 = vmatprep.subr.bf16.mxu0 0
  %2141 = vmatpush1.bf16.msra.mxu0 0
  %2142 = vmatprep.subr.bf16.mxu0 0
  %2143 = vmatpush1.bf16.msra.mxu0 0
  %2144 = vmatprep.subr.bf16.mxu0 0
  %2145 = vmatpush1.bf16.msra.mxu0 0
  %2146 = vmatprep.subr.bf16.mxu0 0
  %2147 = vmatpush1.bf16.msra.mxu0 0
  %2148 = vmatprep.subr.bf16.mxu0 0
  %2149 = vmatpush1.bf16.msra.mxu0 0
  %2150 = vmatprep.subr.bf16.mxu0 0
  %2151 = vmatpush1.bf16.msra.mxu0 0
  %2152 = vmatprep.subr.bf16.mxu0 0
  %2153 = vmatpush1.bf16.msra.mxu0 %v150
  %2154 = vmatprep.subr.bf16.mxu0 0
  %2155 = vmatpush2.bf16.msra.mxu0 0
  %2156 = vmatprep.subr.bf16.mxu0 0
  %2157 = vmatpush2.bf16.msra.mxu0 0
  %2158 = vmatprep.subr.bf16.mxu0 0
  %2159 = vmatpush2.bf16.msra.mxu0 0
  %2160 = vmatprep.subr.bf16.mxu0 0
  %2161 = vmatpush2.bf16.msra.mxu0 0
  %2162 = vmatprep.subr.bf16.mxu0 0
  %2163 = vmatpush2.bf16.msra.mxu0 0
  %2164 = vmatprep.subr.bf16.mxu0 0
  %2165 = vmatpush2.bf16.msra.mxu0 0
  %2166 = vmatprep.subr.bf16.mxu0 0
  %2167 = vmatpush2.bf16.msra.mxu0 0
  %2168 = vmatprep.subr.bf16.mxu0 0
  %2169 = vmatpush2.bf16.msra.mxu0 0
  %2170 = vmatprep.mubr.bf16.mxu0 0
  %2171 = vmatmul.mubr.bf16.gmra.mxu0 %v2127
  %v2172 = vpop.f32.mrf.mxu0
  %v2173 = vadd.f32 0.0, %v2172
  %v2174 = vpop.f32.mrf.mxu0
  %v2175 = vpop.f32.mrf.mxu0
  %v2176 = vadd.f32 0.0, %v2175
  %v2177 = vpop.f32.mrf.mxu0
  %2178 = vmatprep.mubr.bf16.mxu0 0
  %2179 = vmatmul.mubr.bf16.gmra.mxu0 %v2130
  %v2180 = vpop.f32.mrf.mxu0
  %v2181 = vadd.f32 0.0, %v2180
  %v2182 = vpop.f32.mrf.mxu0
  %v2183 = vpop.f32.mrf.mxu0
  %v2184 = vadd.f32 0.0, %v2183
  %v2185 = vpop.f32.mrf.mxu0
  %2186 = vmatprep.mubr.bf16.mxu0 0
  %2187 = vmatmul.mubr.bf16.gmra.mxu0 %v2133
  %v2188 = vpop.f32.mrf.mxu0
  %v2189 = vadd.f32 0.0, %v2188
  %v2190 = vpop.f32.mrf.mxu0
  %v2191 = vpop.f32.mrf.mxu0
  %v2192 = vadd.f32 0.0, %v2191
  %v2193 = vpop.f32.mrf.mxu0
  %2194 = vmatprep.mubr.bf16.mxu0 0
  %2195 = vmatmul.mubr.bf16.gmra.mxu0 %v2136
  %v2196 = vpop.f32.mrf.mxu0
  %v2197 = vadd.f32 0.0, %v2196
  %v2198 = vpop.f32.mrf.mxu0
  %v2199 = vpop.f32.mrf.mxu0
  %v2200 = vpop.f32.mrf.mxu0
  %2201 = vdwg.mxu0
  %v2202 = vmul.f32 %v2173, %v241
  %v2203 = vmul.f32 %v2176, %v241
  %v2204 = vmul.f32 %v2181, %v241
  %v2205 = vmul.f32 %v2184, %v241
  %v2206 = vmul.f32 %v2189, %v241
  %v2207 = vmul.f32 %v2192, %v241
  %v2208 = vmul.f32 %v2197, %v241
  %v2209 = vadd.f32 %v2202, %v252
  %v2210 = vadd.f32 %v2203, %v252
  %v2211 = vadd.f32 %v2204, %v252
  %v2212 = vadd.f32 %v2205, %v252
  %v2213 = vadd.f32 %v2206, %v252
  %v2214 = vadd.f32 %v2207, %v252
  %v2215 = vadd.f32 %v2208, %v252
  %vm2216 = vcmp.ge.f32.partialorder %v2209, 0.0
  %vm2217 = vcmp.ge.f32.partialorder %v2210, 0.0
  %vm2218 = vcmp.ge.f32.partialorder %v2211, 0.0
  %vm2219 = vcmp.ge.f32.partialorder %v2212, 0.0
  %vm2220 = vcmp.ge.f32.partialorder %v2213, 0.0
  %vm2221 = vcmp.ge.f32.partialorder %v2214, 0.0
  %vm2222 = vcmp.ge.f32.partialorder %v2215, 0.0
  %v2223 = vmul.f32 %v2209, 0.2
  %v2224 = vmul.f32 %v2210, 0.2
  %v2225 = vmul.f32 %v2211, 0.2
  %v2226 = vmul.f32 %v2212, 0.2
  %v2227 = vmul.f32 %v2213, 0.2
  %v2228 = vmul.f32 %v2214, 0.2
  %v2229 = vmul.f32 %v2215, 0.2
  %v2230 = vsel %vm2216, %v2209, %v2223
  %v2231 = vsel %vm2217, %v2210, %v2224
  %v2232 = vsel %vm2218, %v2211, %v2225
  %v2233 = vsel %vm2219, %v2212, %v2226
  %v2234 = vsel %vm2220, %v2213, %v2227
  %v2235 = vsel %vm2221, %v2214, %v2228
  %v2236 = vsel %vm2222, %v2215, %v2229
  %v2237 = vpack.c.bf16 %v2231, %v2230
  %v2238 = vpack.c.bf16 %v2233, %v2232
  %v2239 = vpack.c.bf16 %v2235, %v2234
  %v2240 = vpack.c.bf16 %v2236, %v2236
  %s2241 = scalar_lea.vmem %s1, 72
  %v2242 = vld [vmem:[%s2241] sm:$0xf]
  %v2243 = vld [vmem:[%s2241 + $0x4] sm:$0xf]
  %v2246 = vunpack.c.l.b16 %v2242
  %v2247 = vunpack.c.l.b16 %v2243
  %v2248 = vpack.c.b16 %v2247, %v2246
  %v2251 = vsel %vm30, %v2237, 0
  %v2254 = vsel %vm30, %v2238, 0
  %v2257 = vsel %vm30, %v2239, 0
  %v2260 = vsel %vm30, %v2240, 0
  %2262 = vmatprep.subr.bf16.mxu0 0
  %2263 = vmatpush1.bf16.msra.mxu0 0
  %2264 = vmatprep.subr.bf16.mxu0 0
  %2265 = vmatpush1.bf16.msra.mxu0 0
  %2266 = vmatprep.subr.bf16.mxu0 0
  %2267 = vmatpush1.bf16.msra.mxu0 0
  %2268 = vmatprep.subr.bf16.mxu0 0
  %2269 = vmatpush1.bf16.msra.mxu0 0
  %2270 = vmatprep.subr.bf16.mxu0 0
  %2271 = vmatpush1.bf16.msra.mxu0 0
  %2272 = vmatprep.subr.bf16.mxu0 0
  %2273 = vmatpush1.bf16.msra.mxu0 0
  %2274 = vmatprep.subr.bf16.mxu0 0
  %2275 = vmatpush1.bf16.msra.mxu0 0
  %2276 = vmatprep.subr.bf16.mxu0 0
  %2277 = vmatpush1.bf16.msra.mxu0 %v2248
  %2278 = vmatprep.subr.bf16.mxu0 0
  %2279 = vmatpush2.bf16.msra.mxu0 0
  %2280 = vmatprep.subr.bf16.mxu0 0
  %2281 = vmatpush2.bf16.msra.mxu0 0
  %2282 = vmatprep.subr.bf16.mxu0 0
  %2283 = vmatpush2.bf16.msra.mxu0 0
  %2284 = vmatprep.subr.bf16.mxu0 0
  %2285 = vmatpush2.bf16.msra.mxu0 0
  %2286 = vmatprep.subr.bf16.mxu0 0
  %2287 = vmatpush2.bf16.msra.mxu0 0
  %2288 = vmatprep.subr.bf16.mxu0 0
  %2289 = vmatpush2.bf16.msra.mxu0 0
  %2290 = vmatprep.subr.bf16.mxu0 0
  %2291 = vmatpush2.bf16.msra.mxu0 0
  %2292 = vmatprep.subr.bf16.mxu0 0
  %2293 = vmatpush2.bf16.msra.mxu0 0
  %2294 = vmatprep.mubr.bf16.mxu0 0
  %2295 = vmatmul.mubr.bf16.gmra.mxu0 %v2251
  %v2296 = vpop.f32.mrf.mxu0
  %v2297 = vadd.f32 0.0, %v2296
  %v2298 = vpop.f32.mrf.mxu0
  %v2299 = vpop.f32.mrf.mxu0
  %v2300 = vadd.f32 0.0, %v2299
  %v2301 = vpop.f32.mrf.mxu0
  %2302 = vmatprep.mubr.bf16.mxu0 0
  %2303 = vmatmul.mubr.bf16.gmra.mxu0 %v2254
  %v2304 = vpop.f32.mrf.mxu0
  %v2305 = vadd.f32 0.0, %v2304
  %v2306 = vpop.f32.mrf.mxu0
  %v2307 = vpop.f32.mrf.mxu0
  %v2308 = vadd.f32 0.0, %v2307
  %v2309 = vpop.f32.mrf.mxu0
  %2310 = vmatprep.mubr.bf16.mxu0 0
  %2311 = vmatmul.mubr.bf16.gmra.mxu0 %v2257
  %v2312 = vpop.f32.mrf.mxu0
  %v2313 = vadd.f32 0.0, %v2312
  %v2314 = vpop.f32.mrf.mxu0
  %v2315 = vpop.f32.mrf.mxu0
  %v2316 = vadd.f32 0.0, %v2315
  %v2317 = vpop.f32.mrf.mxu0
  %2318 = vmatprep.mubr.bf16.mxu0 0
  %2319 = vmatmul.mubr.bf16.gmra.mxu0 %v2260
  %v2320 = vpop.f32.mrf.mxu0
  %v2321 = vadd.f32 0.0, %v2320
  %v2322 = vpop.f32.mrf.mxu0
  %v2323 = vpop.f32.mrf.mxu0
  %v2324 = vpop.f32.mrf.mxu0
  %2325 = vdwg.mxu0
  %v2326 = vadd.f32 %v2107, %v2297
  %v2327 = vadd.f32 %v2108, %v2300
  %v2328 = vadd.f32 %v2109, %v2305
  %v2329 = vadd.f32 %v2110, %v2308
  %v2330 = vadd.f32 %v2111, %v2313
  %v2331 = vadd.f32 %v2112, %v2316
  %v2332 = vadd.f32 %v2113, %v2321
  %s2333 = scalar_lea.vmem %s0, 560
  %v2334 = vld [vmem:[%s2333] sm:$0xff]
  %v2335 = vld [vmem:[%s2333 + $0x8] sm:$0xff]
  %v2336 = vld [vmem:[%s2333 + $0x10] sm:$0xff]
  %v2337 = vld [vmem:[%s2333 + $0x18] sm:$0xff]
  %v2338 = vld [vmem:[%s2333 + $0x20] sm:$0xff]
  %v2339 = vld [vmem:[%s2333 + $0x28] sm:$0xff]
  %v2340 = vld [vmem:[%s2333 + $0x30] sm:$0x3]
  %v2341 = vpack.c.bf16 %v2335, %v2334
  %v2342 = vpack.c.bf16 %v2337, %v2336
  %v2343 = vpack.c.bf16 %v2339, %v2338
  %v2344 = vpack.c.bf16 %v2340, %v2340
  %v2346 = vsel %vm30, %v2341, 0
  %v2349 = vsel %vm30, %v2342, 0
  %v2352 = vsel %vm30, %v2343, 0
  %v2355 = vsel %vm30, %v2344, 0
  %2357 = vmatprep.subr.bf16.mxu0 0
  %2358 = vmatpush1.bf16.msra.mxu0 0
  %2359 = vmatprep.subr.bf16.mxu0 0
  %2360 = vmatpush1.bf16.msra.mxu0 0
  %2361 = vmatprep.subr.bf16.mxu0 0
  %2362 = vmatpush1.bf16.msra.mxu0 0
  %2363 = vmatprep.subr.bf16.mxu0 0
  %2364 = vmatpush1.bf16.msra.mxu0 0
  %2365 = vmatprep.subr.bf16.mxu0 0
  %2366 = vmatpush1.bf16.msra.mxu0 0
  %2367 = vmatprep.subr.bf16.mxu0 0
  %2368 = vmatpush1.bf16.msra.mxu0 0
  %2369 = vmatprep.subr.bf16.mxu0 0
  %2370 = vmatpush1.bf16.msra.mxu0 0
  %2371 = vmatprep.subr.bf16.mxu0 0
  %2372 = vmatpush1.bf16.msra.mxu0 %v150
  %2373 = vmatprep.subr.bf16.mxu0 0
  %2374 = vmatpush2.bf16.msra.mxu0 0
  %2375 = vmatprep.subr.bf16.mxu0 0
  %2376 = vmatpush2.bf16.msra.mxu0 0
  %2377 = vmatprep.subr.bf16.mxu0 0
  %2378 = vmatpush2.bf16.msra.mxu0 0
  %2379 = vmatprep.subr.bf16.mxu0 0
  %2380 = vmatpush2.bf16.msra.mxu0 0
  %2381 = vmatprep.subr.bf16.mxu0 0
  %2382 = vmatpush2.bf16.msra.mxu0 0
  %2383 = vmatprep.subr.bf16.mxu0 0
  %2384 = vmatpush2.bf16.msra.mxu0 0
  %2385 = vmatprep.subr.bf16.mxu0 0
  %2386 = vmatpush2.bf16.msra.mxu0 0
  %2387 = vmatprep.subr.bf16.mxu0 0
  %2388 = vmatpush2.bf16.msra.mxu0 0
  %2389 = vmatprep.mubr.bf16.mxu0 0
  %2390 = vmatmul.mubr.bf16.gmra.mxu0 %v2346
  %v2391 = vpop.f32.mrf.mxu0
  %v2392 = vadd.f32 0.0, %v2391
  %v2393 = vpop.f32.mrf.mxu0
  %v2394 = vpop.f32.mrf.mxu0
  %v2395 = vadd.f32 0.0, %v2394
  %v2396 = vpop.f32.mrf.mxu0
  %2397 = vmatprep.mubr.bf16.mxu0 0
  %2398 = vmatmul.mubr.bf16.gmra.mxu0 %v2349
  %v2399 = vpop.f32.mrf.mxu0
  %v2400 = vadd.f32 0.0, %v2399
  %v2401 = vpop.f32.mrf.mxu0
  %v2402 = vpop.f32.mrf.mxu0
  %v2403 = vadd.f32 0.0, %v2402
  %v2404 = vpop.f32.mrf.mxu0
  %2405 = vmatprep.mubr.bf16.mxu0 0
  %2406 = vmatmul.mubr.bf16.gmra.mxu0 %v2352
  %v2407 = vpop.f32.mrf.mxu0
  %v2408 = vadd.f32 0.0, %v2407
  %v2409 = vpop.f32.mrf.mxu0
  %v2410 = vpop.f32.mrf.mxu0
  %v2411 = vadd.f32 0.0, %v2410
  %v2412 = vpop.f32.mrf.mxu0
  %2413 = vmatprep.mubr.bf16.mxu0 0
  %2414 = vmatmul.mubr.bf16.gmra.mxu0 %v2355
  %v2415 = vpop.f32.mrf.mxu0
  %v2416 = vadd.f32 0.0, %v2415
  %v2417 = vpop.f32.mrf.mxu0
  %v2418 = vpop.f32.mrf.mxu0
  %v2419 = vpop.f32.mrf.mxu0
  %2420 = vdwg.mxu0
  %v2421 = vmul.f32 %v2392, %v241
  %v2422 = vmul.f32 %v2395, %v241
  %v2423 = vmul.f32 %v2400, %v241
  %v2424 = vmul.f32 %v2403, %v241
  %v2425 = vmul.f32 %v2408, %v241
  %v2426 = vmul.f32 %v2411, %v241
  %v2427 = vmul.f32 %v2416, %v241
  %v2428 = vadd.f32 %v2421, %v252
  %v2429 = vadd.f32 %v2422, %v252
  %v2430 = vadd.f32 %v2423, %v252
  %v2431 = vadd.f32 %v2424, %v252
  %v2432 = vadd.f32 %v2425, %v252
  %v2433 = vadd.f32 %v2426, %v252
  %v2434 = vadd.f32 %v2427, %v252
  %vm2435 = vcmp.ge.f32.partialorder %v2428, 0.0
  %vm2436 = vcmp.ge.f32.partialorder %v2429, 0.0
  %vm2437 = vcmp.ge.f32.partialorder %v2430, 0.0
  %vm2438 = vcmp.ge.f32.partialorder %v2431, 0.0
  %vm2439 = vcmp.ge.f32.partialorder %v2432, 0.0
  %vm2440 = vcmp.ge.f32.partialorder %v2433, 0.0
  %vm2441 = vcmp.ge.f32.partialorder %v2434, 0.0
  %v2442 = vmul.f32 %v2428, 0.2
  %v2443 = vmul.f32 %v2429, 0.2
  %v2444 = vmul.f32 %v2430, 0.2
  %v2445 = vmul.f32 %v2431, 0.2
  %v2446 = vmul.f32 %v2432, 0.2
  %v2447 = vmul.f32 %v2433, 0.2
  %v2448 = vmul.f32 %v2434, 0.2
  %v2449 = vsel %vm2435, %v2428, %v2442
  %v2450 = vsel %vm2436, %v2429, %v2443
  %v2451 = vsel %vm2437, %v2430, %v2444
  %v2452 = vsel %vm2438, %v2431, %v2445
  %v2453 = vsel %vm2439, %v2432, %v2446
  %v2454 = vsel %vm2440, %v2433, %v2447
  %v2455 = vsel %vm2441, %v2434, %v2448
  %v2456 = vpack.c.bf16 %v2450, %v2449
  %v2457 = vpack.c.bf16 %v2452, %v2451
  %v2458 = vpack.c.bf16 %v2454, %v2453
  %v2459 = vpack.c.bf16 %v2455, %v2455
  %s2460 = scalar_lea.vmem %s1, 80
  %v2461 = vld [vmem:[%s2460] sm:$0xf]
  %v2462 = vld [vmem:[%s2460 + $0x4] sm:$0xf]
  %v2465 = vunpack.c.l.b16 %v2461
  %v2466 = vunpack.c.l.b16 %v2462
  %v2467 = vpack.c.b16 %v2466, %v2465
  %v2470 = vsel %vm30, %v2456, 0
  %v2473 = vsel %vm30, %v2457, 0
  %v2476 = vsel %vm30, %v2458, 0
  %v2479 = vsel %vm30, %v2459, 0
  %2481 = vmatprep.subr.bf16.mxu0 0
  %2482 = vmatpush1.bf16.msra.mxu0 0
  %2483 = vmatprep.subr.bf16.mxu0 0
  %2484 = vmatpush1.bf16.msra.mxu0 0
  %2485 = vmatprep.subr.bf16.mxu0 0
  %2486 = vmatpush1.bf16.msra.mxu0 0
  %2487 = vmatprep.subr.bf16.mxu0 0
  %2488 = vmatpush1.bf16.msra.mxu0 0
  %2489 = vmatprep.subr.bf16.mxu0 0
  %2490 = vmatpush1.bf16.msra.mxu0 0
  %2491 = vmatprep.subr.bf16.mxu0 0
  %2492 = vmatpush1.bf16.msra.mxu0 0
  %2493 = vmatprep.subr.bf16.mxu0 0
  %2494 = vmatpush1.bf16.msra.mxu0 0
  %2495 = vmatprep.subr.bf16.mxu0 0
  %2496 = vmatpush1.bf16.msra.mxu0 %v2467
  %2497 = vmatprep.subr.bf16.mxu0 0
  %2498 = vmatpush2.bf16.msra.mxu0 0
  %2499 = vmatprep.subr.bf16.mxu0 0
  %2500 = vmatpush2.bf16.msra.mxu0 0
  %2501 = vmatprep.subr.bf16.mxu0 0
  %2502 = vmatpush2.bf16.msra.mxu0 0
  %2503 = vmatprep.subr.bf16.mxu0 0
  %2504 = vmatpush2.bf16.msra.mxu0 0
  %2505 = vmatprep.subr.bf16.mxu0 0
  %2506 = vmatpush2.bf16.msra.mxu0 0
  %2507 = vmatprep.subr.bf16.mxu0 0
  %2508 = vmatpush2.bf16.msra.mxu0 0
  %2509 = vmatprep.subr.bf16.mxu0 0
  %2510 = vmatpush2.bf16.msra.mxu0 0
  %2511 = vmatprep.subr.bf16.mxu0 0
  %2512 = vmatpush2.bf16.msra.mxu0 0
  %2513 = vmatprep.mubr.bf16.mxu0 0
  %2514 = vmatmul.mubr.bf16.gmra.mxu0 %v2470
  %v2515 = vpop.f32.mrf.mxu0
  %v2516 = vadd.f32 0.0, %v2515
  %v2517 = vpop.f32.mrf.mxu0
  %v2518 = vpop.f32.mrf.mxu0
  %v2519 = vadd.f32 0.0, %v2518
  %v2520 = vpop.f32.mrf.mxu0
  %2521 = vmatprep.mubr.bf16.mxu0 0
  %2522 = vmatmul.mubr.bf16.gmra.mxu0 %v2473
  %v2523 = vpop.f32.mrf.mxu0
  %v2524 = vadd.f32 0.0, %v2523
  %v2525 = vpop.f32.mrf.mxu0
  %v2526 = vpop.f32.mrf.mxu0
  %v2527 = vadd.f32 0.0, %v2526
  %v2528 = vpop.f32.mrf.mxu0
  %2529 = vmatprep.mubr.bf16.mxu0 0
  %2530 = vmatmul.mubr.bf16.gmra.mxu0 %v2476
  %v2531 = vpop.f32.mrf.mxu0
  %v2532 = vadd.f32 0.0, %v2531
  %v2533 = vpop.f32.mrf.mxu0
  %v2534 = vpop.f32.mrf.mxu0
  %v2535 = vadd.f32 0.0, %v2534
  %v2536 = vpop.f32.mrf.mxu0
  %2537 = vmatprep.mubr.bf16.mxu0 0
  %2538 = vmatmul.mubr.bf16.gmra.mxu0 %v2479
  %v2539 = vpop.f32.mrf.mxu0
  %v2540 = vadd.f32 0.0, %v2539
  %v2541 = vpop.f32.mrf.mxu0
  %v2542 = vpop.f32.mrf.mxu0
  %v2543 = vpop.f32.mrf.mxu0
  %2544 = vdwg.mxu0
  %v2545 = vadd.f32 %v2326, %v2516
  %v2546 = vadd.f32 %v2327, %v2519
  %v2547 = vadd.f32 %v2328, %v2524
  %v2548 = vadd.f32 %v2329, %v2527
  %v2549 = vadd.f32 %v2330, %v2532
  %v2550 = vadd.f32 %v2331, %v2535
  %v2551 = vadd.f32 %v2332, %v2540
  %s2552 = scalar_lea.vmem %s0, 616
  %v2553 = vld [vmem:[%s2552] sm:$0xff]
  %v2554 = vld [vmem:[%s2552 + $0x8] sm:$0xff]
  %v2555 = vld [vmem:[%s2552 + $0x10] sm:$0xff]
  %v2556 = vld [vmem:[%s2552 + $0x18] sm:$0xff]
  %v2557 = vld [vmem:[%s2552 + $0x20] sm:$0xff]
  %v2558 = vld [vmem:[%s2552 + $0x28] sm:$0xff]
  %v2559 = vld [vmem:[%s2552 + $0x30] sm:$0x3]
  %v2560 = vpack.c.bf16 %v2554, %v2553
  %v2561 = vpack.c.bf16 %v2556, %v2555
  %v2562 = vpack.c.bf16 %v2558, %v2557
  %v2563 = vpack.c.bf16 %v2559, %v2559
  %v2565 = vsel %vm30, %v2560, 0
  %v2568 = vsel %vm30, %v2561, 0
  %v2571 = vsel %vm30, %v2562, 0
  %v2574 = vsel %vm30, %v2563, 0
  %2576 = vmatprep.subr.bf16.mxu0 0
  %2577 = vmatpush1.bf16.msra.mxu0 0
  %2578 = vmatprep.subr.bf16.mxu0 0
  %2579 = vmatpush1.bf16.msra.mxu0 0
  %2580 = vmatprep.subr.bf16.mxu0 0
  %2581 = vmatpush1.bf16.msra.mxu0 0
  %2582 = vmatprep.subr.bf16.mxu0 0
  %2583 = vmatpush1.bf16.msra.mxu0 0
  %2584 = vmatprep.subr.bf16.mxu0 0
  %2585 = vmatpush1.bf16.msra.mxu0 0
  %2586 = vmatprep.subr.bf16.mxu0 0
  %2587 = vmatpush1.bf16.msra.mxu0 0
  %2588 = vmatprep.subr.bf16.mxu0 0
  %2589 = vmatpush1.bf16.msra.mxu0 0
  %2590 = vmatprep.subr.bf16.mxu0 0
  %2591 = vmatpush1.bf16.msra.mxu0 %v150
  %2592 = vmatprep.subr.bf16.mxu0 0
  %2593 = vmatpush2.bf16.msra.mxu0 0
  %2594 = vmatprep.subr.bf16.mxu0 0
  %2595 = vmatpush2.bf16.msra.mxu0 0
  %2596 = vmatprep.subr.bf16.mxu0 0
  %2597 = vmatpush2.bf16.msra.mxu0 0
  %2598 = vmatprep.subr.bf16.mxu0 0
  %2599 = vmatpush2.bf16.msra.mxu0 0
  %2600 = vmatprep.subr.bf16.mxu0 0
  %2601 = vmatpush2.bf16.msra.mxu0 0
  %2602 = vmatprep.subr.bf16.mxu0 0
  %2603 = vmatpush2.bf16.msra.mxu0 0
  %2604 = vmatprep.subr.bf16.mxu0 0
  %2605 = vmatpush2.bf16.msra.mxu0 0
  %2606 = vmatprep.subr.bf16.mxu0 0
  %2607 = vmatpush2.bf16.msra.mxu0 0
  %2608 = vmatprep.mubr.bf16.mxu0 0
  %2609 = vmatmul.mubr.bf16.gmra.mxu0 %v2565
  %v2610 = vpop.f32.mrf.mxu0
  %v2611 = vadd.f32 0.0, %v2610
  %v2612 = vpop.f32.mrf.mxu0
  %v2613 = vpop.f32.mrf.mxu0
  %v2614 = vadd.f32 0.0, %v2613
  %v2615 = vpop.f32.mrf.mxu0
  %2616 = vmatprep.mubr.bf16.mxu0 0
  %2617 = vmatmul.mubr.bf16.gmra.mxu0 %v2568
  %v2618 = vpop.f32.mrf.mxu0
  %v2619 = vadd.f32 0.0, %v2618
  %v2620 = vpop.f32.mrf.mxu0
  %v2621 = vpop.f32.mrf.mxu0
  %v2622 = vadd.f32 0.0, %v2621
  %v2623 = vpop.f32.mrf.mxu0
  %2624 = vmatprep.mubr.bf16.mxu0 0
  %2625 = vmatmul.mubr.bf16.gmra.mxu0 %v2571
  %v2626 = vpop.f32.mrf.mxu0
  %v2627 = vadd.f32 0.0, %v2626
  %v2628 = vpop.f32.mrf.mxu0
  %v2629 = vpop.f32.mrf.mxu0
  %v2630 = vadd.f32 0.0, %v2629
  %v2631 = vpop.f32.mrf.mxu0
  %2632 = vmatprep.mubr.bf16.mxu0 0
  %2633 = vmatmul.mubr.bf16.gmra.mxu0 %v2574
  %v2634 = vpop.f32.mrf.mxu0
  %v2635 = vadd.f32 0.0, %v2634
  %v2636 = vpop.f32.mrf.mxu0
  %v2637 = vpop.f32.mrf.mxu0
  %v2638 = vpop.f32.mrf.mxu0
  %2639 = vdwg.mxu0
  %v2640 = vmul.f32 %v2611, %v241
  %v2641 = vmul.f32 %v2614, %v241
  %v2642 = vmul.f32 %v2619, %v241
  %v2643 = vmul.f32 %v2622, %v241
  %v2644 = vmul.f32 %v2627, %v241
  %v2645 = vmul.f32 %v2630, %v241
  %v2646 = vmul.f32 %v2635, %v241
  %v2647 = vadd.f32 %v2640, %v252
  %v2648 = vadd.f32 %v2641, %v252
  %v2649 = vadd.f32 %v2642, %v252
  %v2650 = vadd.f32 %v2643, %v252
  %v2651 = vadd.f32 %v2644, %v252
  %v2652 = vadd.f32 %v2645, %v252
  %v2653 = vadd.f32 %v2646, %v252
  %vm2654 = vcmp.ge.f32.partialorder %v2647, 0.0
  %vm2655 = vcmp.ge.f32.partialorder %v2648, 0.0
  %vm2656 = vcmp.ge.f32.partialorder %v2649, 0.0
  %vm2657 = vcmp.ge.f32.partialorder %v2650, 0.0
  %vm2658 = vcmp.ge.f32.partialorder %v2651, 0.0
  %vm2659 = vcmp.ge.f32.partialorder %v2652, 0.0
  %vm2660 = vcmp.ge.f32.partialorder %v2653, 0.0
  %v2661 = vmul.f32 %v2647, 0.2
  %v2662 = vmul.f32 %v2648, 0.2
  %v2663 = vmul.f32 %v2649, 0.2
  %v2664 = vmul.f32 %v2650, 0.2
  %v2665 = vmul.f32 %v2651, 0.2
  %v2666 = vmul.f32 %v2652, 0.2
  %v2667 = vmul.f32 %v2653, 0.2
  %v2668 = vsel %vm2654, %v2647, %v2661
  %v2669 = vsel %vm2655, %v2648, %v2662
  %v2670 = vsel %vm2656, %v2649, %v2663
  %v2671 = vsel %vm2657, %v2650, %v2664
  %v2672 = vsel %vm2658, %v2651, %v2665
  %v2673 = vsel %vm2659, %v2652, %v2666
  %v2674 = vsel %vm2660, %v2653, %v2667
  %v2675 = vpack.c.bf16 %v2669, %v2668
  %v2676 = vpack.c.bf16 %v2671, %v2670
  %v2677 = vpack.c.bf16 %v2673, %v2672
  %v2678 = vpack.c.bf16 %v2674, %v2674
  %s2679 = scalar_lea.vmem %s1, 88
  %v2680 = vld [vmem:[%s2679] sm:$0xf]
  %v2681 = vld [vmem:[%s2679 + $0x4] sm:$0xf]
  %v2684 = vunpack.c.l.b16 %v2680
  %v2685 = vunpack.c.l.b16 %v2681
  %v2686 = vpack.c.b16 %v2685, %v2684
  %v2689 = vsel %vm30, %v2675, 0
  %v2692 = vsel %vm30, %v2676, 0
  %v2695 = vsel %vm30, %v2677, 0
  %v2698 = vsel %vm30, %v2678, 0
  %2700 = vmatprep.subr.bf16.mxu0 0
  %2701 = vmatpush1.bf16.msra.mxu0 0
  %2702 = vmatprep.subr.bf16.mxu0 0
  %2703 = vmatpush1.bf16.msra.mxu0 0
  %2704 = vmatprep.subr.bf16.mxu0 0
  %2705 = vmatpush1.bf16.msra.mxu0 0
  %2706 = vmatprep.subr.bf16.mxu0 0
  %2707 = vmatpush1.bf16.msra.mxu0 0
  %2708 = vmatprep.subr.bf16.mxu0 0
  %2709 = vmatpush1.bf16.msra.mxu0 0
  %2710 = vmatprep.subr.bf16.mxu0 0
  %2711 = vmatpush1.bf16.msra.mxu0 0
  %2712 = vmatprep.subr.bf16.mxu0 0
  %2713 = vmatpush1.bf16.msra.mxu0 0
  %2714 = vmatprep.subr.bf16.mxu0 0
  %2715 = vmatpush1.bf16.msra.mxu0 %v2686
  %2716 = vmatprep.subr.bf16.mxu0 0
  %2717 = vmatpush2.bf16.msra.mxu0 0
  %2718 = vmatprep.subr.bf16.mxu0 0
  %2719 = vmatpush2.bf16.msra.mxu0 0
  %2720 = vmatprep.subr.bf16.mxu0 0
  %2721 = vmatpush2.bf16.msra.mxu0 0
  %2722 = vmatprep.subr.bf16.mxu0 0
  %2723 = vmatpush2.bf16.msra.mxu0 0
  %2724 = vmatprep.subr.bf16.mxu0 0
  %2725 = vmatpush2.bf16.msra.mxu0 0
  %2726 = vmatprep.subr.bf16.mxu0 0
  %2727 = vmatpush2.bf16.msra.mxu0 0
  %2728 = vmatprep.subr.bf16.mxu0 0
  %2729 = vmatpush2.bf16.msra.mxu0 0
  %2730 = vmatprep.subr.bf16.mxu0 0
  %2731 = vmatpush2.bf16.msra.mxu0 0
  %2732 = vmatprep.mubr.bf16.mxu0 0
  %2733 = vmatmul.mubr.bf16.gmra.mxu0 %v2689
  %v2734 = vpop.f32.mrf.mxu0
  %v2735 = vadd.f32 0.0, %v2734
  %v2736 = vpop.f32.mrf.mxu0
  %v2737 = vpop.f32.mrf.mxu0
  %v2738 = vadd.f32 0.0, %v2737
  %v2739 = vpop.f32.mrf.mxu0
  %2740 = vmatprep.mubr.bf16.mxu0 0
  %2741 = vmatmul.mubr.bf16.gmra.mxu0 %v2692
  %v2742 = vpop.f32.mrf.mxu0
  %v2743 = vadd.f32 0.0, %v2742
  %v2744 = vpop.f32.mrf.mxu0
  %v2745 = vpop.f32.mrf.mxu0
  %v2746 = vadd.f32 0.0, %v2745
  %v2747 = vpop.f32.mrf.mxu0
  %2748 = vmatprep.mubr.bf16.mxu0 0
  %2749 = vmatmul.mubr.bf16.gmra.mxu0 %v2695
  %v2750 = vpop.f32.mrf.mxu0
  %v2751 = vadd.f32 0.0, %v2750
  %v2752 = vpop.f32.mrf.mxu0
  %v2753 = vpop.f32.mrf.mxu0
  %v2754 = vadd.f32 0.0, %v2753
  %v2755 = vpop.f32.mrf.mxu0
  %2756 = vmatprep.mubr.bf16.mxu0 0
  %2757 = vmatmul.mubr.bf16.gmra.mxu0 %v2698
  %v2758 = vpop.f32.mrf.mxu0
  %v2759 = vadd.f32 0.0, %v2758
  %v2760 = vpop.f32.mrf.mxu0
  %v2761 = vpop.f32.mrf.mxu0
  %v2762 = vpop.f32.mrf.mxu0
  %2763 = vdwg.mxu0
  %v2764 = vadd.f32 %v2545, %v2735
  %v2765 = vadd.f32 %v2546, %v2738
  %v2766 = vadd.f32 %v2547, %v2743
  %v2767 = vadd.f32 %v2548, %v2746
  %v2768 = vadd.f32 %v2549, %v2751
  %v2769 = vadd.f32 %v2550, %v2754
  %v2770 = vadd.f32 %v2551, %v2759
  %s2771 = scalar_lea.vmem %s0, 672
  %v2772 = vld [vmem:[%s2771] sm:$0xff]
  %v2773 = vld [vmem:[%s2771 + $0x8] sm:$0xff]
  %v2774 = vld [vmem:[%s2771 + $0x10] sm:$0xff]
  %v2775 = vld [vmem:[%s2771 + $0x18] sm:$0xff]
  %v2776 = vld [vmem:[%s2771 + $0x20] sm:$0xff]
  %v2777 = vld [vmem:[%s2771 + $0x28] sm:$0xff]
  %v2778 = vld [vmem:[%s2771 + $0x30] sm:$0x3]
  %v2779 = vpack.c.bf16 %v2773, %v2772
  %v2780 = vpack.c.bf16 %v2775, %v2774
  %v2781 = vpack.c.bf16 %v2777, %v2776
  %v2782 = vpack.c.bf16 %v2778, %v2778
  %v2784 = vsel %vm30, %v2779, 0
  %v2787 = vsel %vm30, %v2780, 0
  %v2790 = vsel %vm30, %v2781, 0
  %v2793 = vsel %vm30, %v2782, 0
  %2795 = vmatprep.subr.bf16.mxu0 0
  %2796 = vmatpush1.bf16.msra.mxu0 0
  %2797 = vmatprep.subr.bf16.mxu0 0
  %2798 = vmatpush1.bf16.msra.mxu0 0
  %2799 = vmatprep.subr.bf16.mxu0 0
  %2800 = vmatpush1.bf16.msra.mxu0 0
  %2801 = vmatprep.subr.bf16.mxu0 0
  %2802 = vmatpush1.bf16.msra.mxu0 0
  %2803 = vmatprep.subr.bf16.mxu0 0
  %2804 = vmatpush1.bf16.msra.mxu0 0
  %2805 = vmatprep.subr.bf16.mxu0 0
  %2806 = vmatpush1.bf16.msra.mxu0 0
  %2807 = vmatprep.subr.bf16.mxu0 0
  %2808 = vmatpush1.bf16.msra.mxu0 0
  %2809 = vmatprep.subr.bf16.mxu0 0
  %2810 = vmatpush1.bf16.msra.mxu0 %v150
  %2811 = vmatprep.subr.bf16.mxu0 0
  %2812 = vmatpush2.bf16.msra.mxu0 0
  %2813 = vmatprep.subr.bf16.mxu0 0
  %2814 = vmatpush2.bf16.msra.mxu0 0
  %2815 = vmatprep.subr.bf16.mxu0 0
  %2816 = vmatpush2.bf16.msra.mxu0 0
  %2817 = vmatprep.subr.bf16.mxu0 0
  %2818 = vmatpush2.bf16.msra.mxu0 0
  %2819 = vmatprep.subr.bf16.mxu0 0
  %2820 = vmatpush2.bf16.msra.mxu0 0
  %2821 = vmatprep.subr.bf16.mxu0 0
  %2822 = vmatpush2.bf16.msra.mxu0 0
  %2823 = vmatprep.subr.bf16.mxu0 0
  %2824 = vmatpush2.bf16.msra.mxu0 0
  %2825 = vmatprep.subr.bf16.mxu0 0
  %2826 = vmatpush2.bf16.msra.mxu0 0
  %2827 = vmatprep.mubr.bf16.mxu0 0
  %2828 = vmatmul.mubr.bf16.gmra.mxu0 %v2784
  %v2829 = vpop.f32.mrf.mxu0
  %v2830 = vadd.f32 0.0, %v2829
  %v2831 = vpop.f32.mrf.mxu0
  %v2832 = vpop.f32.mrf.mxu0
  %v2833 = vadd.f32 0.0, %v2832
  %v2834 = vpop.f32.mrf.mxu0
  %2835 = vmatprep.mubr.bf16.mxu0 0
  %2836 = vmatmul.mubr.bf16.gmra.mxu0 %v2787
  %v2837 = vpop.f32.mrf.mxu0
  %v2838 = vadd.f32 0.0, %v2837
  %v2839 = vpop.f32.mrf.mxu0
  %v2840 = vpop.f32.mrf.mxu0
  %v2841 = vadd.f32 0.0, %v2840
  %v2842 = vpop.f32.mrf.mxu0
  %2843 = vmatprep.mubr.bf16.mxu0 0
  %2844 = vmatmul.mubr.bf16.gmra.mxu0 %v2790
  %v2845 = vpop.f32.mrf.mxu0
  %v2846 = vadd.f32 0.0, %v2845
  %v2847 = vpop.f32.mrf.mxu0
  %v2848 = vpop.f32.mrf.mxu0
  %v2849 = vadd.f32 0.0, %v2848
  %v2850 = vpop.f32.mrf.mxu0
  %2851 = vmatprep.mubr.bf16.mxu0 0
  %2852 = vmatmul.mubr.bf16.gmra.mxu0 %v2793
  %v2853 = vpop.f32.mrf.mxu0
  %v2854 = vadd.f32 0.0, %v2853
  %v2855 = vpop.f32.mrf.mxu0
  %v2856 = vpop.f32.mrf.mxu0
  %v2857 = vpop.f32.mrf.mxu0
  %2858 = vdwg.mxu0
  %v2859 = vmul.f32 %v2830, %v241
  %v2860 = vmul.f32 %v2833, %v241
  %v2861 = vmul.f32 %v2838, %v241
  %v2862 = vmul.f32 %v2841, %v241
  %v2863 = vmul.f32 %v2846, %v241
  %v2864 = vmul.f32 %v2849, %v241
  %v2865 = vmul.f32 %v2854, %v241
  %v2866 = vadd.f32 %v2859, %v252
  %v2867 = vadd.f32 %v2860, %v252
  %v2868 = vadd.f32 %v2861, %v252
  %v2869 = vadd.f32 %v2862, %v252
  %v2870 = vadd.f32 %v2863, %v252
  %v2871 = vadd.f32 %v2864, %v252
  %v2872 = vadd.f32 %v2865, %v252
  %vm2873 = vcmp.ge.f32.partialorder %v2866, 0.0
  %vm2874 = vcmp.ge.f32.partialorder %v2867, 0.0
  %vm2875 = vcmp.ge.f32.partialorder %v2868, 0.0
  %vm2876 = vcmp.ge.f32.partialorder %v2869, 0.0
  %vm2877 = vcmp.ge.f32.partialorder %v2870, 0.0
  %vm2878 = vcmp.ge.f32.partialorder %v2871, 0.0
  %vm2879 = vcmp.ge.f32.partialorder %v2872, 0.0
  %v2880 = vmul.f32 %v2866, 0.2
  %v2881 = vmul.f32 %v2867, 0.2
  %v2882 = vmul.f32 %v2868, 0.2
  %v2883 = vmul.f32 %v2869, 0.2
  %v2884 = vmul.f32 %v2870, 0.2
  %v2885 = vmul.f32 %v2871, 0.2
  %v2886 = vmul.f32 %v2872, 0.2
  %v2887 = vsel %vm2873, %v2866, %v2880
  %v2888 = vsel %vm2874, %v2867, %v2881
  %v2889 = vsel %vm2875, %v2868, %v2882
  %v2890 = vsel %vm2876, %v2869, %v2883
  %v2891 = vsel %vm2877, %v2870, %v2884
  %v2892 = vsel %vm2878, %v2871, %v2885
  %v2893 = vsel %vm2879, %v2872, %v2886
  %v2894 = vpack.c.bf16 %v2888, %v2887
  %v2895 = vpack.c.bf16 %v2890, %v2889
  %v2896 = vpack.c.bf16 %v2892, %v2891
  %v2897 = vpack.c.bf16 %v2893, %v2893
  %s2898 = scalar_lea.vmem %s1, 96
  %v2899 = vld [vmem:[%s2898] sm:$0xf]
  %v2900 = vld [vmem:[%s2898 + $0x4] sm:$0xf]
  %v2903 = vunpack.c.l.b16 %v2899
  %v2904 = vunpack.c.l.b16 %v2900
  %v2905 = vpack.c.b16 %v2904, %v2903
  %v2908 = vsel %vm30, %v2894, 0
  %v2911 = vsel %vm30, %v2895, 0
  %v2914 = vsel %vm30, %v2896, 0
  %v2917 = vsel %vm30, %v2897, 0
  %2919 = vmatprep.subr.bf16.mxu0 0
  %2920 = vmatpush1.bf16.msra.mxu0 0
  %2921 = vmatprep.subr.bf16.mxu0 0
  %2922 = vmatpush1.bf16.msra.mxu0 0
  %2923 = vmatprep.subr.bf16.mxu0 0
  %2924 = vmatpush1.bf16.msra.mxu0 0
  %2925 = vmatprep.subr.bf16.mxu0 0
  %2926 = vmatpush1.bf16.msra.mxu0 0
  %2927 = vmatprep.subr.bf16.mxu0 0
  %2928 = vmatpush1.bf16.msra.mxu0 0
  %2929 = vmatprep.subr.bf16.mxu0 0
  %2930 = vmatpush1.bf16.msra.mxu0 0
  %2931 = vmatprep.subr.bf16.mxu0 0
  %2932 = vmatpush1.bf16.msra.mxu0 0
  %2933 = vmatprep.subr.bf16.mxu0 0
  %2934 = vmatpush1.bf16.msra.mxu0 %v2905
  %2935 = vmatprep.subr.bf16.mxu0 0
  %2936 = vmatpush2.bf16.msra.mxu0 0
  %2937 = vmatprep.subr.bf16.mxu0 0
  %2938 = vmatpush2.bf16.msra.mxu0 0
  %2939 = vmatprep.subr.bf16.mxu0 0
  %2940 = vmatpush2.bf16.msra.mxu0 0
  %2941 = vmatprep.subr.bf16.mxu0 0
  %2942 = vmatpush2.bf16.msra.mxu0 0
  %2943 = vmatprep.subr.bf16.mxu0 0
  %2944 = vmatpush2.bf16.msra.mxu0 0
  %2945 = vmatprep.subr.bf16.mxu0 0
  %2946 = vmatpush2.bf16.msra.mxu0 0
  %2947 = vmatprep.subr.bf16.mxu0 0
  %2948 = vmatpush2.bf16.msra.mxu0 0
  %2949 = vmatprep.subr.bf16.mxu0 0
  %2950 = vmatpush2.bf16.msra.mxu0 0
  %2951 = vmatprep.mubr.bf16.mxu0 0
  %2952 = vmatmul.mubr.bf16.gmra.mxu0 %v2908
  %v2953 = vpop.f32.mrf.mxu0
  %v2954 = vadd.f32 0.0, %v2953
  %v2955 = vpop.f32.mrf.mxu0
  %v2956 = vpop.f32.mrf.mxu0
  %v2957 = vadd.f32 0.0, %v2956
  %v2958 = vpop.f32.mrf.mxu0
  %2959 = vmatprep.mubr.bf16.mxu0 0
  %2960 = vmatmul.mubr.bf16.gmra.mxu0 %v2911
  %v2961 = vpop.f32.mrf.mxu0
  %v2962 = vadd.f32 0.0, %v2961
  %v2963 = vpop.f32.mrf.mxu0
  %v2964 = vpop.f32.mrf.mxu0
  %v2965 = vadd.f32 0.0, %v2964
  %v2966 = vpop.f32.mrf.mxu0
  %2967 = vmatprep.mubr.bf16.mxu0 0
  %2968 = vmatmul.mubr.bf16.gmra.mxu0 %v2914
  %v2969 = vpop.f32.mrf.mxu0
  %v2970 = vadd.f32 0.0, %v2969
  %v2971 = vpop.f32.mrf.mxu0
  %v2972 = vpop.f32.mrf.mxu0
  %v2973 = vadd.f32 0.0, %v2972
  %v2974 = vpop.f32.mrf.mxu0
  %2975 = vmatprep.mubr.bf16.mxu0 0
  %2976 = vmatmul.mubr.bf16.gmra.mxu0 %v2917
  %v2977 = vpop.f32.mrf.mxu0
  %v2978 = vadd.f32 0.0, %v2977
  %v2979 = vpop.f32.mrf.mxu0
  %v2980 = vpop.f32.mrf.mxu0
  %v2981 = vpop.f32.mrf.mxu0
  %2982 = vdwg.mxu0
  %v2983 = vadd.f32 %v2764, %v2954
  %v2984 = vadd.f32 %v2765, %v2957
  %v2985 = vadd.f32 %v2766, %v2962
  %v2986 = vadd.f32 %v2767, %v2965
  %v2987 = vadd.f32 %v2768, %v2970
  %v2988 = vadd.f32 %v2769, %v2973
  %v2989 = vadd.f32 %v2770, %v2978
  %s2990 = scalar_lea.vmem %s0, 728
  %v2991 = vld [vmem:[%s2990] sm:$0xff]
  %v2992 = vld [vmem:[%s2990 + $0x8] sm:$0xff]
  %v2993 = vld [vmem:[%s2990 + $0x10] sm:$0xff]
  %v2994 = vld [vmem:[%s2990 + $0x18] sm:$0xff]
  %v2995 = vld [vmem:[%s2990 + $0x20] sm:$0xff]
  %v2996 = vld [vmem:[%s2990 + $0x28] sm:$0xff]
  %v2997 = vld [vmem:[%s2990 + $0x30] sm:$0x3]
  %v2998 = vpack.c.bf16 %v2992, %v2991
  %v2999 = vpack.c.bf16 %v2994, %v2993
  %v3000 = vpack.c.bf16 %v2996, %v2995
  %v3001 = vpack.c.bf16 %v2997, %v2997
  %v3003 = vsel %vm30, %v2998, 0
  %v3006 = vsel %vm30, %v2999, 0
  %v3009 = vsel %vm30, %v3000, 0
  %v3012 = vsel %vm30, %v3001, 0
  %3014 = vmatprep.subr.bf16.mxu0 0
  %3015 = vmatpush1.bf16.msra.mxu0 0
  %3016 = vmatprep.subr.bf16.mxu0 0
  %3017 = vmatpush1.bf16.msra.mxu0 0
  %3018 = vmatprep.subr.bf16.mxu0 0
  %3019 = vmatpush1.bf16.msra.mxu0 0
  %3020 = vmatprep.subr.bf16.mxu0 0
  %3021 = vmatpush1.bf16.msra.mxu0 0
  %3022 = vmatprep.subr.bf16.mxu0 0
  %3023 = vmatpush1.bf16.msra.mxu0 0
  %3024 = vmatprep.subr.bf16.mxu0 0
  %3025 = vmatpush1.bf16.msra.mxu0 0
  %3026 = vmatprep.subr.bf16.mxu0 0
  %3027 = vmatpush1.bf16.msra.mxu0 0
  %3028 = vmatprep.subr.bf16.mxu0 0
  %3029 = vmatpush1.bf16.msra.mxu0 %v150
  %3030 = vmatprep.subr.bf16.mxu0 0
  %3031 = vmatpush2.bf16.msra.mxu0 0
  %3032 = vmatprep.subr.bf16.mxu0 0
  %3033 = vmatpush2.bf16.msra.mxu0 0
  %3034 = vmatprep.subr.bf16.mxu0 0
  %3035 = vmatpush2.bf16.msra.mxu0 0
  %3036 = vmatprep.subr.bf16.mxu0 0
  %3037 = vmatpush2.bf16.msra.mxu0 0
  %3038 = vmatprep.subr.bf16.mxu0 0
  %3039 = vmatpush2.bf16.msra.mxu0 0
  %3040 = vmatprep.subr.bf16.mxu0 0
  %3041 = vmatpush2.bf16.msra.mxu0 0
  %3042 = vmatprep.subr.bf16.mxu0 0
  %3043 = vmatpush2.bf16.msra.mxu0 0
  %3044 = vmatprep.subr.bf16.mxu0 0
  %3045 = vmatpush2.bf16.msra.mxu0 0
  %3046 = vmatprep.mubr.bf16.mxu0 0
  %3047 = vmatmul.mubr.bf16.gmra.mxu0 %v3003
  %v3048 = vpop.f32.mrf.mxu0
  %v3049 = vadd.f32 0.0, %v3048
  %v3050 = vpop.f32.mrf.mxu0
  %v3051 = vpop.f32.mrf.mxu0
  %v3052 = vadd.f32 0.0, %v3051
  %v3053 = vpop.f32.mrf.mxu0
  %3054 = vmatprep.mubr.bf16.mxu0 0
  %3055 = vmatmul.mubr.bf16.gmra.mxu0 %v3006
  %v3056 = vpop.f32.mrf.mxu0
  %v3057 = vadd.f32 0.0, %v3056
  %v3058 = vpop.f32.mrf.mxu0
  %v3059 = vpop.f32.mrf.mxu0
  %v3060 = vadd.f32 0.0, %v3059
  %v3061 = vpop.f32.mrf.mxu0
  %3062 = vmatprep.mubr.bf16.mxu0 0
  %3063 = vmatmul.mubr.bf16.gmra.mxu0 %v3009
  %v3064 = vpop.f32.mrf.mxu0
  %v3065 = vadd.f32 0.0, %v3064
  %v3066 = vpop.f32.mrf.mxu0
  %v3067 = vpop.f32.mrf.mxu0
  %v3068 = vadd.f32 0.0, %v3067
  %v3069 = vpop.f32.mrf.mxu0
  %3070 = vmatprep.mubr.bf16.mxu0 0
  %3071 = vmatmul.mubr.bf16.gmra.mxu0 %v3012
  %v3072 = vpop.f32.mrf.mxu0
  %v3073 = vadd.f32 0.0, %v3072
  %v3074 = vpop.f32.mrf.mxu0
  %v3075 = vpop.f32.mrf.mxu0
  %v3076 = vpop.f32.mrf.mxu0
  %3077 = vdwg.mxu0
  %v3078 = vmul.f32 %v3049, %v241
  %v3079 = vmul.f32 %v3052, %v241
  %v3080 = vmul.f32 %v3057, %v241
  %v3081 = vmul.f32 %v3060, %v241
  %v3082 = vmul.f32 %v3065, %v241
  %v3083 = vmul.f32 %v3068, %v241
  %v3084 = vmul.f32 %v3073, %v241
  %v3085 = vadd.f32 %v3078, %v252
  %v3086 = vadd.f32 %v3079, %v252
  %v3087 = vadd.f32 %v3080, %v252
  %v3088 = vadd.f32 %v3081, %v252
  %v3089 = vadd.f32 %v3082, %v252
  %v3090 = vadd.f32 %v3083, %v252
  %v3091 = vadd.f32 %v3084, %v252
  %vm3092 = vcmp.ge.f32.partialorder %v3085, 0.0
  %vm3093 = vcmp.ge.f32.partialorder %v3086, 0.0
  %vm3094 = vcmp.ge.f32.partialorder %v3087, 0.0
  %vm3095 = vcmp.ge.f32.partialorder %v3088, 0.0
  %vm3096 = vcmp.ge.f32.partialorder %v3089, 0.0
  %vm3097 = vcmp.ge.f32.partialorder %v3090, 0.0
  %vm3098 = vcmp.ge.f32.partialorder %v3091, 0.0
  %v3099 = vmul.f32 %v3085, 0.2
  %v3100 = vmul.f32 %v3086, 0.2
  %v3101 = vmul.f32 %v3087, 0.2
  %v3102 = vmul.f32 %v3088, 0.2
  %v3103 = vmul.f32 %v3089, 0.2
  %v3104 = vmul.f32 %v3090, 0.2
  %v3105 = vmul.f32 %v3091, 0.2
  %v3106 = vsel %vm3092, %v3085, %v3099
  %v3107 = vsel %vm3093, %v3086, %v3100
  %v3108 = vsel %vm3094, %v3087, %v3101
  %v3109 = vsel %vm3095, %v3088, %v3102
  %v3110 = vsel %vm3096, %v3089, %v3103
  %v3111 = vsel %vm3097, %v3090, %v3104
  %v3112 = vsel %vm3098, %v3091, %v3105
  %v3113 = vpack.c.bf16 %v3107, %v3106
  %v3114 = vpack.c.bf16 %v3109, %v3108
  %v3115 = vpack.c.bf16 %v3111, %v3110
  %v3116 = vpack.c.bf16 %v3112, %v3112
  %s3117 = scalar_lea.vmem %s1, 104
  %v3118 = vld [vmem:[%s3117] sm:$0xf]
  %v3119 = vld [vmem:[%s3117 + $0x4] sm:$0xf]
  %v3122 = vunpack.c.l.b16 %v3118
  %v3123 = vunpack.c.l.b16 %v3119
  %v3124 = vpack.c.b16 %v3123, %v3122
  %v3127 = vsel %vm30, %v3113, 0
  %v3130 = vsel %vm30, %v3114, 0
  %v3133 = vsel %vm30, %v3115, 0
  %v3136 = vsel %vm30, %v3116, 0
  %3138 = vmatprep.subr.bf16.mxu0 0
  %3139 = vmatpush1.bf16.msra.mxu0 0
  %3140 = vmatprep.subr.bf16.mxu0 0
  %3141 = vmatpush1.bf16.msra.mxu0 0
  %3142 = vmatprep.subr.bf16.mxu0 0
  %3143 = vmatpush1.bf16.msra.mxu0 0
  %3144 = vmatprep.subr.bf16.mxu0 0
  %3145 = vmatpush1.bf16.msra.mxu0 0
  %3146 = vmatprep.subr.bf16.mxu0 0
  %3147 = vmatpush1.bf16.msra.mxu0 0
  %3148 = vmatprep.subr.bf16.mxu0 0
  %3149 = vmatpush1.bf16.msra.mxu0 0
  %3150 = vmatprep.subr.bf16.mxu0 0
  %3151 = vmatpush1.bf16.msra.mxu0 0
  %3152 = vmatprep.subr.bf16.mxu0 0
  %3153 = vmatpush1.bf16.msra.mxu0 %v3124
  %3154 = vmatprep.subr.bf16.mxu0 0
  %3155 = vmatpush2.bf16.msra.mxu0 0
  %3156 = vmatprep.subr.bf16.mxu0 0
  %3157 = vmatpush2.bf16.msra.mxu0 0
  %3158 = vmatprep.subr.bf16.mxu0 0
  %3159 = vmatpush2.bf16.msra.mxu0 0
  %3160 = vmatprep.subr.bf16.mxu0 0
  %3161 = vmatpush2.bf16.msra.mxu0 0
  %3162 = vmatprep.subr.bf16.mxu0 0
  %3163 = vmatpush2.bf16.msra.mxu0 0
  %3164 = vmatprep.subr.bf16.mxu0 0
  %3165 = vmatpush2.bf16.msra.mxu0 0
  %3166 = vmatprep.subr.bf16.mxu0 0
  %3167 = vmatpush2.bf16.msra.mxu0 0
  %3168 = vmatprep.subr.bf16.mxu0 0
  %3169 = vmatpush2.bf16.msra.mxu0 0
  %3170 = vmatprep.mubr.bf16.mxu0 0
  %3171 = vmatmul.mubr.bf16.gmra.mxu0 %v3127
  %v3172 = vpop.f32.mrf.mxu0
  %v3173 = vadd.f32 0.0, %v3172
  %v3174 = vpop.f32.mrf.mxu0
  %v3175 = vpop.f32.mrf.mxu0
  %v3176 = vadd.f32 0.0, %v3175
  %v3177 = vpop.f32.mrf.mxu0
  %3178 = vmatprep.mubr.bf16.mxu0 0
  %3179 = vmatmul.mubr.bf16.gmra.mxu0 %v3130
  %v3180 = vpop.f32.mrf.mxu0
  %v3181 = vadd.f32 0.0, %v3180
  %v3182 = vpop.f32.mrf.mxu0
  %v3183 = vpop.f32.mrf.mxu0
  %v3184 = vadd.f32 0.0, %v3183
  %v3185 = vpop.f32.mrf.mxu0
  %3186 = vmatprep.mubr.bf16.mxu0 0
  %3187 = vmatmul.mubr.bf16.gmra.mxu0 %v3133
  %v3188 = vpop.f32.mrf.mxu0
  %v3189 = vadd.f32 0.0, %v3188
  %v3190 = vpop.f32.mrf.mxu0
  %v3191 = vpop.f32.mrf.mxu0
  %v3192 = vadd.f32 0.0, %v3191
  %v3193 = vpop.f32.mrf.mxu0
  %3194 = vmatprep.mubr.bf16.mxu0 0
  %3195 = vmatmul.mubr.bf16.gmra.mxu0 %v3136
  %v3196 = vpop.f32.mrf.mxu0
  %v3197 = vadd.f32 0.0, %v3196
  %v3198 = vpop.f32.mrf.mxu0
  %v3199 = vpop.f32.mrf.mxu0
  %v3200 = vpop.f32.mrf.mxu0
  %3201 = vdwg.mxu0
  %v3202 = vadd.f32 %v2983, %v3173
  %v3203 = vadd.f32 %v2984, %v3176
  %v3204 = vadd.f32 %v2985, %v3181
  %v3205 = vadd.f32 %v2986, %v3184
  %v3206 = vadd.f32 %v2987, %v3189
  %v3207 = vadd.f32 %v2988, %v3192
  %v3208 = vadd.f32 %v2989, %v3197
  %s3209 = scalar_lea.vmem %s0, 784
  %v3210 = vld [vmem:[%s3209] sm:$0xff]
  %v3211 = vld [vmem:[%s3209 + $0x8] sm:$0xff]
  %v3212 = vld [vmem:[%s3209 + $0x10] sm:$0xff]
  %v3213 = vld [vmem:[%s3209 + $0x18] sm:$0xff]
  %v3214 = vld [vmem:[%s3209 + $0x20] sm:$0xff]
  %v3215 = vld [vmem:[%s3209 + $0x28] sm:$0xff]
  %v3216 = vld [vmem:[%s3209 + $0x30] sm:$0x3]
  %v3217 = vpack.c.bf16 %v3211, %v3210
  %v3218 = vpack.c.bf16 %v3213, %v3212
  %v3219 = vpack.c.bf16 %v3215, %v3214
  %v3220 = vpack.c.bf16 %v3216, %v3216
  %v3222 = vsel %vm30, %v3217, 0
  %v3225 = vsel %vm30, %v3218, 0
  %v3228 = vsel %vm30, %v3219, 0
  %v3231 = vsel %vm30, %v3220, 0
  %3233 = vmatprep.subr.bf16.mxu0 0
  %3234 = vmatpush1.bf16.msra.mxu0 0
  %3235 = vmatprep.subr.bf16.mxu0 0
  %3236 = vmatpush1.bf16.msra.mxu0 0
  %3237 = vmatprep.subr.bf16.mxu0 0
  %3238 = vmatpush1.bf16.msra.mxu0 0
  %3239 = vmatprep.subr.bf16.mxu0 0
  %3240 = vmatpush1.bf16.msra.mxu0 0
  %3241 = vmatprep.subr.bf16.mxu0 0
  %3242 = vmatpush1.bf16.msra.mxu0 0
  %3243 = vmatprep.subr.bf16.mxu0 0
  %3244 = vmatpush1.bf16.msra.mxu0 0
  %3245 = vmatprep.subr.bf16.mxu0 0
  %3246 = vmatpush1.bf16.msra.mxu0 0
  %3247 = vmatprep.subr.bf16.mxu0 0
  %3248 = vmatpush1.bf16.msra.mxu0 %v150
  %3249 = vmatprep.subr.bf16.mxu0 0
  %3250 = vmatpush2.bf16.msra.mxu0 0
  %3251 = vmatprep.subr.bf16.mxu0 0
  %3252 = vmatpush2.bf16.msra.mxu0 0
  %3253 = vmatprep.subr.bf16.mxu0 0
  %3254 = vmatpush2.bf16.msra.mxu0 0
  %3255 = vmatprep.subr.bf16.mxu0 0
  %3256 = vmatpush2.bf16.msra.mxu0 0
  %3257 = vmatprep.subr.bf16.mxu0 0
  %3258 = vmatpush2.bf16.msra.mxu0 0
  %3259 = vmatprep.subr.bf16.mxu0 0
  %3260 = vmatpush2.bf16.msra.mxu0 0
  %3261 = vmatprep.subr.bf16.mxu0 0
  %3262 = vmatpush2.bf16.msra.mxu0 0
  %3263 = vmatprep.subr.bf16.mxu0 0
  %3264 = vmatpush2.bf16.msra.mxu0 0
  %3265 = vmatprep.mubr.bf16.mxu0 0
  %3266 = vmatmul.mubr.bf16.gmra.mxu0 %v3222
  %v3267 = vpop.f32.mrf.mxu0
  %v3268 = vadd.f32 0.0, %v3267
  %v3269 = vpop.f32.mrf.mxu0
  %v3270 = vpop.f32.mrf.mxu0
  %v3271 = vadd.f32 0.0, %v3270
  %v3272 = vpop.f32.mrf.mxu0
  %3273 = vmatprep.mubr.bf16.mxu0 0
  %3274 = vmatmul.mubr.bf16.gmra.mxu0 %v3225
  %v3275 = vpop.f32.mrf.mxu0
  %v3276 = vadd.f32 0.0, %v3275
  %v3277 = vpop.f32.mrf.mxu0
  %v3278 = vpop.f32.mrf.mxu0
  %v3279 = vadd.f32 0.0, %v3278
  %v3280 = vpop.f32.mrf.mxu0
  %3281 = vmatprep.mubr.bf16.mxu0 0
  %3282 = vmatmul.mubr.bf16.gmra.mxu0 %v3228
  %v3283 = vpop.f32.mrf.mxu0
  %v3284 = vadd.f32 0.0, %v3283
  %v3285 = vpop.f32.mrf.mxu0
  %v3286 = vpop.f32.mrf.mxu0
  %v3287 = vadd.f32 0.0, %v3286
  %v3288 = vpop.f32.mrf.mxu0
  %3289 = vmatprep.mubr.bf16.mxu0 0
  %3290 = vmatmul.mubr.bf16.gmra.mxu0 %v3231
  %v3291 = vpop.f32.mrf.mxu0
  %v3292 = vadd.f32 0.0, %v3291
  %v3293 = vpop.f32.mrf.mxu0
  %v3294 = vpop.f32.mrf.mxu0
  %v3295 = vpop.f32.mrf.mxu0
  %3296 = vdwg.mxu0
  %v3297 = vmul.f32 %v3268, %v241
  %v3298 = vmul.f32 %v3271, %v241
  %v3299 = vmul.f32 %v3276, %v241
  %v3300 = vmul.f32 %v3279, %v241
  %v3301 = vmul.f32 %v3284, %v241
  %v3302 = vmul.f32 %v3287, %v241
  %v3303 = vmul.f32 %v3292, %v241
  %v3304 = vadd.f32 %v3297, %v252
  %v3305 = vadd.f32 %v3298, %v252
  %v3306 = vadd.f32 %v3299, %v252
  %v3307 = vadd.f32 %v3300, %v252
  %v3308 = vadd.f32 %v3301, %v252
  %v3309 = vadd.f32 %v3302, %v252
  %v3310 = vadd.f32 %v3303, %v252
  %vm3311 = vcmp.ge.f32.partialorder %v3304, 0.0
  %vm3312 = vcmp.ge.f32.partialorder %v3305, 0.0
  %vm3313 = vcmp.ge.f32.partialorder %v3306, 0.0
  %vm3314 = vcmp.ge.f32.partialorder %v3307, 0.0
  %vm3315 = vcmp.ge.f32.partialorder %v3308, 0.0
  %vm3316 = vcmp.ge.f32.partialorder %v3309, 0.0
  %vm3317 = vcmp.ge.f32.partialorder %v3310, 0.0
  %v3318 = vmul.f32 %v3304, 0.2
  %v3319 = vmul.f32 %v3305, 0.2
  %v3320 = vmul.f32 %v3306, 0.2
  %v3321 = vmul.f32 %v3307, 0.2
  %v3322 = vmul.f32 %v3308, 0.2
  %v3323 = vmul.f32 %v3309, 0.2
  %v3324 = vmul.f32 %v3310, 0.2
  %v3325 = vsel %vm3311, %v3304, %v3318
  %v3326 = vsel %vm3312, %v3305, %v3319
  %v3327 = vsel %vm3313, %v3306, %v3320
  %v3328 = vsel %vm3314, %v3307, %v3321
  %v3329 = vsel %vm3315, %v3308, %v3322
  %v3330 = vsel %vm3316, %v3309, %v3323
  %v3331 = vsel %vm3317, %v3310, %v3324
  %v3332 = vpack.c.bf16 %v3326, %v3325
  %v3333 = vpack.c.bf16 %v3328, %v3327
  %v3334 = vpack.c.bf16 %v3330, %v3329
  %v3335 = vpack.c.bf16 %v3331, %v3331
  %s3336 = scalar_lea.vmem %s1, 112
  %v3337 = vld [vmem:[%s3336] sm:$0xf]
  %v3338 = vld [vmem:[%s3336 + $0x4] sm:$0xf]
  %v3341 = vunpack.c.l.b16 %v3337
  %v3342 = vunpack.c.l.b16 %v3338
  %v3343 = vpack.c.b16 %v3342, %v3341
  %v3346 = vsel %vm30, %v3332, 0
  %v3349 = vsel %vm30, %v3333, 0
  %v3352 = vsel %vm30, %v3334, 0
  %v3355 = vsel %vm30, %v3335, 0
  %3357 = vmatprep.subr.bf16.mxu0 0
  %3358 = vmatpush1.bf16.msra.mxu0 0
  %3359 = vmatprep.subr.bf16.mxu0 0
  %3360 = vmatpush1.bf16.msra.mxu0 0
  %3361 = vmatprep.subr.bf16.mxu0 0
  %3362 = vmatpush1.bf16.msra.mxu0 0
  %3363 = vmatprep.subr.bf16.mxu0 0
  %3364 = vmatpush1.bf16.msra.mxu0 0
  %3365 = vmatprep.subr.bf16.mxu0 0
  %3366 = vmatpush1.bf16.msra.mxu0 0
  %3367 = vmatprep.subr.bf16.mxu0 0
  %3368 = vmatpush1.bf16.msra.mxu0 0
  %3369 = vmatprep.subr.bf16.mxu0 0
  %3370 = vmatpush1.bf16.msra.mxu0 0
  %3371 = vmatprep.subr.bf16.mxu0 0
  %3372 = vmatpush1.bf16.msra.mxu0 %v3343
  %3373 = vmatprep.subr.bf16.mxu0 0
  %3374 = vmatpush2.bf16.msra.mxu0 0
  %3375 = vmatprep.subr.bf16.mxu0 0
  %3376 = vmatpush2.bf16.msra.mxu0 0
  %3377 = vmatprep.subr.bf16.mxu0 0
  %3378 = vmatpush2.bf16.msra.mxu0 0
  %3379 = vmatprep.subr.bf16.mxu0 0
  %3380 = vmatpush2.bf16.msra.mxu0 0
  %3381 = vmatprep.subr.bf16.mxu0 0
  %3382 = vmatpush2.bf16.msra.mxu0 0
  %3383 = vmatprep.subr.bf16.mxu0 0
  %3384 = vmatpush2.bf16.msra.mxu0 0
  %3385 = vmatprep.subr.bf16.mxu0 0
  %3386 = vmatpush2.bf16.msra.mxu0 0
  %3387 = vmatprep.subr.bf16.mxu0 0
  %3388 = vmatpush2.bf16.msra.mxu0 0
  %3389 = vmatprep.mubr.bf16.mxu0 0
  %3390 = vmatmul.mubr.bf16.gmra.mxu0 %v3346
  %v3391 = vpop.f32.mrf.mxu0
  %v3392 = vadd.f32 0.0, %v3391
  %v3393 = vpop.f32.mrf.mxu0
  %v3394 = vpop.f32.mrf.mxu0
  %v3395 = vadd.f32 0.0, %v3394
  %v3396 = vpop.f32.mrf.mxu0
  %3397 = vmatprep.mubr.bf16.mxu0 0
  %3398 = vmatmul.mubr.bf16.gmra.mxu0 %v3349
  %v3399 = vpop.f32.mrf.mxu0
  %v3400 = vadd.f32 0.0, %v3399
  %v3401 = vpop.f32.mrf.mxu0
  %v3402 = vpop.f32.mrf.mxu0
  %v3403 = vadd.f32 0.0, %v3402
  %v3404 = vpop.f32.mrf.mxu0
  %3405 = vmatprep.mubr.bf16.mxu0 0
  %3406 = vmatmul.mubr.bf16.gmra.mxu0 %v3352
  %v3407 = vpop.f32.mrf.mxu0
  %v3408 = vadd.f32 0.0, %v3407
  %v3409 = vpop.f32.mrf.mxu0
  %v3410 = vpop.f32.mrf.mxu0
  %v3411 = vadd.f32 0.0, %v3410
  %v3412 = vpop.f32.mrf.mxu0
  %3413 = vmatprep.mubr.bf16.mxu0 0
  %3414 = vmatmul.mubr.bf16.gmra.mxu0 %v3355
  %v3415 = vpop.f32.mrf.mxu0
  %v3416 = vadd.f32 0.0, %v3415
  %v3417 = vpop.f32.mrf.mxu0
  %v3418 = vpop.f32.mrf.mxu0
  %v3419 = vpop.f32.mrf.mxu0
  %3420 = vdwg.mxu0
  %v3421 = vadd.f32 %v3202, %v3392
  %v3422 = vadd.f32 %v3203, %v3395
  %v3423 = vadd.f32 %v3204, %v3400
  %v3424 = vadd.f32 %v3205, %v3403
  %v3425 = vadd.f32 %v3206, %v3408
  %v3426 = vadd.f32 %v3207, %v3411
  %v3427 = vadd.f32 %v3208, %v3416
  %s3428 = scalar_lea.vmem %s0, 840
  %v3429 = vld [vmem:[%s3428] sm:$0xff]
  %v3430 = vld [vmem:[%s3428 + $0x8] sm:$0xff]
  %v3431 = vld [vmem:[%s3428 + $0x10] sm:$0xff]
  %v3432 = vld [vmem:[%s3428 + $0x18] sm:$0xff]
  %v3433 = vld [vmem:[%s3428 + $0x20] sm:$0xff]
  %v3434 = vld [vmem:[%s3428 + $0x28] sm:$0xff]
  %v3435 = vld [vmem:[%s3428 + $0x30] sm:$0x3]
  %v3436 = vpack.c.bf16 %v3430, %v3429
  %v3437 = vpack.c.bf16 %v3432, %v3431
  %v3438 = vpack.c.bf16 %v3434, %v3433
  %v3439 = vpack.c.bf16 %v3435, %v3435
  %v3441 = vsel %vm30, %v3436, 0
  %v3444 = vsel %vm30, %v3437, 0
  %v3447 = vsel %vm30, %v3438, 0
  %v3450 = vsel %vm30, %v3439, 0
  %3452 = vmatprep.subr.bf16.mxu0 0
  %3453 = vmatpush1.bf16.msra.mxu0 0
  %3454 = vmatprep.subr.bf16.mxu0 0
  %3455 = vmatpush1.bf16.msra.mxu0 0
  %3456 = vmatprep.subr.bf16.mxu0 0
  %3457 = vmatpush1.bf16.msra.mxu0 0
  %3458 = vmatprep.subr.bf16.mxu0 0
  %3459 = vmatpush1.bf16.msra.mxu0 0
  %3460 = vmatprep.subr.bf16.mxu0 0
  %3461 = vmatpush1.bf16.msra.mxu0 0
  %3462 = vmatprep.subr.bf16.mxu0 0
  %3463 = vmatpush1.bf16.msra.mxu0 0
  %3464 = vmatprep.subr.bf16.mxu0 0
  %3465 = vmatpush1.bf16.msra.mxu0 0
  %3466 = vmatprep.subr.bf16.mxu0 0
  %3467 = vmatpush1.bf16.msra.mxu0 %v150
  %3468 = vmatprep.subr.bf16.mxu0 0
  %3469 = vmatpush2.bf16.msra.mxu0 0
  %3470 = vmatprep.subr.bf16.mxu0 0
  %3471 = vmatpush2.bf16.msra.mxu0 0
  %3472 = vmatprep.subr.bf16.mxu0 0
  %3473 = vmatpush2.bf16.msra.mxu0 0
  %3474 = vmatprep.subr.bf16.mxu0 0
  %3475 = vmatpush2.bf16.msra.mxu0 0
  %3476 = vmatprep.subr.bf16.mxu0 0
  %3477 = vmatpush2.bf16.msra.mxu0 0
  %3478 = vmatprep.subr.bf16.mxu0 0
  %3479 = vmatpush2.bf16.msra.mxu0 0
  %3480 = vmatprep.subr.bf16.mxu0 0
  %3481 = vmatpush2.bf16.msra.mxu0 0
  %3482 = vmatprep.subr.bf16.mxu0 0
  %3483 = vmatpush2.bf16.msra.mxu0 0
  %3484 = vmatprep.mubr.bf16.mxu0 0
  %3485 = vmatmul.mubr.bf16.gmra.mxu0 %v3441
  %v3486 = vpop.f32.mrf.mxu0
  %v3487 = vadd.f32 0.0, %v3486
  %v3488 = vpop.f32.mrf.mxu0
  %v3489 = vpop.f32.mrf.mxu0
  %v3490 = vadd.f32 0.0, %v3489
  %v3491 = vpop.f32.mrf.mxu0
  %3492 = vmatprep.mubr.bf16.mxu0 0
  %3493 = vmatmul.mubr.bf16.gmra.mxu0 %v3444
  %v3494 = vpop.f32.mrf.mxu0
  %v3495 = vadd.f32 0.0, %v3494
  %v3496 = vpop.f32.mrf.mxu0
  %v3497 = vpop.f32.mrf.mxu0
  %v3498 = vadd.f32 0.0, %v3497
  %v3499 = vpop.f32.mrf.mxu0
  %3500 = vmatprep.mubr.bf16.mxu0 0
  %3501 = vmatmul.mubr.bf16.gmra.mxu0 %v3447
  %v3502 = vpop.f32.mrf.mxu0
  %v3503 = vadd.f32 0.0, %v3502
  %v3504 = vpop.f32.mrf.mxu0
  %v3505 = vpop.f32.mrf.mxu0
  %v3506 = vadd.f32 0.0, %v3505
  %v3507 = vpop.f32.mrf.mxu0
  %3508 = vmatprep.mubr.bf16.mxu0 0
  %3509 = vmatmul.mubr.bf16.gmra.mxu0 %v3450
  %v3510 = vpop.f32.mrf.mxu0
  %v3511 = vadd.f32 0.0, %v3510
  %v3512 = vpop.f32.mrf.mxu0
  %v3513 = vpop.f32.mrf.mxu0
  %v3514 = vpop.f32.mrf.mxu0
  %3515 = vdwg.mxu0
  %v3516 = vmul.f32 %v3487, %v241
  %v3517 = vmul.f32 %v3490, %v241
  %v3518 = vmul.f32 %v3495, %v241
  %v3519 = vmul.f32 %v3498, %v241
  %v3520 = vmul.f32 %v3503, %v241
  %v3521 = vmul.f32 %v3506, %v241
  %v3522 = vmul.f32 %v3511, %v241
  %v3523 = vadd.f32 %v3516, %v252
  %v3524 = vadd.f32 %v3517, %v252
  %v3525 = vadd.f32 %v3518, %v252
  %v3526 = vadd.f32 %v3519, %v252
  %v3527 = vadd.f32 %v3520, %v252
  %v3528 = vadd.f32 %v3521, %v252
  %v3529 = vadd.f32 %v3522, %v252
  %vm3530 = vcmp.ge.f32.partialorder %v3523, 0.0
  %vm3531 = vcmp.ge.f32.partialorder %v3524, 0.0
  %vm3532 = vcmp.ge.f32.partialorder %v3525, 0.0
  %vm3533 = vcmp.ge.f32.partialorder %v3526, 0.0
  %vm3534 = vcmp.ge.f32.partialorder %v3527, 0.0
  %vm3535 = vcmp.ge.f32.partialorder %v3528, 0.0
  %vm3536 = vcmp.ge.f32.partialorder %v3529, 0.0
  %v3537 = vmul.f32 %v3523, 0.2
  %v3538 = vmul.f32 %v3524, 0.2
  %v3539 = vmul.f32 %v3525, 0.2
  %v3540 = vmul.f32 %v3526, 0.2
  %v3541 = vmul.f32 %v3527, 0.2
  %v3542 = vmul.f32 %v3528, 0.2
  %v3543 = vmul.f32 %v3529, 0.2
  %v3544 = vsel %vm3530, %v3523, %v3537
  %v3545 = vsel %vm3531, %v3524, %v3538
  %v3546 = vsel %vm3532, %v3525, %v3539
  %v3547 = vsel %vm3533, %v3526, %v3540
  %v3548 = vsel %vm3534, %v3527, %v3541
  %v3549 = vsel %vm3535, %v3528, %v3542
  %v3550 = vsel %vm3536, %v3529, %v3543
  %v3551 = vpack.c.bf16 %v3545, %v3544
  %v3552 = vpack.c.bf16 %v3547, %v3546
  %v3553 = vpack.c.bf16 %v3549, %v3548
  %v3554 = vpack.c.bf16 %v3550, %v3550
  %s3555 = scalar_lea.vmem %s1, 120
  %v3556 = vld [vmem:[%s3555] sm:$0xf]
  %v3557 = vld [vmem:[%s3555 + $0x4] sm:$0xf]
  %v3560 = vunpack.c.l.b16 %v3556
  %v3561 = vunpack.c.l.b16 %v3557
  %v3562 = vpack.c.b16 %v3561, %v3560
  %v3565 = vsel %vm30, %v3551, 0
  %v3568 = vsel %vm30, %v3552, 0
  %v3571 = vsel %vm30, %v3553, 0
  %v3574 = vsel %vm30, %v3554, 0
  %3576 = vmatprep.subr.bf16.mxu0 0
  %3577 = vmatpush1.bf16.msra.mxu0 0
  %3578 = vmatprep.subr.bf16.mxu0 0
  %3579 = vmatpush1.bf16.msra.mxu0 0
  %3580 = vmatprep.subr.bf16.mxu0 0
  %3581 = vmatpush1.bf16.msra.mxu0 0
  %3582 = vmatprep.subr.bf16.mxu0 0
  %3583 = vmatpush1.bf16.msra.mxu0 0
  %3584 = vmatprep.subr.bf16.mxu0 0
  %3585 = vmatpush1.bf16.msra.mxu0 0
  %3586 = vmatprep.subr.bf16.mxu0 0
  %3587 = vmatpush1.bf16.msra.mxu0 0
  %3588 = vmatprep.subr.bf16.mxu0 0
  %3589 = vmatpush1.bf16.msra.mxu0 0
  %3590 = vmatprep.subr.bf16.mxu0 0
  %3591 = vmatpush1.bf16.msra.mxu0 %v3562
  %3592 = vmatprep.subr.bf16.mxu0 0
  %3593 = vmatpush2.bf16.msra.mxu0 0
  %3594 = vmatprep.subr.bf16.mxu0 0
  %3595 = vmatpush2.bf16.msra.mxu0 0
  %3596 = vmatprep.subr.bf16.mxu0 0
  %3597 = vmatpush2.bf16.msra.mxu0 0
  %3598 = vmatprep.subr.bf16.mxu0 0
  %3599 = vmatpush2.bf16.msra.mxu0 0
  %3600 = vmatprep.subr.bf16.mxu0 0
  %3601 = vmatpush2.bf16.msra.mxu0 0
  %3602 = vmatprep.subr.bf16.mxu0 0
  %3603 = vmatpush2.bf16.msra.mxu0 0
  %3604 = vmatprep.subr.bf16.mxu0 0
  %3605 = vmatpush2.bf16.msra.mxu0 0
  %3606 = vmatprep.subr.bf16.mxu0 0
  %3607 = vmatpush2.bf16.msra.mxu0 0
  %3608 = vmatprep.mubr.bf16.mxu0 0
  %3609 = vmatmul.mubr.bf16.gmra.mxu0 %v3565
  %v3610 = vpop.f32.mrf.mxu0
  %v3611 = vadd.f32 0.0, %v3610
  %v3612 = vpop.f32.mrf.mxu0
  %v3613 = vpop.f32.mrf.mxu0
  %v3614 = vadd.f32 0.0, %v3613
  %v3615 = vpop.f32.mrf.mxu0
  %3616 = vmatprep.mubr.bf16.mxu0 0
  %3617 = vmatmul.mubr.bf16.gmra.mxu0 %v3568
  %v3618 = vpop.f32.mrf.mxu0
  %v3619 = vadd.f32 0.0, %v3618
  %v3620 = vpop.f32.mrf.mxu0
  %v3621 = vpop.f32.mrf.mxu0
  %v3622 = vadd.f32 0.0, %v3621
  %v3623 = vpop.f32.mrf.mxu0
  %3624 = vmatprep.mubr.bf16.mxu0 0
  %3625 = vmatmul.mubr.bf16.gmra.mxu0 %v3571
  %v3626 = vpop.f32.mrf.mxu0
  %v3627 = vadd.f32 0.0, %v3626
  %v3628 = vpop.f32.mrf.mxu0
  %v3629 = vpop.f32.mrf.mxu0
  %v3630 = vadd.f32 0.0, %v3629
  %v3631 = vpop.f32.mrf.mxu0
  %3632 = vmatprep.mubr.bf16.mxu0 0
  %3633 = vmatmul.mubr.bf16.gmra.mxu0 %v3574
  %v3634 = vpop.f32.mrf.mxu0
  %v3635 = vadd.f32 0.0, %v3634
  %v3636 = vpop.f32.mrf.mxu0
  %v3637 = vpop.f32.mrf.mxu0
  %v3638 = vpop.f32.mrf.mxu0
  %3639 = vdwg.mxu0
  %v3640 = vadd.f32 %v3421, %v3611
  %v3641 = vadd.f32 %v3422, %v3614
  %v3642 = vadd.f32 %v3423, %v3619
  %v3643 = vadd.f32 %v3424, %v3622
  %v3644 = vadd.f32 %v3425, %v3627
  %v3645 = vadd.f32 %v3426, %v3630
  %v3646 = vadd.f32 %v3427, %v3635
  %s3647 = scalar_lea.vmem %s0, 896
  %v3648 = vld [vmem:[%s3647] sm:$0xff]
  %v3649 = vld [vmem:[%s3647 + $0x8] sm:$0xff]
  %v3650 = vld [vmem:[%s3647 + $0x10] sm:$0xff]
  %v3651 = vld [vmem:[%s3647 + $0x18] sm:$0xff]
  %v3652 = vld [vmem:[%s3647 + $0x20] sm:$0xff]
  %v3653 = vld [vmem:[%s3647 + $0x28] sm:$0xff]
  %v3654 = vld [vmem:[%s3647 + $0x30] sm:$0x3]
  %v3655 = vpack.c.bf16 %v3649, %v3648
  %v3656 = vpack.c.bf16 %v3651, %v3650
  %v3657 = vpack.c.bf16 %v3653, %v3652
  %v3658 = vpack.c.bf16 %v3654, %v3654
  %v3660 = vsel %vm30, %v3655, 0
  %v3663 = vsel %vm30, %v3656, 0
  %v3666 = vsel %vm30, %v3657, 0
  %v3669 = vsel %vm30, %v3658, 0
  %3671 = vmatprep.subr.bf16.mxu0 0
  %3672 = vmatpush1.bf16.msra.mxu0 0
  %3673 = vmatprep.subr.bf16.mxu0 0
  %3674 = vmatpush1.bf16.msra.mxu0 0
  %3675 = vmatprep.subr.bf16.mxu0 0
  %3676 = vmatpush1.bf16.msra.mxu0 0
  %3677 = vmatprep.subr.bf16.mxu0 0
  %3678 = vmatpush1.bf16.msra.mxu0 0
  %3679 = vmatprep.subr.bf16.mxu0 0
  %3680 = vmatpush1.bf16.msra.mxu0 0
  %3681 = vmatprep.subr.bf16.mxu0 0
  %3682 = vmatpush1.bf16.msra.mxu0 0
  %3683 = vmatprep.subr.bf16.mxu0 0
  %3684 = vmatpush1.bf16.msra.mxu0 0
  %3685 = vmatprep.subr.bf16.mxu0 0
  %3686 = vmatpush1.bf16.msra.mxu0 %v150
  %3687 = vmatprep.subr.bf16.mxu0 0
  %3688 = vmatpush2.bf16.msra.mxu0 0
  %3689 = vmatprep.subr.bf16.mxu0 0
  %3690 = vmatpush2.bf16.msra.mxu0 0
  %3691 = vmatprep.subr.bf16.mxu0 0
  %3692 = vmatpush2.bf16.msra.mxu0 0
  %3693 = vmatprep.subr.bf16.mxu0 0
  %3694 = vmatpush2.bf16.msra.mxu0 0
  %3695 = vmatprep.subr.bf16.mxu0 0
  %3696 = vmatpush2.bf16.msra.mxu0 0
  %3697 = vmatprep.subr.bf16.mxu0 0
  %3698 = vmatpush2.bf16.msra.mxu0 0
  %3699 = vmatprep.subr.bf16.mxu0 0
  %3700 = vmatpush2.bf16.msra.mxu0 0
  %3701 = vmatprep.subr.bf16.mxu0 0
  %3702 = vmatpush2.bf16.msra.mxu0 0
  %3703 = vmatprep.mubr.bf16.mxu0 0
  %3704 = vmatmul.mubr.bf16.gmra.mxu0 %v3660
  %v3705 = vpop.f32.mrf.mxu0
  %v3706 = vadd.f32 0.0, %v3705
  %v3707 = vpop.f32.mrf.mxu0
  %v3708 = vpop.f32.mrf.mxu0
  %v3709 = vadd.f32 0.0, %v3708
  %v3710 = vpop.f32.mrf.mxu0
  %3711 = vmatprep.mubr.bf16.mxu0 0
  %3712 = vmatmul.mubr.bf16.gmra.mxu0 %v3663
  %v3713 = vpop.f32.mrf.mxu0
  %v3714 = vadd.f32 0.0, %v3713
  %v3715 = vpop.f32.mrf.mxu0
  %v3716 = vpop.f32.mrf.mxu0
  %v3717 = vadd.f32 0.0, %v3716
  %v3718 = vpop.f32.mrf.mxu0
  %3719 = vmatprep.mubr.bf16.mxu0 0
  %3720 = vmatmul.mubr.bf16.gmra.mxu0 %v3666
  %v3721 = vpop.f32.mrf.mxu0
  %v3722 = vadd.f32 0.0, %v3721
  %v3723 = vpop.f32.mrf.mxu0
  %v3724 = vpop.f32.mrf.mxu0
  %v3725 = vadd.f32 0.0, %v3724
  %v3726 = vpop.f32.mrf.mxu0
  %3727 = vmatprep.mubr.bf16.mxu0 0
  %3728 = vmatmul.mubr.bf16.gmra.mxu0 %v3669
  %v3729 = vpop.f32.mrf.mxu0
  %v3730 = vadd.f32 0.0, %v3729
  %v3731 = vpop.f32.mrf.mxu0
  %v3732 = vpop.f32.mrf.mxu0
  %v3733 = vpop.f32.mrf.mxu0
  %3734 = vdwg.mxu0
  %v3735 = vmul.f32 %v3706, %v241
  %v3736 = vmul.f32 %v3709, %v241
  %v3737 = vmul.f32 %v3714, %v241
  %v3738 = vmul.f32 %v3717, %v241
  %v3739 = vmul.f32 %v3722, %v241
  %v3740 = vmul.f32 %v3725, %v241
  %v3741 = vmul.f32 %v3730, %v241
  %v3742 = vadd.f32 %v3735, %v252
  %v3743 = vadd.f32 %v3736, %v252
  %v3744 = vadd.f32 %v3737, %v252
  %v3745 = vadd.f32 %v3738, %v252
  %v3746 = vadd.f32 %v3739, %v252
  %v3747 = vadd.f32 %v3740, %v252
  %v3748 = vadd.f32 %v3741, %v252
  %vm3749 = vcmp.ge.f32.partialorder %v3742, 0.0
  %vm3750 = vcmp.ge.f32.partialorder %v3743, 0.0
  %vm3751 = vcmp.ge.f32.partialorder %v3744, 0.0
  %vm3752 = vcmp.ge.f32.partialorder %v3745, 0.0
  %vm3753 = vcmp.ge.f32.partialorder %v3746, 0.0
  %vm3754 = vcmp.ge.f32.partialorder %v3747, 0.0
  %vm3755 = vcmp.ge.f32.partialorder %v3748, 0.0
  %v3756 = vmul.f32 %v3742, 0.2
  %v3757 = vmul.f32 %v3743, 0.2
  %v3758 = vmul.f32 %v3744, 0.2
  %v3759 = vmul.f32 %v3745, 0.2
  %v3760 = vmul.f32 %v3746, 0.2
  %v3761 = vmul.f32 %v3747, 0.2
  %v3762 = vmul.f32 %v3748, 0.2
  %v3763 = vsel %vm3749, %v3742, %v3756
  %v3764 = vsel %vm3750, %v3743, %v3757
  %v3765 = vsel %vm3751, %v3744, %v3758
  %v3766 = vsel %vm3752, %v3745, %v3759
  %v3767 = vsel %vm3753, %v3746, %v3760
  %v3768 = vsel %vm3754, %v3747, %v3761
  %v3769 = vsel %vm3755, %v3748, %v3762
  %v3770 = vpack.c.bf16 %v3764, %v3763
  %v3771 = vpack.c.bf16 %v3766, %v3765
  %v3772 = vpack.c.bf16 %v3768, %v3767
  %v3773 = vpack.c.bf16 %v3769, %v3769
  %s3774 = scalar_lea.vmem %s1, 128
  %v3775 = vld [vmem:[%s3774] sm:$0xf]
  %v3776 = vld [vmem:[%s3774 + $0x4] sm:$0xf]
  %v3779 = vunpack.c.l.b16 %v3775
  %v3780 = vunpack.c.l.b16 %v3776
  %v3781 = vpack.c.b16 %v3780, %v3779
  %v3784 = vsel %vm30, %v3770, 0
  %v3787 = vsel %vm30, %v3771, 0
  %v3790 = vsel %vm30, %v3772, 0
  %v3793 = vsel %vm30, %v3773, 0
  %3795 = vmatprep.subr.bf16.mxu0 0
  %3796 = vmatpush1.bf16.msra.mxu0 0
  %3797 = vmatprep.subr.bf16.mxu0 0
  %3798 = vmatpush1.bf16.msra.mxu0 0
  %3799 = vmatprep.subr.bf16.mxu0 0
  %3800 = vmatpush1.bf16.msra.mxu0 0
  %3801 = vmatprep.subr.bf16.mxu0 0
  %3802 = vmatpush1.bf16.msra.mxu0 0
  %3803 = vmatprep.subr.bf16.mxu0 0
  %3804 = vmatpush1.bf16.msra.mxu0 0
  %3805 = vmatprep.subr.bf16.mxu0 0
  %3806 = vmatpush1.bf16.msra.mxu0 0
  %3807 = vmatprep.subr.bf16.mxu0 0
  %3808 = vmatpush1.bf16.msra.mxu0 0
  %3809 = vmatprep.subr.bf16.mxu0 0
  %3810 = vmatpush1.bf16.msra.mxu0 %v3781
  %3811 = vmatprep.subr.bf16.mxu0 0
  %3812 = vmatpush2.bf16.msra.mxu0 0
  %3813 = vmatprep.subr.bf16.mxu0 0
  %3814 = vmatpush2.bf16.msra.mxu0 0
  %3815 = vmatprep.subr.bf16.mxu0 0
  %3816 = vmatpush2.bf16.msra.mxu0 0
  %3817 = vmatprep.subr.bf16.mxu0 0
  %3818 = vmatpush2.bf16.msra.mxu0 0
  %3819 = vmatprep.subr.bf16.mxu0 0
  %3820 = vmatpush2.bf16.msra.mxu0 0
  %3821 = vmatprep.subr.bf16.mxu0 0
  %3822 = vmatpush2.bf16.msra.mxu0 0
  %3823 = vmatprep.subr.bf16.mxu0 0
  %3824 = vmatpush2.bf16.msra.mxu0 0
  %3825 = vmatprep.subr.bf16.mxu0 0
  %3826 = vmatpush2.bf16.msra.mxu0 0
  %3827 = vmatprep.mubr.bf16.mxu0 0
  %3828 = vmatmul.mubr.bf16.gmra.mxu0 %v3784
  %v3829 = vpop.f32.mrf.mxu0
  %v3830 = vadd.f32 0.0, %v3829
  %v3831 = vpop.f32.mrf.mxu0
  %v3832 = vpop.f32.mrf.mxu0
  %v3833 = vadd.f32 0.0, %v3832
  %v3834 = vpop.f32.mrf.mxu0
  %3835 = vmatprep.mubr.bf16.mxu0 0
  %3836 = vmatmul.mubr.bf16.gmra.mxu0 %v3787
  %v3837 = vpop.f32.mrf.mxu0
  %v3838 = vadd.f32 0.0, %v3837
  %v3839 = vpop.f32.mrf.mxu0
  %v3840 = vpop.f32.mrf.mxu0
  %v3841 = vadd.f32 0.0, %v3840
  %v3842 = vpop.f32.mrf.mxu0
  %3843 = vmatprep.mubr.bf16.mxu0 0
  %3844 = vmatmul.mubr.bf16.gmra.mxu0 %v3790
  %v3845 = vpop.f32.mrf.mxu0
  %v3846 = vadd.f32 0.0, %v3845
  %v3847 = vpop.f32.mrf.mxu0
  %v3848 = vpop.f32.mrf.mxu0
  %v3849 = vadd.f32 0.0, %v3848
  %v3850 = vpop.f32.mrf.mxu0
  %3851 = vmatprep.mubr.bf16.mxu0 0
  %3852 = vmatmul.mubr.bf16.gmra.mxu0 %v3793
  %v3853 = vpop.f32.mrf.mxu0
  %v3854 = vadd.f32 0.0, %v3853
  %v3855 = vpop.f32.mrf.mxu0
  %v3856 = vpop.f32.mrf.mxu0
  %v3857 = vpop.f32.mrf.mxu0
  %3858 = vdwg.mxu0
  %v3859 = vadd.f32 %v3640, %v3830
  %v3860 = vadd.f32 %v3641, %v3833
  %v3861 = vadd.f32 %v3642, %v3838
  %v3862 = vadd.f32 %v3643, %v3841
  %v3863 = vadd.f32 %v3644, %v3846
  %v3864 = vadd.f32 %v3645, %v3849
  %v3865 = vadd.f32 %v3646, %v3854
  %s3866 = scalar_lea.vmem %s0, 952
  %v3867 = vld [vmem:[%s3866] sm:$0xff]
  %v3868 = vld [vmem:[%s3866 + $0x8] sm:$0xff]
  %v3869 = vld [vmem:[%s3866 + $0x10] sm:$0xff]
  %v3870 = vld [vmem:[%s3866 + $0x18] sm:$0xff]
  %v3871 = vld [vmem:[%s3866 + $0x20] sm:$0xff]
  %v3872 = vld [vmem:[%s3866 + $0x28] sm:$0xff]
  %v3873 = vld [vmem:[%s3866 + $0x30] sm:$0x3]
  %v3874 = vpack.c.bf16 %v3868, %v3867
  %v3875 = vpack.c.bf16 %v3870, %v3869
  %v3876 = vpack.c.bf16 %v3872, %v3871
  %v3877 = vpack.c.bf16 %v3873, %v3873
  %v3879 = vsel %vm30, %v3874, 0
  %v3882 = vsel %vm30, %v3875, 0
  %v3885 = vsel %vm30, %v3876, 0
  %v3888 = vsel %vm30, %v3877, 0
  %3890 = vmatprep.subr.bf16.mxu0 0
  %3891 = vmatpush1.bf16.msra.mxu0 0
  %3892 = vmatprep.subr.bf16.mxu0 0
  %3893 = vmatpush1.bf16.msra.mxu0 0
  %3894 = vmatprep.subr.bf16.mxu0 0
  %3895 = vmatpush1.bf16.msra.mxu0 0
  %3896 = vmatprep.subr.bf16.mxu0 0
  %3897 = vmatpush1.bf16.msra.mxu0 0
  %3898 = vmatprep.subr.bf16.mxu0 0
  %3899 = vmatpush1.bf16.msra.mxu0 0
  %3900 = vmatprep.subr.bf16.mxu0 0
  %3901 = vmatpush1.bf16.msra.mxu0 0
  %3902 = vmatprep.subr.bf16.mxu0 0
  %3903 = vmatpush1.bf16.msra.mxu0 0
  %3904 = vmatprep.subr.bf16.mxu0 0
  %3905 = vmatpush1.bf16.msra.mxu0 %v150
  %3906 = vmatprep.subr.bf16.mxu0 0
  %3907 = vmatpush2.bf16.msra.mxu0 0
  %3908 = vmatprep.subr.bf16.mxu0 0
  %3909 = vmatpush2.bf16.msra.mxu0 0
  %3910 = vmatprep.subr.bf16.mxu0 0
  %3911 = vmatpush2.bf16.msra.mxu0 0
  %3912 = vmatprep.subr.bf16.mxu0 0
  %3913 = vmatpush2.bf16.msra.mxu0 0
  %3914 = vmatprep.subr.bf16.mxu0 0
  %3915 = vmatpush2.bf16.msra.mxu0 0
  %3916 = vmatprep.subr.bf16.mxu0 0
  %3917 = vmatpush2.bf16.msra.mxu0 0
  %3918 = vmatprep.subr.bf16.mxu0 0
  %3919 = vmatpush2.bf16.msra.mxu0 0
  %3920 = vmatprep.subr.bf16.mxu0 0
  %3921 = vmatpush2.bf16.msra.mxu0 0
  %3922 = vmatprep.mubr.bf16.mxu0 0
  %3923 = vmatmul.mubr.bf16.gmra.mxu0 %v3879
  %v3924 = vpop.f32.mrf.mxu0
  %v3925 = vadd.f32 0.0, %v3924
  %v3926 = vpop.f32.mrf.mxu0
  %v3927 = vpop.f32.mrf.mxu0
  %v3928 = vadd.f32 0.0, %v3927
  %v3929 = vpop.f32.mrf.mxu0
  %3930 = vmatprep.mubr.bf16.mxu0 0
  %3931 = vmatmul.mubr.bf16.gmra.mxu0 %v3882
  %v3932 = vpop.f32.mrf.mxu0
  %v3933 = vadd.f32 0.0, %v3932
  %v3934 = vpop.f32.mrf.mxu0
  %v3935 = vpop.f32.mrf.mxu0
  %v3936 = vadd.f32 0.0, %v3935
  %v3937 = vpop.f32.mrf.mxu0
  %3938 = vmatprep.mubr.bf16.mxu0 0
  %3939 = vmatmul.mubr.bf16.gmra.mxu0 %v3885
  %v3940 = vpop.f32.mrf.mxu0
  %v3941 = vadd.f32 0.0, %v3940
  %v3942 = vpop.f32.mrf.mxu0
  %v3943 = vpop.f32.mrf.mxu0
  %v3944 = vadd.f32 0.0, %v3943
  %v3945 = vpop.f32.mrf.mxu0
  %3946 = vmatprep.mubr.bf16.mxu0 0
  %3947 = vmatmul.mubr.bf16.gmra.mxu0 %v3888
  %v3948 = vpop.f32.mrf.mxu0
  %v3949 = vadd.f32 0.0, %v3948
  %v3950 = vpop.f32.mrf.mxu0
  %v3951 = vpop.f32.mrf.mxu0
  %v3952 = vpop.f32.mrf.mxu0
  %3953 = vdwg.mxu0
  %v3954 = vmul.f32 %v3925, %v241
  %v3955 = vmul.f32 %v3928, %v241
  %v3956 = vmul.f32 %v3933, %v241
  %v3957 = vmul.f32 %v3936, %v241
  %v3958 = vmul.f32 %v3941, %v241
  %v3959 = vmul.f32 %v3944, %v241
  %v3960 = vmul.f32 %v3949, %v241
  %v3961 = vadd.f32 %v3954, %v252
  %v3962 = vadd.f32 %v3955, %v252
  %v3963 = vadd.f32 %v3956, %v252
  %v3964 = vadd.f32 %v3957, %v252
  %v3965 = vadd.f32 %v3958, %v252
  %v3966 = vadd.f32 %v3959, %v252
  %v3967 = vadd.f32 %v3960, %v252
  %vm3968 = vcmp.ge.f32.partialorder %v3961, 0.0
  %vm3969 = vcmp.ge.f32.partialorder %v3962, 0.0
  %vm3970 = vcmp.ge.f32.partialorder %v3963, 0.0
  %vm3971 = vcmp.ge.f32.partialorder %v3964, 0.0
  %vm3972 = vcmp.ge.f32.partialorder %v3965, 0.0
  %vm3973 = vcmp.ge.f32.partialorder %v3966, 0.0
  %vm3974 = vcmp.ge.f32.partialorder %v3967, 0.0
  %v3975 = vmul.f32 %v3961, 0.2
  %v3976 = vmul.f32 %v3962, 0.2
  %v3977 = vmul.f32 %v3963, 0.2
  %v3978 = vmul.f32 %v3964, 0.2
  %v3979 = vmul.f32 %v3965, 0.2
  %v3980 = vmul.f32 %v3966, 0.2
  %v3981 = vmul.f32 %v3967, 0.2
  %v3982 = vsel %vm3968, %v3961, %v3975
  %v3983 = vsel %vm3969, %v3962, %v3976
  %v3984 = vsel %vm3970, %v3963, %v3977
  %v3985 = vsel %vm3971, %v3964, %v3978
  %v3986 = vsel %vm3972, %v3965, %v3979
  %v3987 = vsel %vm3973, %v3966, %v3980
  %v3988 = vsel %vm3974, %v3967, %v3981
  %v3989 = vpack.c.bf16 %v3983, %v3982
  %v3990 = vpack.c.bf16 %v3985, %v3984
  %v3991 = vpack.c.bf16 %v3987, %v3986
  %v3992 = vpack.c.bf16 %v3988, %v3988
  %s3993 = scalar_lea.vmem %s1, 136
  %v3994 = vld [vmem:[%s3993] sm:$0xf]
  %v3995 = vld [vmem:[%s3993 + $0x4] sm:$0xf]
  %v3998 = vunpack.c.l.b16 %v3994
  %v3999 = vunpack.c.l.b16 %v3995
  %v4000 = vpack.c.b16 %v3999, %v3998
  %v4003 = vsel %vm30, %v3989, 0
  %v4006 = vsel %vm30, %v3990, 0
  %v4009 = vsel %vm30, %v3991, 0
  %v4012 = vsel %vm30, %v3992, 0
  %4014 = vmatprep.subr.bf16.mxu0 0
  %4015 = vmatpush1.bf16.msra.mxu0 0
  %4016 = vmatprep.subr.bf16.mxu0 0
  %4017 = vmatpush1.bf16.msra.mxu0 0
  %4018 = vmatprep.subr.bf16.mxu0 0
  %4019 = vmatpush1.bf16.msra.mxu0 0
  %4020 = vmatprep.subr.bf16.mxu0 0
  %4021 = vmatpush1.bf16.msra.mxu0 0
  %4022 = vmatprep.subr.bf16.mxu0 0
  %4023 = vmatpush1.bf16.msra.mxu0 0
  %4024 = vmatprep.subr.bf16.mxu0 0
  %4025 = vmatpush1.bf16.msra.mxu0 0
  %4026 = vmatprep.subr.bf16.mxu0 0
  %4027 = vmatpush1.bf16.msra.mxu0 0
  %4028 = vmatprep.subr.bf16.mxu0 0
  %4029 = vmatpush1.bf16.msra.mxu0 %v4000
  %4030 = vmatprep.subr.bf16.mxu0 0
  %4031 = vmatpush2.bf16.msra.mxu0 0
  %4032 = vmatprep.subr.bf16.mxu0 0
  %4033 = vmatpush2.bf16.msra.mxu0 0
  %4034 = vmatprep.subr.bf16.mxu0 0
  %4035 = vmatpush2.bf16.msra.mxu0 0
  %4036 = vmatprep.subr.bf16.mxu0 0
  %4037 = vmatpush2.bf16.msra.mxu0 0
  %4038 = vmatprep.subr.bf16.mxu0 0
  %4039 = vmatpush2.bf16.msra.mxu0 0
  %4040 = vmatprep.subr.bf16.mxu0 0
  %4041 = vmatpush2.bf16.msra.mxu0 0
  %4042 = vmatprep.subr.bf16.mxu0 0
  %4043 = vmatpush2.bf16.msra.mxu0 0
  %4044 = vmatprep.subr.bf16.mxu0 0
  %4045 = vmatpush2.bf16.msra.mxu0 0
  %4046 = vmatprep.mubr.bf16.mxu0 0
  %4047 = vmatmul.mubr.bf16.gmra.mxu0 %v4003
  %v4048 = vpop.f32.mrf.mxu0
  %v4049 = vadd.f32 0.0, %v4048
  %v4050 = vpop.f32.mrf.mxu0
  %v4051 = vpop.f32.mrf.mxu0
  %v4052 = vadd.f32 0.0, %v4051
  %v4053 = vpop.f32.mrf.mxu0
  %4054 = vmatprep.mubr.bf16.mxu0 0
  %4055 = vmatmul.mubr.bf16.gmra.mxu0 %v4006
  %v4056 = vpop.f32.mrf.mxu0
  %v4057 = vadd.f32 0.0, %v4056
  %v4058 = vpop.f32.mrf.mxu0
  %v4059 = vpop.f32.mrf.mxu0
  %v4060 = vadd.f32 0.0, %v4059
  %v4061 = vpop.f32.mrf.mxu0
  %4062 = vmatprep.mubr.bf16.mxu0 0
  %4063 = vmatmul.mubr.bf16.gmra.mxu0 %v4009
  %v4064 = vpop.f32.mrf.mxu0
  %v4065 = vadd.f32 0.0, %v4064
  %v4066 = vpop.f32.mrf.mxu0
  %v4067 = vpop.f32.mrf.mxu0
  %v4068 = vadd.f32 0.0, %v4067
  %v4069 = vpop.f32.mrf.mxu0
  %4070 = vmatprep.mubr.bf16.mxu0 0
  %4071 = vmatmul.mubr.bf16.gmra.mxu0 %v4012
  %v4072 = vpop.f32.mrf.mxu0
  %v4073 = vadd.f32 0.0, %v4072
  %v4074 = vpop.f32.mrf.mxu0
  %v4075 = vpop.f32.mrf.mxu0
  %v4076 = vpop.f32.mrf.mxu0
  %4077 = vdwg.mxu0
  %v4078 = vadd.f32 %v3859, %v4049
  %v4079 = vadd.f32 %v3860, %v4052
  %v4080 = vadd.f32 %v3861, %v4057
  %v4081 = vadd.f32 %v3862, %v4060
  %v4082 = vadd.f32 %v3863, %v4065
  %v4083 = vadd.f32 %v3864, %v4068
  %v4084 = vadd.f32 %v3865, %v4073
  %s4085 = scalar_lea.vmem %s0, 1008
  %v4086 = vld [vmem:[%s4085] sm:$0xff]
  %v4087 = vld [vmem:[%s4085 + $0x8] sm:$0xff]
  %v4088 = vld [vmem:[%s4085 + $0x10] sm:$0xff]
  %v4089 = vld [vmem:[%s4085 + $0x18] sm:$0xff]
  %v4090 = vld [vmem:[%s4085 + $0x20] sm:$0xff]
  %v4091 = vld [vmem:[%s4085 + $0x28] sm:$0xff]
  %v4092 = vld [vmem:[%s4085 + $0x30] sm:$0x3]
  %v4093 = vpack.c.bf16 %v4087, %v4086
  %v4094 = vpack.c.bf16 %v4089, %v4088
  %v4095 = vpack.c.bf16 %v4091, %v4090
  %v4096 = vpack.c.bf16 %v4092, %v4092
  %v4098 = vsel %vm30, %v4093, 0
  %v4101 = vsel %vm30, %v4094, 0
  %v4104 = vsel %vm30, %v4095, 0
  %v4107 = vsel %vm30, %v4096, 0
  %4109 = vmatprep.subr.bf16.mxu0 0
  %4110 = vmatpush1.bf16.msra.mxu0 0
  %4111 = vmatprep.subr.bf16.mxu0 0
  %4112 = vmatpush1.bf16.msra.mxu0 0
  %4113 = vmatprep.subr.bf16.mxu0 0
  %4114 = vmatpush1.bf16.msra.mxu0 0
  %4115 = vmatprep.subr.bf16.mxu0 0
  %4116 = vmatpush1.bf16.msra.mxu0 0
  %4117 = vmatprep.subr.bf16.mxu0 0
  %4118 = vmatpush1.bf16.msra.mxu0 0
  %4119 = vmatprep.subr.bf16.mxu0 0
  %4120 = vmatpush1.bf16.msra.mxu0 0
  %4121 = vmatprep.subr.bf16.mxu0 0
  %4122 = vmatpush1.bf16.msra.mxu0 0
  %4123 = vmatprep.subr.bf16.mxu0 0
  %4124 = vmatpush1.bf16.msra.mxu0 %v150
  %4125 = vmatprep.subr.bf16.mxu0 0
  %4126 = vmatpush2.bf16.msra.mxu0 0
  %4127 = vmatprep.subr.bf16.mxu0 0
  %4128 = vmatpush2.bf16.msra.mxu0 0
  %4129 = vmatprep.subr.bf16.mxu0 0
  %4130 = vmatpush2.bf16.msra.mxu0 0
  %4131 = vmatprep.subr.bf16.mxu0 0
  %4132 = vmatpush2.bf16.msra.mxu0 0
  %4133 = vmatprep.subr.bf16.mxu0 0
  %4134 = vmatpush2.bf16.msra.mxu0 0
  %4135 = vmatprep.subr.bf16.mxu0 0
  %4136 = vmatpush2.bf16.msra.mxu0 0
  %4137 = vmatprep.subr.bf16.mxu0 0
  %4138 = vmatpush2.bf16.msra.mxu0 0
  %4139 = vmatprep.subr.bf16.mxu0 0
  %4140 = vmatpush2.bf16.msra.mxu0 0
  %4141 = vmatprep.mubr.bf16.mxu0 0
  %4142 = vmatmul.mubr.bf16.gmra.mxu0 %v4098
  %v4143 = vpop.f32.mrf.mxu0
  %v4144 = vadd.f32 0.0, %v4143
  %v4145 = vpop.f32.mrf.mxu0
  %v4146 = vpop.f32.mrf.mxu0
  %v4147 = vadd.f32 0.0, %v4146
  %v4148 = vpop.f32.mrf.mxu0
  %4149 = vmatprep.mubr.bf16.mxu0 0
  %4150 = vmatmul.mubr.bf16.gmra.mxu0 %v4101
  %v4151 = vpop.f32.mrf.mxu0
  %v4152 = vadd.f32 0.0, %v4151
  %v4153 = vpop.f32.mrf.mxu0
  %v4154 = vpop.f32.mrf.mxu0
  %v4155 = vadd.f32 0.0, %v4154
  %v4156 = vpop.f32.mrf.mxu0
  %4157 = vmatprep.mubr.bf16.mxu0 0
  %4158 = vmatmul.mubr.bf16.gmra.mxu0 %v4104
  %v4159 = vpop.f32.mrf.mxu0
  %v4160 = vadd.f32 0.0, %v4159
  %v4161 = vpop.f32.mrf.mxu0
  %v4162 = vpop.f32.mrf.mxu0
  %v4163 = vadd.f32 0.0, %v4162
  %v4164 = vpop.f32.mrf.mxu0
  %4165 = vmatprep.mubr.bf16.mxu0 0
  %4166 = vmatmul.mubr.bf16.gmra.mxu0 %v4107
  %v4167 = vpop.f32.mrf.mxu0
  %v4168 = vadd.f32 0.0, %v4167
  %v4169 = vpop.f32.mrf.mxu0
  %v4170 = vpop.f32.mrf.mxu0
  %v4171 = vpop.f32.mrf.mxu0
  %4172 = vdwg.mxu0
  %v4173 = vmul.f32 %v4144, %v241
  %v4174 = vmul.f32 %v4147, %v241
  %v4175 = vmul.f32 %v4152, %v241
  %v4176 = vmul.f32 %v4155, %v241
  %v4177 = vmul.f32 %v4160, %v241
  %v4178 = vmul.f32 %v4163, %v241
  %v4179 = vmul.f32 %v4168, %v241
  %v4180 = vadd.f32 %v4173, %v252
  %v4181 = vadd.f32 %v4174, %v252
  %v4182 = vadd.f32 %v4175, %v252
  %v4183 = vadd.f32 %v4176, %v252
  %v4184 = vadd.f32 %v4177, %v252
  %v4185 = vadd.f32 %v4178, %v252
  %v4186 = vadd.f32 %v4179, %v252
  %vm4187 = vcmp.ge.f32.partialorder %v4180, 0.0
  %vm4188 = vcmp.ge.f32.partialorder %v4181, 0.0
  %vm4189 = vcmp.ge.f32.partialorder %v4182, 0.0
  %vm4190 = vcmp.ge.f32.partialorder %v4183, 0.0
  %vm4191 = vcmp.ge.f32.partialorder %v4184, 0.0
  %vm4192 = vcmp.ge.f32.partialorder %v4185, 0.0
  %vm4193 = vcmp.ge.f32.partialorder %v4186, 0.0
  %v4194 = vmul.f32 %v4180, 0.2
  %v4195 = vmul.f32 %v4181, 0.2
  %v4196 = vmul.f32 %v4182, 0.2
  %v4197 = vmul.f32 %v4183, 0.2
  %v4198 = vmul.f32 %v4184, 0.2
  %v4199 = vmul.f32 %v4185, 0.2
  %v4200 = vmul.f32 %v4186, 0.2
  %v4201 = vsel %vm4187, %v4180, %v4194
  %v4202 = vsel %vm4188, %v4181, %v4195
  %v4203 = vsel %vm4189, %v4182, %v4196
  %v4204 = vsel %vm4190, %v4183, %v4197
  %v4205 = vsel %vm4191, %v4184, %v4198
  %v4206 = vsel %vm4192, %v4185, %v4199
  %v4207 = vsel %vm4193, %v4186, %v4200
  %v4208 = vpack.c.bf16 %v4202, %v4201
  %v4209 = vpack.c.bf16 %v4204, %v4203
  %v4210 = vpack.c.bf16 %v4206, %v4205
  %v4211 = vpack.c.bf16 %v4207, %v4207
  %s4212 = scalar_lea.vmem %s1, 144
  %v4213 = vld [vmem:[%s4212] sm:$0xf]
  %v4214 = vld [vmem:[%s4212 + $0x4] sm:$0xf]
  %v4217 = vunpack.c.l.b16 %v4213
  %v4218 = vunpack.c.l.b16 %v4214
  %v4219 = vpack.c.b16 %v4218, %v4217
  %v4222 = vsel %vm30, %v4208, 0
  %v4225 = vsel %vm30, %v4209, 0
  %v4228 = vsel %vm30, %v4210, 0
  %v4231 = vsel %vm30, %v4211, 0
  %4233 = vmatprep.subr.bf16.mxu0 0
  %4234 = vmatpush1.bf16.msra.mxu0 0
  %4235 = vmatprep.subr.bf16.mxu0 0
  %4236 = vmatpush1.bf16.msra.mxu0 0
  %4237 = vmatprep.subr.bf16.mxu0 0
  %4238 = vmatpush1.bf16.msra.mxu0 0
  %4239 = vmatprep.subr.bf16.mxu0 0
  %4240 = vmatpush1.bf16.msra.mxu0 0
  %4241 = vmatprep.subr.bf16.mxu0 0
  %4242 = vmatpush1.bf16.msra.mxu0 0
  %4243 = vmatprep.subr.bf16.mxu0 0
  %4244 = vmatpush1.bf16.msra.mxu0 0
  %4245 = vmatprep.subr.bf16.mxu0 0
  %4246 = vmatpush1.bf16.msra.mxu0 0
  %4247 = vmatprep.subr.bf16.mxu0 0
  %4248 = vmatpush1.bf16.msra.mxu0 %v4219
  %4249 = vmatprep.subr.bf16.mxu0 0
  %4250 = vmatpush2.bf16.msra.mxu0 0
  %4251 = vmatprep.subr.bf16.mxu0 0
  %4252 = vmatpush2.bf16.msra.mxu0 0
  %4253 = vmatprep.subr.bf16.mxu0 0
  %4254 = vmatpush2.bf16.msra.mxu0 0
  %4255 = vmatprep.subr.bf16.mxu0 0
  %4256 = vmatpush2.bf16.msra.mxu0 0
  %4257 = vmatprep.subr.bf16.mxu0 0
  %4258 = vmatpush2.bf16.msra.mxu0 0
  %4259 = vmatprep.subr.bf16.mxu0 0
  %4260 = vmatpush2.bf16.msra.mxu0 0
  %4261 = vmatprep.subr.bf16.mxu0 0
  %4262 = vmatpush2.bf16.msra.mxu0 0
  %4263 = vmatprep.subr.bf16.mxu0 0
  %4264 = vmatpush2.bf16.msra.mxu0 0
  %4265 = vmatprep.mubr.bf16.mxu0 0
  %4266 = vmatmul.mubr.bf16.gmra.mxu0 %v4222
  %v4267 = vpop.f32.mrf.mxu0
  %v4268 = vadd.f32 0.0, %v4267
  %v4269 = vpop.f32.mrf.mxu0
  %v4270 = vpop.f32.mrf.mxu0
  %v4271 = vadd.f32 0.0, %v4270
  %v4272 = vpop.f32.mrf.mxu0
  %4273 = vmatprep.mubr.bf16.mxu0 0
  %4274 = vmatmul.mubr.bf16.gmra.mxu0 %v4225
  %v4275 = vpop.f32.mrf.mxu0
  %v4276 = vadd.f32 0.0, %v4275
  %v4277 = vpop.f32.mrf.mxu0
  %v4278 = vpop.f32.mrf.mxu0
  %v4279 = vadd.f32 0.0, %v4278
  %v4280 = vpop.f32.mrf.mxu0
  %4281 = vmatprep.mubr.bf16.mxu0 0
  %4282 = vmatmul.mubr.bf16.gmra.mxu0 %v4228
  %v4283 = vpop.f32.mrf.mxu0
  %v4284 = vadd.f32 0.0, %v4283
  %v4285 = vpop.f32.mrf.mxu0
  %v4286 = vpop.f32.mrf.mxu0
  %v4287 = vadd.f32 0.0, %v4286
  %v4288 = vpop.f32.mrf.mxu0
  %4289 = vmatprep.mubr.bf16.mxu0 0
  %4290 = vmatmul.mubr.bf16.gmra.mxu0 %v4231
  %v4291 = vpop.f32.mrf.mxu0
  %v4292 = vadd.f32 0.0, %v4291
  %v4293 = vpop.f32.mrf.mxu0
  %v4294 = vpop.f32.mrf.mxu0
  %v4295 = vpop.f32.mrf.mxu0
  %4296 = vdwg.mxu0
  %v4297 = vadd.f32 %v4078, %v4268
  %v4298 = vadd.f32 %v4079, %v4271
  %v4299 = vadd.f32 %v4080, %v4276
  %v4300 = vadd.f32 %v4081, %v4279
  %v4301 = vadd.f32 %v4082, %v4284
  %v4302 = vadd.f32 %v4083, %v4287
  %v4303 = vadd.f32 %v4084, %v4292
  %s4304 = scalar_lea.vmem %s0, 1064
  %v4305 = vld [vmem:[%s4304] sm:$0xff]
  %v4306 = vld [vmem:[%s4304 + $0x8] sm:$0xff]
  %v4307 = vld [vmem:[%s4304 + $0x10] sm:$0xff]
  %v4308 = vld [vmem:[%s4304 + $0x18] sm:$0xff]
  %v4309 = vld [vmem:[%s4304 + $0x20] sm:$0xff]
  %v4310 = vld [vmem:[%s4304 + $0x28] sm:$0xff]
  %v4311 = vld [vmem:[%s4304 + $0x30] sm:$0x3]
  %v4312 = vpack.c.bf16 %v4306, %v4305
  %v4313 = vpack.c.bf16 %v4308, %v4307
  %v4314 = vpack.c.bf16 %v4310, %v4309
  %v4315 = vpack.c.bf16 %v4311, %v4311
  %v4317 = vsel %vm30, %v4312, 0
  %v4320 = vsel %vm30, %v4313, 0
  %v4323 = vsel %vm30, %v4314, 0
  %v4326 = vsel %vm30, %v4315, 0
  %4328 = vmatprep.subr.bf16.mxu0 0
  %4329 = vmatpush1.bf16.msra.mxu0 0
  %4330 = vmatprep.subr.bf16.mxu0 0
  %4331 = vmatpush1.bf16.msra.mxu0 0
  %4332 = vmatprep.subr.bf16.mxu0 0
  %4333 = vmatpush1.bf16.msra.mxu0 0
  %4334 = vmatprep.subr.bf16.mxu0 0
  %4335 = vmatpush1.bf16.msra.mxu0 0
  %4336 = vmatprep.subr.bf16.mxu0 0
  %4337 = vmatpush1.bf16.msra.mxu0 0
  %4338 = vmatprep.subr.bf16.mxu0 0
  %4339 = vmatpush1.bf16.msra.mxu0 0
  %4340 = vmatprep.subr.bf16.mxu0 0
  %4341 = vmatpush1.bf16.msra.mxu0 0
  %4342 = vmatprep.subr.bf16.mxu0 0
  %4343 = vmatpush1.bf16.msra.mxu0 %v150
  %4344 = vmatprep.subr.bf16.mxu0 0
  %4345 = vmatpush2.bf16.msra.mxu0 0
  %4346 = vmatprep.subr.bf16.mxu0 0
  %4347 = vmatpush2.bf16.msra.mxu0 0
  %4348 = vmatprep.subr.bf16.mxu0 0
  %4349 = vmatpush2.bf16.msra.mxu0 0
  %4350 = vmatprep.subr.bf16.mxu0 0
  %4351 = vmatpush2.bf16.msra.mxu0 0
  %4352 = vmatprep.subr.bf16.mxu0 0
  %4353 = vmatpush2.bf16.msra.mxu0 0
  %4354 = vmatprep.subr.bf16.mxu0 0
  %4355 = vmatpush2.bf16.msra.mxu0 0
  %4356 = vmatprep.subr.bf16.mxu0 0
  %4357 = vmatpush2.bf16.msra.mxu0 0
  %4358 = vmatprep.subr.bf16.mxu0 0
  %4359 = vmatpush2.bf16.msra.mxu0 0
  %4360 = vmatprep.mubr.bf16.mxu0 0
  %4361 = vmatmul.mubr.bf16.gmra.mxu0 %v4317
  %v4362 = vpop.f32.mrf.mxu0
  %v4363 = vadd.f32 0.0, %v4362
  %v4364 = vpop.f32.mrf.mxu0
  %v4365 = vpop.f32.mrf.mxu0
  %v4366 = vadd.f32 0.0, %v4365
  %v4367 = vpop.f32.mrf.mxu0
  %4368 = vmatprep.mubr.bf16.mxu0 0
  %4369 = vmatmul.mubr.bf16.gmra.mxu0 %v4320
  %v4370 = vpop.f32.mrf.mxu0
  %v4371 = vadd.f32 0.0, %v4370
  %v4372 = vpop.f32.mrf.mxu0
  %v4373 = vpop.f32.mrf.mxu0
  %v4374 = vadd.f32 0.0, %v4373
  %v4375 = vpop.f32.mrf.mxu0
  %4376 = vmatprep.mubr.bf16.mxu0 0
  %4377 = vmatmul.mubr.bf16.gmra.mxu0 %v4323
  %v4378 = vpop.f32.mrf.mxu0
  %v4379 = vadd.f32 0.0, %v4378
  %v4380 = vpop.f32.mrf.mxu0
  %v4381 = vpop.f32.mrf.mxu0
  %v4382 = vadd.f32 0.0, %v4381
  %v4383 = vpop.f32.mrf.mxu0
  %4384 = vmatprep.mubr.bf16.mxu0 0
  %4385 = vmatmul.mubr.bf16.gmra.mxu0 %v4326
  %v4386 = vpop.f32.mrf.mxu0
  %v4387 = vadd.f32 0.0, %v4386
  %v4388 = vpop.f32.mrf.mxu0
  %v4389 = vpop.f32.mrf.mxu0
  %v4390 = vpop.f32.mrf.mxu0
  %4391 = vdwg.mxu0
  %v4392 = vmul.f32 %v4363, %v241
  %v4393 = vmul.f32 %v4366, %v241
  %v4394 = vmul.f32 %v4371, %v241
  %v4395 = vmul.f32 %v4374, %v241
  %v4396 = vmul.f32 %v4379, %v241
  %v4397 = vmul.f32 %v4382, %v241
  %v4398 = vmul.f32 %v4387, %v241
  %v4399 = vadd.f32 %v4392, %v252
  %v4400 = vadd.f32 %v4393, %v252
  %v4401 = vadd.f32 %v4394, %v252
  %v4402 = vadd.f32 %v4395, %v252
  %v4403 = vadd.f32 %v4396, %v252
  %v4404 = vadd.f32 %v4397, %v252
  %v4405 = vadd.f32 %v4398, %v252
  %vm4406 = vcmp.ge.f32.partialorder %v4399, 0.0
  %vm4407 = vcmp.ge.f32.partialorder %v4400, 0.0
  %vm4408 = vcmp.ge.f32.partialorder %v4401, 0.0
  %vm4409 = vcmp.ge.f32.partialorder %v4402, 0.0
  %vm4410 = vcmp.ge.f32.partialorder %v4403, 0.0
  %vm4411 = vcmp.ge.f32.partialorder %v4404, 0.0
  %vm4412 = vcmp.ge.f32.partialorder %v4405, 0.0
  %v4413 = vmul.f32 %v4399, 0.2
  %v4414 = vmul.f32 %v4400, 0.2
  %v4415 = vmul.f32 %v4401, 0.2
  %v4416 = vmul.f32 %v4402, 0.2
  %v4417 = vmul.f32 %v4403, 0.2
  %v4418 = vmul.f32 %v4404, 0.2
  %v4419 = vmul.f32 %v4405, 0.2
  %v4420 = vsel %vm4406, %v4399, %v4413
  %v4421 = vsel %vm4407, %v4400, %v4414
  %v4422 = vsel %vm4408, %v4401, %v4415
  %v4423 = vsel %vm4409, %v4402, %v4416
  %v4424 = vsel %vm4410, %v4403, %v4417
  %v4425 = vsel %vm4411, %v4404, %v4418
  %v4426 = vsel %vm4412, %v4405, %v4419
  %v4427 = vpack.c.bf16 %v4421, %v4420
  %v4428 = vpack.c.bf16 %v4423, %v4422
  %v4429 = vpack.c.bf16 %v4425, %v4424
  %v4430 = vpack.c.bf16 %v4426, %v4426
  %s4431 = scalar_lea.vmem %s1, 152
  %v4432 = vld [vmem:[%s4431] sm:$0xf]
  %v4433 = vld [vmem:[%s4431 + $0x4] sm:$0xf]
  %v4436 = vunpack.c.l.b16 %v4432
  %v4437 = vunpack.c.l.b16 %v4433
  %v4438 = vpack.c.b16 %v4437, %v4436
  %v4441 = vsel %vm30, %v4427, 0
  %v4444 = vsel %vm30, %v4428, 0
  %v4447 = vsel %vm30, %v4429, 0
  %v4450 = vsel %vm30, %v4430, 0
  %4452 = vmatprep.subr.bf16.mxu0 0
  %4453 = vmatpush1.bf16.msra.mxu0 0
  %4454 = vmatprep.subr.bf16.mxu0 0
  %4455 = vmatpush1.bf16.msra.mxu0 0
  %4456 = vmatprep.subr.bf16.mxu0 0
  %4457 = vmatpush1.bf16.msra.mxu0 0
  %4458 = vmatprep.subr.bf16.mxu0 0
  %4459 = vmatpush1.bf16.msra.mxu0 0
  %4460 = vmatprep.subr.bf16.mxu0 0
  %4461 = vmatpush1.bf16.msra.mxu0 0
  %4462 = vmatprep.subr.bf16.mxu0 0
  %4463 = vmatpush1.bf16.msra.mxu0 0
  %4464 = vmatprep.subr.bf16.mxu0 0
  %4465 = vmatpush1.bf16.msra.mxu0 0
  %4466 = vmatprep.subr.bf16.mxu0 0
  %4467 = vmatpush1.bf16.msra.mxu0 %v4438
  %4468 = vmatprep.subr.bf16.mxu0 0
  %4469 = vmatpush2.bf16.msra.mxu0 0
  %4470 = vmatprep.subr.bf16.mxu0 0
  %4471 = vmatpush2.bf16.msra.mxu0 0
  %4472 = vmatprep.subr.bf16.mxu0 0
  %4473 = vmatpush2.bf16.msra.mxu0 0
  %4474 = vmatprep.subr.bf16.mxu0 0
  %4475 = vmatpush2.bf16.msra.mxu0 0
  %4476 = vmatprep.subr.bf16.mxu0 0
  %4477 = vmatpush2.bf16.msra.mxu0 0
  %4478 = vmatprep.subr.bf16.mxu0 0
  %4479 = vmatpush2.bf16.msra.mxu0 0
  %4480 = vmatprep.subr.bf16.mxu0 0
  %4481 = vmatpush2.bf16.msra.mxu0 0
  %4482 = vmatprep.subr.bf16.mxu0 0
  %4483 = vmatpush2.bf16.msra.mxu0 0
  %4484 = vmatprep.mubr.bf16.mxu0 0
  %4485 = vmatmul.mubr.bf16.gmra.mxu0 %v4441
  %v4486 = vpop.f32.mrf.mxu0
  %v4487 = vadd.f32 0.0, %v4486
  %v4488 = vpop.f32.mrf.mxu0
  %v4489 = vpop.f32.mrf.mxu0
  %v4490 = vadd.f32 0.0, %v4489
  %v4491 = vpop.f32.mrf.mxu0
  %4492 = vmatprep.mubr.bf16.mxu0 0
  %4493 = vmatmul.mubr.bf16.gmra.mxu0 %v4444
  %v4494 = vpop.f32.mrf.mxu0
  %v4495 = vadd.f32 0.0, %v4494
  %v4496 = vpop.f32.mrf.mxu0
  %v4497 = vpop.f32.mrf.mxu0
  %v4498 = vadd.f32 0.0, %v4497
  %v4499 = vpop.f32.mrf.mxu0
  %4500 = vmatprep.mubr.bf16.mxu0 0
  %4501 = vmatmul.mubr.bf16.gmra.mxu0 %v4447
  %v4502 = vpop.f32.mrf.mxu0
  %v4503 = vadd.f32 0.0, %v4502
  %v4504 = vpop.f32.mrf.mxu0
  %v4505 = vpop.f32.mrf.mxu0
  %v4506 = vadd.f32 0.0, %v4505
  %v4507 = vpop.f32.mrf.mxu0
  %4508 = vmatprep.mubr.bf16.mxu0 0
  %4509 = vmatmul.mubr.bf16.gmra.mxu0 %v4450
  %v4510 = vpop.f32.mrf.mxu0
  %v4511 = vadd.f32 0.0, %v4510
  %v4512 = vpop.f32.mrf.mxu0
  %v4513 = vpop.f32.mrf.mxu0
  %v4514 = vpop.f32.mrf.mxu0
  %4515 = vdwg.mxu0
  %v4516 = vadd.f32 %v4297, %v4487
  %v4517 = vadd.f32 %v4298, %v4490
  %v4518 = vadd.f32 %v4299, %v4495
  %v4519 = vadd.f32 %v4300, %v4498
  %v4520 = vadd.f32 %v4301, %v4503
  %v4521 = vadd.f32 %v4302, %v4506
  %v4522 = vadd.f32 %v4303, %v4511
  %s4523 = scalar_lea.vmem %s0, 1120
  %v4524 = vld [vmem:[%s4523] sm:$0xff]
  %v4525 = vld [vmem:[%s4523 + $0x8] sm:$0xff]
  %v4526 = vld [vmem:[%s4523 + $0x10] sm:$0xff]
  %v4527 = vld [vmem:[%s4523 + $0x18] sm:$0xff]
  %v4528 = vld [vmem:[%s4523 + $0x20] sm:$0xff]
  %v4529 = vld [vmem:[%s4523 + $0x28] sm:$0xff]
  %v4530 = vld [vmem:[%s4523 + $0x30] sm:$0x3]
  %v4531 = vpack.c.bf16 %v4525, %v4524
  %v4532 = vpack.c.bf16 %v4527, %v4526
  %v4533 = vpack.c.bf16 %v4529, %v4528
  %v4534 = vpack.c.bf16 %v4530, %v4530
  %v4536 = vsel %vm30, %v4531, 0
  %v4539 = vsel %vm30, %v4532, 0
  %v4542 = vsel %vm30, %v4533, 0
  %v4545 = vsel %vm30, %v4534, 0
  %4547 = vmatprep.subr.bf16.mxu0 0
  %4548 = vmatpush1.bf16.msra.mxu0 0
  %4549 = vmatprep.subr.bf16.mxu0 0
  %4550 = vmatpush1.bf16.msra.mxu0 0
  %4551 = vmatprep.subr.bf16.mxu0 0
  %4552 = vmatpush1.bf16.msra.mxu0 0
  %4553 = vmatprep.subr.bf16.mxu0 0
  %4554 = vmatpush1.bf16.msra.mxu0 0
  %4555 = vmatprep.subr.bf16.mxu0 0
  %4556 = vmatpush1.bf16.msra.mxu0 0
  %4557 = vmatprep.subr.bf16.mxu0 0
  %4558 = vmatpush1.bf16.msra.mxu0 0
  %4559 = vmatprep.subr.bf16.mxu0 0
  %4560 = vmatpush1.bf16.msra.mxu0 0
  %4561 = vmatprep.subr.bf16.mxu0 0
  %4562 = vmatpush1.bf16.msra.mxu0 %v150
  %4563 = vmatprep.subr.bf16.mxu0 0
  %4564 = vmatpush2.bf16.msra.mxu0 0
  %4565 = vmatprep.subr.bf16.mxu0 0
  %4566 = vmatpush2.bf16.msra.mxu0 0
  %4567 = vmatprep.subr.bf16.mxu0 0
  %4568 = vmatpush2.bf16.msra.mxu0 0
  %4569 = vmatprep.subr.bf16.mxu0 0
  %4570 = vmatpush2.bf16.msra.mxu0 0
  %4571 = vmatprep.subr.bf16.mxu0 0
  %4572 = vmatpush2.bf16.msra.mxu0 0
  %4573 = vmatprep.subr.bf16.mxu0 0
  %4574 = vmatpush2.bf16.msra.mxu0 0
  %4575 = vmatprep.subr.bf16.mxu0 0
  %4576 = vmatpush2.bf16.msra.mxu0 0
  %4577 = vmatprep.subr.bf16.mxu0 0
  %4578 = vmatpush2.bf16.msra.mxu0 0
  %4579 = vmatprep.mubr.bf16.mxu0 0
  %4580 = vmatmul.mubr.bf16.gmra.mxu0 %v4536
  %v4581 = vpop.f32.mrf.mxu0
  %v4582 = vadd.f32 0.0, %v4581
  %v4583 = vpop.f32.mrf.mxu0
  %v4584 = vpop.f32.mrf.mxu0
  %v4585 = vadd.f32 0.0, %v4584
  %v4586 = vpop.f32.mrf.mxu0
  %4587 = vmatprep.mubr.bf16.mxu0 0
  %4588 = vmatmul.mubr.bf16.gmra.mxu0 %v4539
  %v4589 = vpop.f32.mrf.mxu0
  %v4590 = vadd.f32 0.0, %v4589
  %v4591 = vpop.f32.mrf.mxu0
  %v4592 = vpop.f32.mrf.mxu0
  %v4593 = vadd.f32 0.0, %v4592
  %v4594 = vpop.f32.mrf.mxu0
  %4595 = vmatprep.mubr.bf16.mxu0 0
  %4596 = vmatmul.mubr.bf16.gmra.mxu0 %v4542
  %v4597 = vpop.f32.mrf.mxu0
  %v4598 = vadd.f32 0.0, %v4597
  %v4599 = vpop.f32.mrf.mxu0
  %v4600 = vpop.f32.mrf.mxu0
  %v4601 = vadd.f32 0.0, %v4600
  %v4602 = vpop.f32.mrf.mxu0
  %4603 = vmatprep.mubr.bf16.mxu0 0
  %4604 = vmatmul.mubr.bf16.gmra.mxu0 %v4545
  %v4605 = vpop.f32.mrf.mxu0
  %v4606 = vadd.f32 0.0, %v4605
  %v4607 = vpop.f32.mrf.mxu0
  %v4608 = vpop.f32.mrf.mxu0
  %v4609 = vpop.f32.mrf.mxu0
  %4610 = vdwg.mxu0
  %v4611 = vmul.f32 %v4582, %v241
  %v4612 = vmul.f32 %v4585, %v241
  %v4613 = vmul.f32 %v4590, %v241
  %v4614 = vmul.f32 %v4593, %v241
  %v4615 = vmul.f32 %v4598, %v241
  %v4616 = vmul.f32 %v4601, %v241
  %v4617 = vmul.f32 %v4606, %v241
  %v4618 = vadd.f32 %v4611, %v252
  %v4619 = vadd.f32 %v4612, %v252
  %v4620 = vadd.f32 %v4613, %v252
  %v4621 = vadd.f32 %v4614, %v252
  %v4622 = vadd.f32 %v4615, %v252
  %v4623 = vadd.f32 %v4616, %v252
  %v4624 = vadd.f32 %v4617, %v252
  %vm4625 = vcmp.ge.f32.partialorder %v4618, 0.0
  %vm4626 = vcmp.ge.f32.partialorder %v4619, 0.0
  %vm4627 = vcmp.ge.f32.partialorder %v4620, 0.0
  %vm4628 = vcmp.ge.f32.partialorder %v4621, 0.0
  %vm4629 = vcmp.ge.f32.partialorder %v4622, 0.0
  %vm4630 = vcmp.ge.f32.partialorder %v4623, 0.0
  %vm4631 = vcmp.ge.f32.partialorder %v4624, 0.0
  %v4632 = vmul.f32 %v4618, 0.2
  %v4633 = vmul.f32 %v4619, 0.2
  %v4634 = vmul.f32 %v4620, 0.2
  %v4635 = vmul.f32 %v4621, 0.2
  %v4636 = vmul.f32 %v4622, 0.2
  %v4637 = vmul.f32 %v4623, 0.2
  %v4638 = vmul.f32 %v4624, 0.2
  %v4639 = vsel %vm4625, %v4618, %v4632
  %v4640 = vsel %vm4626, %v4619, %v4633
  %v4641 = vsel %vm4627, %v4620, %v4634
  %v4642 = vsel %vm4628, %v4621, %v4635
  %v4643 = vsel %vm4629, %v4622, %v4636
  %v4644 = vsel %vm4630, %v4623, %v4637
  %v4645 = vsel %vm4631, %v4624, %v4638
  %v4646 = vpack.c.bf16 %v4640, %v4639
  %v4647 = vpack.c.bf16 %v4642, %v4641
  %v4648 = vpack.c.bf16 %v4644, %v4643
  %v4649 = vpack.c.bf16 %v4645, %v4645
  %s4650 = scalar_lea.vmem %s1, 160
  %v4651 = vld [vmem:[%s4650] sm:$0xf]
  %v4652 = vld [vmem:[%s4650 + $0x4] sm:$0xf]
  %v4655 = vunpack.c.l.b16 %v4651
  %v4656 = vunpack.c.l.b16 %v4652
  %v4657 = vpack.c.b16 %v4656, %v4655
  %v4660 = vsel %vm30, %v4646, 0
  %v4663 = vsel %vm30, %v4647, 0
  %v4666 = vsel %vm30, %v4648, 0
  %v4669 = vsel %vm30, %v4649, 0
  %4671 = vmatprep.subr.bf16.mxu0 0
  %4672 = vmatpush1.bf16.msra.mxu0 0
  %4673 = vmatprep.subr.bf16.mxu0 0
  %4674 = vmatpush1.bf16.msra.mxu0 0
  %4675 = vmatprep.subr.bf16.mxu0 0
  %4676 = vmatpush1.bf16.msra.mxu0 0
  %4677 = vmatprep.subr.bf16.mxu0 0
  %4678 = vmatpush1.bf16.msra.mxu0 0
  %4679 = vmatprep.subr.bf16.mxu0 0
  %4680 = vmatpush1.bf16.msra.mxu0 0
  %4681 = vmatprep.subr.bf16.mxu0 0
  %4682 = vmatpush1.bf16.msra.mxu0 0
  %4683 = vmatprep.subr.bf16.mxu0 0
  %4684 = vmatpush1.bf16.msra.mxu0 0
  %4685 = vmatprep.subr.bf16.mxu0 0
  %4686 = vmatpush1.bf16.msra.mxu0 %v4657
  %4687 = vmatprep.subr.bf16.mxu0 0
  %4688 = vmatpush2.bf16.msra.mxu0 0
  %4689 = vmatprep.subr.bf16.mxu0 0
  %4690 = vmatpush2.bf16.msra.mxu0 0
  %4691 = vmatprep.subr.bf16.mxu0 0
  %4692 = vmatpush2.bf16.msra.mxu0 0
  %4693 = vmatprep.subr.bf16.mxu0 0
  %4694 = vmatpush2.bf16.msra.mxu0 0
  %4695 = vmatprep.subr.bf16.mxu0 0
  %4696 = vmatpush2.bf16.msra.mxu0 0
  %4697 = vmatprep.subr.bf16.mxu0 0
  %4698 = vmatpush2.bf16.msra.mxu0 0
  %4699 = vmatprep.subr.bf16.mxu0 0
  %4700 = vmatpush2.bf16.msra.mxu0 0
  %4701 = vmatprep.subr.bf16.mxu0 0
  %4702 = vmatpush2.bf16.msra.mxu0 0
  %4703 = vmatprep.mubr.bf16.mxu0 0
  %4704 = vmatmul.mubr.bf16.gmra.mxu0 %v4660
  %v4705 = vpop.f32.mrf.mxu0
  %v4706 = vadd.f32 0.0, %v4705
  %v4707 = vpop.f32.mrf.mxu0
  %v4708 = vpop.f32.mrf.mxu0
  %v4709 = vadd.f32 0.0, %v4708
  %v4710 = vpop.f32.mrf.mxu0
  %4711 = vmatprep.mubr.bf16.mxu0 0
  %4712 = vmatmul.mubr.bf16.gmra.mxu0 %v4663
  %v4713 = vpop.f32.mrf.mxu0
  %v4714 = vadd.f32 0.0, %v4713
  %v4715 = vpop.f32.mrf.mxu0
  %v4716 = vpop.f32.mrf.mxu0
  %v4717 = vadd.f32 0.0, %v4716
  %v4718 = vpop.f32.mrf.mxu0
  %4719 = vmatprep.mubr.bf16.mxu0 0
  %4720 = vmatmul.mubr.bf16.gmra.mxu0 %v4666
  %v4721 = vpop.f32.mrf.mxu0
  %v4722 = vadd.f32 0.0, %v4721
  %v4723 = vpop.f32.mrf.mxu0
  %v4724 = vpop.f32.mrf.mxu0
  %v4725 = vadd.f32 0.0, %v4724
  %v4726 = vpop.f32.mrf.mxu0
  %4727 = vmatprep.mubr.bf16.mxu0 0
  %4728 = vmatmul.mubr.bf16.gmra.mxu0 %v4669
  %v4729 = vpop.f32.mrf.mxu0
  %v4730 = vadd.f32 0.0, %v4729
  %v4731 = vpop.f32.mrf.mxu0
  %v4732 = vpop.f32.mrf.mxu0
  %v4733 = vpop.f32.mrf.mxu0
  %4734 = vdwg.mxu0
  %v4735 = vadd.f32 %v4516, %v4706
  %v4736 = vadd.f32 %v4517, %v4709
  %v4737 = vadd.f32 %v4518, %v4714
  %v4738 = vadd.f32 %v4519, %v4717
  %v4739 = vadd.f32 %v4520, %v4722
  %v4740 = vadd.f32 %v4521, %v4725
  %v4741 = vadd.f32 %v4522, %v4730
  %s4742 = scalar_lea.vmem %s0, 1176
  %v4743 = vld [vmem:[%s4742] sm:$0xff]
  %v4744 = vld [vmem:[%s4742 + $0x8] sm:$0xff]
  %v4745 = vld [vmem:[%s4742 + $0x10] sm:$0xff]
  %v4746 = vld [vmem:[%s4742 + $0x18] sm:$0xff]
  %v4747 = vld [vmem:[%s4742 + $0x20] sm:$0xff]
  %v4748 = vld [vmem:[%s4742 + $0x28] sm:$0xff]
  %v4749 = vld [vmem:[%s4742 + $0x30] sm:$0x3]
  %v4750 = vpack.c.bf16 %v4744, %v4743
  %v4751 = vpack.c.bf16 %v4746, %v4745
  %v4752 = vpack.c.bf16 %v4748, %v4747
  %v4753 = vpack.c.bf16 %v4749, %v4749
  %v4755 = vsel %vm30, %v4750, 0
  %v4758 = vsel %vm30, %v4751, 0
  %v4761 = vsel %vm30, %v4752, 0
  %v4764 = vsel %vm30, %v4753, 0
  %4766 = vmatprep.subr.bf16.mxu0 0
  %4767 = vmatpush1.bf16.msra.mxu0 0
  %4768 = vmatprep.subr.bf16.mxu0 0
  %4769 = vmatpush1.bf16.msra.mxu0 0
  %4770 = vmatprep.subr.bf16.mxu0 0
  %4771 = vmatpush1.bf16.msra.mxu0 0
  %4772 = vmatprep.subr.bf16.mxu0 0
  %4773 = vmatpush1.bf16.msra.mxu0 0
  %4774 = vmatprep.subr.bf16.mxu0 0
  %4775 = vmatpush1.bf16.msra.mxu0 0
  %4776 = vmatprep.subr.bf16.mxu0 0
  %4777 = vmatpush1.bf16.msra.mxu0 0
  %4778 = vmatprep.subr.bf16.mxu0 0
  %4779 = vmatpush1.bf16.msra.mxu0 0
  %4780 = vmatprep.subr.bf16.mxu0 0
  %4781 = vmatpush1.bf16.msra.mxu0 %v150
  %4782 = vmatprep.subr.bf16.mxu0 0
  %4783 = vmatpush2.bf16.msra.mxu0 0
  %4784 = vmatprep.subr.bf16.mxu0 0
  %4785 = vmatpush2.bf16.msra.mxu0 0
  %4786 = vmatprep.subr.bf16.mxu0 0
  %4787 = vmatpush2.bf16.msra.mxu0 0
  %4788 = vmatprep.subr.bf16.mxu0 0
  %4789 = vmatpush2.bf16.msra.mxu0 0
  %4790 = vmatprep.subr.bf16.mxu0 0
  %4791 = vmatpush2.bf16.msra.mxu0 0
  %4792 = vmatprep.subr.bf16.mxu0 0
  %4793 = vmatpush2.bf16.msra.mxu0 0
  %4794 = vmatprep.subr.bf16.mxu0 0
  %4795 = vmatpush2.bf16.msra.mxu0 0
  %4796 = vmatprep.subr.bf16.mxu0 0
  %4797 = vmatpush2.bf16.msra.mxu0 0
  %4798 = vmatprep.mubr.bf16.mxu0 0
  %4799 = vmatmul.mubr.bf16.gmra.mxu0 %v4755
  %v4800 = vpop.f32.mrf.mxu0
  %v4801 = vadd.f32 0.0, %v4800
  %v4802 = vpop.f32.mrf.mxu0
  %v4803 = vpop.f32.mrf.mxu0
  %v4804 = vadd.f32 0.0, %v4803
  %v4805 = vpop.f32.mrf.mxu0
  %4806 = vmatprep.mubr.bf16.mxu0 0
  %4807 = vmatmul.mubr.bf16.gmra.mxu0 %v4758
  %v4808 = vpop.f32.mrf.mxu0
  %v4809 = vadd.f32 0.0, %v4808
  %v4810 = vpop.f32.mrf.mxu0
  %v4811 = vpop.f32.mrf.mxu0
  %v4812 = vadd.f32 0.0, %v4811
  %v4813 = vpop.f32.mrf.mxu0
  %4814 = vmatprep.mubr.bf16.mxu0 0
  %4815 = vmatmul.mubr.bf16.gmra.mxu0 %v4761
  %v4816 = vpop.f32.mrf.mxu0
  %v4817 = vadd.f32 0.0, %v4816
  %v4818 = vpop.f32.mrf.mxu0
  %v4819 = vpop.f32.mrf.mxu0
  %v4820 = vadd.f32 0.0, %v4819
  %v4821 = vpop.f32.mrf.mxu0
  %4822 = vmatprep.mubr.bf16.mxu0 0
  %4823 = vmatmul.mubr.bf16.gmra.mxu0 %v4764
  %v4824 = vpop.f32.mrf.mxu0
  %v4825 = vadd.f32 0.0, %v4824
  %v4826 = vpop.f32.mrf.mxu0
  %v4827 = vpop.f32.mrf.mxu0
  %v4828 = vpop.f32.mrf.mxu0
  %4829 = vdwg.mxu0
  %v4830 = vmul.f32 %v4801, %v241
  %v4831 = vmul.f32 %v4804, %v241
  %v4832 = vmul.f32 %v4809, %v241
  %v4833 = vmul.f32 %v4812, %v241
  %v4834 = vmul.f32 %v4817, %v241
  %v4835 = vmul.f32 %v4820, %v241
  %v4836 = vmul.f32 %v4825, %v241
  %v4837 = vadd.f32 %v4830, %v252
  %v4838 = vadd.f32 %v4831, %v252
  %v4839 = vadd.f32 %v4832, %v252
  %v4840 = vadd.f32 %v4833, %v252
  %v4841 = vadd.f32 %v4834, %v252
  %v4842 = vadd.f32 %v4835, %v252
  %v4843 = vadd.f32 %v4836, %v252
  %vm4844 = vcmp.ge.f32.partialorder %v4837, 0.0
  %vm4845 = vcmp.ge.f32.partialorder %v4838, 0.0
  %vm4846 = vcmp.ge.f32.partialorder %v4839, 0.0
  %vm4847 = vcmp.ge.f32.partialorder %v4840, 0.0
  %vm4848 = vcmp.ge.f32.partialorder %v4841, 0.0
  %vm4849 = vcmp.ge.f32.partialorder %v4842, 0.0
  %vm4850 = vcmp.ge.f32.partialorder %v4843, 0.0
  %v4851 = vmul.f32 %v4837, 0.2
  %v4852 = vmul.f32 %v4838, 0.2
  %v4853 = vmul.f32 %v4839, 0.2
  %v4854 = vmul.f32 %v4840, 0.2
  %v4855 = vmul.f32 %v4841, 0.2
  %v4856 = vmul.f32 %v4842, 0.2
  %v4857 = vmul.f32 %v4843, 0.2
  %v4858 = vsel %vm4844, %v4837, %v4851
  %v4859 = vsel %vm4845, %v4838, %v4852
  %v4860 = vsel %vm4846, %v4839, %v4853
  %v4861 = vsel %vm4847, %v4840, %v4854
  %v4862 = vsel %vm4848, %v4841, %v4855
  %v4863 = vsel %vm4849, %v4842, %v4856
  %v4864 = vsel %vm4850, %v4843, %v4857
  %v4865 = vpack.c.bf16 %v4859, %v4858
  %v4866 = vpack.c.bf16 %v4861, %v4860
  %v4867 = vpack.c.bf16 %v4863, %v4862
  %v4868 = vpack.c.bf16 %v4864, %v4864
  %s4869 = scalar_lea.vmem %s1, 168
  %v4870 = vld [vmem:[%s4869] sm:$0xf]
  %v4871 = vld [vmem:[%s4869 + $0x4] sm:$0xf]
  %v4874 = vunpack.c.l.b16 %v4870
  %v4875 = vunpack.c.l.b16 %v4871
  %v4876 = vpack.c.b16 %v4875, %v4874
  %v4879 = vsel %vm30, %v4865, 0
  %v4882 = vsel %vm30, %v4866, 0
  %v4885 = vsel %vm30, %v4867, 0
  %v4888 = vsel %vm30, %v4868, 0
  %4890 = vmatprep.subr.bf16.mxu0 0
  %4891 = vmatpush1.bf16.msra.mxu0 0
  %4892 = vmatprep.subr.bf16.mxu0 0
  %4893 = vmatpush1.bf16.msra.mxu0 0
  %4894 = vmatprep.subr.bf16.mxu0 0
  %4895 = vmatpush1.bf16.msra.mxu0 0
  %4896 = vmatprep.subr.bf16.mxu0 0
  %4897 = vmatpush1.bf16.msra.mxu0 0
  %4898 = vmatprep.subr.bf16.mxu0 0
  %4899 = vmatpush1.bf16.msra.mxu0 0
  %4900 = vmatprep.subr.bf16.mxu0 0
  %4901 = vmatpush1.bf16.msra.mxu0 0
  %4902 = vmatprep.subr.bf16.mxu0 0
  %4903 = vmatpush1.bf16.msra.mxu0 0
  %4904 = vmatprep.subr.bf16.mxu0 0
  %4905 = vmatpush1.bf16.msra.mxu0 %v4876
  %4906 = vmatprep.subr.bf16.mxu0 0
  %4907 = vmatpush2.bf16.msra.mxu0 0
  %4908 = vmatprep.subr.bf16.mxu0 0
  %4909 = vmatpush2.bf16.msra.mxu0 0
  %4910 = vmatprep.subr.bf16.mxu0 0
  %4911 = vmatpush2.bf16.msra.mxu0 0
  %4912 = vmatprep.subr.bf16.mxu0 0
  %4913 = vmatpush2.bf16.msra.mxu0 0
  %4914 = vmatprep.subr.bf16.mxu0 0
  %4915 = vmatpush2.bf16.msra.mxu0 0
  %4916 = vmatprep.subr.bf16.mxu0 0
  %4917 = vmatpush2.bf16.msra.mxu0 0
  %4918 = vmatprep.subr.bf16.mxu0 0
  %4919 = vmatpush2.bf16.msra.mxu0 0
  %4920 = vmatprep.subr.bf16.mxu0 0
  %4921 = vmatpush2.bf16.msra.mxu0 0
  %4922 = vmatprep.mubr.bf16.mxu0 0
  %4923 = vmatmul.mubr.bf16.gmra.mxu0 %v4879
  %v4924 = vpop.f32.mrf.mxu0
  %v4925 = vadd.f32 0.0, %v4924
  %v4926 = vpop.f32.mrf.mxu0
  %v4927 = vpop.f32.mrf.mxu0
  %v4928 = vadd.f32 0.0, %v4927
  %v4929 = vpop.f32.mrf.mxu0
  %4930 = vmatprep.mubr.bf16.mxu0 0
  %4931 = vmatmul.mubr.bf16.gmra.mxu0 %v4882
  %v4932 = vpop.f32.mrf.mxu0
  %v4933 = vadd.f32 0.0, %v4932
  %v4934 = vpop.f32.mrf.mxu0
  %v4935 = vpop.f32.mrf.mxu0
  %v4936 = vadd.f32 0.0, %v4935
  %v4937 = vpop.f32.mrf.mxu0
  %4938 = vmatprep.mubr.bf16.mxu0 0
  %4939 = vmatmul.mubr.bf16.gmra.mxu0 %v4885
  %v4940 = vpop.f32.mrf.mxu0
  %v4941 = vadd.f32 0.0, %v4940
  %v4942 = vpop.f32.mrf.mxu0
  %v4943 = vpop.f32.mrf.mxu0
  %v4944 = vadd.f32 0.0, %v4943
  %v4945 = vpop.f32.mrf.mxu0
  %4946 = vmatprep.mubr.bf16.mxu0 0
  %4947 = vmatmul.mubr.bf16.gmra.mxu0 %v4888
  %v4948 = vpop.f32.mrf.mxu0
  %v4949 = vadd.f32 0.0, %v4948
  %v4950 = vpop.f32.mrf.mxu0
  %v4951 = vpop.f32.mrf.mxu0
  %v4952 = vpop.f32.mrf.mxu0
  %4953 = vdwg.mxu0
  %v4954 = vadd.f32 %v4735, %v4925
  %v4955 = vadd.f32 %v4736, %v4928
  %v4956 = vadd.f32 %v4737, %v4933
  %v4957 = vadd.f32 %v4738, %v4936
  %v4958 = vadd.f32 %v4739, %v4941
  %v4959 = vadd.f32 %v4740, %v4944
  %v4960 = vadd.f32 %v4741, %v4949
  %s4961 = scalar_lea.vmem %s0, 1232
  %v4962 = vld [vmem:[%s4961] sm:$0xff]
  %v4963 = vld [vmem:[%s4961 + $0x8] sm:$0xff]
  %v4964 = vld [vmem:[%s4961 + $0x10] sm:$0xff]
  %v4965 = vld [vmem:[%s4961 + $0x18] sm:$0xff]
  %v4966 = vld [vmem:[%s4961 + $0x20] sm:$0xff]
  %v4967 = vld [vmem:[%s4961 + $0x28] sm:$0xff]
  %v4968 = vld [vmem:[%s4961 + $0x30] sm:$0x3]
  %v4969 = vpack.c.bf16 %v4963, %v4962
  %v4970 = vpack.c.bf16 %v4965, %v4964
  %v4971 = vpack.c.bf16 %v4967, %v4966
  %v4972 = vpack.c.bf16 %v4968, %v4968
  %v4974 = vsel %vm30, %v4969, 0
  %v4977 = vsel %vm30, %v4970, 0
  %v4980 = vsel %vm30, %v4971, 0
  %v4983 = vsel %vm30, %v4972, 0
  %4985 = vmatprep.subr.bf16.mxu0 0
  %4986 = vmatpush1.bf16.msra.mxu0 0
  %4987 = vmatprep.subr.bf16.mxu0 0
  %4988 = vmatpush1.bf16.msra.mxu0 0
  %4989 = vmatprep.subr.bf16.mxu0 0
  %4990 = vmatpush1.bf16.msra.mxu0 0
  %4991 = vmatprep.subr.bf16.mxu0 0
  %4992 = vmatpush1.bf16.msra.mxu0 0
  %4993 = vmatprep.subr.bf16.mxu0 0
  %4994 = vmatpush1.bf16.msra.mxu0 0
  %4995 = vmatprep.subr.bf16.mxu0 0
  %4996 = vmatpush1.bf16.msra.mxu0 0
  %4997 = vmatprep.subr.bf16.mxu0 0
  %4998 = vmatpush1.bf16.msra.mxu0 0
  %4999 = vmatprep.subr.bf16.mxu0 0
  %5000 = vmatpush1.bf16.msra.mxu0 %v150
  %5001 = vmatprep.subr.bf16.mxu0 0
  %5002 = vmatpush2.bf16.msra.mxu0 0
  %5003 = vmatprep.subr.bf16.mxu0 0
  %5004 = vmatpush2.bf16.msra.mxu0 0
  %5005 = vmatprep.subr.bf16.mxu0 0
  %5006 = vmatpush2.bf16.msra.mxu0 0
  %5007 = vmatprep.subr.bf16.mxu0 0
  %5008 = vmatpush2.bf16.msra.mxu0 0
  %5009 = vmatprep.subr.bf16.mxu0 0
  %5010 = vmatpush2.bf16.msra.mxu0 0
  %5011 = vmatprep.subr.bf16.mxu0 0
  %5012 = vmatpush2.bf16.msra.mxu0 0
  %5013 = vmatprep.subr.bf16.mxu0 0
  %5014 = vmatpush2.bf16.msra.mxu0 0
  %5015 = vmatprep.subr.bf16.mxu0 0
  %5016 = vmatpush2.bf16.msra.mxu0 0
  %5017 = vmatprep.mubr.bf16.mxu0 0
  %5018 = vmatmul.mubr.bf16.gmra.mxu0 %v4974
  %v5019 = vpop.f32.mrf.mxu0
  %v5020 = vadd.f32 0.0, %v5019
  %v5021 = vpop.f32.mrf.mxu0
  %v5022 = vpop.f32.mrf.mxu0
  %v5023 = vadd.f32 0.0, %v5022
  %v5024 = vpop.f32.mrf.mxu0
  %5025 = vmatprep.mubr.bf16.mxu0 0
  %5026 = vmatmul.mubr.bf16.gmra.mxu0 %v4977
  %v5027 = vpop.f32.mrf.mxu0
  %v5028 = vadd.f32 0.0, %v5027
  %v5029 = vpop.f32.mrf.mxu0
  %v5030 = vpop.f32.mrf.mxu0
  %v5031 = vadd.f32 0.0, %v5030
  %v5032 = vpop.f32.mrf.mxu0
  %5033 = vmatprep.mubr.bf16.mxu0 0
  %5034 = vmatmul.mubr.bf16.gmra.mxu0 %v4980
  %v5035 = vpop.f32.mrf.mxu0
  %v5036 = vadd.f32 0.0, %v5035
  %v5037 = vpop.f32.mrf.mxu0
  %v5038 = vpop.f32.mrf.mxu0
  %v5039 = vadd.f32 0.0, %v5038
  %v5040 = vpop.f32.mrf.mxu0
  %5041 = vmatprep.mubr.bf16.mxu0 0
  %5042 = vmatmul.mubr.bf16.gmra.mxu0 %v4983
  %v5043 = vpop.f32.mrf.mxu0
  %v5044 = vadd.f32 0.0, %v5043
  %v5045 = vpop.f32.mrf.mxu0
  %v5046 = vpop.f32.mrf.mxu0
  %v5047 = vpop.f32.mrf.mxu0
  %5048 = vdwg.mxu0
  %v5049 = vmul.f32 %v5020, %v241
  %v5050 = vmul.f32 %v5023, %v241
  %v5051 = vmul.f32 %v5028, %v241
  %v5052 = vmul.f32 %v5031, %v241
  %v5053 = vmul.f32 %v5036, %v241
  %v5054 = vmul.f32 %v5039, %v241
  %v5055 = vmul.f32 %v5044, %v241
  %v5056 = vadd.f32 %v5049, %v252
  %v5057 = vadd.f32 %v5050, %v252
  %v5058 = vadd.f32 %v5051, %v252
  %v5059 = vadd.f32 %v5052, %v252
  %v5060 = vadd.f32 %v5053, %v252
  %v5061 = vadd.f32 %v5054, %v252
  %v5062 = vadd.f32 %v5055, %v252
  %vm5063 = vcmp.ge.f32.partialorder %v5056, 0.0
  %vm5064 = vcmp.ge.f32.partialorder %v5057, 0.0
  %vm5065 = vcmp.ge.f32.partialorder %v5058, 0.0
  %vm5066 = vcmp.ge.f32.partialorder %v5059, 0.0
  %vm5067 = vcmp.ge.f32.partialorder %v5060, 0.0
  %vm5068 = vcmp.ge.f32.partialorder %v5061, 0.0
  %vm5069 = vcmp.ge.f32.partialorder %v5062, 0.0
  %v5070 = vmul.f32 %v5056, 0.2
  %v5071 = vmul.f32 %v5057, 0.2
  %v5072 = vmul.f32 %v5058, 0.2
  %v5073 = vmul.f32 %v5059, 0.2
  %v5074 = vmul.f32 %v5060, 0.2
  %v5075 = vmul.f32 %v5061, 0.2
  %v5076 = vmul.f32 %v5062, 0.2
  %v5077 = vsel %vm5063, %v5056, %v5070
  %v5078 = vsel %vm5064, %v5057, %v5071
  %v5079 = vsel %vm5065, %v5058, %v5072
  %v5080 = vsel %vm5066, %v5059, %v5073
  %v5081 = vsel %vm5067, %v5060, %v5074
  %v5082 = vsel %vm5068, %v5061, %v5075
  %v5083 = vsel %vm5069, %v5062, %v5076
  %v5084 = vpack.c.bf16 %v5078, %v5077
  %v5085 = vpack.c.bf16 %v5080, %v5079
  %v5086 = vpack.c.bf16 %v5082, %v5081
  %v5087 = vpack.c.bf16 %v5083, %v5083
  %s5088 = scalar_lea.vmem %s1, 176
  %v5089 = vld [vmem:[%s5088] sm:$0xf]
  %v5090 = vld [vmem:[%s5088 + $0x4] sm:$0xf]
  %v5093 = vunpack.c.l.b16 %v5089
  %v5094 = vunpack.c.l.b16 %v5090
  %v5095 = vpack.c.b16 %v5094, %v5093
  %v5098 = vsel %vm30, %v5084, 0
  %v5101 = vsel %vm30, %v5085, 0
  %v5104 = vsel %vm30, %v5086, 0
  %v5107 = vsel %vm30, %v5087, 0
  %5109 = vmatprep.subr.bf16.mxu0 0
  %5110 = vmatpush1.bf16.msra.mxu0 0
  %5111 = vmatprep.subr.bf16.mxu0 0
  %5112 = vmatpush1.bf16.msra.mxu0 0
  %5113 = vmatprep.subr.bf16.mxu0 0
  %5114 = vmatpush1.bf16.msra.mxu0 0
  %5115 = vmatprep.subr.bf16.mxu0 0
  %5116 = vmatpush1.bf16.msra.mxu0 0
  %5117 = vmatprep.subr.bf16.mxu0 0
  %5118 = vmatpush1.bf16.msra.mxu0 0
  %5119 = vmatprep.subr.bf16.mxu0 0
  %5120 = vmatpush1.bf16.msra.mxu0 0
  %5121 = vmatprep.subr.bf16.mxu0 0
  %5122 = vmatpush1.bf16.msra.mxu0 0
  %5123 = vmatprep.subr.bf16.mxu0 0
  %5124 = vmatpush1.bf16.msra.mxu0 %v5095
  %5125 = vmatprep.subr.bf16.mxu0 0
  %5126 = vmatpush2.bf16.msra.mxu0 0
  %5127 = vmatprep.subr.bf16.mxu0 0
  %5128 = vmatpush2.bf16.msra.mxu0 0
  %5129 = vmatprep.subr.bf16.mxu0 0
  %5130 = vmatpush2.bf16.msra.mxu0 0
  %5131 = vmatprep.subr.bf16.mxu0 0
  %5132 = vmatpush2.bf16.msra.mxu0 0
  %5133 = vmatprep.subr.bf16.mxu0 0
  %5134 = vmatpush2.bf16.msra.mxu0 0
  %5135 = vmatprep.subr.bf16.mxu0 0
  %5136 = vmatpush2.bf16.msra.mxu0 0
  %5137 = vmatprep.subr.bf16.mxu0 0
  %5138 = vmatpush2.bf16.msra.mxu0 0
  %5139 = vmatprep.subr.bf16.mxu0 0
  %5140 = vmatpush2.bf16.msra.mxu0 0
  %5141 = vmatprep.mubr.bf16.mxu0 0
  %5142 = vmatmul.mubr.bf16.gmra.mxu0 %v5098
  %v5143 = vpop.f32.mrf.mxu0
  %v5144 = vadd.f32 0.0, %v5143
  %v5145 = vpop.f32.mrf.mxu0
  %v5146 = vpop.f32.mrf.mxu0
  %v5147 = vadd.f32 0.0, %v5146
  %v5148 = vpop.f32.mrf.mxu0
  %5149 = vmatprep.mubr.bf16.mxu0 0
  %5150 = vmatmul.mubr.bf16.gmra.mxu0 %v5101
  %v5151 = vpop.f32.mrf.mxu0
  %v5152 = vadd.f32 0.0, %v5151
  %v5153 = vpop.f32.mrf.mxu0
  %v5154 = vpop.f32.mrf.mxu0
  %v5155 = vadd.f32 0.0, %v5154
  %v5156 = vpop.f32.mrf.mxu0
  %5157 = vmatprep.mubr.bf16.mxu0 0
  %5158 = vmatmul.mubr.bf16.gmra.mxu0 %v5104
  %v5159 = vpop.f32.mrf.mxu0
  %v5160 = vadd.f32 0.0, %v5159
  %v5161 = vpop.f32.mrf.mxu0
  %v5162 = vpop.f32.mrf.mxu0
  %v5163 = vadd.f32 0.0, %v5162
  %v5164 = vpop.f32.mrf.mxu0
  %5165 = vmatprep.mubr.bf16.mxu0 0
  %5166 = vmatmul.mubr.bf16.gmra.mxu0 %v5107
  %v5167 = vpop.f32.mrf.mxu0
  %v5168 = vadd.f32 0.0, %v5167
  %v5169 = vpop.f32.mrf.mxu0
  %v5170 = vpop.f32.mrf.mxu0
  %v5171 = vpop.f32.mrf.mxu0
  %5172 = vdwg.mxu0
  %v5173 = vadd.f32 %v4954, %v5144
  %v5174 = vadd.f32 %v4955, %v5147
  %v5175 = vadd.f32 %v4956, %v5152
  %v5176 = vadd.f32 %v4957, %v5155
  %v5177 = vadd.f32 %v4958, %v5160
  %v5178 = vadd.f32 %v4959, %v5163
  %v5179 = vadd.f32 %v4960, %v5168
  %s5180 = scalar_lea.vmem %s0, 1288
  %v5181 = vld [vmem:[%s5180] sm:$0xff]
  %v5182 = vld [vmem:[%s5180 + $0x8] sm:$0xff]
  %v5183 = vld [vmem:[%s5180 + $0x10] sm:$0xff]
  %v5184 = vld [vmem:[%s5180 + $0x18] sm:$0xff]
  %v5185 = vld [vmem:[%s5180 + $0x20] sm:$0xff]
  %v5186 = vld [vmem:[%s5180 + $0x28] sm:$0xff]
  %v5187 = vld [vmem:[%s5180 + $0x30] sm:$0x3]
  %v5188 = vpack.c.bf16 %v5182, %v5181
  %v5189 = vpack.c.bf16 %v5184, %v5183
  %v5190 = vpack.c.bf16 %v5186, %v5185
  %v5191 = vpack.c.bf16 %v5187, %v5187
  %v5193 = vsel %vm30, %v5188, 0
  %v5196 = vsel %vm30, %v5189, 0
  %v5199 = vsel %vm30, %v5190, 0
  %v5202 = vsel %vm30, %v5191, 0
  %5204 = vmatprep.subr.bf16.mxu0 0
  %5205 = vmatpush1.bf16.msra.mxu0 0
  %5206 = vmatprep.subr.bf16.mxu0 0
  %5207 = vmatpush1.bf16.msra.mxu0 0
  %5208 = vmatprep.subr.bf16.mxu0 0
  %5209 = vmatpush1.bf16.msra.mxu0 0
  %5210 = vmatprep.subr.bf16.mxu0 0
  %5211 = vmatpush1.bf16.msra.mxu0 0
  %5212 = vmatprep.subr.bf16.mxu0 0
  %5213 = vmatpush1.bf16.msra.mxu0 0
  %5214 = vmatprep.subr.bf16.mxu0 0
  %5215 = vmatpush1.bf16.msra.mxu0 0
  %5216 = vmatprep.subr.bf16.mxu0 0
  %5217 = vmatpush1.bf16.msra.mxu0 0
  %5218 = vmatprep.subr.bf16.mxu0 0
  %5219 = vmatpush1.bf16.msra.mxu0 %v150
  %5220 = vmatprep.subr.bf16.mxu0 0
  %5221 = vmatpush2.bf16.msra.mxu0 0
  %5222 = vmatprep.subr.bf16.mxu0 0
  %5223 = vmatpush2.bf16.msra.mxu0 0
  %5224 = vmatprep.subr.bf16.mxu0 0
  %5225 = vmatpush2.bf16.msra.mxu0 0
  %5226 = vmatprep.subr.bf16.mxu0 0
  %5227 = vmatpush2.bf16.msra.mxu0 0
  %5228 = vmatprep.subr.bf16.mxu0 0
  %5229 = vmatpush2.bf16.msra.mxu0 0
  %5230 = vmatprep.subr.bf16.mxu0 0
  %5231 = vmatpush2.bf16.msra.mxu0 0
  %5232 = vmatprep.subr.bf16.mxu0 0
  %5233 = vmatpush2.bf16.msra.mxu0 0
  %5234 = vmatprep.subr.bf16.mxu0 0
  %5235 = vmatpush2.bf16.msra.mxu0 0
  %5236 = vmatprep.mubr.bf16.mxu0 0
  %5237 = vmatmul.mubr.bf16.gmra.mxu0 %v5193
  %v5238 = vpop.f32.mrf.mxu0
  %v5239 = vadd.f32 0.0, %v5238
  %v5240 = vpop.f32.mrf.mxu0
  %v5241 = vpop.f32.mrf.mxu0
  %v5242 = vadd.f32 0.0, %v5241
  %v5243 = vpop.f32.mrf.mxu0
  %5244 = vmatprep.mubr.bf16.mxu0 0
  %5245 = vmatmul.mubr.bf16.gmra.mxu0 %v5196
  %v5246 = vpop.f32.mrf.mxu0
  %v5247 = vadd.f32 0.0, %v5246
  %v5248 = vpop.f32.mrf.mxu0
  %v5249 = vpop.f32.mrf.mxu0
  %v5250 = vadd.f32 0.0, %v5249
  %v5251 = vpop.f32.mrf.mxu0
  %5252 = vmatprep.mubr.bf16.mxu0 0
  %5253 = vmatmul.mubr.bf16.gmra.mxu0 %v5199
  %v5254 = vpop.f32.mrf.mxu0
  %v5255 = vadd.f32 0.0, %v5254
  %v5256 = vpop.f32.mrf.mxu0
  %v5257 = vpop.f32.mrf.mxu0
  %v5258 = vadd.f32 0.0, %v5257
  %v5259 = vpop.f32.mrf.mxu0
  %5260 = vmatprep.mubr.bf16.mxu0 0
  %5261 = vmatmul.mubr.bf16.gmra.mxu0 %v5202
  %v5262 = vpop.f32.mrf.mxu0
  %v5263 = vadd.f32 0.0, %v5262
  %v5264 = vpop.f32.mrf.mxu0
  %v5265 = vpop.f32.mrf.mxu0
  %v5266 = vpop.f32.mrf.mxu0
  %5267 = vdwg.mxu0
  %v5268 = vmul.f32 %v5239, %v241
  %v5269 = vmul.f32 %v5242, %v241
  %v5270 = vmul.f32 %v5247, %v241
  %v5271 = vmul.f32 %v5250, %v241
  %v5272 = vmul.f32 %v5255, %v241
  %v5273 = vmul.f32 %v5258, %v241
  %v5274 = vmul.f32 %v5263, %v241
  %v5275 = vadd.f32 %v5268, %v252
  %v5276 = vadd.f32 %v5269, %v252
  %v5277 = vadd.f32 %v5270, %v252
  %v5278 = vadd.f32 %v5271, %v252
  %v5279 = vadd.f32 %v5272, %v252
  %v5280 = vadd.f32 %v5273, %v252
  %v5281 = vadd.f32 %v5274, %v252
  %vm5282 = vcmp.ge.f32.partialorder %v5275, 0.0
  %vm5283 = vcmp.ge.f32.partialorder %v5276, 0.0
  %vm5284 = vcmp.ge.f32.partialorder %v5277, 0.0
  %vm5285 = vcmp.ge.f32.partialorder %v5278, 0.0
  %vm5286 = vcmp.ge.f32.partialorder %v5279, 0.0
  %vm5287 = vcmp.ge.f32.partialorder %v5280, 0.0
  %vm5288 = vcmp.ge.f32.partialorder %v5281, 0.0
  %v5289 = vmul.f32 %v5275, 0.2
  %v5290 = vmul.f32 %v5276, 0.2
  %v5291 = vmul.f32 %v5277, 0.2
  %v5292 = vmul.f32 %v5278, 0.2
  %v5293 = vmul.f32 %v5279, 0.2
  %v5294 = vmul.f32 %v5280, 0.2
  %v5295 = vmul.f32 %v5281, 0.2
  %v5296 = vsel %vm5282, %v5275, %v5289
  %v5297 = vsel %vm5283, %v5276, %v5290
  %v5298 = vsel %vm5284, %v5277, %v5291
  %v5299 = vsel %vm5285, %v5278, %v5292
  %v5300 = vsel %vm5286, %v5279, %v5293
  %v5301 = vsel %vm5287, %v5280, %v5294
  %v5302 = vsel %vm5288, %v5281, %v5295
  %v5303 = vpack.c.bf16 %v5297, %v5296
  %v5304 = vpack.c.bf16 %v5299, %v5298
  %v5305 = vpack.c.bf16 %v5301, %v5300
  %v5306 = vpack.c.bf16 %v5302, %v5302
  %s5307 = scalar_lea.vmem %s1, 184
  %v5308 = vld [vmem:[%s5307] sm:$0xf]
  %v5309 = vld [vmem:[%s5307 + $0x4] sm:$0xf]
  %v5312 = vunpack.c.l.b16 %v5308
  %v5313 = vunpack.c.l.b16 %v5309
  %v5314 = vpack.c.b16 %v5313, %v5312
  %v5317 = vsel %vm30, %v5303, 0
  %v5320 = vsel %vm30, %v5304, 0
  %v5323 = vsel %vm30, %v5305, 0
  %v5326 = vsel %vm30, %v5306, 0
  %5328 = vmatprep.subr.bf16.mxu0 0
  %5329 = vmatpush1.bf16.msra.mxu0 0
  %5330 = vmatprep.subr.bf16.mxu0 0
  %5331 = vmatpush1.bf16.msra.mxu0 0
  %5332 = vmatprep.subr.bf16.mxu0 0
  %5333 = vmatpush1.bf16.msra.mxu0 0
  %5334 = vmatprep.subr.bf16.mxu0 0
  %5335 = vmatpush1.bf16.msra.mxu0 0
  %5336 = vmatprep.subr.bf16.mxu0 0
  %5337 = vmatpush1.bf16.msra.mxu0 0
  %5338 = vmatprep.subr.bf16.mxu0 0
  %5339 = vmatpush1.bf16.msra.mxu0 0
  %5340 = vmatprep.subr.bf16.mxu0 0
  %5341 = vmatpush1.bf16.msra.mxu0 0
  %5342 = vmatprep.subr.bf16.mxu0 0
  %5343 = vmatpush1.bf16.msra.mxu0 %v5314
  %5344 = vmatprep.subr.bf16.mxu0 0
  %5345 = vmatpush2.bf16.msra.mxu0 0
  %5346 = vmatprep.subr.bf16.mxu0 0
  %5347 = vmatpush2.bf16.msra.mxu0 0
  %5348 = vmatprep.subr.bf16.mxu0 0
  %5349 = vmatpush2.bf16.msra.mxu0 0
  %5350 = vmatprep.subr.bf16.mxu0 0
  %5351 = vmatpush2.bf16.msra.mxu0 0
  %5352 = vmatprep.subr.bf16.mxu0 0
  %5353 = vmatpush2.bf16.msra.mxu0 0
  %5354 = vmatprep.subr.bf16.mxu0 0
  %5355 = vmatpush2.bf16.msra.mxu0 0
  %5356 = vmatprep.subr.bf16.mxu0 0
  %5357 = vmatpush2.bf16.msra.mxu0 0
  %5358 = vmatprep.subr.bf16.mxu0 0
  %5359 = vmatpush2.bf16.msra.mxu0 0
  %5360 = vmatprep.mubr.bf16.mxu0 0
  %5361 = vmatmul.mubr.bf16.gmra.mxu0 %v5317
  %v5362 = vpop.f32.mrf.mxu0
  %v5363 = vadd.f32 0.0, %v5362
  %v5364 = vpop.f32.mrf.mxu0
  %v5365 = vpop.f32.mrf.mxu0
  %v5366 = vadd.f32 0.0, %v5365
  %v5367 = vpop.f32.mrf.mxu0
  %5368 = vmatprep.mubr.bf16.mxu0 0
  %5369 = vmatmul.mubr.bf16.gmra.mxu0 %v5320
  %v5370 = vpop.f32.mrf.mxu0
  %v5371 = vadd.f32 0.0, %v5370
  %v5372 = vpop.f32.mrf.mxu0
  %v5373 = vpop.f32.mrf.mxu0
  %v5374 = vadd.f32 0.0, %v5373
  %v5375 = vpop.f32.mrf.mxu0
  %5376 = vmatprep.mubr.bf16.mxu0 0
  %5377 = vmatmul.mubr.bf16.gmra.mxu0 %v5323
  %v5378 = vpop.f32.mrf.mxu0
  %v5379 = vadd.f32 0.0, %v5378
  %v5380 = vpop.f32.mrf.mxu0
  %v5381 = vpop.f32.mrf.mxu0
  %v5382 = vadd.f32 0.0, %v5381
  %v5383 = vpop.f32.mrf.mxu0
  %5384 = vmatprep.mubr.bf16.mxu0 0
  %5385 = vmatmul.mubr.bf16.gmra.mxu0 %v5326
  %v5386 = vpop.f32.mrf.mxu0
  %v5387 = vadd.f32 0.0, %v5386
  %v5388 = vpop.f32.mrf.mxu0
  %v5389 = vpop.f32.mrf.mxu0
  %v5390 = vpop.f32.mrf.mxu0
  %5391 = vdwg.mxu0
  %v5392 = vadd.f32 %v5173, %v5363
  %v5393 = vadd.f32 %v5174, %v5366
  %v5394 = vadd.f32 %v5175, %v5371
  %v5395 = vadd.f32 %v5176, %v5374
  %v5396 = vadd.f32 %v5177, %v5379
  %v5397 = vadd.f32 %v5178, %v5382
  %v5398 = vadd.f32 %v5179, %v5387
  %s5399 = scalar_lea.vmem %s0, 1344
  %v5400 = vld [vmem:[%s5399] sm:$0xff]
  %v5401 = vld [vmem:[%s5399 + $0x8] sm:$0xff]
  %v5402 = vld [vmem:[%s5399 + $0x10] sm:$0xff]
  %v5403 = vld [vmem:[%s5399 + $0x18] sm:$0xff]
  %v5404 = vld [vmem:[%s5399 + $0x20] sm:$0xff]
  %v5405 = vld [vmem:[%s5399 + $0x28] sm:$0xff]
  %v5406 = vld [vmem:[%s5399 + $0x30] sm:$0x3]
  %v5407 = vpack.c.bf16 %v5401, %v5400
  %v5408 = vpack.c.bf16 %v5403, %v5402
  %v5409 = vpack.c.bf16 %v5405, %v5404
  %v5410 = vpack.c.bf16 %v5406, %v5406
  %v5412 = vsel %vm30, %v5407, 0
  %v5415 = vsel %vm30, %v5408, 0
  %v5418 = vsel %vm30, %v5409, 0
  %v5421 = vsel %vm30, %v5410, 0
  %5423 = vmatprep.subr.bf16.mxu0 0
  %5424 = vmatpush1.bf16.msra.mxu0 0
  %5425 = vmatprep.subr.bf16.mxu0 0
  %5426 = vmatpush1.bf16.msra.mxu0 0
  %5427 = vmatprep.subr.bf16.mxu0 0
  %5428 = vmatpush1.bf16.msra.mxu0 0
  %5429 = vmatprep.subr.bf16.mxu0 0
  %5430 = vmatpush1.bf16.msra.mxu0 0
  %5431 = vmatprep.subr.bf16.mxu0 0
  %5432 = vmatpush1.bf16.msra.mxu0 0
  %5433 = vmatprep.subr.bf16.mxu0 0
  %5434 = vmatpush1.bf16.msra.mxu0 0
  %5435 = vmatprep.subr.bf16.mxu0 0
  %5436 = vmatpush1.bf16.msra.mxu0 0
  %5437 = vmatprep.subr.bf16.mxu0 0
  %5438 = vmatpush1.bf16.msra.mxu0 %v150
  %5439 = vmatprep.subr.bf16.mxu0 0
  %5440 = vmatpush2.bf16.msra.mxu0 0
  %5441 = vmatprep.subr.bf16.mxu0 0
  %5442 = vmatpush2.bf16.msra.mxu0 0
  %5443 = vmatprep.subr.bf16.mxu0 0
  %5444 = vmatpush2.bf16.msra.mxu0 0
  %5445 = vmatprep.subr.bf16.mxu0 0
  %5446 = vmatpush2.bf16.msra.mxu0 0
  %5447 = vmatprep.subr.bf16.mxu0 0
  %5448 = vmatpush2.bf16.msra.mxu0 0
  %5449 = vmatprep.subr.bf16.mxu0 0
  %5450 = vmatpush2.bf16.msra.mxu0 0
  %5451 = vmatprep.subr.bf16.mxu0 0
  %5452 = vmatpush2.bf16.msra.mxu0 0
  %5453 = vmatprep.subr.bf16.mxu0 0
  %5454 = vmatpush2.bf16.msra.mxu0 0
  %5455 = vmatprep.mubr.bf16.mxu0 0
  %5456 = vmatmul.mubr.bf16.gmra.mxu0 %v5412
  %v5457 = vpop.f32.mrf.mxu0
  %v5458 = vadd.f32 0.0, %v5457
  %v5459 = vpop.f32.mrf.mxu0
  %v5460 = vpop.f32.mrf.mxu0
  %v5461 = vadd.f32 0.0, %v5460
  %v5462 = vpop.f32.mrf.mxu0
  %5463 = vmatprep.mubr.bf16.mxu0 0
  %5464 = vmatmul.mubr.bf16.gmra.mxu0 %v5415
  %v5465 = vpop.f32.mrf.mxu0
  %v5466 = vadd.f32 0.0, %v5465
  %v5467 = vpop.f32.mrf.mxu0
  %v5468 = vpop.f32.mrf.mxu0
  %v5469 = vadd.f32 0.0, %v5468
  %v5470 = vpop.f32.mrf.mxu0
  %5471 = vmatprep.mubr.bf16.mxu0 0
  %5472 = vmatmul.mubr.bf16.gmra.mxu0 %v5418
  %v5473 = vpop.f32.mrf.mxu0
  %v5474 = vadd.f32 0.0, %v5473
  %v5475 = vpop.f32.mrf.mxu0
  %v5476 = vpop.f32.mrf.mxu0
  %v5477 = vadd.f32 0.0, %v5476
  %v5478 = vpop.f32.mrf.mxu0
  %5479 = vmatprep.mubr.bf16.mxu0 0
  %5480 = vmatmul.mubr.bf16.gmra.mxu0 %v5421
  %v5481 = vpop.f32.mrf.mxu0
  %v5482 = vadd.f32 0.0, %v5481
  %v5483 = vpop.f32.mrf.mxu0
  %v5484 = vpop.f32.mrf.mxu0
  %v5485 = vpop.f32.mrf.mxu0
  %5486 = vdwg.mxu0
  %v5487 = vmul.f32 %v5458, %v241
  %v5488 = vmul.f32 %v5461, %v241
  %v5489 = vmul.f32 %v5466, %v241
  %v5490 = vmul.f32 %v5469, %v241
  %v5491 = vmul.f32 %v5474, %v241
  %v5492 = vmul.f32 %v5477, %v241
  %v5493 = vmul.f32 %v5482, %v241
  %v5494 = vadd.f32 %v5487, %v252
  %v5495 = vadd.f32 %v5488, %v252
  %v5496 = vadd.f32 %v5489, %v252
  %v5497 = vadd.f32 %v5490, %v252
  %v5498 = vadd.f32 %v5491, %v252
  %v5499 = vadd.f32 %v5492, %v252
  %v5500 = vadd.f32 %v5493, %v252
  %vm5501 = vcmp.ge.f32.partialorder %v5494, 0.0
  %vm5502 = vcmp.ge.f32.partialorder %v5495, 0.0
  %vm5503 = vcmp.ge.f32.partialorder %v5496, 0.0
  %vm5504 = vcmp.ge.f32.partialorder %v5497, 0.0
  %vm5505 = vcmp.ge.f32.partialorder %v5498, 0.0
  %vm5506 = vcmp.ge.f32.partialorder %v5499, 0.0
  %vm5507 = vcmp.ge.f32.partialorder %v5500, 0.0
  %v5508 = vmul.f32 %v5494, 0.2
  %v5509 = vmul.f32 %v5495, 0.2
  %v5510 = vmul.f32 %v5496, 0.2
  %v5511 = vmul.f32 %v5497, 0.2
  %v5512 = vmul.f32 %v5498, 0.2
  %v5513 = vmul.f32 %v5499, 0.2
  %v5514 = vmul.f32 %v5500, 0.2
  %v5515 = vsel %vm5501, %v5494, %v5508
  %v5516 = vsel %vm5502, %v5495, %v5509
  %v5517 = vsel %vm5503, %v5496, %v5510
  %v5518 = vsel %vm5504, %v5497, %v5511
  %v5519 = vsel %vm5505, %v5498, %v5512
  %v5520 = vsel %vm5506, %v5499, %v5513
  %v5521 = vsel %vm5507, %v5500, %v5514
  %v5522 = vpack.c.bf16 %v5516, %v5515
  %v5523 = vpack.c.bf16 %v5518, %v5517
  %v5524 = vpack.c.bf16 %v5520, %v5519
  %v5525 = vpack.c.bf16 %v5521, %v5521
  %s5526 = scalar_lea.vmem %s1, 192
  %v5527 = vld [vmem:[%s5526] sm:$0xf]
  %v5528 = vld [vmem:[%s5526 + $0x4] sm:$0xf]
  %v5531 = vunpack.c.l.b16 %v5527
  %v5532 = vunpack.c.l.b16 %v5528
  %v5533 = vpack.c.b16 %v5532, %v5531
  %v5536 = vsel %vm30, %v5522, 0
  %v5539 = vsel %vm30, %v5523, 0
  %v5542 = vsel %vm30, %v5524, 0
  %v5545 = vsel %vm30, %v5525, 0
  %5547 = vmatprep.subr.bf16.mxu0 0
  %5548 = vmatpush1.bf16.msra.mxu0 0
  %5549 = vmatprep.subr.bf16.mxu0 0
  %5550 = vmatpush1.bf16.msra.mxu0 0
  %5551 = vmatprep.subr.bf16.mxu0 0
  %5552 = vmatpush1.bf16.msra.mxu0 0
  %5553 = vmatprep.subr.bf16.mxu0 0
  %5554 = vmatpush1.bf16.msra.mxu0 0
  %5555 = vmatprep.subr.bf16.mxu0 0
  %5556 = vmatpush1.bf16.msra.mxu0 0
  %5557 = vmatprep.subr.bf16.mxu0 0
  %5558 = vmatpush1.bf16.msra.mxu0 0
  %5559 = vmatprep.subr.bf16.mxu0 0
  %5560 = vmatpush1.bf16.msra.mxu0 0
  %5561 = vmatprep.subr.bf16.mxu0 0
  %5562 = vmatpush1.bf16.msra.mxu0 %v5533
  %5563 = vmatprep.subr.bf16.mxu0 0
  %5564 = vmatpush2.bf16.msra.mxu0 0
  %5565 = vmatprep.subr.bf16.mxu0 0
  %5566 = vmatpush2.bf16.msra.mxu0 0
  %5567 = vmatprep.subr.bf16.mxu0 0
  %5568 = vmatpush2.bf16.msra.mxu0 0
  %5569 = vmatprep.subr.bf16.mxu0 0
  %5570 = vmatpush2.bf16.msra.mxu0 0
  %5571 = vmatprep.subr.bf16.mxu0 0
  %5572 = vmatpush2.bf16.msra.mxu0 0
  %5573 = vmatprep.subr.bf16.mxu0 0
  %5574 = vmatpush2.bf16.msra.mxu0 0
  %5575 = vmatprep.subr.bf16.mxu0 0
  %5576 = vmatpush2.bf16.msra.mxu0 0
  %5577 = vmatprep.subr.bf16.mxu0 0
  %5578 = vmatpush2.bf16.msra.mxu0 0
  %5579 = vmatprep.mubr.bf16.mxu0 0
  %5580 = vmatmul.mubr.bf16.gmra.mxu0 %v5536
  %v5581 = vpop.f32.mrf.mxu0
  %v5582 = vadd.f32 0.0, %v5581
  %v5583 = vpop.f32.mrf.mxu0
  %v5584 = vpop.f32.mrf.mxu0
  %v5585 = vadd.f32 0.0, %v5584
  %v5586 = vpop.f32.mrf.mxu0
  %5587 = vmatprep.mubr.bf16.mxu0 0
  %5588 = vmatmul.mubr.bf16.gmra.mxu0 %v5539
  %v5589 = vpop.f32.mrf.mxu0
  %v5590 = vadd.f32 0.0, %v5589
  %v5591 = vpop.f32.mrf.mxu0
  %v5592 = vpop.f32.mrf.mxu0
  %v5593 = vadd.f32 0.0, %v5592
  %v5594 = vpop.f32.mrf.mxu0
  %5595 = vmatprep.mubr.bf16.mxu0 0
  %5596 = vmatmul.mubr.bf16.gmra.mxu0 %v5542
  %v5597 = vpop.f32.mrf.mxu0
  %v5598 = vadd.f32 0.0, %v5597
  %v5599 = vpop.f32.mrf.mxu0
  %v5600 = vpop.f32.mrf.mxu0
  %v5601 = vadd.f32 0.0, %v5600
  %v5602 = vpop.f32.mrf.mxu0
  %5603 = vmatprep.mubr.bf16.mxu0 0
  %5604 = vmatmul.mubr.bf16.gmra.mxu0 %v5545
  %v5605 = vpop.f32.mrf.mxu0
  %v5606 = vadd.f32 0.0, %v5605
  %v5607 = vpop.f32.mrf.mxu0
  %v5608 = vpop.f32.mrf.mxu0
  %v5609 = vpop.f32.mrf.mxu0
  %5610 = vdwg.mxu0
  %v5611 = vadd.f32 %v5392, %v5582
  %v5612 = vadd.f32 %v5393, %v5585
  %v5613 = vadd.f32 %v5394, %v5590
  %v5614 = vadd.f32 %v5395, %v5593
  %v5615 = vadd.f32 %v5396, %v5598
  %v5616 = vadd.f32 %v5397, %v5601
  %v5617 = vadd.f32 %v5398, %v5606
  %vm5618 = vcmask 261120
  %v5619 = vsel %vm5618, %v5611, 0.0
  %v5620 = vsel %vm5618, %v5612, 0.0
  %v5621 = vadd.f32 %v5619, %v5620
  %v5622 = vsel %vm5618, %v5613, 0.0
  %v5623 = vadd.f32 %v5621, %v5622
  %v5624 = vsel %vm5618, %v5614, 0.0
  %v5625 = vadd.f32 %v5623, %v5624
  %v5626 = vsel %vm5618, %v5615, 0.0
  %v5627 = vadd.f32 %v5625, %v5626
  %v5628 = vsel %vm5618, %v5616, 0.0
  %v5629 = vadd.f32 %v5627, %v5628
  %vm5630 = vcmask 254976
  %v5631 = vsel %vm5630, %v5617, 0.0
  %v5632 = vadd.f32 %v5629, %v5631
  %v5633 = vrot.slane %v5632, 4
  %v5634 = vadd.f32 %v5632, %v5633
  %v5635 = vrot.slane %v5634, 2
  %v5636 = vadd.f32 %v5634, %v5635
  %v5637 = vrot.slane %v5636, 1
  %v5638 = vadd.f32 %v5636, %v5637
  %v5639 = vmul.f32 %v5638, 0.02
  %v5640 = vmul.f32 %v5611, %v5611
  %v5641 = vmul.f32 %v5612, %v5612
  %v5642 = vmul.f32 %v5613, %v5613
  %v5643 = vmul.f32 %v5614, %v5614
  %v5644 = vmul.f32 %v5615, %v5615
  %v5645 = vmul.f32 %v5616, %v5616
  %v5646 = vmul.f32 %v5617, %v5617
  %v5647 = vsel %vm5618, %v5640, 0.0
  %v5648 = vsel %vm5618, %v5641, 0.0
  %v5649 = vadd.f32 %v5647, %v5648
  %v5650 = vsel %vm5618, %v5642, 0.0
  %v5651 = vadd.f32 %v5649, %v5650
  %v5652 = vsel %vm5618, %v5643, 0.0
  %v5653 = vadd.f32 %v5651, %v5652
  %v5654 = vsel %vm5618, %v5644, 0.0
  %v5655 = vadd.f32 %v5653, %v5654
  %v5656 = vsel %vm5618, %v5645, 0.0
  %v5657 = vadd.f32 %v5655, %v5656
  %v5658 = vsel %vm5630, %v5646, 0.0
  %v5659 = vadd.f32 %v5657, %v5658
  %v5660 = vrot.slane %v5659, 4
  %v5661 = vadd.f32 %v5659, %v5660
  %v5662 = vrot.slane %v5661, 2
  %v5663 = vadd.f32 %v5661, %v5662
  %v5664 = vrot.slane %v5663, 1
  %v5665 = vadd.f32 %v5663, %v5664
  %v5666 = vmul.f32 %v5665, 0.02
  %v5667 = vmul.f32 %v5639, %v5639
  %v5668 = vsub.f32 %v5666, %v5667
  %v5669 = vmax.f32 %v5668, 0.0
  %v5670 = vadd.f32 %v5669, 1e-05
  %v5671 = vrsqrt.pop %v5670
  %v5672 = vmul.f32 %v24, %v5671
  %v5673 = vmul.f32 %v5639, %v5672
  %v5674 = vsub.f32 %v25, %v5673
  %v5675 = vlaneseq
  %v5676 = vshrl.u32 %v5675, 7
  %v5677 = vsub.s32 0, %v5676
  %v5678 = vrot.slane %v5672, %v5677
  %v5679 = vmul.f32 %v5611, %v5678
  %v5680 = vmul.f32 %v5612, %v5678
  %v5681 = vmul.f32 %v5613, %v5678
  %v5682 = vmul.f32 %v5614, %v5678
  %v5683 = vmul.f32 %v5615, %v5678
  %v5684 = vmul.f32 %v5616, %v5678
  %v5685 = vmul.f32 %v5617, %v5678
  %v5686 = vlaneseq
  %v5687 = vshrl.u32 %v5686, 7
  %v5688 = vsub.s32 0, %v5687
  %v5689 = vrot.slane %v5674, %v5688
  %v5690 = vadd.f32 %v5679, %v5689
  %v5691 = vadd.f32 %v5680, %v5689
  %v5692 = vadd.f32 %v5681, %v5689
  %v5693 = vadd.f32 %v5682, %v5689
  %v5694 = vadd.f32 %v5683, %v5689
  %v5695 = vadd.f32 %v5684, %v5689
  %v5696 = vadd.f32 %v5685, %v5689
  %vm5697 = vcmp.ge.f32.partialorder %v5690, 0.0
  %vm5698 = vcmp.ge.f32.partialorder %v5691, 0.0
  %vm5699 = vcmp.ge.f32.partialorder %v5692, 0.0
  %vm5700 = vcmp.ge.f32.partialorder %v5693, 0.0
  %vm5701 = vcmp.ge.f32.partialorder %v5694, 0.0
  %vm5702 = vcmp.ge.f32.partialorder %v5695, 0.0
  %vm5703 = vcmp.ge.f32.partialorder %v5696, 0.0
  %v5704 = vmul.f32 %v5690, 0.2
  %v5705 = vmul.f32 %v5691, 0.2
  %v5706 = vmul.f32 %v5692, 0.2
  %v5707 = vmul.f32 %v5693, 0.2
  %v5708 = vmul.f32 %v5694, 0.2
  %v5709 = vmul.f32 %v5695, 0.2
  %v5710 = vmul.f32 %v5696, 0.2
  %v5711 = vsel %vm5697, %v5690, %v5704
  %v5712 = vsel %vm5698, %v5691, %v5705
  %v5713 = vsel %vm5699, %v5692, %v5706
  %v5714 = vsel %vm5700, %v5693, %v5707
  %v5715 = vsel %vm5701, %v5694, %v5708
  %v5716 = vsel %vm5702, %v5695, %v5709
  %v5717 = vsel %vm5703, %v5696, %v5710
  %v5718 = vpack.c.bf16 %v5712, %v5711
  %v5719 = vpack.c.bf16 %v5714, %v5713
  %v5720 = vpack.c.bf16 %v5716, %v5715
  %v5721 = vpack.c.bf16 %v5717, %v5717
  %v5722 = vld [vmem:[%s2] sm:$0xf]
  %v5723 = vld [vmem:[%s2 + $0x4] sm:$0xf]
  %v5724 = vld [vmem:[%s2 + $0x8] sm:$0xf]
  %v5725 = vld [vmem:[%s2 + $0xc] sm:$0xf]
  %s5726 = scalar_lea.vmem %s2, 16
  %v5727 = vld [vmem:[%s5726] sm:$0xf]
  %v5728 = vld [vmem:[%s5726 + $0x4] sm:$0xf]
  %v5729 = vld [vmem:[%s5726 + $0x8] sm:$0xf]
  %v5730 = vld [vmem:[%s5726 + $0xc] sm:$0xf]
  %v5732 = vrot.slane %v5718, 1
  %v5737 = vunpack.c.l.b16 %v5727
  %v5738 = vunpack.c.l.b16 %v5728
  %v5739 = vunpack.c.l.b16 %v5729
  %v5740 = vunpack.c.l.b16 %v5730
  %v5741 = vpack.c.b16 %v5738, %v5737
  %v5742 = vpack.c.b16 %v5740, %v5739
  %v5746 = vsel %vm5618, %v5732, 0
  %5748 = vmatprep.subr.bf16.mxu0 0
  %5749 = vmatpush1.bf16.msra.mxu0 0
  %5750 = vmatprep.subr.bf16.mxu0 0
  %5751 = vmatpush1.bf16.msra.mxu0 0
  %5752 = vmatprep.subr.bf16.mxu0 0
  %5753 = vmatpush1.bf16.msra.mxu0 0
  %5754 = vmatprep.subr.bf16.mxu0 0
  %5755 = vmatpush1.bf16.msra.mxu0 0
  %5756 = vmatprep.subr.bf16.mxu0 0
  %5757 = vmatpush1.bf16.msra.mxu0 0
  %5758 = vmatprep.subr.bf16.mxu0 0
  %5759 = vmatpush1.bf16.msra.mxu0 0
  %5760 = vmatprep.subr.bf16.mxu0 0
  %5761 = vmatpush1.bf16.msra.mxu0 %v5742
  %5762 = vmatprep.subr.bf16.mxu0 0
  %5763 = vmatpush1.bf16.msra.mxu0 %v5741
  %5764 = vmatprep.subr.bf16.mxu0 0
  %5765 = vmatpush2.bf16.msra.mxu0 0
  %5766 = vmatprep.subr.bf16.mxu0 0
  %5767 = vmatpush2.bf16.msra.mxu0 0
  %5768 = vmatprep.subr.bf16.mxu0 0
  %5769 = vmatpush2.bf16.msra.mxu0 0
  %5770 = vmatprep.subr.bf16.mxu0 0
  %5771 = vmatpush2.bf16.msra.mxu0 0
  %5772 = vmatprep.subr.bf16.mxu0 0
  %5773 = vmatpush2.bf16.msra.mxu0 0
  %5774 = vmatprep.subr.bf16.mxu0 0
  %5775 = vmatpush2.bf16.msra.mxu0 0
  %5776 = vmatprep.subr.bf16.mxu0 0
  %5777 = vmatpush2.bf16.msra.mxu0 0
  %5778 = vmatprep.subr.bf16.mxu0 0
  %5779 = vmatpush2.bf16.msra.mxu0 0
  %5780 = vmatprep.mubr.bf16.mxu0 0
  %5781 = vmatmul.mubr.bf16.gmra.mxu0 %v5746
  %v5782 = vpop.f32.mrf.mxu0
  %v5783 = vadd.f32 0.0, %v5782
  %v5784 = vpop.f32.mrf.mxu0
  %v5785 = vpop.f32.mrf.mxu0
  %v5786 = vpop.f32.mrf.mxu0
  %5787 = vdwg.mxu0
  %v5792 = vunpack.c.l.b16 %v5722
  %v5793 = vunpack.c.l.b16 %v5723
  %v5794 = vunpack.c.l.b16 %v5724
  %v5795 = vunpack.c.l.b16 %v5725
  %v5796 = vpack.c.b16 %v5793, %v5792
  %v5797 = vpack.c.b16 %v5795, %v5794
  %v5801 = vsel %vm5618, %v5718, 0
  %5803 = vmatprep.subr.bf16.mxu0 0
  %5804 = vmatpush1.bf16.msra.mxu0 0
  %5805 = vmatprep.subr.bf16.mxu0 0
  %5806 = vmatpush1.bf16.msra.mxu0 0
  %5807 = vmatprep.subr.bf16.mxu0 0
  %5808 = vmatpush1.bf16.msra.mxu0 0
  %5809 = vmatprep.subr.bf16.mxu0 0
  %5810 = vmatpush1.bf16.msra.mxu0 0
  %5811 = vmatprep.subr.bf16.mxu0 0
  %5812 = vmatpush1.bf16.msra.mxu0 0
  %5813 = vmatprep.subr.bf16.mxu0 0
  %5814 = vmatpush1.bf16.msra.mxu0 0
  %5815 = vmatprep.subr.bf16.mxu0 0
  %5816 = vmatpush1.bf16.msra.mxu0 %v5797
  %5817 = vmatprep.subr.bf16.mxu0 0
  %5818 = vmatpush1.bf16.msra.mxu0 %v5796
  %5819 = vmatprep.subr.bf16.mxu0 0
  %5820 = vmatpush2.bf16.msra.mxu0 0
  %5821 = vmatprep.subr.bf16.mxu0 0
  %5822 = vmatpush2.bf16.msra.mxu0 0
  %5823 = vmatprep.subr.bf16.mxu0 0
  %5824 = vmatpush2.bf16.msra.mxu0 0
  %5825 = vmatprep.subr.bf16.mxu0 0
  %5826 = vmatpush2.bf16.msra.mxu0 0
  %5827 = vmatprep.subr.bf16.mxu0 0
  %5828 = vmatpush2.bf16.msra.mxu0 0
  %5829 = vmatprep.subr.bf16.mxu0 0
  %5830 = vmatpush2.bf16.msra.mxu0 0
  %5831 = vmatprep.subr.bf16.mxu0 0
  %5832 = vmatpush2.bf16.msra.mxu0 0
  %5833 = vmatprep.subr.bf16.mxu0 0
  %5834 = vmatpush2.bf16.msra.mxu0 0
  %5835 = vmatprep.mubr.bf16.mxu0 0
  %5836 = vmatmul.mubr.bf16.gmra.mxu0 %v5801
  %v5837 = vpop.f32.mrf.mxu0
  %v5838 = vadd.f32 %v5783, %v5837
  %v5839 = vpop.f32.mrf.mxu0
  %v5840 = vpop.f32.mrf.mxu0
  %v5841 = vpop.f32.mrf.mxu0
  %5842 = vdwg.mxu0
  %s5843 = scalar_lea.vmem %s2, 32
  %v5844 = vld [vmem:[%s5843] sm:$0xf]
  %v5845 = vld [vmem:[%s5843 + $0x4] sm:$0xf]
  %v5846 = vld [vmem:[%s5843 + $0x8] sm:$0xf]
  %v5847 = vld [vmem:[%s5843 + $0xc] sm:$0xf]
  %v5848 = vrot.slane %v5718, 2
  %v5853 = vunpack.c.l.b16 %v5844
  %v5854 = vunpack.c.l.b16 %v5845
  %v5855 = vunpack.c.l.b16 %v5846
  %v5856 = vunpack.c.l.b16 %v5847
  %v5857 = vpack.c.b16 %v5854, %v5853
  %v5858 = vpack.c.b16 %v5856, %v5855
  %v5862 = vsel %vm5618, %v5848, 0
  %5864 = vmatprep.subr.bf16.mxu0 0
  %5865 = vmatpush1.bf16.msra.mxu0 0
  %5866 = vmatprep.subr.bf16.mxu0 0
  %5867 = vmatpush1.bf16.msra.mxu0 0
  %5868 = vmatprep.subr.bf16.mxu0 0
  %5869 = vmatpush1.bf16.msra.mxu0 0
  %5870 = vmatprep.subr.bf16.mxu0 0
  %5871 = vmatpush1.bf16.msra.mxu0 0
  %5872 = vmatprep.subr.bf16.mxu0 0
  %5873 = vmatpush1.bf16.msra.mxu0 0
  %5874 = vmatprep.subr.bf16.mxu0 0
  %5875 = vmatpush1.bf16.msra.mxu0 0
  %5876 = vmatprep.subr.bf16.mxu0 0
  %5877 = vmatpush1.bf16.msra.mxu0 %v5858
  %5878 = vmatprep.subr.bf16.mxu0 0
  %5879 = vmatpush1.bf16.msra.mxu0 %v5857
  %5880 = vmatprep.subr.bf16.mxu0 0
  %5881 = vmatpush2.bf16.msra.mxu0 0
  %5882 = vmatprep.subr.bf16.mxu0 0
  %5883 = vmatpush2.bf16.msra.mxu0 0
  %5884 = vmatprep.subr.bf16.mxu0 0
  %5885 = vmatpush2.bf16.msra.mxu0 0
  %5886 = vmatprep.subr.bf16.mxu0 0
  %5887 = vmatpush2.bf16.msra.mxu0 0
  %5888 = vmatprep.subr.bf16.mxu0 0
  %5889 = vmatpush2.bf16.msra.mxu0 0
  %5890 = vmatprep.subr.bf16.mxu0 0
  %5891 = vmatpush2.bf16.msra.mxu0 0
  %5892 = vmatprep.subr.bf16.mxu0 0
  %5893 = vmatpush2.bf16.msra.mxu0 0
  %5894 = vmatprep.subr.bf16.mxu0 0
  %5895 = vmatpush2.bf16.msra.mxu0 0
  %5896 = vmatprep.mubr.bf16.mxu0 0
  %5897 = vmatmul.mubr.bf16.gmra.mxu0 %v5862
  %v5898 = vpop.f32.mrf.mxu0
  %v5899 = vadd.f32 0.0, %v5898
  %v5900 = vpop.f32.mrf.mxu0
  %v5901 = vpop.f32.mrf.mxu0
  %v5902 = vpop.f32.mrf.mxu0
  %5903 = vdwg.mxu0
  %v5904 = vadd.f32 %v5838, %v5899
  %s5905 = scalar_lea.vmem %s2, 48
  %v5906 = vld [vmem:[%s5905] sm:$0xf]
  %v5907 = vld [vmem:[%s5905 + $0x4] sm:$0xf]
  %v5908 = vld [vmem:[%s5905 + $0x8] sm:$0xf]
  %v5909 = vld [vmem:[%s5905 + $0xc] sm:$0xf]
  %v5910 = vrot.slane %v5718, 3
  %v5915 = vunpack.c.l.b16 %v5906
  %v5916 = vunpack.c.l.b16 %v5907
  %v5917 = vunpack.c.l.b16 %v5908
  %v5918 = vunpack.c.l.b16 %v5909
  %v5919 = vpack.c.b16 %v5916, %v5915
  %v5920 = vpack.c.b16 %v5918, %v5917
  %v5924 = vsel %vm5618, %v5910, 0
  %5926 = vmatprep.subr.bf16.mxu0 0
  %5927 = vmatpush1.bf16.msra.mxu0 0
  %5928 = vmatprep.subr.bf16.mxu0 0
  %5929 = vmatpush1.bf16.msra.mxu0 0
  %5930 = vmatprep.subr.bf16.mxu0 0
  %5931 = vmatpush1.bf16.msra.mxu0 0
  %5932 = vmatprep.subr.bf16.mxu0 0
  %5933 = vmatpush1.bf16.msra.mxu0 0
  %5934 = vmatprep.subr.bf16.mxu0 0
  %5935 = vmatpush1.bf16.msra.mxu0 0
  %5936 = vmatprep.subr.bf16.mxu0 0
  %5937 = vmatpush1.bf16.msra.mxu0 0
  %5938 = vmatprep.subr.bf16.mxu0 0
  %5939 = vmatpush1.bf16.msra.mxu0 %v5920
  %5940 = vmatprep.subr.bf16.mxu0 0
  %5941 = vmatpush1.bf16.msra.mxu0 %v5919
  %5942 = vmatprep.subr.bf16.mxu0 0
  %5943 = vmatpush2.bf16.msra.mxu0 0
  %5944 = vmatprep.subr.bf16.mxu0 0
  %5945 = vmatpush2.bf16.msra.mxu0 0
  %5946 = vmatprep.subr.bf16.mxu0 0
  %5947 = vmatpush2.bf16.msra.mxu0 0
  %5948 = vmatprep.subr.bf16.mxu0 0
  %5949 = vmatpush2.bf16.msra.mxu0 0
  %5950 = vmatprep.subr.bf16.mxu0 0
  %5951 = vmatpush2.bf16.msra.mxu0 0
  %5952 = vmatprep.subr.bf16.mxu0 0
  %5953 = vmatpush2.bf16.msra.mxu0 0
  %5954 = vmatprep.subr.bf16.mxu0 0
  %5955 = vmatpush2.bf16.msra.mxu0 0
  %5956 = vmatprep.subr.bf16.mxu0 0
  %5957 = vmatpush2.bf16.msra.mxu0 0
  %5958 = vmatprep.mubr.bf16.mxu0 0
  %5959 = vmatmul.mubr.bf16.gmra.mxu0 %v5924
  %v5960 = vpop.f32.mrf.mxu0
  %v5961 = vadd.f32 0.0, %v5960
  %v5962 = vpop.f32.mrf.mxu0
  %v5963 = vpop.f32.mrf.mxu0
  %v5964 = vpop.f32.mrf.mxu0
  %5965 = vdwg.mxu0
  %v5966 = vadd.f32 %v5904, %v5961
  %s5967 = scalar_lea.vmem %s2, 64
  %v5968 = vld [vmem:[%s5967] sm:$0xf]
  %v5969 = vld [vmem:[%s5967 + $0x4] sm:$0xf]
  %v5970 = vld [vmem:[%s5967 + $0x8] sm:$0xf]
  %v5971 = vld [vmem:[%s5967 + $0xc] sm:$0xf]
  %v5972 = vrot.slane %v5718, 4
  %v5977 = vunpack.c.l.b16 %v5968
  %v5978 = vunpack.c.l.b16 %v5969
  %v5979 = vunpack.c.l.b16 %v5970
  %v5980 = vunpack.c.l.b16 %v5971
  %v5981 = vpack.c.b16 %v5978, %v5977
  %v5982 = vpack.c.b16 %v5980, %v5979
  %v5986 = vsel %vm5618, %v5972, 0
  %5988 = vmatprep.subr.bf16.mxu0 0
  %5989 = vmatpush1.bf16.msra.mxu0 0
  %5990 = vmatprep.subr.bf16.mxu0 0
  %5991 = vmatpush1.bf16.msra.mxu0 0
  %5992 = vmatprep.subr.bf16.mxu0 0
  %5993 = vmatpush1.bf16.msra.mxu0 0
  %5994 = vmatprep.subr.bf16.mxu0 0
  %5995 = vmatpush1.bf16.msra.mxu0 0
  %5996 = vmatprep.subr.bf16.mxu0 0
  %5997 = vmatpush1.bf16.msra.mxu0 0
  %5998 = vmatprep.subr.bf16.mxu0 0
  %5999 = vmatpush1.bf16.msra.mxu0 0
  %6000 = vmatprep.subr.bf16.mxu0 0
  %6001 = vmatpush1.bf16.msra.mxu0 %v5982
  %6002 = vmatprep.subr.bf16.mxu0 0
  %6003 = vmatpush1.bf16.msra.mxu0 %v5981
  %6004 = vmatprep.subr.bf16.mxu0 0
  %6005 = vmatpush2.bf16.msra.mxu0 0
  %6006 = vmatprep.subr.bf16.mxu0 0
  %6007 = vmatpush2.bf16.msra.mxu0 0
  %6008 = vmatprep.subr.bf16.mxu0 0
  %6009 = vmatpush2.bf16.msra.mxu0 0
  %6010 = vmatprep.subr.bf16.mxu0 0
  %6011 = vmatpush2.bf16.msra.mxu0 0
  %6012 = vmatprep.subr.bf16.mxu0 0
  %6013 = vmatpush2.bf16.msra.mxu0 0
  %6014 = vmatprep.subr.bf16.mxu0 0
  %6015 = vmatpush2.bf16.msra.mxu0 0
  %6016 = vmatprep.subr.bf16.mxu0 0
  %6017 = vmatpush2.bf16.msra.mxu0 0
  %6018 = vmatprep.subr.bf16.mxu0 0
  %6019 = vmatpush2.bf16.msra.mxu0 0
  %6020 = vmatprep.mubr.bf16.mxu0 0
  %6021 = vmatmul.mubr.bf16.gmra.mxu0 %v5986
  %v6022 = vpop.f32.mrf.mxu0
  %v6023 = vadd.f32 0.0, %v6022
  %v6024 = vpop.f32.mrf.mxu0
  %v6025 = vpop.f32.mrf.mxu0
  %v6026 = vpop.f32.mrf.mxu0
  %6027 = vdwg.mxu0
  %v6028 = vadd.f32 %v5966, %v6023
  %s6029 = scalar_lea.vmem %s2, 80
  %v6030 = vld [vmem:[%s6029] sm:$0xf]
  %v6031 = vld [vmem:[%s6029 + $0x4] sm:$0xf]
  %v6032 = vld [vmem:[%s6029 + $0x8] sm:$0xf]
  %v6033 = vld [vmem:[%s6029 + $0xc] sm:$0xf]
  %v6034 = vrot.slane %v5718, 5
  %v6039 = vunpack.c.l.b16 %v6030
  %v6040 = vunpack.c.l.b16 %v6031
  %v6041 = vunpack.c.l.b16 %v6032
  %v6042 = vunpack.c.l.b16 %v6033
  %v6043 = vpack.c.b16 %v6040, %v6039
  %v6044 = vpack.c.b16 %v6042, %v6041
  %v6048 = vsel %vm5618, %v6034, 0
  %6050 = vmatprep.subr.bf16.mxu0 0
  %6051 = vmatpush1.bf16.msra.mxu0 0
  %6052 = vmatprep.subr.bf16.mxu0 0
  %6053 = vmatpush1.bf16.msra.mxu0 0
  %6054 = vmatprep.subr.bf16.mxu0 0
  %6055 = vmatpush1.bf16.msra.mxu0 0
  %6056 = vmatprep.subr.bf16.mxu0 0
  %6057 = vmatpush1.bf16.msra.mxu0 0
  %6058 = vmatprep.subr.bf16.mxu0 0
  %6059 = vmatpush1.bf16.msra.mxu0 0
  %6060 = vmatprep.subr.bf16.mxu0 0
  %6061 = vmatpush1.bf16.msra.mxu0 0
  %6062 = vmatprep.subr.bf16.mxu0 0
  %6063 = vmatpush1.bf16.msra.mxu0 %v6044
  %6064 = vmatprep.subr.bf16.mxu0 0
  %6065 = vmatpush1.bf16.msra.mxu0 %v6043
  %6066 = vmatprep.subr.bf16.mxu0 0
  %6067 = vmatpush2.bf16.msra.mxu0 0
  %6068 = vmatprep.subr.bf16.mxu0 0
  %6069 = vmatpush2.bf16.msra.mxu0 0
  %6070 = vmatprep.subr.bf16.mxu0 0
  %6071 = vmatpush2.bf16.msra.mxu0 0
  %6072 = vmatprep.subr.bf16.mxu0 0
  %6073 = vmatpush2.bf16.msra.mxu0 0
  %6074 = vmatprep.subr.bf16.mxu0 0
  %6075 = vmatpush2.bf16.msra.mxu0 0
  %6076 = vmatprep.subr.bf16.mxu0 0
  %6077 = vmatpush2.bf16.msra.mxu0 0
  %6078 = vmatprep.subr.bf16.mxu0 0
  %6079 = vmatpush2.bf16.msra.mxu0 0
  %6080 = vmatprep.subr.bf16.mxu0 0
  %6081 = vmatpush2.bf16.msra.mxu0 0
  %6082 = vmatprep.mubr.bf16.mxu0 0
  %6083 = vmatmul.mubr.bf16.gmra.mxu0 %v6048
  %v6084 = vpop.f32.mrf.mxu0
  %v6085 = vadd.f32 0.0, %v6084
  %v6086 = vpop.f32.mrf.mxu0
  %v6087 = vpop.f32.mrf.mxu0
  %v6088 = vpop.f32.mrf.mxu0
  %6089 = vdwg.mxu0
  %v6090 = vadd.f32 %v6028, %v6085
  %s6091 = scalar_lea.vmem %s2, 96
  %v6092 = vld [vmem:[%s6091] sm:$0xf]
  %v6093 = vld [vmem:[%s6091 + $0x4] sm:$0xf]
  %v6094 = vld [vmem:[%s6091 + $0x8] sm:$0xf]
  %v6095 = vld [vmem:[%s6091 + $0xc] sm:$0xf]
  %v6096 = vrot.slane %v5718, 6
  %v6101 = vunpack.c.l.b16 %v6092
  %v6102 = vunpack.c.l.b16 %v6093
  %v6103 = vunpack.c.l.b16 %v6094
  %v6104 = vunpack.c.l.b16 %v6095
  %v6105 = vpack.c.b16 %v6102, %v6101
  %v6106 = vpack.c.b16 %v6104, %v6103
  %v6110 = vsel %vm5618, %v6096, 0
  %6112 = vmatprep.subr.bf16.mxu0 0
  %6113 = vmatpush1.bf16.msra.mxu0 0
  %6114 = vmatprep.subr.bf16.mxu0 0
  %6115 = vmatpush1.bf16.msra.mxu0 0
  %6116 = vmatprep.subr.bf16.mxu0 0
  %6117 = vmatpush1.bf16.msra.mxu0 0
  %6118 = vmatprep.subr.bf16.mxu0 0
  %6119 = vmatpush1.bf16.msra.mxu0 0
  %6120 = vmatprep.subr.bf16.mxu0 0
  %6121 = vmatpush1.bf16.msra.mxu0 0
  %6122 = vmatprep.subr.bf16.mxu0 0
  %6123 = vmatpush1.bf16.msra.mxu0 0
  %6124 = vmatprep.subr.bf16.mxu0 0
  %6125 = vmatpush1.bf16.msra.mxu0 %v6106
  %6126 = vmatprep.subr.bf16.mxu0 0
  %6127 = vmatpush1.bf16.msra.mxu0 %v6105
  %6128 = vmatprep.subr.bf16.mxu0 0
  %6129 = vmatpush2.bf16.msra.mxu0 0
  %6130 = vmatprep.subr.bf16.mxu0 0
  %6131 = vmatpush2.bf16.msra.mxu0 0
  %6132 = vmatprep.subr.bf16.mxu0 0
  %6133 = vmatpush2.bf16.msra.mxu0 0
  %6134 = vmatprep.subr.bf16.mxu0 0
  %6135 = vmatpush2.bf16.msra.mxu0 0
  %6136 = vmatprep.subr.bf16.mxu0 0
  %6137 = vmatpush2.bf16.msra.mxu0 0
  %6138 = vmatprep.subr.bf16.mxu0 0
  %6139 = vmatpush2.bf16.msra.mxu0 0
  %6140 = vmatprep.subr.bf16.mxu0 0
  %6141 = vmatpush2.bf16.msra.mxu0 0
  %6142 = vmatprep.subr.bf16.mxu0 0
  %6143 = vmatpush2.bf16.msra.mxu0 0
  %6144 = vmatprep.mubr.bf16.mxu0 0
  %6145 = vmatmul.mubr.bf16.gmra.mxu0 %v6110
  %v6146 = vpop.f32.mrf.mxu0
  %v6147 = vadd.f32 0.0, %v6146
  %v6148 = vpop.f32.mrf.mxu0
  %v6149 = vpop.f32.mrf.mxu0
  %v6150 = vpop.f32.mrf.mxu0
  %6151 = vdwg.mxu0
  %v6152 = vadd.f32 %v6090, %v6147
  %s6153 = scalar_lea.vmem %s2, 112
  %v6154 = vld [vmem:[%s6153] sm:$0xf]
  %v6155 = vld [vmem:[%s6153 + $0x4] sm:$0xf]
  %v6156 = vld [vmem:[%s6153 + $0x8] sm:$0xf]
  %v6157 = vld [vmem:[%s6153 + $0xc] sm:$0xf]
  %v6158 = vrot.slane %v5718, 7
  %v6163 = vunpack.c.l.b16 %v6154
  %v6164 = vunpack.c.l.b16 %v6155
  %v6165 = vunpack.c.l.b16 %v6156
  %v6166 = vunpack.c.l.b16 %v6157
  %v6167 = vpack.c.b16 %v6164, %v6163
  %v6168 = vpack.c.b16 %v6166, %v6165
  %v6172 = vsel %vm5618, %v6158, 0
  %6174 = vmatprep.subr.bf16.mxu0 0
  %6175 = vmatpush1.bf16.msra.mxu0 0
  %6176 = vmatprep.subr.bf16.mxu0 0
  %6177 = vmatpush1.bf16.msra.mxu0 0
  %6178 = vmatprep.subr.bf16.mxu0 0
  %6179 = vmatpush1.bf16.msra.mxu0 0
  %6180 = vmatprep.subr.bf16.mxu0 0
  %6181 = vmatpush1.bf16.msra.mxu0 0
  %6182 = vmatprep.subr.bf16.mxu0 0
  %6183 = vmatpush1.bf16.msra.mxu0 0
  %6184 = vmatprep.subr.bf16.mxu0 0
  %6185 = vmatpush1.bf16.msra.mxu0 0
  %6186 = vmatprep.subr.bf16.mxu0 0
  %6187 = vmatpush1.bf16.msra.mxu0 %v6168
  %6188 = vmatprep.subr.bf16.mxu0 0
  %6189 = vmatpush1.bf16.msra.mxu0 %v6167
  %6190 = vmatprep.subr.bf16.mxu0 0
  %6191 = vmatpush2.bf16.msra.mxu0 0
  %6192 = vmatprep.subr.bf16.mxu0 0
  %6193 = vmatpush2.bf16.msra.mxu0 0
  %6194 = vmatprep.subr.bf16.mxu0 0
  %6195 = vmatpush2.bf16.msra.mxu0 0
  %6196 = vmatprep.subr.bf16.mxu0 0
  %6197 = vmatpush2.bf16.msra.mxu0 0
  %6198 = vmatprep.subr.bf16.mxu0 0
  %6199 = vmatpush2.bf16.msra.mxu0 0
  %6200 = vmatprep.subr.bf16.mxu0 0
  %6201 = vmatpush2.bf16.msra.mxu0 0
  %6202 = vmatprep.subr.bf16.mxu0 0
  %6203 = vmatpush2.bf16.msra.mxu0 0
  %6204 = vmatprep.subr.bf16.mxu0 0
  %6205 = vmatpush2.bf16.msra.mxu0 0
  %6206 = vmatprep.mubr.bf16.mxu0 0
  %6207 = vmatmul.mubr.bf16.gmra.mxu0 %v6172
  %v6208 = vpop.f32.mrf.mxu0
  %v6209 = vadd.f32 0.0, %v6208
  %v6210 = vpop.f32.mrf.mxu0
  %v6211 = vpop.f32.mrf.mxu0
  %v6212 = vpop.f32.mrf.mxu0
  %6213 = vdwg.mxu0
  %v6214 = vadd.f32 %v6152, %v6209
  %s6215 = scalar_lea.vmem %s2, 128
  %v6216 = vld [vmem:[%s6215] sm:$0xf]
  %v6217 = vld [vmem:[%s6215 + $0x4] sm:$0xf]
  %v6218 = vld [vmem:[%s6215 + $0x8] sm:$0xf]
  %v6219 = vld [vmem:[%s6215 + $0xc] sm:$0xf]
  %v6224 = vunpack.c.l.b16 %v6216
  %v6225 = vunpack.c.l.b16 %v6217
  %v6226 = vunpack.c.l.b16 %v6218
  %v6227 = vunpack.c.l.b16 %v6219
  %v6228 = vpack.c.b16 %v6225, %v6224
  %v6229 = vpack.c.b16 %v6227, %v6226
  %v6233 = vsel %vm5618, %v5719, 0
  %6235 = vmatprep.subr.bf16.mxu0 0
  %6236 = vmatpush1.bf16.msra.mxu0 0
  %6237 = vmatprep.subr.bf16.mxu0 0
  %6238 = vmatpush1.bf16.msra.mxu0 0
  %6239 = vmatprep.subr.bf16.mxu0 0
  %6240 = vmatpush1.bf16.msra.mxu0 0
  %6241 = vmatprep.subr.bf16.mxu0 0
  %6242 = vmatpush1.bf16.msra.mxu0 0
  %6243 = vmatprep.subr.bf16.mxu0 0
  %6244 = vmatpush1.bf16.msra.mxu0 0
  %6245 = vmatprep.subr.bf16.mxu0 0
  %6246 = vmatpush1.bf16.msra.mxu0 0
  %6247 = vmatprep.subr.bf16.mxu0 0
  %6248 = vmatpush1.bf16.msra.mxu0 %v6229
  %6249 = vmatprep.subr.bf16.mxu0 0
  %6250 = vmatpush1.bf16.msra.mxu0 %v6228
  %6251 = vmatprep.subr.bf16.mxu0 0
  %6252 = vmatpush2.bf16.msra.mxu0 0
  %6253 = vmatprep.subr.bf16.mxu0 0
  %6254 = vmatpush2.bf16.msra.mxu0 0
  %6255 = vmatprep.subr.bf16.mxu0 0
  %6256 = vmatpush2.bf16.msra.mxu0 0
  %6257 = vmatprep.subr.bf16.mxu0 0
  %6258 = vmatpush2.bf16.msra.mxu0 0
  %6259 = vmatprep.subr.bf16.mxu0 0
  %6260 = vmatpush2.bf16.msra.mxu0 0
  %6261 = vmatprep.subr.bf16.mxu0 0
  %6262 = vmatpush2.bf16.msra.mxu0 0
  %6263 = vmatprep.subr.bf16.mxu0 0
  %6264 = vmatpush2.bf16.msra.mxu0 0
  %6265 = vmatprep.subr.bf16.mxu0 0
  %6266 = vmatpush2.bf16.msra.mxu0 0
  %6267 = vmatprep.mubr.bf16.mxu0 0
  %6268 = vmatmul.mubr.bf16.gmra.mxu0 %v6233
  %v6269 = vpop.f32.mrf.mxu0
  %v6270 = vadd.f32 0.0, %v6269
  %v6271 = vpop.f32.mrf.mxu0
  %v6272 = vpop.f32.mrf.mxu0
  %v6273 = vpop.f32.mrf.mxu0
  %6274 = vdwg.mxu0
  %v6275 = vadd.f32 %v6214, %v6270
  %s6276 = scalar_lea.vmem %s2, 144
  %v6277 = vld [vmem:[%s6276] sm:$0xf]
  %v6278 = vld [vmem:[%s6276 + $0x4] sm:$0xf]
  %v6279 = vld [vmem:[%s6276 + $0x8] sm:$0xf]
  %v6280 = vld [vmem:[%s6276 + $0xc] sm:$0xf]
  %v6282 = vrot.slane %v5719, 1
  %v6287 = vunpack.c.l.b16 %v6277
  %v6288 = vunpack.c.l.b16 %v6278
  %v6289 = vunpack.c.l.b16 %v6279
  %v6290 = vunpack.c.l.b16 %v6280
  %v6291 = vpack.c.b16 %v6288, %v6287
  %v6292 = vpack.c.b16 %v6290, %v6289
  %v6296 = vsel %vm5618, %v6282, 0
  %6298 = vmatprep.subr.bf16.mxu0 0
  %6299 = vmatpush1.bf16.msra.mxu0 0
  %6300 = vmatprep.subr.bf16.mxu0 0
  %6301 = vmatpush1.bf16.msra.mxu0 0
  %6302 = vmatprep.subr.bf16.mxu0 0
  %6303 = vmatpush1.bf16.msra.mxu0 0
  %6304 = vmatprep.subr.bf16.mxu0 0
  %6305 = vmatpush1.bf16.msra.mxu0 0
  %6306 = vmatprep.subr.bf16.mxu0 0
  %6307 = vmatpush1.bf16.msra.mxu0 0
  %6308 = vmatprep.subr.bf16.mxu0 0
  %6309 = vmatpush1.bf16.msra.mxu0 0
  %6310 = vmatprep.subr.bf16.mxu0 0
  %6311 = vmatpush1.bf16.msra.mxu0 %v6292
  %6312 = vmatprep.subr.bf16.mxu0 0
  %6313 = vmatpush1.bf16.msra.mxu0 %v6291
  %6314 = vmatprep.subr.bf16.mxu0 0
  %6315 = vmatpush2.bf16.msra.mxu0 0
  %6316 = vmatprep.subr.bf16.mxu0 0
  %6317 = vmatpush2.bf16.msra.mxu0 0
  %6318 = vmatprep.subr.bf16.mxu0 0
  %6319 = vmatpush2.bf16.msra.mxu0 0
  %6320 = vmatprep.subr.bf16.mxu0 0
  %6321 = vmatpush2.bf16.msra.mxu0 0
  %6322 = vmatprep.subr.bf16.mxu0 0
  %6323 = vmatpush2.bf16.msra.mxu0 0
  %6324 = vmatprep.subr.bf16.mxu0 0
  %6325 = vmatpush2.bf16.msra.mxu0 0
  %6326 = vmatprep.subr.bf16.mxu0 0
  %6327 = vmatpush2.bf16.msra.mxu0 0
  %6328 = vmatprep.subr.bf16.mxu0 0
  %6329 = vmatpush2.bf16.msra.mxu0 0
  %6330 = vmatprep.mubr.bf16.mxu0 0
  %6331 = vmatmul.mubr.bf16.gmra.mxu0 %v6296
  %v6332 = vpop.f32.mrf.mxu0
  %v6333 = vadd.f32 0.0, %v6332
  %v6334 = vpop.f32.mrf.mxu0
  %v6335 = vpop.f32.mrf.mxu0
  %v6336 = vpop.f32.mrf.mxu0
  %6337 = vdwg.mxu0
  %v6338 = vadd.f32 %v6275, %v6333
  %s6339 = scalar_lea.vmem %s2, 160
  %v6340 = vld [vmem:[%s6339] sm:$0xf]
  %v6341 = vld [vmem:[%s6339 + $0x4] sm:$0xf]
  %v6342 = vld [vmem:[%s6339 + $0x8] sm:$0xf]
  %v6343 = vld [vmem:[%s6339 + $0xc] sm:$0xf]
  %v6344 = vrot.slane %v5719, 2
  %v6349 = vunpack.c.l.b16 %v6340
  %v6350 = vunpack.c.l.b16 %v6341
  %v6351 = vunpack.c.l.b16 %v6342
  %v6352 = vunpack.c.l.b16 %v6343
  %v6353 = vpack.c.b16 %v6350, %v6349
  %v6354 = vpack.c.b16 %v6352, %v6351
  %v6358 = vsel %vm5618, %v6344, 0
  %6360 = vmatprep.subr.bf16.mxu0 0
  %6361 = vmatpush1.bf16.msra.mxu0 0
  %6362 = vmatprep.subr.bf16.mxu0 0
  %6363 = vmatpush1.bf16.msra.mxu0 0
  %6364 = vmatprep.subr.bf16.mxu0 0
  %6365 = vmatpush1.bf16.msra.mxu0 0
  %6366 = vmatprep.subr.bf16.mxu0 0
  %6367 = vmatpush1.bf16.msra.mxu0 0
  %6368 = vmatprep.subr.bf16.mxu0 0
  %6369 = vmatpush1.bf16.msra.mxu0 0
  %6370 = vmatprep.subr.bf16.mxu0 0
  %6371 = vmatpush1.bf16.msra.mxu0 0
  %6372 = vmatprep.subr.bf16.mxu0 0
  %6373 = vmatpush1.bf16.msra.mxu0 %v6354
  %6374 = vmatprep.subr.bf16.mxu0 0
  %6375 = vmatpush1.bf16.msra.mxu0 %v6353
  %6376 = vmatprep.subr.bf16.mxu0 0
  %6377 = vmatpush2.bf16.msra.mxu0 0
  %6378 = vmatprep.subr.bf16.mxu0 0
  %6379 = vmatpush2.bf16.msra.mxu0 0
  %6380 = vmatprep.subr.bf16.mxu0 0
  %6381 = vmatpush2.bf16.msra.mxu0 0
  %6382 = vmatprep.subr.bf16.mxu0 0
  %6383 = vmatpush2.bf16.msra.mxu0 0
  %6384 = vmatprep.subr.bf16.mxu0 0
  %6385 = vmatpush2.bf16.msra.mxu0 0
  %6386 = vmatprep.subr.bf16.mxu0 0
  %6387 = vmatpush2.bf16.msra.mxu0 0
  %6388 = vmatprep.subr.bf16.mxu0 0
  %6389 = vmatpush2.bf16.msra.mxu0 0
  %6390 = vmatprep.subr.bf16.mxu0 0
  %6391 = vmatpush2.bf16.msra.mxu0 0
  %6392 = vmatprep.mubr.bf16.mxu0 0
  %6393 = vmatmul.mubr.bf16.gmra.mxu0 %v6358
  %v6394 = vpop.f32.mrf.mxu0
  %v6395 = vadd.f32 0.0, %v6394
  %v6396 = vpop.f32.mrf.mxu0
  %v6397 = vpop.f32.mrf.mxu0
  %v6398 = vpop.f32.mrf.mxu0
  %6399 = vdwg.mxu0
  %v6400 = vadd.f32 %v6338, %v6395
  %s6401 = scalar_lea.vmem %s2, 176
  %v6402 = vld [vmem:[%s6401] sm:$0xf]
  %v6403 = vld [vmem:[%s6401 + $0x4] sm:$0xf]
  %v6404 = vld [vmem:[%s6401 + $0x8] sm:$0xf]
  %v6405 = vld [vmem:[%s6401 + $0xc] sm:$0xf]
  %v6406 = vrot.slane %v5719, 3
  %v6411 = vunpack.c.l.b16 %v6402
  %v6412 = vunpack.c.l.b16 %v6403
  %v6413 = vunpack.c.l.b16 %v6404
  %v6414 = vunpack.c.l.b16 %v6405
  %v6415 = vpack.c.b16 %v6412, %v6411
  %v6416 = vpack.c.b16 %v6414, %v6413
  %v6420 = vsel %vm5618, %v6406, 0
  %6422 = vmatprep.subr.bf16.mxu0 0
  %6423 = vmatpush1.bf16.msra.mxu0 0
  %6424 = vmatprep.subr.bf16.mxu0 0
  %6425 = vmatpush1.bf16.msra.mxu0 0
  %6426 = vmatprep.subr.bf16.mxu0 0
  %6427 = vmatpush1.bf16.msra.mxu0 0
  %6428 = vmatprep.subr.bf16.mxu0 0
  %6429 = vmatpush1.bf16.msra.mxu0 0
  %6430 = vmatprep.subr.bf16.mxu0 0
  %6431 = vmatpush1.bf16.msra.mxu0 0
  %6432 = vmatprep.subr.bf16.mxu0 0
  %6433 = vmatpush1.bf16.msra.mxu0 0
  %6434 = vmatprep.subr.bf16.mxu0 0
  %6435 = vmatpush1.bf16.msra.mxu0 %v6416
  %6436 = vmatprep.subr.bf16.mxu0 0
  %6437 = vmatpush1.bf16.msra.mxu0 %v6415
  %6438 = vmatprep.subr.bf16.mxu0 0
  %6439 = vmatpush2.bf16.msra.mxu0 0
  %6440 = vmatprep.subr.bf16.mxu0 0
  %6441 = vmatpush2.bf16.msra.mxu0 0
  %6442 = vmatprep.subr.bf16.mxu0 0
  %6443 = vmatpush2.bf16.msra.mxu0 0
  %6444 = vmatprep.subr.bf16.mxu0 0
  %6445 = vmatpush2.bf16.msra.mxu0 0
  %6446 = vmatprep.subr.bf16.mxu0 0
  %6447 = vmatpush2.bf16.msra.mxu0 0
  %6448 = vmatprep.subr.bf16.mxu0 0
  %6449 = vmatpush2.bf16.msra.mxu0 0
  %6450 = vmatprep.subr.bf16.mxu0 0
  %6451 = vmatpush2.bf16.msra.mxu0 0
  %6452 = vmatprep.subr.bf16.mxu0 0
  %6453 = vmatpush2.bf16.msra.mxu0 0
  %6454 = vmatprep.mubr.bf16.mxu0 0
  %6455 = vmatmul.mubr.bf16.gmra.mxu0 %v6420
  %v6456 = vpop.f32.mrf.mxu0
  %v6457 = vadd.f32 0.0, %v6456
  %v6458 = vpop.f32.mrf.mxu0
  %v6459 = vpop.f32.mrf.mxu0
  %v6460 = vpop.f32.mrf.mxu0
  %6461 = vdwg.mxu0
  %v6462 = vadd.f32 %v6400, %v6457
  %s6463 = scalar_lea.vmem %s2, 192
  %v6464 = vld [vmem:[%s6463] sm:$0xf]
  %v6465 = vld [vmem:[%s6463 + $0x4] sm:$0xf]
  %v6466 = vld [vmem:[%s6463 + $0x8] sm:$0xf]
  %v6467 = vld [vmem:[%s6463 + $0xc] sm:$0xf]
  %v6468 = vrot.slane %v5719, 4
  %v6473 = vunpack.c.l.b16 %v6464
  %v6474 = vunpack.c.l.b16 %v6465
  %v6475 = vunpack.c.l.b16 %v6466
  %v6476 = vunpack.c.l.b16 %v6467
  %v6477 = vpack.c.b16 %v6474, %v6473
  %v6478 = vpack.c.b16 %v6476, %v6475
  %v6482 = vsel %vm5618, %v6468, 0
  %6484 = vmatprep.subr.bf16.mxu0 0
  %6485 = vmatpush1.bf16.msra.mxu0 0
  %6486 = vmatprep.subr.bf16.mxu0 0
  %6487 = vmatpush1.bf16.msra.mxu0 0
  %6488 = vmatprep.subr.bf16.mxu0 0
  %6489 = vmatpush1.bf16.msra.mxu0 0
  %6490 = vmatprep.subr.bf16.mxu0 0
  %6491 = vmatpush1.bf16.msra.mxu0 0
  %6492 = vmatprep.subr.bf16.mxu0 0
  %6493 = vmatpush1.bf16.msra.mxu0 0
  %6494 = vmatprep.subr.bf16.mxu0 0
  %6495 = vmatpush1.bf16.msra.mxu0 0
  %6496 = vmatprep.subr.bf16.mxu0 0
  %6497 = vmatpush1.bf16.msra.mxu0 %v6478
  %6498 = vmatprep.subr.bf16.mxu0 0
  %6499 = vmatpush1.bf16.msra.mxu0 %v6477
  %6500 = vmatprep.subr.bf16.mxu0 0
  %6501 = vmatpush2.bf16.msra.mxu0 0
  %6502 = vmatprep.subr.bf16.mxu0 0
  %6503 = vmatpush2.bf16.msra.mxu0 0
  %6504 = vmatprep.subr.bf16.mxu0 0
  %6505 = vmatpush2.bf16.msra.mxu0 0
  %6506 = vmatprep.subr.bf16.mxu0 0
  %6507 = vmatpush2.bf16.msra.mxu0 0
  %6508 = vmatprep.subr.bf16.mxu0 0
  %6509 = vmatpush2.bf16.msra.mxu0 0
  %6510 = vmatprep.subr.bf16.mxu0 0
  %6511 = vmatpush2.bf16.msra.mxu0 0
  %6512 = vmatprep.subr.bf16.mxu0 0
  %6513 = vmatpush2.bf16.msra.mxu0 0
  %6514 = vmatprep.subr.bf16.mxu0 0
  %6515 = vmatpush2.bf16.msra.mxu0 0
  %6516 = vmatprep.mubr.bf16.mxu0 0
  %6517 = vmatmul.mubr.bf16.gmra.mxu0 %v6482
  %v6518 = vpop.f32.mrf.mxu0
  %v6519 = vadd.f32 0.0, %v6518
  %v6520 = vpop.f32.mrf.mxu0
  %v6521 = vpop.f32.mrf.mxu0
  %v6522 = vpop.f32.mrf.mxu0
  %6523 = vdwg.mxu0
  %v6524 = vadd.f32 %v6462, %v6519
  %s6525 = scalar_lea.vmem %s2, 208
  %v6526 = vld [vmem:[%s6525] sm:$0xf]
  %v6527 = vld [vmem:[%s6525 + $0x4] sm:$0xf]
  %v6528 = vld [vmem:[%s6525 + $0x8] sm:$0xf]
  %v6529 = vld [vmem:[%s6525 + $0xc] sm:$0xf]
  %v6530 = vrot.slane %v5719, 5
  %v6535 = vunpack.c.l.b16 %v6526
  %v6536 = vunpack.c.l.b16 %v6527
  %v6537 = vunpack.c.l.b16 %v6528
  %v6538 = vunpack.c.l.b16 %v6529
  %v6539 = vpack.c.b16 %v6536, %v6535
  %v6540 = vpack.c.b16 %v6538, %v6537
  %v6544 = vsel %vm5618, %v6530, 0
  %6546 = vmatprep.subr.bf16.mxu0 0
  %6547 = vmatpush1.bf16.msra.mxu0 0
  %6548 = vmatprep.subr.bf16.mxu0 0
  %6549 = vmatpush1.bf16.msra.mxu0 0
  %6550 = vmatprep.subr.bf16.mxu0 0
  %6551 = vmatpush1.bf16.msra.mxu0 0
  %6552 = vmatprep.subr.bf16.mxu0 0
  %6553 = vmatpush1.bf16.msra.mxu0 0
  %6554 = vmatprep.subr.bf16.mxu0 0
  %6555 = vmatpush1.bf16.msra.mxu0 0
  %6556 = vmatprep.subr.bf16.mxu0 0
  %6557 = vmatpush1.bf16.msra.mxu0 0
  %6558 = vmatprep.subr.bf16.mxu0 0
  %6559 = vmatpush1.bf16.msra.mxu0 %v6540
  %6560 = vmatprep.subr.bf16.mxu0 0
  %6561 = vmatpush1.bf16.msra.mxu0 %v6539
  %6562 = vmatprep.subr.bf16.mxu0 0
  %6563 = vmatpush2.bf16.msra.mxu0 0
  %6564 = vmatprep.subr.bf16.mxu0 0
  %6565 = vmatpush2.bf16.msra.mxu0 0
  %6566 = vmatprep.subr.bf16.mxu0 0
  %6567 = vmatpush2.bf16.msra.mxu0 0
  %6568 = vmatprep.subr.bf16.mxu0 0
  %6569 = vmatpush2.bf16.msra.mxu0 0
  %6570 = vmatprep.subr.bf16.mxu0 0
  %6571 = vmatpush2.bf16.msra.mxu0 0
  %6572 = vmatprep.subr.bf16.mxu0 0
  %6573 = vmatpush2.bf16.msra.mxu0 0
  %6574 = vmatprep.subr.bf16.mxu0 0
  %6575 = vmatpush2.bf16.msra.mxu0 0
  %6576 = vmatprep.subr.bf16.mxu0 0
  %6577 = vmatpush2.bf16.msra.mxu0 0
  %6578 = vmatprep.mubr.bf16.mxu0 0
  %6579 = vmatmul.mubr.bf16.gmra.mxu0 %v6544
  %v6580 = vpop.f32.mrf.mxu0
  %v6581 = vadd.f32 0.0, %v6580
  %v6582 = vpop.f32.mrf.mxu0
  %v6583 = vpop.f32.mrf.mxu0
  %v6584 = vpop.f32.mrf.mxu0
  %6585 = vdwg.mxu0
  %v6586 = vadd.f32 %v6524, %v6581
  %s6587 = scalar_lea.vmem %s2, 224
  %v6588 = vld [vmem:[%s6587] sm:$0xf]
  %v6589 = vld [vmem:[%s6587 + $0x4] sm:$0xf]
  %v6590 = vld [vmem:[%s6587 + $0x8] sm:$0xf]
  %v6591 = vld [vmem:[%s6587 + $0xc] sm:$0xf]
  %v6592 = vrot.slane %v5719, 6
  %v6597 = vunpack.c.l.b16 %v6588
  %v6598 = vunpack.c.l.b16 %v6589
  %v6599 = vunpack.c.l.b16 %v6590
  %v6600 = vunpack.c.l.b16 %v6591
  %v6601 = vpack.c.b16 %v6598, %v6597
  %v6602 = vpack.c.b16 %v6600, %v6599
  %v6606 = vsel %vm5618, %v6592, 0
  %6608 = vmatprep.subr.bf16.mxu0 0
  %6609 = vmatpush1.bf16.msra.mxu0 0
  %6610 = vmatprep.subr.bf16.mxu0 0
  %6611 = vmatpush1.bf16.msra.mxu0 0
  %6612 = vmatprep.subr.bf16.mxu0 0
  %6613 = vmatpush1.bf16.msra.mxu0 0
  %6614 = vmatprep.subr.bf16.mxu0 0
  %6615 = vmatpush1.bf16.msra.mxu0 0
  %6616 = vmatprep.subr.bf16.mxu0 0
  %6617 = vmatpush1.bf16.msra.mxu0 0
  %6618 = vmatprep.subr.bf16.mxu0 0
  %6619 = vmatpush1.bf16.msra.mxu0 0
  %6620 = vmatprep.subr.bf16.mxu0 0
  %6621 = vmatpush1.bf16.msra.mxu0 %v6602
  %6622 = vmatprep.subr.bf16.mxu0 0
  %6623 = vmatpush1.bf16.msra.mxu0 %v6601
  %6624 = vmatprep.subr.bf16.mxu0 0
  %6625 = vmatpush2.bf16.msra.mxu0 0
  %6626 = vmatprep.subr.bf16.mxu0 0
  %6627 = vmatpush2.bf16.msra.mxu0 0
  %6628 = vmatprep.subr.bf16.mxu0 0
  %6629 = vmatpush2.bf16.msra.mxu0 0
  %6630 = vmatprep.subr.bf16.mxu0 0
  %6631 = vmatpush2.bf16.msra.mxu0 0
  %6632 = vmatprep.subr.bf16.mxu0 0
  %6633 = vmatpush2.bf16.msra.mxu0 0
  %6634 = vmatprep.subr.bf16.mxu0 0
  %6635 = vmatpush2.bf16.msra.mxu0 0
  %6636 = vmatprep.subr.bf16.mxu0 0
  %6637 = vmatpush2.bf16.msra.mxu0 0
  %6638 = vmatprep.subr.bf16.mxu0 0
  %6639 = vmatpush2.bf16.msra.mxu0 0
  %6640 = vmatprep.mubr.bf16.mxu0 0
  %6641 = vmatmul.mubr.bf16.gmra.mxu0 %v6606
  %v6642 = vpop.f32.mrf.mxu0
  %v6643 = vadd.f32 0.0, %v6642
  %v6644 = vpop.f32.mrf.mxu0
  %v6645 = vpop.f32.mrf.mxu0
  %v6646 = vpop.f32.mrf.mxu0
  %6647 = vdwg.mxu0
  %v6648 = vadd.f32 %v6586, %v6643
  %s6649 = scalar_lea.vmem %s2, 240
  %v6650 = vld [vmem:[%s6649] sm:$0xf]
  %v6651 = vld [vmem:[%s6649 + $0x4] sm:$0xf]
  %v6652 = vld [vmem:[%s6649 + $0x8] sm:$0xf]
  %v6653 = vld [vmem:[%s6649 + $0xc] sm:$0xf]
  %v6654 = vrot.slane %v5719, 7
  %v6659 = vunpack.c.l.b16 %v6650
  %v6660 = vunpack.c.l.b16 %v6651
  %v6661 = vunpack.c.l.b16 %v6652
  %v6662 = vunpack.c.l.b16 %v6653
  %v6663 = vpack.c.b16 %v6660, %v6659
  %v6664 = vpack.c.b16 %v6662, %v6661
  %v6668 = vsel %vm5618, %v6654, 0
  %6670 = vmatprep.subr.bf16.mxu0 0
  %6671 = vmatpush1.bf16.msra.mxu0 0
  %6672 = vmatprep.subr.bf16.mxu0 0
  %6673 = vmatpush1.bf16.msra.mxu0 0
  %6674 = vmatprep.subr.bf16.mxu0 0
  %6675 = vmatpush1.bf16.msra.mxu0 0
  %6676 = vmatprep.subr.bf16.mxu0 0
  %6677 = vmatpush1.bf16.msra.mxu0 0
  %6678 = vmatprep.subr.bf16.mxu0 0
  %6679 = vmatpush1.bf16.msra.mxu0 0
  %6680 = vmatprep.subr.bf16.mxu0 0
  %6681 = vmatpush1.bf16.msra.mxu0 0
  %6682 = vmatprep.subr.bf16.mxu0 0
  %6683 = vmatpush1.bf16.msra.mxu0 %v6664
  %6684 = vmatprep.subr.bf16.mxu0 0
  %6685 = vmatpush1.bf16.msra.mxu0 %v6663
  %6686 = vmatprep.subr.bf16.mxu0 0
  %6687 = vmatpush2.bf16.msra.mxu0 0
  %6688 = vmatprep.subr.bf16.mxu0 0
  %6689 = vmatpush2.bf16.msra.mxu0 0
  %6690 = vmatprep.subr.bf16.mxu0 0
  %6691 = vmatpush2.bf16.msra.mxu0 0
  %6692 = vmatprep.subr.bf16.mxu0 0
  %6693 = vmatpush2.bf16.msra.mxu0 0
  %6694 = vmatprep.subr.bf16.mxu0 0
  %6695 = vmatpush2.bf16.msra.mxu0 0
  %6696 = vmatprep.subr.bf16.mxu0 0
  %6697 = vmatpush2.bf16.msra.mxu0 0
  %6698 = vmatprep.subr.bf16.mxu0 0
  %6699 = vmatpush2.bf16.msra.mxu0 0
  %6700 = vmatprep.subr.bf16.mxu0 0
  %6701 = vmatpush2.bf16.msra.mxu0 0
  %6702 = vmatprep.mubr.bf16.mxu0 0
  %6703 = vmatmul.mubr.bf16.gmra.mxu0 %v6668
  %v6704 = vpop.f32.mrf.mxu0
  %v6705 = vadd.f32 0.0, %v6704
  %v6706 = vpop.f32.mrf.mxu0
  %v6707 = vpop.f32.mrf.mxu0
  %v6708 = vpop.f32.mrf.mxu0
  %6709 = vdwg.mxu0
  %v6710 = vadd.f32 %v6648, %v6705
  %s6711 = scalar_lea.vmem %s2, 256
  %v6712 = vld [vmem:[%s6711] sm:$0xf]
  %v6713 = vld [vmem:[%s6711 + $0x4] sm:$0xf]
  %v6714 = vld [vmem:[%s6711 + $0x8] sm:$0xf]
  %v6715 = vld [vmem:[%s6711 + $0xc] sm:$0xf]
  %v6720 = vunpack.c.l.b16 %v6712
  %v6721 = vunpack.c.l.b16 %v6713
  %v6722 = vunpack.c.l.b16 %v6714
  %v6723 = vunpack.c.l.b16 %v6715
  %v6724 = vpack.c.b16 %v6721, %v6720
  %v6725 = vpack.c.b16 %v6723, %v6722
  %v6729 = vsel %vm5618, %v5720, 0
  %6731 = vmatprep.subr.bf16.mxu0 0
  %6732 = vmatpush1.bf16.msra.mxu0 0
  %6733 = vmatprep.subr.bf16.mxu0 0
  %6734 = vmatpush1.bf16.msra.mxu0 0
  %6735 = vmatprep.subr.bf16.mxu0 0
  %6736 = vmatpush1.bf16.msra.mxu0 0
  %6737 = vmatprep.subr.bf16.mxu0 0
  %6738 = vmatpush1.bf16.msra.mxu0 0
  %6739 = vmatprep.subr.bf16.mxu0 0
  %6740 = vmatpush1.bf16.msra.mxu0 0
  %6741 = vmatprep.subr.bf16.mxu0 0
  %6742 = vmatpush1.bf16.msra.mxu0 0
  %6743 = vmatprep.subr.bf16.mxu0 0
  %6744 = vmatpush1.bf16.msra.mxu0 %v6725
  %6745 = vmatprep.subr.bf16.mxu0 0
  %6746 = vmatpush1.bf16.msra.mxu0 %v6724
  %6747 = vmatprep.subr.bf16.mxu0 0
  %6748 = vmatpush2.bf16.msra.mxu0 0
  %6749 = vmatprep.subr.bf16.mxu0 0
  %6750 = vmatpush2.bf16.msra.mxu0 0
  %6751 = vmatprep.subr.bf16.mxu0 0
  %6752 = vmatpush2.bf16.msra.mxu0 0
  %6753 = vmatprep.subr.bf16.mxu0 0
  %6754 = vmatpush2.bf16.msra.mxu0 0
  %6755 = vmatprep.subr.bf16.mxu0 0
  %6756 = vmatpush2.bf16.msra.mxu0 0
  %6757 = vmatprep.subr.bf16.mxu0 0
  %6758 = vmatpush2.bf16.msra.mxu0 0
  %6759 = vmatprep.subr.bf16.mxu0 0
  %6760 = vmatpush2.bf16.msra.mxu0 0
  %6761 = vmatprep.subr.bf16.mxu0 0
  %6762 = vmatpush2.bf16.msra.mxu0 0
  %6763 = vmatprep.mubr.bf16.mxu0 0
  %6764 = vmatmul.mubr.bf16.gmra.mxu0 %v6729
  %v6765 = vpop.f32.mrf.mxu0
  %v6766 = vadd.f32 0.0, %v6765
  %v6767 = vpop.f32.mrf.mxu0
  %v6768 = vpop.f32.mrf.mxu0
  %v6769 = vpop.f32.mrf.mxu0
  %6770 = vdwg.mxu0
  %v6771 = vadd.f32 %v6710, %v6766
  %s6772 = scalar_lea.vmem %s2, 272
  %v6773 = vld [vmem:[%s6772] sm:$0xf]
  %v6774 = vld [vmem:[%s6772 + $0x4] sm:$0xf]
  %v6775 = vld [vmem:[%s6772 + $0x8] sm:$0xf]
  %v6776 = vld [vmem:[%s6772 + $0xc] sm:$0xf]
  %v6778 = vrot.slane %v5720, 1
  %v6783 = vunpack.c.l.b16 %v6773
  %v6784 = vunpack.c.l.b16 %v6774
  %v6785 = vunpack.c.l.b16 %v6775
  %v6786 = vunpack.c.l.b16 %v6776
  %v6787 = vpack.c.b16 %v6784, %v6783
  %v6788 = vpack.c.b16 %v6786, %v6785
  %v6792 = vsel %vm5618, %v6778, 0
  %6794 = vmatprep.subr.bf16.mxu0 0
  %6795 = vmatpush1.bf16.msra.mxu0 0
  %6796 = vmatprep.subr.bf16.mxu0 0
  %6797 = vmatpush1.bf16.msra.mxu0 0
  %6798 = vmatprep.subr.bf16.mxu0 0
  %6799 = vmatpush1.bf16.msra.mxu0 0
  %6800 = vmatprep.subr.bf16.mxu0 0
  %6801 = vmatpush1.bf16.msra.mxu0 0
  %6802 = vmatprep.subr.bf16.mxu0 0
  %6803 = vmatpush1.bf16.msra.mxu0 0
  %6804 = vmatprep.subr.bf16.mxu0 0
  %6805 = vmatpush1.bf16.msra.mxu0 0
  %6806 = vmatprep.subr.bf16.mxu0 0
  %6807 = vmatpush1.bf16.msra.mxu0 %v6788
  %6808 = vmatprep.subr.bf16.mxu0 0
  %6809 = vmatpush1.bf16.msra.mxu0 %v6787
  %6810 = vmatprep.subr.bf16.mxu0 0
  %6811 = vmatpush2.bf16.msra.mxu0 0
  %6812 = vmatprep.subr.bf16.mxu0 0
  %6813 = vmatpush2.bf16.msra.mxu0 0
  %6814 = vmatprep.subr.bf16.mxu0 0
  %6815 = vmatpush2.bf16.msra.mxu0 0
  %6816 = vmatprep.subr.bf16.mxu0 0
  %6817 = vmatpush2.bf16.msra.mxu0 0
  %6818 = vmatprep.subr.bf16.mxu0 0
  %6819 = vmatpush2.bf16.msra.mxu0 0
  %6820 = vmatprep.subr.bf16.mxu0 0
  %6821 = vmatpush2.bf16.msra.mxu0 0
  %6822 = vmatprep.subr.bf16.mxu0 0
  %6823 = vmatpush2.bf16.msra.mxu0 0
  %6824 = vmatprep.subr.bf16.mxu0 0
  %6825 = vmatpush2.bf16.msra.mxu0 0
  %6826 = vmatprep.mubr.bf16.mxu0 0
  %6827 = vmatmul.mubr.bf16.gmra.mxu0 %v6792
  %v6828 = vpop.f32.mrf.mxu0
  %v6829 = vadd.f32 0.0, %v6828
  %v6830 = vpop.f32.mrf.mxu0
  %v6831 = vpop.f32.mrf.mxu0
  %v6832 = vpop.f32.mrf.mxu0
  %6833 = vdwg.mxu0
  %v6834 = vadd.f32 %v6771, %v6829
  %s6835 = scalar_lea.vmem %s2, 288
  %v6836 = vld [vmem:[%s6835] sm:$0xf]
  %v6837 = vld [vmem:[%s6835 + $0x4] sm:$0xf]
  %v6838 = vld [vmem:[%s6835 + $0x8] sm:$0xf]
  %v6839 = vld [vmem:[%s6835 + $0xc] sm:$0xf]
  %v6840 = vrot.slane %v5720, 2
  %v6845 = vunpack.c.l.b16 %v6836
  %v6846 = vunpack.c.l.b16 %v6837
  %v6847 = vunpack.c.l.b16 %v6838
  %v6848 = vunpack.c.l.b16 %v6839
  %v6849 = vpack.c.b16 %v6846, %v6845
  %v6850 = vpack.c.b16 %v6848, %v6847
  %v6854 = vsel %vm5618, %v6840, 0
  %6856 = vmatprep.subr.bf16.mxu0 0
  %6857 = vmatpush1.bf16.msra.mxu0 0
  %6858 = vmatprep.subr.bf16.mxu0 0
  %6859 = vmatpush1.bf16.msra.mxu0 0
  %6860 = vmatprep.subr.bf16.mxu0 0
  %6861 = vmatpush1.bf16.msra.mxu0 0
  %6862 = vmatprep.subr.bf16.mxu0 0
  %6863 = vmatpush1.bf16.msra.mxu0 0
  %6864 = vmatprep.subr.bf16.mxu0 0
  %6865 = vmatpush1.bf16.msra.mxu0 0
  %6866 = vmatprep.subr.bf16.mxu0 0
  %6867 = vmatpush1.bf16.msra.mxu0 0
  %6868 = vmatprep.subr.bf16.mxu0 0
  %6869 = vmatpush1.bf16.msra.mxu0 %v6850
  %6870 = vmatprep.subr.bf16.mxu0 0
  %6871 = vmatpush1.bf16.msra.mxu0 %v6849
  %6872 = vmatprep.subr.bf16.mxu0 0
  %6873 = vmatpush2.bf16.msra.mxu0 0
  %6874 = vmatprep.subr.bf16.mxu0 0
  %6875 = vmatpush2.bf16.msra.mxu0 0
  %6876 = vmatprep.subr.bf16.mxu0 0
  %6877 = vmatpush2.bf16.msra.mxu0 0
  %6878 = vmatprep.subr.bf16.mxu0 0
  %6879 = vmatpush2.bf16.msra.mxu0 0
  %6880 = vmatprep.subr.bf16.mxu0 0
  %6881 = vmatpush2.bf16.msra.mxu0 0
  %6882 = vmatprep.subr.bf16.mxu0 0
  %6883 = vmatpush2.bf16.msra.mxu0 0
  %6884 = vmatprep.subr.bf16.mxu0 0
  %6885 = vmatpush2.bf16.msra.mxu0 0
  %6886 = vmatprep.subr.bf16.mxu0 0
  %6887 = vmatpush2.bf16.msra.mxu0 0
  %6888 = vmatprep.mubr.bf16.mxu0 0
  %6889 = vmatmul.mubr.bf16.gmra.mxu0 %v6854
  %v6890 = vpop.f32.mrf.mxu0
  %v6891 = vadd.f32 0.0, %v6890
  %v6892 = vpop.f32.mrf.mxu0
  %v6893 = vpop.f32.mrf.mxu0
  %v6894 = vpop.f32.mrf.mxu0
  %6895 = vdwg.mxu0
  %v6896 = vadd.f32 %v6834, %v6891
  %s6897 = scalar_lea.vmem %s2, 304
  %v6898 = vld [vmem:[%s6897] sm:$0xf]
  %v6899 = vld [vmem:[%s6897 + $0x4] sm:$0xf]
  %v6900 = vld [vmem:[%s6897 + $0x8] sm:$0xf]
  %v6901 = vld [vmem:[%s6897 + $0xc] sm:$0xf]
  %v6902 = vrot.slane %v5720, 3
  %v6907 = vunpack.c.l.b16 %v6898
  %v6908 = vunpack.c.l.b16 %v6899
  %v6909 = vunpack.c.l.b16 %v6900
  %v6910 = vunpack.c.l.b16 %v6901
  %v6911 = vpack.c.b16 %v6908, %v6907
  %v6912 = vpack.c.b16 %v6910, %v6909
  %v6916 = vsel %vm5618, %v6902, 0
  %6918 = vmatprep.subr.bf16.mxu0 0
  %6919 = vmatpush1.bf16.msra.mxu0 0
  %6920 = vmatprep.subr.bf16.mxu0 0
  %6921 = vmatpush1.bf16.msra.mxu0 0
  %6922 = vmatprep.subr.bf16.mxu0 0
  %6923 = vmatpush1.bf16.msra.mxu0 0
  %6924 = vmatprep.subr.bf16.mxu0 0
  %6925 = vmatpush1.bf16.msra.mxu0 0
  %6926 = vmatprep.subr.bf16.mxu0 0
  %6927 = vmatpush1.bf16.msra.mxu0 0
  %6928 = vmatprep.subr.bf16.mxu0 0
  %6929 = vmatpush1.bf16.msra.mxu0 0
  %6930 = vmatprep.subr.bf16.mxu0 0
  %6931 = vmatpush1.bf16.msra.mxu0 %v6912
  %6932 = vmatprep.subr.bf16.mxu0 0
  %6933 = vmatpush1.bf16.msra.mxu0 %v6911
  %6934 = vmatprep.subr.bf16.mxu0 0
  %6935 = vmatpush2.bf16.msra.mxu0 0
  %6936 = vmatprep.subr.bf16.mxu0 0
  %6937 = vmatpush2.bf16.msra.mxu0 0
  %6938 = vmatprep.subr.bf16.mxu0 0
  %6939 = vmatpush2.bf16.msra.mxu0 0
  %6940 = vmatprep.subr.bf16.mxu0 0
  %6941 = vmatpush2.bf16.msra.mxu0 0
  %6942 = vmatprep.subr.bf16.mxu0 0
  %6943 = vmatpush2.bf16.msra.mxu0 0
  %6944 = vmatprep.subr.bf16.mxu0 0
  %6945 = vmatpush2.bf16.msra.mxu0 0
  %6946 = vmatprep.subr.bf16.mxu0 0
  %6947 = vmatpush2.bf16.msra.mxu0 0
  %6948 = vmatprep.subr.bf16.mxu0 0
  %6949 = vmatpush2.bf16.msra.mxu0 0
  %6950 = vmatprep.mubr.bf16.mxu0 0
  %6951 = vmatmul.mubr.bf16.gmra.mxu0 %v6916
  %v6952 = vpop.f32.mrf.mxu0
  %v6953 = vadd.f32 0.0, %v6952
  %v6954 = vpop.f32.mrf.mxu0
  %v6955 = vpop.f32.mrf.mxu0
  %v6956 = vpop.f32.mrf.mxu0
  %6957 = vdwg.mxu0
  %v6958 = vadd.f32 %v6896, %v6953
  %s6959 = scalar_lea.vmem %s2, 320
  %v6960 = vld [vmem:[%s6959] sm:$0xf]
  %v6961 = vld [vmem:[%s6959 + $0x4] sm:$0xf]
  %v6962 = vld [vmem:[%s6959 + $0x8] sm:$0xf]
  %v6963 = vld [vmem:[%s6959 + $0xc] sm:$0xf]
  %v6964 = vrot.slane %v5720, 4
  %v6969 = vunpack.c.l.b16 %v6960
  %v6970 = vunpack.c.l.b16 %v6961
  %v6971 = vunpack.c.l.b16 %v6962
  %v6972 = vunpack.c.l.b16 %v6963
  %v6973 = vpack.c.b16 %v6970, %v6969
  %v6974 = vpack.c.b16 %v6972, %v6971
  %v6978 = vsel %vm5618, %v6964, 0
  %6980 = vmatprep.subr.bf16.mxu0 0
  %6981 = vmatpush1.bf16.msra.mxu0 0
  %6982 = vmatprep.subr.bf16.mxu0 0
  %6983 = vmatpush1.bf16.msra.mxu0 0
  %6984 = vmatprep.subr.bf16.mxu0 0
  %6985 = vmatpush1.bf16.msra.mxu0 0
  %6986 = vmatprep.subr.bf16.mxu0 0
  %6987 = vmatpush1.bf16.msra.mxu0 0
  %6988 = vmatprep.subr.bf16.mxu0 0
  %6989 = vmatpush1.bf16.msra.mxu0 0
  %6990 = vmatprep.subr.bf16.mxu0 0
  %6991 = vmatpush1.bf16.msra.mxu0 0
  %6992 = vmatprep.subr.bf16.mxu0 0
  %6993 = vmatpush1.bf16.msra.mxu0 %v6974
  %6994 = vmatprep.subr.bf16.mxu0 0
  %6995 = vmatpush1.bf16.msra.mxu0 %v6973
  %6996 = vmatprep.subr.bf16.mxu0 0
  %6997 = vmatpush2.bf16.msra.mxu0 0
  %6998 = vmatprep.subr.bf16.mxu0 0
  %6999 = vmatpush2.bf16.msra.mxu0 0
  %7000 = vmatprep.subr.bf16.mxu0 0
  %7001 = vmatpush2.bf16.msra.mxu0 0
  %7002 = vmatprep.subr.bf16.mxu0 0
  %7003 = vmatpush2.bf16.msra.mxu0 0
  %7004 = vmatprep.subr.bf16.mxu0 0
  %7005 = vmatpush2.bf16.msra.mxu0 0
  %7006 = vmatprep.subr.bf16.mxu0 0
  %7007 = vmatpush2.bf16.msra.mxu0 0
  %7008 = vmatprep.subr.bf16.mxu0 0
  %7009 = vmatpush2.bf16.msra.mxu0 0
  %7010 = vmatprep.subr.bf16.mxu0 0
  %7011 = vmatpush2.bf16.msra.mxu0 0
  %7012 = vmatprep.mubr.bf16.mxu0 0
  %7013 = vmatmul.mubr.bf16.gmra.mxu0 %v6978
  %v7014 = vpop.f32.mrf.mxu0
  %v7015 = vadd.f32 0.0, %v7014
  %v7016 = vpop.f32.mrf.mxu0
  %v7017 = vpop.f32.mrf.mxu0
  %v7018 = vpop.f32.mrf.mxu0
  %7019 = vdwg.mxu0
  %v7020 = vadd.f32 %v6958, %v7015
  %s7021 = scalar_lea.vmem %s2, 336
  %v7022 = vld [vmem:[%s7021] sm:$0xf]
  %v7023 = vld [vmem:[%s7021 + $0x4] sm:$0xf]
  %v7024 = vld [vmem:[%s7021 + $0x8] sm:$0xf]
  %v7025 = vld [vmem:[%s7021 + $0xc] sm:$0xf]
  %v7026 = vrot.slane %v5720, 5
  %v7031 = vunpack.c.l.b16 %v7022
  %v7032 = vunpack.c.l.b16 %v7023
  %v7033 = vunpack.c.l.b16 %v7024
  %v7034 = vunpack.c.l.b16 %v7025
  %v7035 = vpack.c.b16 %v7032, %v7031
  %v7036 = vpack.c.b16 %v7034, %v7033
  %v7040 = vsel %vm5618, %v7026, 0
  %7042 = vmatprep.subr.bf16.mxu0 0
  %7043 = vmatpush1.bf16.msra.mxu0 0
  %7044 = vmatprep.subr.bf16.mxu0 0
  %7045 = vmatpush1.bf16.msra.mxu0 0
  %7046 = vmatprep.subr.bf16.mxu0 0
  %7047 = vmatpush1.bf16.msra.mxu0 0
  %7048 = vmatprep.subr.bf16.mxu0 0
  %7049 = vmatpush1.bf16.msra.mxu0 0
  %7050 = vmatprep.subr.bf16.mxu0 0
  %7051 = vmatpush1.bf16.msra.mxu0 0
  %7052 = vmatprep.subr.bf16.mxu0 0
  %7053 = vmatpush1.bf16.msra.mxu0 0
  %7054 = vmatprep.subr.bf16.mxu0 0
  %7055 = vmatpush1.bf16.msra.mxu0 %v7036
  %7056 = vmatprep.subr.bf16.mxu0 0
  %7057 = vmatpush1.bf16.msra.mxu0 %v7035
  %7058 = vmatprep.subr.bf16.mxu0 0
  %7059 = vmatpush2.bf16.msra.mxu0 0
  %7060 = vmatprep.subr.bf16.mxu0 0
  %7061 = vmatpush2.bf16.msra.mxu0 0
  %7062 = vmatprep.subr.bf16.mxu0 0
  %7063 = vmatpush2.bf16.msra.mxu0 0
  %7064 = vmatprep.subr.bf16.mxu0 0
  %7065 = vmatpush2.bf16.msra.mxu0 0
  %7066 = vmatprep.subr.bf16.mxu0 0
  %7067 = vmatpush2.bf16.msra.mxu0 0
  %7068 = vmatprep.subr.bf16.mxu0 0
  %7069 = vmatpush2.bf16.msra.mxu0 0
  %7070 = vmatprep.subr.bf16.mxu0 0
  %7071 = vmatpush2.bf16.msra.mxu0 0
  %7072 = vmatprep.subr.bf16.mxu0 0
  %7073 = vmatpush2.bf16.msra.mxu0 0
  %7074 = vmatprep.mubr.bf16.mxu0 0
  %7075 = vmatmul.mubr.bf16.gmra.mxu0 %v7040
  %v7076 = vpop.f32.mrf.mxu0
  %v7077 = vadd.f32 0.0, %v7076
  %v7078 = vpop.f32.mrf.mxu0
  %v7079 = vpop.f32.mrf.mxu0
  %v7080 = vpop.f32.mrf.mxu0
  %7081 = vdwg.mxu0
  %v7082 = vadd.f32 %v7020, %v7077
  %s7083 = scalar_lea.vmem %s2, 352
  %v7084 = vld [vmem:[%s7083] sm:$0xf]
  %v7085 = vld [vmem:[%s7083 + $0x4] sm:$0xf]
  %v7086 = vld [vmem:[%s7083 + $0x8] sm:$0xf]
  %v7087 = vld [vmem:[%s7083 + $0xc] sm:$0xf]
  %v7088 = vrot.slane %v5720, 6
  %v7093 = vunpack.c.l.b16 %v7084
  %v7094 = vunpack.c.l.b16 %v7085
  %v7095 = vunpack.c.l.b16 %v7086
  %v7096 = vunpack.c.l.b16 %v7087
  %v7097 = vpack.c.b16 %v7094, %v7093
  %v7098 = vpack.c.b16 %v7096, %v7095
  %v7102 = vsel %vm5618, %v7088, 0
  %7104 = vmatprep.subr.bf16.mxu0 0
  %7105 = vmatpush1.bf16.msra.mxu0 0
  %7106 = vmatprep.subr.bf16.mxu0 0
  %7107 = vmatpush1.bf16.msra.mxu0 0
  %7108 = vmatprep.subr.bf16.mxu0 0
  %7109 = vmatpush1.bf16.msra.mxu0 0
  %7110 = vmatprep.subr.bf16.mxu0 0
  %7111 = vmatpush1.bf16.msra.mxu0 0
  %7112 = vmatprep.subr.bf16.mxu0 0
  %7113 = vmatpush1.bf16.msra.mxu0 0
  %7114 = vmatprep.subr.bf16.mxu0 0
  %7115 = vmatpush1.bf16.msra.mxu0 0
  %7116 = vmatprep.subr.bf16.mxu0 0
  %7117 = vmatpush1.bf16.msra.mxu0 %v7098
  %7118 = vmatprep.subr.bf16.mxu0 0
  %7119 = vmatpush1.bf16.msra.mxu0 %v7097
  %7120 = vmatprep.subr.bf16.mxu0 0
  %7121 = vmatpush2.bf16.msra.mxu0 0
  %7122 = vmatprep.subr.bf16.mxu0 0
  %7123 = vmatpush2.bf16.msra.mxu0 0
  %7124 = vmatprep.subr.bf16.mxu0 0
  %7125 = vmatpush2.bf16.msra.mxu0 0
  %7126 = vmatprep.subr.bf16.mxu0 0
  %7127 = vmatpush2.bf16.msra.mxu0 0
  %7128 = vmatprep.subr.bf16.mxu0 0
  %7129 = vmatpush2.bf16.msra.mxu0 0
  %7130 = vmatprep.subr.bf16.mxu0 0
  %7131 = vmatpush2.bf16.msra.mxu0 0
  %7132 = vmatprep.subr.bf16.mxu0 0
  %7133 = vmatpush2.bf16.msra.mxu0 0
  %7134 = vmatprep.subr.bf16.mxu0 0
  %7135 = vmatpush2.bf16.msra.mxu0 0
  %7136 = vmatprep.mubr.bf16.mxu0 0
  %7137 = vmatmul.mubr.bf16.gmra.mxu0 %v7102
  %v7138 = vpop.f32.mrf.mxu0
  %v7139 = vadd.f32 0.0, %v7138
  %v7140 = vpop.f32.mrf.mxu0
  %v7141 = vpop.f32.mrf.mxu0
  %v7142 = vpop.f32.mrf.mxu0
  %7143 = vdwg.mxu0
  %v7144 = vadd.f32 %v7082, %v7139
  %s7145 = scalar_lea.vmem %s2, 368
  %v7146 = vld [vmem:[%s7145] sm:$0xf]
  %v7147 = vld [vmem:[%s7145 + $0x4] sm:$0xf]
  %v7148 = vld [vmem:[%s7145 + $0x8] sm:$0xf]
  %v7149 = vld [vmem:[%s7145 + $0xc] sm:$0xf]
  %v7150 = vrot.slane %v5720, 7
  %v7155 = vunpack.c.l.b16 %v7146
  %v7156 = vunpack.c.l.b16 %v7147
  %v7157 = vunpack.c.l.b16 %v7148
  %v7158 = vunpack.c.l.b16 %v7149
  %v7159 = vpack.c.b16 %v7156, %v7155
  %v7160 = vpack.c.b16 %v7158, %v7157
  %v7164 = vsel %vm5618, %v7150, 0
  %7166 = vmatprep.subr.bf16.mxu0 0
  %7167 = vmatpush1.bf16.msra.mxu0 0
  %7168 = vmatprep.subr.bf16.mxu0 0
  %7169 = vmatpush1.bf16.msra.mxu0 0
  %7170 = vmatprep.subr.bf16.mxu0 0
  %7171 = vmatpush1.bf16.msra.mxu0 0
  %7172 = vmatprep.subr.bf16.mxu0 0
  %7173 = vmatpush1.bf16.msra.mxu0 0
  %7174 = vmatprep.subr.bf16.mxu0 0
  %7175 = vmatpush1.bf16.msra.mxu0 0
  %7176 = vmatprep.subr.bf16.mxu0 0
  %7177 = vmatpush1.bf16.msra.mxu0 0
  %7178 = vmatprep.subr.bf16.mxu0 0
  %7179 = vmatpush1.bf16.msra.mxu0 %v7160
  %7180 = vmatprep.subr.bf16.mxu0 0
  %7181 = vmatpush1.bf16.msra.mxu0 %v7159
  %7182 = vmatprep.subr.bf16.mxu0 0
  %7183 = vmatpush2.bf16.msra.mxu0 0
  %7184 = vmatprep.subr.bf16.mxu0 0
  %7185 = vmatpush2.bf16.msra.mxu0 0
  %7186 = vmatprep.subr.bf16.mxu0 0
  %7187 = vmatpush2.bf16.msra.mxu0 0
  %7188 = vmatprep.subr.bf16.mxu0 0
  %7189 = vmatpush2.bf16.msra.mxu0 0
  %7190 = vmatprep.subr.bf16.mxu0 0
  %7191 = vmatpush2.bf16.msra.mxu0 0
  %7192 = vmatprep.subr.bf16.mxu0 0
  %7193 = vmatpush2.bf16.msra.mxu0 0
  %7194 = vmatprep.subr.bf16.mxu0 0
  %7195 = vmatpush2.bf16.msra.mxu0 0
  %7196 = vmatprep.subr.bf16.mxu0 0
  %7197 = vmatpush2.bf16.msra.mxu0 0
  %7198 = vmatprep.mubr.bf16.mxu0 0
  %7199 = vmatmul.mubr.bf16.gmra.mxu0 %v7164
  %v7200 = vpop.f32.mrf.mxu0
  %v7201 = vadd.f32 0.0, %v7200
  %v7202 = vpop.f32.mrf.mxu0
  %v7203 = vpop.f32.mrf.mxu0
  %v7204 = vpop.f32.mrf.mxu0
  %7205 = vdwg.mxu0
  %v7206 = vadd.f32 %v7144, %v7201
  %s7207 = scalar_lea.vmem %s2, 384
  %v7208 = vld [vmem:[%s7207] sm:$0xf]
  %v7209 = vld [vmem:[%s7207 + $0x4] sm:$0xf]
  %v7210 = vld [vmem:[%s7207 + $0x8] sm:$0xf]
  %v7211 = vld [vmem:[%s7207 + $0xc] sm:$0xf]
  %v7216 = vunpack.c.l.b16 %v7208
  %v7217 = vunpack.c.l.b16 %v7209
  %v7218 = vunpack.c.l.b16 %v7210
  %v7219 = vunpack.c.l.b16 %v7211
  %v7220 = vpack.c.b16 %v7217, %v7216
  %v7221 = vpack.c.b16 %v7219, %v7218
  %v7225 = vsel %vm5618, %v5721, 0
  %7227 = vmatprep.subr.bf16.mxu0 0
  %7228 = vmatpush1.bf16.msra.mxu0 0
  %7229 = vmatprep.subr.bf16.mxu0 0
  %7230 = vmatpush1.bf16.msra.mxu0 0
  %7231 = vmatprep.subr.bf16.mxu0 0
  %7232 = vmatpush1.bf16.msra.mxu0 0
  %7233 = vmatprep.subr.bf16.mxu0 0
  %7234 = vmatpush1.bf16.msra.mxu0 0
  %7235 = vmatprep.subr.bf16.mxu0 0
  %7236 = vmatpush1.bf16.msra.mxu0 0
  %7237 = vmatprep.subr.bf16.mxu0 0
  %7238 = vmatpush1.bf16.msra.mxu0 0
  %7239 = vmatprep.subr.bf16.mxu0 0
  %7240 = vmatpush1.bf16.msra.mxu0 %v7221
  %7241 = vmatprep.subr.bf16.mxu0 0
  %7242 = vmatpush1.bf16.msra.mxu0 %v7220
  %7243 = vmatprep.subr.bf16.mxu0 0
  %7244 = vmatpush2.bf16.msra.mxu0 0
  %7245 = vmatprep.subr.bf16.mxu0 0
  %7246 = vmatpush2.bf16.msra.mxu0 0
  %7247 = vmatprep.subr.bf16.mxu0 0
  %7248 = vmatpush2.bf16.msra.mxu0 0
  %7249 = vmatprep.subr.bf16.mxu0 0
  %7250 = vmatpush2.bf16.msra.mxu0 0
  %7251 = vmatprep.subr.bf16.mxu0 0
  %7252 = vmatpush2.bf16.msra.mxu0 0
  %7253 = vmatprep.subr.bf16.mxu0 0
  %7254 = vmatpush2.bf16.msra.mxu0 0
  %7255 = vmatprep.subr.bf16.mxu0 0
  %7256 = vmatpush2.bf16.msra.mxu0 0
  %7257 = vmatprep.subr.bf16.mxu0 0
  %7258 = vmatpush2.bf16.msra.mxu0 0
  %7259 = vmatprep.mubr.bf16.mxu0 0
  %7260 = vmatmul.mubr.bf16.gmra.mxu0 %v7225
  %v7261 = vpop.f32.mrf.mxu0
  %v7262 = vadd.f32 0.0, %v7261
  %v7263 = vpop.f32.mrf.mxu0
  %v7264 = vpop.f32.mrf.mxu0
  %v7265 = vpop.f32.mrf.mxu0
  %7266 = vdwg.mxu0
  %v7267 = vadd.f32 %v7206, %v7262
  %vm7268 = vcmask 517120
  %v7269 = vsel %vm7268, %v7267, 0.0
  %v7270 = vrot.slane %v7269, 4
  %v7271 = vadd.f32 %v7269, %v7270
  %v7272 = vrot.slane %v7271, 2
  %v7273 = vadd.f32 %v7271, %v7272
  %v7274 = vrot.slane %v7273, 1
  %v7275 = vadd.f32 %v7273, %v7274
  %v7276 = vmul.f32 %v7275, 0.5
  %v7277 = vmul.f32 %v7267, %v7267
  %v7278 = vsel %vm7268, %v7277, 0.0
  %v7279 = vrot.slane %v7278, 4
  %v7280 = vadd.f32 %v7278, %v7279
  %v7281 = vrot.slane %v7280, 2
  %v7282 = vadd.f32 %v7280, %v7281
  %v7283 = vrot.slane %v7282, 1
  %v7284 = vadd.f32 %v7282, %v7283
  %v7285 = vmul.f32 %v7284, 0.5
  %v7286 = vmul.f32 %v7276, %v7276
  %v7287 = vsub.f32 %v7285, %v7286
  %v7288 = vmax.f32 %v7287, 0.0
  %v7289 = vadd.f32 %v7288, 1e-05
  %v7290 = vrsqrt.pop %v7289
  %v7291 = vmul.f32 %v26, %v7290
  %v7292 = vmul.f32 %v7276, %v7291
  %v7293 = vsub.f32 %v27, %v7292
  %v7294 = vlaneseq
  %v7295 = vshrl.u32 %v7294, 7
  %v7296 = vsub.s32 0, %v7295
  %v7297 = vrot.slane %v7291, %v7296
  %v7298 = vmul.f32 %v7267, %v7297
  %v7299 = vlaneseq
  %v7300 = vshrl.u32 %v7299, 7
  %v7301 = vsub.s32 0, %v7300
  %v7302 = vrot.slane %v7293, %v7301
  %v7303 = vadd.f32 %v7298, %v7302
  %vm7304 = vcmp.ge.f32.partialorder %v7303, 0.0
  %v7305 = vmul.f32 %v7303, 0.2
  %v7306 = vsel %vm7304, %v7303, %v7305
  %v7307 = vlaneseq
  %v7308 = vshrl.u32 %v7307, 7
  %v7309 = vsub.s32 0, %v7308
  %v7310 = vrot.slane %v28, %v7309
  %v7311 = vmul.f32 %v7306, %v7310
  %v7312 = vsel %vm7268, %v7311, 0.0
  %7313 = vadd.xlane.f32.xlu0 %v7312
  %v7314 = vpop.xlane.xlu0 %7313
  %v7315 = vlaneseq
  %v7316 = vshrl.u32 %v7315, 7
  %v7317 = vsub.s32 0, %v7316
  %v7318 = vrot.slane %v29, %v7317
  %v7319 = vadd.f32 %v7314, %v7318
  %vm7320 = vcmask 1024
  %7321 = vst.msk [vmem:[%s4] sm:$0x3] %vm7320, %v7319
  // Predicated region
  $region18: #{discriminator_forward.1} parent=0 // pred_check
    _
  $region19: #{discriminator_forward.1} parent=0 // pred_check_branch
    %7323 = sbr.rel (0) target = $region21
  $region20: #{discriminator_forward.1} parent=0 // pred_region
    _
  $region21: #{discriminator_forward.1} parent=0 // pred_fallthru
    _
  // Predicated region
  $region22: #{discriminator_forward.1} parent=0 // pred_check
    _
  $region23: #{discriminator_forward.1} parent=0 // pred_check_branch
    %7325 = sbr.rel (0) target = $region25
  $region24: #{discriminator_forward.1} parent=0 // pred_region
    _
  $region25: #{discriminator_forward.1} parent=0 // pred_fallthru
    _

</llo_original>
